<compile_context>
chip_gen: v7x
topology: tpu7x:2x2x1
jax: 0.10.0
libtpu: 0.0.40
codegen_flags: <defaults>
</compile_context>

<pallas_src>
import functools

import jax
import jax.numpy as jnp
from jax import lax
from jax.experimental import pallas as pl
from jax.experimental.pallas import tpu as pltpu

NEG_SLOPE = 0.01   # F.leaky_relu default
HALT_EPS = 0.001   # while sum(sigmoid(probm)) < 1 - 0.001
HIDDEN = 64
FUSED_W = 128      # [ W2 (64) | w3 (1) | w5 (3) | zero pad ] -> 128 lanes


# ------------------------------ fused kernel ---------------------------------
def _fused_kernel(g_ref, feat_ref, w1_ref, b1_ref, wf_ref, bf_ref,
                  wi_ref, bi_ref, wh_ref, bh_ref, wlt_ref, blin_ref,
                  y_ref, cnt_ref, fprob_ref, *, cap):
    f32 = jnp.float32
    bf16 = jnp.bfloat16
    H = HIDDEN

    def leaky(v):
        return jnp.where(v > 0, v, f32(NEG_SLOPE) * v)

    def g_matmul(x_b, w, b):
        # y = g @ (x @ W) + b ; bf16 operands, f32 MXU accumulation.
        xw = jnp.dot(x_b, w, preferred_element_type=f32).astype(bf16)
        return jnp.dot(g_ref[...], xw, preferred_element_type=f32) + b

    def gru_input_gates(inp_col):
        # All three input gates (r|z|n lane-packed in wi): ONE VPU broadcast
        # multiply + ONE node-axis reduction.  Zero-padded wi rows kill padded
        # nodes.
        return jnp.sum(inp_col * wi_ref[...], axis=0, keepdims=True) + bi_ref[...]

    def end_prob(h_new):
        # end_determine as VPU multiply + lane reduce (no 1x1 MXU matvec).
        pre = jnp.sum(h_new * wlt_ref[...], axis=-1, keepdims=True) + blin_ref[...]
        return jnp.sum(jax.nn.sigmoid(pre))

    # ----- prologue: layer1, first fused (layer2|layer3|layer5) pass, GRU ------
    x0 = leaky(g_matmul(feat_ref[...], w1_ref[...], b1_ref[...]))       # (Np, H) f32
    y0 = g_matmul(x0.astype(bf16), wf_ref[...], bf_ref[...])            # (Np, 128) f32
    y_ref[...] = y0                                                     # f32 recurrence

    inp0 = leaky(y0[:, H:H + 1])                                        # layer3 column
    gi0 = gru_input_gates(inp0)
    gh0 = bh_ref[...]                                                   # h = 0 -> Wh@h = 0
    r0 = jax.nn.sigmoid(gi0[:, :H] + gh0[:, :H])
    z0 = jax.nn.sigmoid(gi0[:, H:2 * H] + gh0[:, H:2 * H])
    n0 = jnp.tanh(gi0[:, 2 * H:] + r0 * gh0[:, 2 * H:])
    state = (1.0 - z0) * n0                                             # + z0 * 0
    prob0 = end_prob(state)

    # Hidden-side gates are loop-invariant (the reference never reassigns
    # self.state inside the loop) -> compute them once and close over them.
    gh = jnp.dot(state, wh_ref[...], preferred_element_type=f32) + bh_ref[...]
    gh_r, gh_z, gh_n = gh[:, :H], gh[:, H:2 * H], gh[:, 2 * H:]

    # ----- data-dependent halting loop, fully in-kernel -------------------------
    def cond(carry):
        cum, cnt, _ = carry
        return jnp.logical_and(cum < f32(1.0 - HALT_EPS), cnt < cap)

    def body(carry):
        cum, cnt, _ = carry
        y_prev = y_ref[...]                                   # F(x_{k-1}), f32
        x = leaky(y_prev[:, :H]).astype(bf16)                 # x_k = leaky(layer2(x_{k-1}))
        y = g_matmul(x, wf_ref[...], bf_ref[...])             # ONE fused g pass
        y_ref[...] = y                                        # holds layer2/3/5 of x_k
        inp = leaky(y[:, H:H + 1])                            # leaky(layer3(x_k))
        gi = gru_input_gates(inp)
        r = jax.nn.sigmoid(gi[:, :H] + gh_r)
        z = jax.nn.sigmoid(gi[:, H:2 * H] + gh_z)
        n = jnp.tanh(gi[:, 2 * H:] + r * gh_n)
        h_new = (1.0 - z) * n + z * state
        prob = end_prob(h_new)
        return cum + prob, cnt + 1, prob

    _, counter, fprob = lax.while_loop(cond, body, (prob0, jnp.int32(0), prob0))

    # layer5 output = columns H+1:H+4 of the last fused result, already in y_ref;
    # the wrapper slices them out.  Scalars exit through SMEM.
    cnt_ref[0] = counter
    fprob_ref[0] = fprob


# --------------------------------- wrapper -----------------------------------
def lastgcn_forward(g_pad, feat_pad, kp, *, n_real, cap=30):
    n_pad = g_pad.shape[0]
    vmem = pl.BlockSpec(memory_space=pltpu.MemorySpace.VMEM)
    smem = pl.BlockSpec(memory_space=pltpu.MemorySpace.SMEM)

    y_pad, cnt, fprob = pl.pallas_call(
        functools.partial(_fused_kernel, cap=cap),
        out_shape=(jax.ShapeDtypeStruct((n_pad, FUSED_W), jnp.float32),
                   jax.ShapeDtypeStruct((1,), jnp.int32),
                   jax.ShapeDtypeStruct((1,), jnp.float32)),
        in_specs=[vmem] * 12,
        out_specs=(vmem, smem, smem),
        compiler_params=pltpu.CompilerParams(vmem_limit_bytes=32 * 1024 * 1024),
    )(g_pad, feat_pad,
      kp["w1"], kp["b1"], kp["wf"], kp["bf"],
      kp["wi"], kp["bi"], kp["wh"], kp["bh"], kp["wlin_t"], kp["blin"])

    x_out = y_pad[:n_real, HIDDEN + 1:HIDDEN + 4]   # layer5 columns (no leaky)
    return x_out, cnt[0], fprob.reshape(1, 1)


# ------------------------------ parameter init -------------------------------
def init_params(key, n_nodes, hidden=64, in_feats=4):
    ks = jax.random.split(key, 14)

    def u(k, shape, fan_in):
        bound = 1.0 / float(fan_in) ** 0.5
        return jax.random.uniform(k, shape, jnp.float32, -bound, bound)

    p = {}
    # CustomConv layers (assumed GCN: y = g @ x @ W + b)
    p["w1"] = u(ks[0], (in_feats, hidden), in_feats)
    p["b1"] = u(ks[1], (1, hidden), in_feats)
    p["w2"] = u(ks[2], (hidden, hidden), hidden)
    p["b2"] = u(ks[3], (1, hidden), hidden)
    p["w3"] = u(ks[4], (hidden, 1), hidden)
    p["b3"] = u(ks[5], (1, 1), hidden)
    p["w5"] = u(ks[6], (hidden, 3), hidden)
    p["b5"] = u(ks[7], (1, 3), hidden)
    # GRUCell(n_nodes, hidden): gates stacked on a leading axis in (r, z, n) order
    p["w_i"] = u(ks[8], (3, n_nodes, hidden), hidden)
    p["w_h"] = u(ks[9], (3, hidden, hidden), hidden)
    p["b_i"] = u(ks[10], (3, 1, hidden), hidden)
    p["b_h"] = u(ks[11], (3, 1, hidden), hidden)
    # end_determine: Linear(hidden, 1)
    p["w_lin"] = u(ks[12], (hidden, 1), hidden)
    p["b_lin"] = u(ks[13], (1, 1), hidden)
    return p


def pack_params(p, n_pad, f_pad):
    """Fuse / pad to TPU-friendly shapes; MXU-side weights go bf16."""
    H = HIDDEN
    kp = {}
    kp["w1"] = jnp.pad(p["w1"], ((0, f_pad - p["w1"].shape[0]), (0, 0))).astype(jnp.bfloat16)
    kp["b1"] = p["b1"]
    # Fused [W2 | w3 | w5] projection, padded to 128 lanes (pad cols are zero
    # weight + zero bias, so they stay exactly zero).
    wf = jnp.concatenate([p["w2"], p["w3"], p["w5"]], axis=1)      # (H, H+4)
    bf = jnp.concatenate([p["b2"], p["b3"], p["b5"]], axis=1)      # (1, H+4)
    kp["wf"] = jnp.pad(wf, ((0, 0), (0, FUSED_W - wf.shape[1]))).astype(jnp.bfloat16)
    kp["bf"] = jnp.pad(bf, ((0, 0), (0, FUSED_W - bf.shape[1])))
    # GRU input weights lane-packed (r|z|n) -> (Np, 3H); zero rows for padded
    # nodes guarantee padded nodes never reach the gates.
    n_nodes = p["w_i"].shape[1]
    wi = jnp.transpose(p["w_i"], (1, 0, 2)).reshape(n_nodes, 3 * H)
    kp["wi"] = jnp.pad(wi, ((0, n_pad - n_nodes), (0, 0)))
    kp["bi"] = p["b_i"].reshape(1, 3 * H)
    # GRU hidden weights lane-packed (used once, outside the loop).
    kp["wh"] = jnp.transpose(p["w_h"], (1, 0, 2)).reshape(H, 3 * H)
    kp["bh"] = p["b_h"].reshape(1, 3 * H)
    # end_determine pre-transposed for the VPU lane-reduce path.
    kp["wlin_t"] = p["w_lin"].T                                    # (1, H)
    kp["blin"] = p["b_lin"]                                        # (1, 1)
    return kp


def pack_inputs(g, features, n_pad, f_pad):
    n = g.shape[0]
    # Padded g ROWS *and* COLUMNS are zero -> padded nodes never influence real rows.
    g_pad = jnp.pad(g, ((0, n_pad - n), (0, n_pad - n))).astype(jnp.bfloat16)
    feat_pad = jnp.pad(features, ((0, n_pad - n),
                                  (0, f_pad - features.shape[1]))).astype(jnp.bfloat16)
    return g_pad, feat_pad


# ----------------------------------- main -------------------------------------
if __name__ == "__main__":
    N_NODES = 588   # implied by nn.GRUCell(588, 64) in the reference module
    IN_FEATS = 4    # implied by CustomConv(4, 64)
    N_PAD = 640     # 5 * 128 -> full MXU tiles / unmasked lanes
    F_PAD = 8

    key = jax.random.PRNGKey(0)
    k_g, k_x, k_p = jax.random.split(key, 3)

    # deterministic random adjacency with self loops, row-normalized
    adj = (jax.random.uniform(k_g, (N_NODES, N_NODES)) > 0.95).astype(jnp.float32)
    adj = adj + jnp.eye(N_NODES, dtype=jnp.float32)
    g = adj / jnp.sum(adj, axis=1, keepdims=True)

    features = jax.random.normal(k_x, (N_NODES, IN_FEATS), dtype=jnp.float32)

    params = init_params(k_p, n_nodes=N_NODES, hidden=HIDDEN, in_feats=IN_FEATS)
    kparams = pack_params(params, N_PAD, F_PAD)
    g_pad, feat_pad = pack_inputs(g, features, N_PAD, F_PAD)

    fwd = jax.jit(functools.partial(lastgcn_forward, n_real=N_NODES, cap=30))
    x_out, counter, fprob = fwd(g_pad, feat_pad, kparams)
    jax.block_until_ready((x_out, counter, fprob))

    assert x_out.shape == (N_NODES, 3)
    assert fprob.shape == (1, 1)
    assert 0 <= int(counter) <= 30
    assert bool(jnp.all(jnp.isfinite(x_out)))
    assert bool(jnp.all(jnp.isfinite(fprob)))
    print("KERNEL_OK")
</pallas_src>

<mosaic_0001>
module attributes {stable_mosaic.version = 11 : i64} {
  func.func @_fused_kernel(%arg0: memref<640x640xbf16, #tpu.memory_space<vmem>>, %arg1: memref<640x8xbf16, #tpu.memory_space<vmem>>, %arg2: memref<8x64xbf16, #tpu.memory_space<vmem>>, %arg3: memref<1x64xf32, #tpu.memory_space<vmem>>, %arg4: memref<64x128xbf16, #tpu.memory_space<vmem>>, %arg5: memref<1x128xf32, #tpu.memory_space<vmem>>, %arg6: memref<640x192xf32, #tpu.memory_space<vmem>>, %arg7: memref<1x192xf32, #tpu.memory_space<vmem>>, %arg8: memref<64x192xf32, #tpu.memory_space<vmem>>, %arg9: memref<1x192xf32, #tpu.memory_space<vmem>>, %arg10: memref<1x64xf32, #tpu.memory_space<vmem>>, %arg11: memref<1x1xf32, #tpu.memory_space<vmem>>, %arg12: memref<640x128xf32, #tpu.memory_space<vmem>>, %arg13: memref<1xi32, #tpu.memory_space<smem>>, %arg14: memref<1xf32, #tpu.memory_space<smem>>) attributes {dimension_semantics = [], scalar_prefetch = 0 : i64, scratch_operands = 0 : i64, tpu.core_type = #tpu.core_type<tc>} {
    %c0 = arith.constant 0 : index
    %c0_0 = arith.constant 0 : index
    %0 = vector.load %arg1[%c0, %c0_0] : memref<640x8xbf16, #tpu.memory_space<vmem>>, vector<640x8xbf16>
    %c0_1 = arith.constant 0 : index
    %c0_2 = arith.constant 0 : index
    %1 = vector.load %arg2[%c0_1, %c0_2] : memref<8x64xbf16, #tpu.memory_space<vmem>>, vector<8x64xbf16>
    %c0_3 = arith.constant 0 : index
    %c0_4 = arith.constant 0 : index
    %2 = vector.load %arg3[%c0_3, %c0_4] : memref<1x64xf32, #tpu.memory_space<vmem>>, vector<1x64xf32>
    %cst = arith.constant dense<0.000000e+00> : vector<640x64xf32>
    %3 = tpu.matmul %0, %1, %cst {dimension_numbers = #tpu.dot_dimension_numbers<[1], [0], [0], [1], [0, 0, 1, 1], [], []>} : vector<640x8xbf16>, vector<8x64xbf16>, vector<640x64xf32> -> vector<640x64xf32>
    %4 = arith.truncf %3 : vector<640x64xf32> to vector<640x64xbf16>
    %c0_5 = arith.constant 0 : index
    %c0_6 = arith.constant 0 : index
    %5 = vector.load %arg0[%c0_5, %c0_6] : memref<640x640xbf16, #tpu.memory_space<vmem>>, vector<640x640xbf16>
    %cst_7 = arith.constant dense<0.000000e+00> : vector<640x64xf32>
    %6 = tpu.matmul %5, %4, %cst_7 {dimension_numbers = #tpu.dot_dimension_numbers<[1], [0], [0], [1], [0, 0, 1, 1], [], []>} : vector<640x640xbf16>, vector<640x64xbf16>, vector<640x64xf32> -> vector<640x64xf32>
    %7 = vector.broadcast %2 : vector<1x64xf32> to vector<640x64xf32>
    %8 = arith.addf %6, %7 : vector<640x64xf32>
    %cst_8 = arith.constant 0.000000e+00 : f32
    %9 = vector.broadcast %cst_8 : f32 to vector<640x64xf32>
    %10 = arith.cmpf ogt, %8, %9 : vector<640x64xf32>
    %cst_9 = arith.constant 0.00999999977 : f32
    %11 = vector.broadcast %cst_9 : f32 to vector<640x64xf32>
    %12 = arith.mulf %11, %8 : vector<640x64xf32>
    %13 = arith.select %10, %8, %12 : vector<640x64xi1>, vector<640x64xf32>
    %14 = arith.truncf %13 : vector<640x64xf32> to vector<640x64xbf16>
    %c0_10 = arith.constant 0 : index
    %c0_11 = arith.constant 0 : index
    %15 = vector.load %arg4[%c0_10, %c0_11] : memref<64x128xbf16, #tpu.memory_space<vmem>>, vector<64x128xbf16>
    %c0_12 = arith.constant 0 : index
    %c0_13 = arith.constant 0 : index
    %16 = vector.load %arg5[%c0_12, %c0_13] : memref<1x128xf32, #tpu.memory_space<vmem>>, vector<1x128xf32>
    %cst_14 = arith.constant dense<0.000000e+00> : vector<640x128xf32>
    %17 = tpu.matmul %14, %15, %cst_14 {dimension_numbers = #tpu.dot_dimension_numbers<[1], [0], [0], [1], [0, 0, 1, 1], [], []>} : vector<640x64xbf16>, vector<64x128xbf16>, vector<640x128xf32> -> vector<640x128xf32>
    %18 = arith.truncf %17 : vector<640x128xf32> to vector<640x128xbf16>
    %c0_15 = arith.constant 0 : index
    %c0_16 = arith.constant 0 : index
    %19 = vector.load %arg0[%c0_15, %c0_16] : memref<640x640xbf16, #tpu.memory_space<vmem>>, vector<640x640xbf16>
    %cst_17 = arith.constant dense<0.000000e+00> : vector<640x128xf32>
    %20 = tpu.matmul %19, %18, %cst_17 {dimension_numbers = #tpu.dot_dimension_numbers<[1], [0], [0], [1], [0, 0, 1, 1], [], []>} : vector<640x640xbf16>, vector<640x128xbf16>, vector<640x128xf32> -> vector<640x128xf32>
    %21 = vector.broadcast %16 : vector<1x128xf32> to vector<640x128xf32>
    %22 = arith.addf %20, %21 : vector<640x128xf32>
    %c0_18 = arith.constant 0 : index
    %c0_19 = arith.constant 0 : index
    %23 = vector.load %arg12[%c0_18, %c0_19] : memref<640x128xf32, #tpu.memory_space<vmem>>, vector<640x128xf32>
    tpu.vector_store %arg12[%c0_18, %c0_19], %22 {strides = array<i32>} : memref<640x128xf32, #tpu.memory_space<vmem>>, vector<640x128xf32>,
    %24 = vector.extract_strided_slice %22 {offsets = [0, 64], sizes = [640, 1], strides = [1, 1]} : vector<640x128xf32> to vector<640x1xf32>
    %cst_20 = arith.constant 0.000000e+00 : f32
    %25 = vector.broadcast %cst_20 : f32 to vector<640x1xf32>
    %26 = arith.cmpf ogt, %24, %25 : vector<640x1xf32>
    %cst_21 = arith.constant 0.00999999977 : f32
    %27 = vector.broadcast %cst_21 : f32 to vector<640x1xf32>
    %28 = arith.mulf %27, %24 : vector<640x1xf32>
    %29 = arith.select %26, %24, %28 : vector<640x1xi1>, vector<640x1xf32>
    %c0_22 = arith.constant 0 : index
    %c0_23 = arith.constant 0 : index
    %30 = vector.load %arg6[%c0_22, %c0_23] : memref<640x192xf32, #tpu.memory_space<vmem>>, vector<640x192xf32>
    %31 = vector.broadcast %29 : vector<640x1xf32> to vector<640x192xf32>
    %32 = arith.mulf %31, %30 : vector<640x192xf32>
    %cst_24 = arith.constant dense<0.000000e+00> : vector<192xf32>
    %33 = vector.multi_reduction <add>, %32, %cst_24 [0] : vector<640x192xf32> to vector<192xf32>
    %34 = vector.shape_cast %33 : vector<192xf32> to vector<1x192xf32>
    %c0_25 = arith.constant 0 : index
    %c0_26 = arith.constant 0 : index
    %35 = vector.load %arg7[%c0_25, %c0_26] : memref<1x192xf32, #tpu.memory_space<vmem>>, vector<1x192xf32>
    %36 = arith.addf %34, %35 : vector<1x192xf32>
    %c0_27 = arith.constant 0 : index
    %c0_28 = arith.constant 0 : index
    %37 = vector.load %arg9[%c0_27, %c0_28] : memref<1x192xf32, #tpu.memory_space<vmem>>, vector<1x192xf32>
    %38 = vector.extract_strided_slice %36 {offsets = [0, 0], sizes = [1, 64], strides = [1, 1]} : vector<1x192xf32> to vector<1x64xf32>
    %39 = vector.extract_strided_slice %37 {offsets = [0, 0], sizes = [1, 64], strides = [1, 1]} : vector<1x192xf32> to vector<1x64xf32>
    %40 = arith.addf %38, %39 : vector<1x64xf32>
    %41 = arith.negf %40 : vector<1x64xf32>
    %42 = math.exp %41 : vector<1x64xf32>
    %cst_29 = arith.constant 1.000000e+00 : f32
    %43 = vector.broadcast %cst_29 : f32 to vector<1x64xf32>
    %44 = arith.addf %43, %42 : vector<1x64xf32>
    %45 = arith.divf %43, %44 : vector<1x64xf32>
    %46 = vector.extract_strided_slice %36 {offsets = [0, 64], sizes = [1, 64], strides = [1, 1]} : vector<1x192xf32> to vector<1x64xf32>
    %47 = vector.extract_strided_slice %37 {offsets = [0, 64], sizes = [1, 64], strides = [1, 1]} : vector<1x192xf32> to vector<1x64xf32>
    %48 = arith.addf %46, %47 : vector<1x64xf32>
    %49 = arith.negf %48 : vector<1x64xf32>
    %50 = math.exp %49 : vector<1x64xf32>
    %cst_30 = arith.constant 1.000000e+00 : f32
    %51 = vector.broadcast %cst_30 : f32 to vector<1x64xf32>
    %52 = arith.addf %51, %50 : vector<1x64xf32>
    %53 = arith.divf %51, %52 : vector<1x64xf32>
    %54 = vector.extract_strided_slice %36 {offsets = [0, 128], sizes = [1, 64], strides = [1, 1]} : vector<1x192xf32> to vector<1x64xf32>
    %55 = vector.extract_strided_slice %37 {offsets = [0, 128], sizes = [1, 64], strides = [1, 1]} : vector<1x192xf32> to vector<1x64xf32>
    %56 = arith.mulf %45, %55 : vector<1x64xf32>
    %57 = arith.addf %54, %56 : vector<1x64xf32>
    %58 = math.tanh %57 : vector<1x64xf32>
    %cst_31 = arith.constant 1.000000e+00 : f32
    %59 = vector.broadcast %cst_31 : f32 to vector<1x64xf32>
    %60 = arith.subf %59, %53 : vector<1x64xf32>
    %61 = arith.mulf %60, %58 : vector<1x64xf32>
    %c0_32 = arith.constant 0 : index
    %c0_33 = arith.constant 0 : index
    %62 = vector.load %arg10[%c0_32, %c0_33] : memref<1x64xf32, #tpu.memory_space<vmem>>, vector<1x64xf32>
    %63 = arith.mulf %61, %62 : vector<1x64xf32>
    %cst_34 = arith.constant dense<0.000000e+00> : vector<1xf32>
    %64 = vector.multi_reduction <add>, %63, %cst_34 [1] : vector<1x64xf32> to vector<1xf32>
    %65 = vector.shape_cast %64 : vector<1xf32> to vector<1x1xf32>
    %c0_35 = arith.constant 0 : index
    %c0_36 = arith.constant 0 : index
    %66 = vector.load %arg11[%c0_35, %c0_36] : memref<1x1xf32, #tpu.memory_space<vmem>>, vector<1x1xf32>
    %67 = arith.addf %65, %66 : vector<1x1xf32>
    %68 = arith.negf %67 : vector<1x1xf32>
    %69 = math.exp %68 : vector<1x1xf32>
    %cst_37 = arith.constant 1.000000e+00 : f32
    %70 = vector.broadcast %cst_37 : f32 to vector<1x1xf32>
    %71 = arith.addf %70, %69 : vector<1x1xf32>
    %72 = arith.divf %70, %71 : vector<1x1xf32>
    %73 = vector.shape_cast %72 : vector<1x1xf32> to vector<1x1x1xf32>
    %cst_38 = arith.constant dense<0.000000e+00> : vector<1xf32>
    %74 = vector.multi_reduction <add>, %73, %cst_38 [1, 2] : vector<1x1x1xf32> to vector<1xf32>
    %75 = vector.shape_cast %74 : vector<1xf32> to vector<1x1x1xf32>
    %76 = vector.extract %75[0, 0, 0] : f32 from vector<1x1x1xf32>
    %c0_39 = arith.constant 0 : index
    %c0_40 = arith.constant 0 : index
    %77 = vector.load %arg8[%c0_39, %c0_40] : memref<64x192xf32, #tpu.memory_space<vmem>>, vector<64x192xf32>
    %cst_41 = arith.constant dense<0.000000e+00> : vector<1x192xf32>
    %78 = tpu.matmul %61, %77, %cst_41 {dimension_numbers = #tpu.dot_dimension_numbers<[1], [0], [0], [1], [0, 0, 1, 1], [], []>} : vector<1x64xf32>, vector<64x192xf32>, vector<1x192xf32> -> vector<1x192xf32>
    %c0_42 = arith.constant 0 : index
    %c0_43 = arith.constant 0 : index
    %79 = vector.load %arg9[%c0_42, %c0_43] : memref<1x192xf32, #tpu.memory_space<vmem>>, vector<1x192xf32>
    %80 = arith.addf %78, %79 : vector<1x192xf32>
    %81 = vector.extract_strided_slice %80 {offsets = [0, 0], sizes = [1, 64], strides = [1, 1]} : vector<1x192xf32> to vector<1x64xf32>
    %82 = vector.extract_strided_slice %80 {offsets = [0, 64], sizes = [1, 64], strides = [1, 1]} : vector<1x192xf32> to vector<1x64xf32>
    %83 = vector.extract_strided_slice %80 {offsets = [0, 128], sizes = [1, 64], strides = [1, 1]} : vector<1x192xf32> to vector<1x64xf32>
    %c0_i32 = arith.constant 0 : i32
    %84:3 = scf.while (%arg15 = %76, %arg16 = %c0_i32, %arg17 = %76) : (f32, i32, f32) -> (f32, i32, f32) {
      %cst_46 = arith.constant 9.990000e-01 : f32
      %87 = arith.cmpf olt, %arg15, %cst_46 : f32
      %c30_i32 = arith.constant 30 : i32
      %88 = arith.cmpi slt, %arg16, %c30_i32 : i32
      %89 = arith.andi %87, %88 : i1
      scf.condition(%89) %arg15, %arg16, %arg17 : f32, i32, f32
    } do {
    ^bb0(%arg15: f32, %arg16: i32, %arg17: f32):
      %c0_46 = arith.constant 0 : index
      %c0_47 = arith.constant 0 : index
      %87 = vector.load %arg12[%c0_46, %c0_47] : memref<640x128xf32, #tpu.memory_space<vmem>>, vector<640x128xf32>
      %88 = vector.extract_strided_slice %87 {offsets = [0, 0], sizes = [640, 64], strides = [1, 1]} : vector<640x128xf32> to vector<640x64xf32>
      %cst_48 = arith.constant 0.000000e+00 : f32
      %89 = vector.broadcast %cst_48 : f32 to vector<640x64xf32>
      %90 = arith.cmpf ogt, %88, %89 : vector<640x64xf32>
      %cst_49 = arith.constant 0.00999999977 : f32
      %91 = vector.broadcast %cst_49 : f32 to vector<640x64xf32>
      %92 = arith.mulf %91, %88 : vector<640x64xf32>
      %93 = arith.select %90, %88, %92 : vector<640x64xi1>, vector<640x64xf32>
      %94 = arith.truncf %93 : vector<640x64xf32> to vector<640x64xbf16>
      %c0_50 = arith.constant 0 : index
      %c0_51 = arith.constant 0 : index
      %95 = vector.load %arg4[%c0_50, %c0_51] : memref<64x128xbf16, #tpu.memory_space<vmem>>, vector<64x128xbf16>
      %c0_52 = arith.constant 0 : index
      %c0_53 = arith.constant 0 : index
      %96 = vector.load %arg5[%c0_52, %c0_53] : memref<1x128xf32, #tpu.memory_space<vmem>>, vector<1x128xf32>
      %cst_54 = arith.constant dense<0.000000e+00> : vector<640x128xf32>
      %97 = tpu.matmul %94, %95, %cst_54 {dimension_numbers = #tpu.dot_dimension_numbers<[1], [0], [0], [1], [0, 0, 1, 1], [], []>} : vector<640x64xbf16>, vector<64x128xbf16>, vector<640x128xf32> -> vector<640x128xf32>
      %98 = arith.truncf %97 : vector<640x128xf32> to vector<640x128xbf16>
      %c0_55 = arith.constant 0 : index
      %c0_56 = arith.constant 0 : index
      %99 = vector.load %arg0[%c0_55, %c0_56] : memref<640x640xbf16, #tpu.memory_space<vmem>>, vector<640x640xbf16>
      %cst_57 = arith.constant dense<0.000000e+00> : vector<640x128xf32>
      %100 = tpu.matmul %99, %98, %cst_57 {dimension_numbers = #tpu.dot_dimension_numbers<[1], [0], [0], [1], [0, 0, 1, 1], [], []>} : vector<640x640xbf16>, vector<640x128xbf16>, vector<640x128xf32> -> vector<640x128xf32>
      %101 = vector.broadcast %96 : vector<1x128xf32> to vector<640x128xf32>
      %102 = arith.addf %100, %101 : vector<640x128xf32>
      %c0_58 = arith.constant 0 : index
      %c0_59 = arith.constant 0 : index
      %103 = vector.load %arg12[%c0_58, %c0_59] : memref<640x128xf32, #tpu.memory_space<vmem>>, vector<640x128xf32>
      tpu.vector_store %arg12[%c0_58, %c0_59], %102 {strides = array<i32>} : memref<640x128xf32, #tpu.memory_space<vmem>>, vector<640x128xf32>,
      %104 = vector.extract_strided_slice %102 {offsets = [0, 64], sizes = [640, 1], strides = [1, 1]} : vector<640x128xf32> to vector<640x1xf32>
      %cst_60 = arith.constant 0.000000e+00 : f32
      %105 = vector.broadcast %cst_60 : f32 to vector<640x1xf32>
      %106 = arith.cmpf ogt, %104, %105 : vector<640x1xf32>
      %cst_61 = arith.constant 0.00999999977 : f32
      %107 = vector.broadcast %cst_61 : f32 to vector<640x1xf32>
      %108 = arith.mulf %107, %104 : vector<640x1xf32>
      %109 = arith.select %106, %104, %108 : vector<640x1xi1>, vector<640x1xf32>
      %c0_62 = arith.constant 0 : index
      %c0_63 = arith.constant 0 : index
      %110 = vector.load %arg6[%c0_62, %c0_63] : memref<640x192xf32, #tpu.memory_space<vmem>>, vector<640x192xf32>
      %111 = vector.broadcast %109 : vector<640x1xf32> to vector<640x192xf32>
      %112 = arith.mulf %111, %110 : vector<640x192xf32>
      %cst_64 = arith.constant dense<0.000000e+00> : vector<192xf32>
      %113 = vector.multi_reduction <add>, %112, %cst_64 [0] : vector<640x192xf32> to vector<192xf32>
      %114 = vector.shape_cast %113 : vector<192xf32> to vector<1x192xf32>
      %c0_65 = arith.constant 0 : index
      %c0_66 = arith.constant 0 : index
      %115 = vector.load %arg7[%c0_65, %c0_66] : memref<1x192xf32, #tpu.memory_space<vmem>>, vector<1x192xf32>
      %116 = arith.addf %114, %115 : vector<1x192xf32>
      %117 = vector.extract_strided_slice %116 {offsets = [0, 0], sizes = [1, 64], strides = [1, 1]} : vector<1x192xf32> to vector<1x64xf32>
      %118 = arith.addf %117, %81 : vector<1x64xf32>
      %119 = arith.negf %118 : vector<1x64xf32>
      %120 = math.exp %119 : vector<1x64xf32>
      %cst_67 = arith.constant 1.000000e+00 : f32
      %121 = vector.broadcast %cst_67 : f32 to vector<1x64xf32>
      %122 = arith.addf %121, %120 : vector<1x64xf32>
      %123 = arith.divf %121, %122 : vector<1x64xf32>
      %124 = vector.extract_strided_slice %116 {offsets = [0, 64], sizes = [1, 64], strides = [1, 1]} : vector<1x192xf32> to vector<1x64xf32>
      %125 = arith.addf %124, %82 : vector<1x64xf32>
      %126 = arith.negf %125 : vector<1x64xf32>
      %127 = math.exp %126 : vector<1x64xf32>
      %cst_68 = arith.constant 1.000000e+00 : f32
      %128 = vector.broadcast %cst_68 : f32 to vector<1x64xf32>
      %129 = arith.addf %128, %127 : vector<1x64xf32>
      %130 = arith.divf %128, %129 : vector<1x64xf32>
      %131 = vector.extract_strided_slice %116 {offsets = [0, 128], sizes = [1, 64], strides = [1, 1]} : vector<1x192xf32> to vector<1x64xf32>
      %132 = arith.mulf %123, %83 : vector<1x64xf32>
      %133 = arith.addf %131, %132 : vector<1x64xf32>
      %134 = math.tanh %133 : vector<1x64xf32>
      %cst_69 = arith.constant 1.000000e+00 : f32
      %135 = vector.broadcast %cst_69 : f32 to vector<1x64xf32>
      %136 = arith.subf %135, %130 : vector<1x64xf32>
      %137 = arith.mulf %136, %134 : vector<1x64xf32>
      %138 = arith.mulf %130, %61 : vector<1x64xf32>
      %139 = arith.addf %137, %138 : vector<1x64xf32>
      %c0_70 = arith.constant 0 : index
      %c0_71 = arith.constant 0 : index
      %140 = vector.load %arg10[%c0_70, %c0_71] : memref<1x64xf32, #tpu.memory_space<vmem>>, vector<1x64xf32>
      %141 = arith.mulf %139, %140 : vector<1x64xf32>
      %cst_72 = arith.constant dense<0.000000e+00> : vector<1xf32>
      %142 = vector.multi_reduction <add>, %141, %cst_72 [1] : vector<1x64xf32> to vector<1xf32>
      %143 = vector.shape_cast %142 : vector<1xf32> to vector<1x1xf32>
      %c0_73 = arith.constant 0 : index
      %c0_74 = arith.constant 0 : index
      %144 = vector.load %arg11[%c0_73, %c0_74] : memref<1x1xf32, #tpu.memory_space<vmem>>, vector<1x1xf32>
      %145 = arith.addf %143, %144 : vector<1x1xf32>
      %146 = arith.negf %145 : vector<1x1xf32>
      %147 = math.exp %146 : vector<1x1xf32>
      %cst_75 = arith.constant 1.000000e+00 : f32
      %148 = vector.broadcast %cst_75 : f32 to vector<1x1xf32>
      %149 = arith.addf %148, %147 : vector<1x1xf32>
      %150 = arith.divf %148, %149 : vector<1x1xf32>
      %151 = vector.shape_cast %150 : vector<1x1xf32> to vector<1x1x1xf32>
      %cst_76 = arith.constant dense<0.000000e+00> : vector<1xf32>
      %152 = vector.multi_reduction <add>, %151, %cst_76 [1, 2] : vector<1x1x1xf32> to vector<1xf32>
      %153 = vector.shape_cast %152 : vector<1xf32> to vector<1x1x1xf32>
      %154 = vector.extract %153[0, 0, 0] : f32 from vector<1x1x1xf32>
      %155 = arith.addf %arg15, %154 : f32
      %c1_i32 = arith.constant 1 : i32
      %156 = arith.addi %arg16, %c1_i32 : i32
      scf.yield %155, %156, %154 : f32, i32, f32
    }
    %c0_44 = arith.constant 0 : index
    %85 = memref.load %arg13[%c0_44] : memref<1xi32, #tpu.memory_space<smem>>
    memref.store %84#1, %arg13[%c0_44] : memref<1xi32, #tpu.memory_space<smem>>
    %c0_45 = arith.constant 0 : index
    %86 = memref.load %arg14[%c0_45] : memref<1xf32, #tpu.memory_space<smem>>
    memref.store %84#2, %arg14[%c0_45] : memref<1xf32, #tpu.memory_space<smem>>
    return
  }
}

</mosaic_0001>

<llo_original>
// kernel: lastgcn_forward.1
$region0: #{lastgcn_forward.1}
  #allocation0 [shape = 'u32[]', space=smem, size = 0x4, offset = 0x4, fixed_abs, tag = 'smem constant byte address 0x4 - core index']
  #allocation1 [shape = 'u32[144,128]{1,0:T(1,128)}', space=vmem, size = 0x12000, scoped, tag = 'internal scratch']
  #allocation2 [shape = 'f32[1,1]{1,0:T(1,128)S(1)}', space=vmem, size = 0x200, scoped, tag = 'scoped memory for lastgcn_forward.1']
  %s0 = inlined_call_operand.vmem [shape: bf16[640,640], index: 0, kind: input, shape index: {}]
  %s1 = inlined_call_operand.vmem [shape: bf16[640,8], index: 1, kind: input, shape index: {}]
  %s2 = inlined_call_operand.vmem [shape: bf16[8,64], index: 2, kind: input, shape index: {}]
  %s3 = inlined_call_operand.vmem [shape: f32[1,64], index: 3, kind: input, shape index: {}]
  %s4 = inlined_call_operand.vmem [shape: bf16[64,128], index: 4, kind: input, shape index: {}]
  %s5 = inlined_call_operand.vmem [shape: f32[1,128], index: 5, kind: input, shape index: {}]
  %s6 = inlined_call_operand.vmem [shape: f32[640,192], index: 6, kind: input, shape index: {}]
  %s7 = inlined_call_operand.vmem [shape: f32[1,192], index: 7, kind: input, shape index: {}]
  %s8 = inlined_call_operand.vmem [shape: f32[64,192], index: 8, kind: input, shape index: {}]
  %s9 = inlined_call_operand.vmem [shape: f32[1,192], index: 9, kind: input, shape index: {}]
  %s10 = inlined_call_operand.vmem [shape: f32[1,64], index: 10, kind: input, shape index: {}]
  %s11 = inlined_call_operand.<no memory space> [shape: f32[1,1], index: 11, kind: input, shape index: {}]
  %s12 = inlined_call_operand.vmem [shape: f32[640,128], index: 12, kind: output, shape index: {0}]
  %s13 = inlined_call_operand.hbm [shape: s32[1], index: 13, kind: output, shape index: {1}]
  %s14 = inlined_call_operand.hbm [shape: f32[1], index: 14, kind: output, shape index: {2}]
  %15 = xla_tuple %s12, %s13, %s14
  %s16 = sld [smem:[#allocation0]]
  $region81: #{lastgcn_forward.1} parent=0
    _
  %s18 = ssub.s32 1, %s16
  %s19 = scalar_select 0, %s18, %s16
  %v20 = vstv %s11
  %21 = vst [vmem:[#allocation2] sm:$0x1] %v20
  $region1: #{lastgcn_forward.1} parent=0
    #allocation3 [shape = 'u8[512]{0}', space=smem, size = 0x200, scoped, tag = 'output window, operand 1, single buffered']
    #allocation4 [shape = 's32[1]{0}', space=sflag, size = 0x4, scoped, tag = 'scoped memory for lastgcn_forward.1']
    #allocation5 [shape = 'u8[512]{0}', space=smem, size = 0x200, scoped, tag = 'output window, operand 2, single buffered']
    #allocation6 [shape = 's32[1]{0}', space=sflag, size = 0x4, scoped, tag = 'scoped memory for lastgcn_forward.1']
    %22 = vsyncpa [#allocation4], 0
    %23 = vsyncpa [#allocation6], 0
    // Predicated region
    $region2: #{lastgcn_forward.1} parent=1 // pred_check
      _
    $region3: #{lastgcn_forward.1} parent=1 // pred_check_branch
      %25 = sbr.rel (0) target = $region5
    $region4: #{lastgcn_forward.1} parent=1 // pred_region
      _
    $region5: #{lastgcn_forward.1} parent=1 // pred_fallthru
      _
    // Predicated region
    $region6: #{lastgcn_forward.1} parent=1 // pred_check
      _
    $region7: #{lastgcn_forward.1} parent=1 // pred_check_branch
      %27 = sbr.rel (0) target = $region9
    $region8: #{lastgcn_forward.1} parent=1 // pred_region
      _
    $region9: #{lastgcn_forward.1} parent=1 // pred_fallthru
      _
    // Predicated region
    $region10: #{lastgcn_forward.1} parent=1 // pred_check
      _
    $region11: #{lastgcn_forward.1} parent=1 // pred_check_branch
      %29 = sbr.rel (0) target = $region13
    $region12: #{lastgcn_forward.1} parent=1 // pred_region
      _
    $region13: #{lastgcn_forward.1} parent=1 // pred_fallthru
      _
    // Predicated region
    $region14: #{lastgcn_forward.1} parent=1 // pred_check
      _
    $region15: #{lastgcn_forward.1} parent=1 // pred_check_branch
      %31 = sbr.rel (0) target = $region17
    $region16: #{lastgcn_forward.1} parent=1 // pred_region
      _
    $region17: #{lastgcn_forward.1} parent=1 // pred_fallthru
      _
    // Predicated region
    $region18: #{lastgcn_forward.1} parent=1 // pred_check
      _
    $region19: #{lastgcn_forward.1} parent=1 // pred_check_branch
      %33 = sbr.rel (0) target = $region21
    $region20: #{lastgcn_forward.1} parent=1 // pred_region
      _
    $region21: #{lastgcn_forward.1} parent=1 // pred_fallthru
      _
    // Predicated region
    $region22: #{lastgcn_forward.1} parent=1 // pred_check
      _
    $region23: #{lastgcn_forward.1} parent=1 // pred_check_branch
      %35 = sbr.rel (0) target = $region25
    $region24: #{lastgcn_forward.1} parent=1 // pred_region
      _
    $region25: #{lastgcn_forward.1} parent=1 // pred_fallthru
      _
    // Predicated region
    $region26: #{lastgcn_forward.1} parent=1 // pred_check
      _
    $region27: #{lastgcn_forward.1} parent=1 // pred_check_branch
      %37 = sbr.rel (0) target = $region29
    $region28: #{lastgcn_forward.1} parent=1 // pred_region
      _
    $region29: #{lastgcn_forward.1} parent=1 // pred_fallthru
      _
    // Predicated region
    $region30: #{lastgcn_forward.1} parent=1 // pred_check
      _
    $region31: #{lastgcn_forward.1} parent=1 // pred_check_branch
      %39 = sbr.rel (0) target = $region33
    $region32: #{lastgcn_forward.1} parent=1 // pred_region
      _
    $region33: #{lastgcn_forward.1} parent=1 // pred_fallthru
      _
    // Predicated region
    $region34: #{lastgcn_forward.1} parent=1 // pred_check
      _
    $region35: #{lastgcn_forward.1} parent=1 // pred_check_branch
      %41 = sbr.rel (0) target = $region37
    $region36: #{lastgcn_forward.1} parent=1 // pred_region
      _
    $region37: #{lastgcn_forward.1} parent=1 // pred_fallthru
      _
    // Predicated region
    $region38: #{lastgcn_forward.1} parent=1 // pred_check
      _
    $region39: #{lastgcn_forward.1} parent=1 // pred_check_branch
      %43 = sbr.rel (0) target = $region41
    $region40: #{lastgcn_forward.1} parent=1 // pred_region
      _
    $region41: #{lastgcn_forward.1} parent=1 // pred_fallthru
      _
    // Predicated region
    $region42: #{lastgcn_forward.1} parent=1 // pred_check
      _
    $region43: #{lastgcn_forward.1} parent=1 // pred_check_branch
      %45 = sbr.rel (0) target = $region45
    $region44: #{lastgcn_forward.1} parent=1 // pred_region
      _
    $region45: #{lastgcn_forward.1} parent=1 // pred_fallthru
      _
    // Predicated region
    $region46: #{lastgcn_forward.1} parent=1 // pred_check
      _
    $region47: #{lastgcn_forward.1} parent=1 // pred_check_branch
      %47 = sbr.rel (0) target = $region49
    $region48: #{lastgcn_forward.1} parent=1 // pred_region
      _
    $region49: #{lastgcn_forward.1} parent=1 // pred_fallthru
      _
    %v49 = vld [vmem:[%s1] sm:$0xf]
    %v50 = vld [vmem:[%s1 + $0x4] sm:$0xf]
    %v51 = vld [vmem:[%s1 + $0x8] sm:$0xf]
    %v52 = vld [vmem:[%s1 + $0xc] sm:$0xf]
    %v53 = vld [vmem:[%s1 + $0x10] sm:$0xf]
    %v54 = vld [vmem:[%s1 + $0x14] sm:$0xf]
    %v55 = vld [vmem:[%s1 + $0x18] sm:$0xf]
    %v56 = vld [vmem:[%s1 + $0x1c] sm:$0xf]
    %v57 = vld [vmem:[%s1 + $0x20] sm:$0xf]
    %v58 = vld [vmem:[%s1 + $0x24] sm:$0xf]
    %v59 = vld [vmem:[%s1 + $0x28] sm:$0xf]
    %v60 = vld [vmem:[%s1 + $0x2c] sm:$0xf]
    %v61 = vld [vmem:[%s1 + $0x30] sm:$0xf]
    %v62 = vld [vmem:[%s1 + $0x34] sm:$0xf]
    %v63 = vld [vmem:[%s1 + $0x38] sm:$0xf]
    %v64 = vld [vmem:[%s1 + $0x3c] sm:$0xf]
    %v65 = vld [vmem:[%s1 + $0x40] sm:$0xf]
    %v66 = vld [vmem:[%s1 + $0x44] sm:$0xf]
    %v67 = vld [vmem:[%s1 + $0x48] sm:$0xf]
    %v68 = vld [vmem:[%s1 + $0x4c] sm:$0xf]
    %v69 = vld [vmem:[%s1 + $0x50] sm:$0xf]
    %v70 = vld [vmem:[%s1 + $0x54] sm:$0xf]
    %v71 = vld [vmem:[%s1 + $0x58] sm:$0xf]
    %v72 = vld [vmem:[%s1 + $0x5c] sm:$0xf]
    %v73 = vld [vmem:[%s1 + $0x60] sm:$0xf]
    %v74 = vld [vmem:[%s1 + $0x64] sm:$0xf]
    %v75 = vld [vmem:[%s1 + $0x68] sm:$0xf]
    %v76 = vld [vmem:[%s1 + $0x6c] sm:$0xf]
    %v77 = vld [vmem:[%s1 + $0x70] sm:$0xf]
    %v78 = vld [vmem:[%s1 + $0x74] sm:$0xf]
    %v79 = vld [vmem:[%s1 + $0x78] sm:$0xf]
    %v80 = vld [vmem:[%s1 + $0x7c] sm:$0xf]
    %v81 = vld [vmem:[%s1 + $0x80] sm:$0xf]
    %v82 = vld [vmem:[%s1 + $0x84] sm:$0xf]
    %v83 = vld [vmem:[%s1 + $0x88] sm:$0xf]
    %v84 = vld [vmem:[%s1 + $0x8c] sm:$0xf]
    %v85 = vld [vmem:[%s1 + $0x90] sm:$0xf]
    %v86 = vld [vmem:[%s1 + $0x94] sm:$0xf]
    %v87 = vld [vmem:[%s1 + $0x98] sm:$0xf]
    %v88 = vld [vmem:[%s1 + $0x9c] sm:$0xf]
    %v89 = vld [vmem:[%s1 + $0xa0] sm:$0xf]
    %v90 = vld [vmem:[%s1 + $0xa4] sm:$0xf]
    %v91 = vld [vmem:[%s1 + $0xa8] sm:$0xf]
    %v92 = vld [vmem:[%s1 + $0xac] sm:$0xf]
    %v93 = vld [vmem:[%s1 + $0xb0] sm:$0xf]
    %v94 = vld [vmem:[%s1 + $0xb4] sm:$0xf]
    %v95 = vld [vmem:[%s1 + $0xb8] sm:$0xf]
    %v96 = vld [vmem:[%s1 + $0xbc] sm:$0xf]
    %v97 = vld [vmem:[%s1 + $0xc0] sm:$0xf]
    %v98 = vld [vmem:[%s1 + $0xc4] sm:$0xf]
    %v99 = vld [vmem:[%s1 + $0xc8] sm:$0xf]
    %v100 = vld [vmem:[%s1 + $0xcc] sm:$0xf]
    %v101 = vld [vmem:[%s1 + $0xd0] sm:$0xf]
    %v102 = vld [vmem:[%s1 + $0xd4] sm:$0xf]
    %v103 = vld [vmem:[%s1 + $0xd8] sm:$0xf]
    %v104 = vld [vmem:[%s1 + $0xdc] sm:$0xf]
    %v105 = vld [vmem:[%s1 + $0xe0] sm:$0xf]
    %v106 = vld [vmem:[%s1 + $0xe4] sm:$0xf]
    %v107 = vld [vmem:[%s1 + $0xe8] sm:$0xf]
    %v108 = vld [vmem:[%s1 + $0xec] sm:$0xf]
    %v109 = vld [vmem:[%s1 + $0xf0] sm:$0xf]
    %v110 = vld [vmem:[%s1 + $0xf4] sm:$0xf]
    %v111 = vld [vmem:[%s1 + $0xf8] sm:$0xf]
    %v112 = vld [vmem:[%s1 + $0xfc] sm:$0xf]
    %v113 = vld [vmem:[%s1 + $0x100] sm:$0xf]
    %v114 = vld [vmem:[%s1 + $0x104] sm:$0xf]
    %v115 = vld [vmem:[%s1 + $0x108] sm:$0xf]
    %v116 = vld [vmem:[%s1 + $0x10c] sm:$0xf]
    %v117 = vld [vmem:[%s1 + $0x110] sm:$0xf]
    %v118 = vld [vmem:[%s1 + $0x114] sm:$0xf]
    %v119 = vld [vmem:[%s1 + $0x118] sm:$0xf]
    %v120 = vld [vmem:[%s1 + $0x11c] sm:$0xf]
    %v121 = vld [vmem:[%s1 + $0x120] sm:$0xf]
    %v122 = vld [vmem:[%s1 + $0x124] sm:$0xf]
    %v123 = vld [vmem:[%s1 + $0x128] sm:$0xf]
    %v124 = vld [vmem:[%s1 + $0x12c] sm:$0xf]
    %v125 = vld [vmem:[%s1 + $0x130] sm:$0xf]
    %v126 = vld [vmem:[%s1 + $0x134] sm:$0xf]
    %v127 = vld [vmem:[%s1 + $0x138] sm:$0xf]
    %v128 = vld [vmem:[%s1 + $0x13c] sm:$0xf]
    %v129 = vld [vmem:[%s2] sm:$0xf]
    %v130 = vld [vmem:[%s3] sm:$0x1]
    %v211 = vunpack.c.l.b16 %v49
    %v212 = vunpack.c.l.b16 %v50
    %v213 = vunpack.c.l.b16 %v51
    %v214 = vunpack.c.l.b16 %v52
    %v215 = vunpack.c.l.b16 %v53
    %v216 = vunpack.c.l.b16 %v54
    %v217 = vunpack.c.l.b16 %v55
    %v218 = vunpack.c.l.b16 %v56
    %v219 = vunpack.c.l.b16 %v57
    %v220 = vunpack.c.l.b16 %v58
    %v221 = vunpack.c.l.b16 %v59
    %v222 = vunpack.c.l.b16 %v60
    %v223 = vunpack.c.l.b16 %v61
    %v224 = vunpack.c.l.b16 %v62
    %v225 = vunpack.c.l.b16 %v63
    %v226 = vunpack.c.l.b16 %v64
    %v227 = vunpack.c.l.b16 %v65
    %v228 = vunpack.c.l.b16 %v66
    %v229 = vunpack.c.l.b16 %v67
    %v230 = vunpack.c.l.b16 %v68
    %v231 = vunpack.c.l.b16 %v69
    %v232 = vunpack.c.l.b16 %v70
    %v233 = vunpack.c.l.b16 %v71
    %v234 = vunpack.c.l.b16 %v72
    %v235 = vunpack.c.l.b16 %v73
    %v236 = vunpack.c.l.b16 %v74
    %v237 = vunpack.c.l.b16 %v75
    %v238 = vunpack.c.l.b16 %v76
    %v239 = vunpack.c.l.b16 %v77
    %v240 = vunpack.c.l.b16 %v78
    %v241 = vunpack.c.l.b16 %v79
    %v242 = vunpack.c.l.b16 %v80
    %v243 = vunpack.c.l.b16 %v81
    %v244 = vunpack.c.l.b16 %v82
    %v245 = vunpack.c.l.b16 %v83
    %v246 = vunpack.c.l.b16 %v84
    %v247 = vunpack.c.l.b16 %v85
    %v248 = vunpack.c.l.b16 %v86
    %v249 = vunpack.c.l.b16 %v87
    %v250 = vunpack.c.l.b16 %v88
    %v251 = vunpack.c.l.b16 %v89
    %v252 = vunpack.c.l.b16 %v90
    %v253 = vunpack.c.l.b16 %v91
    %v254 = vunpack.c.l.b16 %v92
    %v255 = vunpack.c.l.b16 %v93
    %v256 = vunpack.c.l.b16 %v94
    %v257 = vunpack.c.l.b16 %v95
    %v258 = vunpack.c.l.b16 %v96
    %v259 = vunpack.c.l.b16 %v97
    %v260 = vunpack.c.l.b16 %v98
    %v261 = vunpack.c.l.b16 %v99
    %v262 = vunpack.c.l.b16 %v100
    %v263 = vunpack.c.l.b16 %v101
    %v264 = vunpack.c.l.b16 %v102
    %v265 = vunpack.c.l.b16 %v103
    %v266 = vunpack.c.l.b16 %v104
    %v267 = vunpack.c.l.b16 %v105
    %v268 = vunpack.c.l.b16 %v106
    %v269 = vunpack.c.l.b16 %v107
    %v270 = vunpack.c.l.b16 %v108
    %v271 = vunpack.c.l.b16 %v109
    %v272 = vunpack.c.l.b16 %v110
    %v273 = vunpack.c.l.b16 %v111
    %v274 = vunpack.c.l.b16 %v112
    %v275 = vunpack.c.l.b16 %v113
    %v276 = vunpack.c.l.b16 %v114
    %v277 = vunpack.c.l.b16 %v115
    %v278 = vunpack.c.l.b16 %v116
    %v279 = vunpack.c.l.b16 %v117
    %v280 = vunpack.c.l.b16 %v118
    %v281 = vunpack.c.l.b16 %v119
    %v282 = vunpack.c.l.b16 %v120
    %v283 = vunpack.c.l.b16 %v121
    %v284 = vunpack.c.l.b16 %v122
    %v285 = vunpack.c.l.b16 %v123
    %v286 = vunpack.c.l.b16 %v124
    %v287 = vunpack.c.l.b16 %v125
    %v288 = vunpack.c.l.b16 %v126
    %v289 = vunpack.c.l.b16 %v127
    %v290 = vunpack.c.l.b16 %v128
    %v291 = vpack.c.b16 %v212, %v211
    %v292 = vpack.c.b16 %v214, %v213
    %v293 = vpack.c.b16 %v216, %v215
    %v294 = vpack.c.b16 %v218, %v217
    %v295 = vpack.c.b16 %v220, %v219
    %v296 = vpack.c.b16 %v222, %v221
    %v297 = vpack.c.b16 %v224, %v223
    %v298 = vpack.c.b16 %v226, %v225
    %v299 = vpack.c.b16 %v228, %v227
    %v300 = vpack.c.b16 %v230, %v229
    %v301 = vpack.c.b16 %v232, %v231
    %v302 = vpack.c.b16 %v234, %v233
    %v303 = vpack.c.b16 %v236, %v235
    %v304 = vpack.c.b16 %v238, %v237
    %v305 = vpack.c.b16 %v240, %v239
    %v306 = vpack.c.b16 %v242, %v241
    %v307 = vpack.c.b16 %v244, %v243
    %v308 = vpack.c.b16 %v246, %v245
    %v309 = vpack.c.b16 %v248, %v247
    %v310 = vpack.c.b16 %v250, %v249
    %v311 = vpack.c.b16 %v252, %v251
    %v312 = vpack.c.b16 %v254, %v253
    %v313 = vpack.c.b16 %v256, %v255
    %v314 = vpack.c.b16 %v258, %v257
    %v315 = vpack.c.b16 %v260, %v259
    %v316 = vpack.c.b16 %v262, %v261
    %v317 = vpack.c.b16 %v264, %v263
    %v318 = vpack.c.b16 %v266, %v265
    %v319 = vpack.c.b16 %v268, %v267
    %v320 = vpack.c.b16 %v270, %v269
    %v321 = vpack.c.b16 %v272, %v271
    %v322 = vpack.c.b16 %v274, %v273
    %v323 = vpack.c.b16 %v276, %v275
    %v324 = vpack.c.b16 %v278, %v277
    %v325 = vpack.c.b16 %v280, %v279
    %v326 = vpack.c.b16 %v282, %v281
    %v327 = vpack.c.b16 %v284, %v283
    %v328 = vpack.c.b16 %v286, %v285
    %v329 = vpack.c.b16 %v288, %v287
    %v330 = vpack.c.b16 %v290, %v289
    %vm331 = vcmask 64512
    %v333 = vsel %vm331, %v291, 0
    %v336 = vsel %vm331, %v292, 0
    %v339 = vsel %vm331, %v293, 0
    %v342 = vsel %vm331, %v294, 0
    %v345 = vsel %vm331, %v295, 0
    %v348 = vsel %vm331, %v296, 0
    %v351 = vsel %vm331, %v297, 0
    %v354 = vsel %vm331, %v298, 0
    %v357 = vsel %vm331, %v299, 0
    %v360 = vsel %vm331, %v300, 0
    %v363 = vsel %vm331, %v301, 0
    %v366 = vsel %vm331, %v302, 0
    %v369 = vsel %vm331, %v303, 0
    %v372 = vsel %vm331, %v304, 0
    %v375 = vsel %vm331, %v305, 0
    %v378 = vsel %vm331, %v306, 0
    %v381 = vsel %vm331, %v307, 0
    %v384 = vsel %vm331, %v308, 0
    %v387 = vsel %vm331, %v309, 0
    %v390 = vsel %vm331, %v310, 0
    %v393 = vsel %vm331, %v311, 0
    %v396 = vsel %vm331, %v312, 0
    %v399 = vsel %vm331, %v313, 0
    %v402 = vsel %vm331, %v314, 0
    %v405 = vsel %vm331, %v315, 0
    %v408 = vsel %vm331, %v316, 0
    %v411 = vsel %vm331, %v317, 0
    %v414 = vsel %vm331, %v318, 0
    %v417 = vsel %vm331, %v319, 0
    %v420 = vsel %vm331, %v320, 0
    %v423 = vsel %vm331, %v321, 0
    %v426 = vsel %vm331, %v322, 0
    %v429 = vsel %vm331, %v323, 0
    %v432 = vsel %vm331, %v324, 0
    %v435 = vsel %vm331, %v325, 0
    %v438 = vsel %vm331, %v326, 0
    %v441 = vsel %vm331, %v327, 0
    %v444 = vsel %vm331, %v328, 0
    %v447 = vsel %vm331, %v329, 0
    %v450 = vsel %vm331, %v330, 0
    %vm452 = vcmask 1043456
    %v454 = vsel %vm452, %v129, 0
    %456 = vmatprep.subr.bf16.mxu0 0
    %457 = vmatpush1.bf16.msra.mxu0 %v454
    %458 = vmatprep.subr.bf16.mxu0 0
    %459 = vmatpush1.bf16.msra.mxu0 0
    %460 = vmatprep.subr.bf16.mxu0 0
    %461 = vmatpush1.bf16.msra.mxu0 0
    %462 = vmatprep.subr.bf16.mxu0 0
    %463 = vmatpush1.bf16.msra.mxu0 0
    %464 = vmatprep.subr.bf16.mxu0 0
    %465 = vmatpush1.bf16.msra.mxu0 0
    %466 = vmatprep.subr.bf16.mxu0 0
    %467 = vmatpush1.bf16.msra.mxu0 0
    %468 = vmatprep.subr.bf16.mxu0 0
    %469 = vmatpush1.bf16.msra.mxu0 0
    %470 = vmatprep.subr.bf16.mxu0 0
    %471 = vmatpush1.bf16.msra.mxu0 0
    %472 = vmatprep.subr.bf16.mxu0 0
    %473 = vmatpush1.bf16.msra.mxu0 0
    %474 = vmatprep.subr.bf16.mxu0 0
    %475 = vmatpush1.bf16.msra.mxu0 0
    %476 = vmatprep.subr.bf16.mxu0 0
    %477 = vmatpush1.bf16.msra.mxu0 0
    %478 = vmatprep.subr.bf16.mxu0 0
    %479 = vmatpush1.bf16.msra.mxu0 0
    %480 = vmatprep.subr.bf16.mxu0 0
    %481 = vmatpush1.bf16.msra.mxu0 0
    %482 = vmatprep.subr.bf16.mxu0 0
    %483 = vmatpush1.bf16.msra.mxu0 0
    %484 = vmatprep.subr.bf16.mxu0 0
    %485 = vmatpush1.bf16.msra.mxu0 0
    %486 = vmatprep.subr.bf16.mxu0 0
    %487 = vmatpush1.bf16.msra.mxu0 0
    %488 = vmatprep.mubr.bf16.mxu0 0
    %489 = vmatmul.mubr.bf16.gmra.mrb[0].mxu0 %v333
    %v490 = vpop.f32.mrb[0].mxu0
    %v491 = vadd.f32 0.0, %v490
    %v492 = vpop.f32.mrb[0].mxu0
    %v493 = vpop.f32.mrb[0].mxu0
    %v494 = vadd.f32 0.0, %v493
    %v495 = vpop.f32.mrb[0].mxu0
    %496 = vmatprep.mubr.bf16.mxu0 0
    %497 = vmatmul.mubr.bf16.gmra.mrb[0].mxu0 %v336
    %v498 = vpop.f32.mrb[0].mxu0
    %v499 = vadd.f32 0.0, %v498
    %v500 = vpop.f32.mrb[0].mxu0
    %v501 = vpop.f32.mrb[0].mxu0
    %v502 = vadd.f32 0.0, %v501
    %v503 = vpop.f32.mrb[0].mxu0
    %504 = vmatprep.mubr.bf16.mxu0 0
    %505 = vmatmul.mubr.bf16.gmra.mrb[0].mxu0 %v339
    %v506 = vpop.f32.mrb[0].mxu0
    %v507 = vadd.f32 0.0, %v506
    %v508 = vpop.f32.mrb[0].mxu0
    %v509 = vpop.f32.mrb[0].mxu0
    %v510 = vadd.f32 0.0, %v509
    %v511 = vpop.f32.mrb[0].mxu0
    %512 = vmatprep.mubr.bf16.mxu0 0
    %513 = vmatmul.mubr.bf16.gmra.mrb[0].mxu0 %v342
    %v514 = vpop.f32.mrb[0].mxu0
    %v515 = vadd.f32 0.0, %v514
    %v516 = vpop.f32.mrb[0].mxu0
    %v517 = vpop.f32.mrb[0].mxu0
    %v518 = vadd.f32 0.0, %v517
    %v519 = vpop.f32.mrb[0].mxu0
    %520 = vmatprep.mubr.bf16.mxu0 0
    %521 = vmatmul.mubr.bf16.gmra.mrb[0].mxu0 %v345
    %v522 = vpop.f32.mrb[0].mxu0
    %v523 = vadd.f32 0.0, %v522
    %v524 = vpop.f32.mrb[0].mxu0
    %v525 = vpop.f32.mrb[0].mxu0
    %v526 = vadd.f32 0.0, %v525
    %v527 = vpop.f32.mrb[0].mxu0
    %528 = vmatprep.mubr.bf16.mxu0 0
    %529 = vmatmul.mubr.bf16.gmra.mrb[0].mxu0 %v348
    %v530 = vpop.f32.mrb[0].mxu0
    %v531 = vadd.f32 0.0, %v530
    %v532 = vpop.f32.mrb[0].mxu0
    %v533 = vpop.f32.mrb[0].mxu0
    %v534 = vadd.f32 0.0, %v533
    %v535 = vpop.f32.mrb[0].mxu0
    %536 = vmatprep.mubr.bf16.mxu0 0
    %537 = vmatmul.mubr.bf16.gmra.mrb[0].mxu0 %v351
    %v538 = vpop.f32.mrb[0].mxu0
    %v539 = vadd.f32 0.0, %v538
    %v540 = vpop.f32.mrb[0].mxu0
    %v541 = vpop.f32.mrb[0].mxu0
    %v542 = vadd.f32 0.0, %v541
    %v543 = vpop.f32.mrb[0].mxu0
    %544 = vmatprep.mubr.bf16.mxu0 0
    %545 = vmatmul.mubr.bf16.gmra.mrb[0].mxu0 %v354
    %v546 = vpop.f32.mrb[0].mxu0
    %v547 = vadd.f32 0.0, %v546
    %v548 = vpop.f32.mrb[0].mxu0
    %v549 = vpop.f32.mrb[0].mxu0
    %v550 = vadd.f32 0.0, %v549
    %v551 = vpop.f32.mrb[0].mxu0
    %552 = vmatprep.mubr.bf16.mxu0 0
    %553 = vmatmul.mubr.bf16.gmra.mrb[0].mxu0 %v357
    %v554 = vpop.f32.mrb[0].mxu0
    %v555 = vadd.f32 0.0, %v554
    %v556 = vpop.f32.mrb[0].mxu0
    %v557 = vpop.f32.mrb[0].mxu0
    %v558 = vadd.f32 0.0, %v557
    %v559 = vpop.f32.mrb[0].mxu0
    %560 = vmatprep.mubr.bf16.mxu0 0
    %561 = vmatmul.mubr.bf16.gmra.mrb[0].mxu0 %v360
    %v562 = vpop.f32.mrb[0].mxu0
    %v563 = vadd.f32 0.0, %v562
    %v564 = vpop.f32.mrb[0].mxu0
    %v565 = vpop.f32.mrb[0].mxu0
    %v566 = vadd.f32 0.0, %v565
    %v567 = vpop.f32.mrb[0].mxu0
    %568 = vmatprep.mubr.bf16.mxu0 0
    %569 = vmatmul.mubr.bf16.gmra.mrb[0].mxu0 %v363
    %v570 = vpop.f32.mrb[0].mxu0
    %v571 = vadd.f32 0.0, %v570
    %v572 = vpop.f32.mrb[0].mxu0
    %v573 = vpop.f32.mrb[0].mxu0
    %v574 = vadd.f32 0.0, %v573
    %v575 = vpop.f32.mrb[0].mxu0
    %576 = vmatprep.mubr.bf16.mxu0 0
    %577 = vmatmul.mubr.bf16.gmra.mrb[0].mxu0 %v366
    %v578 = vpop.f32.mrb[0].mxu0
    %v579 = vadd.f32 0.0, %v578
    %v580 = vpop.f32.mrb[0].mxu0
    %v581 = vpop.f32.mrb[0].mxu0
    %v582 = vadd.f32 0.0, %v581
    %v583 = vpop.f32.mrb[0].mxu0
    %584 = vmatprep.mubr.bf16.mxu0 0
    %585 = vmatmul.mubr.bf16.gmra.mrb[0].mxu0 %v369
    %v586 = vpop.f32.mrb[0].mxu0
    %v587 = vadd.f32 0.0, %v586
    %v588 = vpop.f32.mrb[0].mxu0
    %v589 = vpop.f32.mrb[0].mxu0
    %v590 = vadd.f32 0.0, %v589
    %v591 = vpop.f32.mrb[0].mxu0
    %592 = vmatprep.mubr.bf16.mxu0 0
    %593 = vmatmul.mubr.bf16.gmra.mrb[0].mxu0 %v372
    %v594 = vpop.f32.mrb[0].mxu0
    %v595 = vadd.f32 0.0, %v594
    %v596 = vpop.f32.mrb[0].mxu0
    %v597 = vpop.f32.mrb[0].mxu0
    %v598 = vadd.f32 0.0, %v597
    %v599 = vpop.f32.mrb[0].mxu0
    %600 = vmatprep.mubr.bf16.mxu0 0
    %601 = vmatmul.mubr.bf16.gmra.mrb[0].mxu0 %v375
    %v602 = vpop.f32.mrb[0].mxu0
    %v603 = vadd.f32 0.0, %v602
    %v604 = vpop.f32.mrb[0].mxu0
    %v605 = vpop.f32.mrb[0].mxu0
    %v606 = vadd.f32 0.0, %v605
    %v607 = vpop.f32.mrb[0].mxu0
    %608 = vmatprep.mubr.bf16.mxu0 0
    %609 = vmatmul.mubr.bf16.gmra.mrb[0].mxu0 %v378
    %v610 = vpop.f32.mrb[0].mxu0
    %v611 = vadd.f32 0.0, %v610
    %v612 = vpop.f32.mrb[0].mxu0
    %v613 = vpop.f32.mrb[0].mxu0
    %v614 = vadd.f32 0.0, %v613
    %v615 = vpop.f32.mrb[0].mxu0
    %616 = vmatprep.mubr.bf16.mxu0 0
    %617 = vmatmul.mubr.bf16.gmra.mrb[0].mxu0 %v381
    %v618 = vpop.f32.mrb[0].mxu0
    %v619 = vadd.f32 0.0, %v618
    %v620 = vpop.f32.mrb[0].mxu0
    %v621 = vpop.f32.mrb[0].mxu0
    %v622 = vadd.f32 0.0, %v621
    %v623 = vpop.f32.mrb[0].mxu0
    %624 = vmatprep.mubr.bf16.mxu0 0
    %625 = vmatmul.mubr.bf16.gmra.mrb[0].mxu0 %v384
    %v626 = vpop.f32.mrb[0].mxu0
    %v627 = vadd.f32 0.0, %v626
    %v628 = vpop.f32.mrb[0].mxu0
    %v629 = vpop.f32.mrb[0].mxu0
    %v630 = vadd.f32 0.0, %v629
    %v631 = vpop.f32.mrb[0].mxu0
    %632 = vmatprep.mubr.bf16.mxu0 0
    %633 = vmatmul.mubr.bf16.gmra.mrb[0].mxu0 %v387
    %v634 = vpop.f32.mrb[0].mxu0
    %v635 = vadd.f32 0.0, %v634
    %v636 = vpop.f32.mrb[0].mxu0
    %v637 = vpop.f32.mrb[0].mxu0
    %v638 = vadd.f32 0.0, %v637
    %v639 = vpop.f32.mrb[0].mxu0
    %640 = vmatprep.mubr.bf16.mxu0 0
    %641 = vmatmul.mubr.bf16.gmra.mrb[0].mxu0 %v390
    %v642 = vpop.f32.mrb[0].mxu0
    %v643 = vadd.f32 0.0, %v642
    %v644 = vpop.f32.mrb[0].mxu0
    %v645 = vpop.f32.mrb[0].mxu0
    %v646 = vadd.f32 0.0, %v645
    %v647 = vpop.f32.mrb[0].mxu0
    %648 = vmatprep.mubr.bf16.mxu0 0
    %649 = vmatmul.mubr.bf16.gmra.mrb[0].mxu0 %v393
    %v650 = vpop.f32.mrb[0].mxu0
    %v651 = vadd.f32 0.0, %v650
    %v652 = vpop.f32.mrb[0].mxu0
    %v653 = vpop.f32.mrb[0].mxu0
    %v654 = vadd.f32 0.0, %v653
    %v655 = vpop.f32.mrb[0].mxu0
    %656 = vmatprep.mubr.bf16.mxu0 0
    %657 = vmatmul.mubr.bf16.gmra.mrb[0].mxu0 %v396
    %v658 = vpop.f32.mrb[0].mxu0
    %v659 = vadd.f32 0.0, %v658
    %v660 = vpop.f32.mrb[0].mxu0
    %v661 = vpop.f32.mrb[0].mxu0
    %v662 = vadd.f32 0.0, %v661
    %v663 = vpop.f32.mrb[0].mxu0
    %664 = vmatprep.mubr.bf16.mxu0 0
    %665 = vmatmul.mubr.bf16.gmra.mrb[0].mxu0 %v399
    %v666 = vpop.f32.mrb[0].mxu0
    %v667 = vadd.f32 0.0, %v666
    %v668 = vpop.f32.mrb[0].mxu0
    %v669 = vpop.f32.mrb[0].mxu0
    %v670 = vadd.f32 0.0, %v669
    %v671 = vpop.f32.mrb[0].mxu0
    %672 = vmatprep.mubr.bf16.mxu0 0
    %673 = vmatmul.mubr.bf16.gmra.mrb[0].mxu0 %v402
    %v674 = vpop.f32.mrb[0].mxu0
    %v675 = vadd.f32 0.0, %v674
    %v676 = vpop.f32.mrb[0].mxu0
    %v677 = vpop.f32.mrb[0].mxu0
    %v678 = vadd.f32 0.0, %v677
    %v679 = vpop.f32.mrb[0].mxu0
    %680 = vmatprep.mubr.bf16.mxu0 0
    %681 = vmatmul.mubr.bf16.gmra.mrb[0].mxu0 %v405
    %v682 = vpop.f32.mrb[0].mxu0
    %v683 = vadd.f32 0.0, %v682
    %v684 = vpop.f32.mrb[0].mxu0
    %v685 = vpop.f32.mrb[0].mxu0
    %v686 = vadd.f32 0.0, %v685
    %v687 = vpop.f32.mrb[0].mxu0
    %688 = vmatprep.mubr.bf16.mxu0 0
    %689 = vmatmul.mubr.bf16.gmra.mrb[0].mxu0 %v408
    %v690 = vpop.f32.mrb[0].mxu0
    %v691 = vadd.f32 0.0, %v690
    %v692 = vpop.f32.mrb[0].mxu0
    %v693 = vpop.f32.mrb[0].mxu0
    %v694 = vadd.f32 0.0, %v693
    %v695 = vpop.f32.mrb[0].mxu0
    %696 = vmatprep.mubr.bf16.mxu0 0
    %697 = vmatmul.mubr.bf16.gmra.mrb[0].mxu0 %v411
    %v698 = vpop.f32.mrb[0].mxu0
    %v699 = vadd.f32 0.0, %v698
    %v700 = vpop.f32.mrb[0].mxu0
    %v701 = vpop.f32.mrb[0].mxu0
    %v702 = vadd.f32 0.0, %v701
    %v703 = vpop.f32.mrb[0].mxu0
    %704 = vmatprep.mubr.bf16.mxu0 0
    %705 = vmatmul.mubr.bf16.gmra.mrb[0].mxu0 %v414
    %v706 = vpop.f32.mrb[0].mxu0
    %v707 = vadd.f32 0.0, %v706
    %v708 = vpop.f32.mrb[0].mxu0
    %v709 = vpop.f32.mrb[0].mxu0
    %v710 = vadd.f32 0.0, %v709
    %v711 = vpop.f32.mrb[0].mxu0
    %712 = vmatprep.mubr.bf16.mxu0 0
    %713 = vmatmul.mubr.bf16.gmra.mrb[0].mxu0 %v417
    %v714 = vpop.f32.mrb[0].mxu0
    %v715 = vadd.f32 0.0, %v714
    %v716 = vpop.f32.mrb[0].mxu0
    %v717 = vpop.f32.mrb[0].mxu0
    %v718 = vadd.f32 0.0, %v717
    %v719 = vpop.f32.mrb[0].mxu0
    %720 = vmatprep.mubr.bf16.mxu0 0
    %721 = vmatmul.mubr.bf16.gmra.mrb[0].mxu0 %v420
    %v722 = vpop.f32.mrb[0].mxu0
    %v723 = vadd.f32 0.0, %v722
    %v724 = vpop.f32.mrb[0].mxu0
    %v725 = vpop.f32.mrb[0].mxu0
    %v726 = vadd.f32 0.0, %v725
    %v727 = vpop.f32.mrb[0].mxu0
    %728 = vmatprep.mubr.bf16.mxu0 0
    %729 = vmatmul.mubr.bf16.gmra.mrb[0].mxu0 %v423
    %v730 = vpop.f32.mrb[0].mxu0
    %v731 = vadd.f32 0.0, %v730
    %v732 = vpop.f32.mrb[0].mxu0
    %v733 = vpop.f32.mrb[0].mxu0
    %v734 = vadd.f32 0.0, %v733
    %v735 = vpop.f32.mrb[0].mxu0
    %736 = vmatprep.mubr.bf16.mxu0 0
    %737 = vmatmul.mubr.bf16.gmra.mrb[0].mxu0 %v426
    %v738 = vpop.f32.mrb[0].mxu0
    %v739 = vadd.f32 0.0, %v738
    %v740 = vpop.f32.mrb[0].mxu0
    %v741 = vpop.f32.mrb[0].mxu0
    %v742 = vadd.f32 0.0, %v741
    %v743 = vpop.f32.mrb[0].mxu0
    %744 = vmatprep.mubr.bf16.mxu0 0
    %745 = vmatmul.mubr.bf16.gmra.mrb[0].mxu0 %v429
    %v746 = vpop.f32.mrb[0].mxu0
    %v747 = vadd.f32 0.0, %v746
    %v748 = vpop.f32.mrb[0].mxu0
    %v749 = vpop.f32.mrb[0].mxu0
    %v750 = vadd.f32 0.0, %v749
    %v751 = vpop.f32.mrb[0].mxu0
    %752 = vmatprep.mubr.bf16.mxu0 0
    %753 = vmatmul.mubr.bf16.gmra.mrb[0].mxu0 %v432
    %v754 = vpop.f32.mrb[0].mxu0
    %v755 = vadd.f32 0.0, %v754
    %v756 = vpop.f32.mrb[0].mxu0
    %v757 = vpop.f32.mrb[0].mxu0
    %v758 = vadd.f32 0.0, %v757
    %v759 = vpop.f32.mrb[0].mxu0
    %760 = vmatprep.mubr.bf16.mxu0 0
    %761 = vmatmul.mubr.bf16.gmra.mrb[0].mxu0 %v435
    %v762 = vpop.f32.mrb[0].mxu0
    %v763 = vadd.f32 0.0, %v762
    %v764 = vpop.f32.mrb[0].mxu0
    %v765 = vpop.f32.mrb[0].mxu0
    %v766 = vadd.f32 0.0, %v765
    %v767 = vpop.f32.mrb[0].mxu0
    %768 = vmatprep.mubr.bf16.mxu0 0
    %769 = vmatmul.mubr.bf16.gmra.mrb[0].mxu0 %v438
    %v770 = vpop.f32.mrb[0].mxu0
    %v771 = vadd.f32 0.0, %v770
    %v772 = vpop.f32.mrb[0].mxu0
    %v773 = vpop.f32.mrb[0].mxu0
    %v774 = vadd.f32 0.0, %v773
    %v775 = vpop.f32.mrb[0].mxu0
    %776 = vmatprep.mubr.bf16.mxu0 0
    %777 = vmatmul.mubr.bf16.gmra.mrb[0].mxu0 %v441
    %v778 = vpop.f32.mrb[0].mxu0
    %v779 = vadd.f32 0.0, %v778
    %v780 = vpop.f32.mrb[0].mxu0
    %v781 = vpop.f32.mrb[0].mxu0
    %v782 = vadd.f32 0.0, %v781
    %v783 = vpop.f32.mrb[0].mxu0
    %784 = vmatprep.mubr.bf16.mxu0 0
    %785 = vmatmul.mubr.bf16.gmra.mrb[0].mxu0 %v444
    %v786 = vpop.f32.mrb[0].mxu0
    %v787 = vadd.f32 0.0, %v786
    %v788 = vpop.f32.mrb[0].mxu0
    %v789 = vpop.f32.mrb[0].mxu0
    %v790 = vadd.f32 0.0, %v789
    %v791 = vpop.f32.mrb[0].mxu0
    %792 = vmatprep.mubr.bf16.mxu0 0
    %793 = vmatmul.mubr.bf16.gmra.mrb[0].mxu0 %v447
    %v794 = vpop.f32.mrb[0].mxu0
    %v795 = vadd.f32 0.0, %v794
    %v796 = vpop.f32.mrb[0].mxu0
    %v797 = vpop.f32.mrb[0].mxu0
    %v798 = vadd.f32 0.0, %v797
    %v799 = vpop.f32.mrb[0].mxu0
    %800 = vmatprep.mubr.bf16.mxu0 0
    %801 = vmatmul.mubr.bf16.gmra.mrb[0].mxu0 %v450
    %v802 = vpop.f32.mrb[0].mxu0
    %v803 = vadd.f32 0.0, %v802
    %v804 = vpop.f32.mrb[0].mxu0
    %v805 = vpop.f32.mrb[0].mxu0
    %v806 = vadd.f32 0.0, %v805
    %v807 = vpop.f32.mrb[0].mxu0
    %808 = vdwg.mxu0
    %v809 = vpack.c.bf16 %v494, %v491
    %v810 = vpack.c.bf16 %v502, %v499
    %v811 = vpack.c.bf16 %v510, %v507
    %v812 = vpack.c.bf16 %v518, %v515
    %v813 = vpack.c.bf16 %v526, %v523
    %v814 = vpack.c.bf16 %v534, %v531
    %v815 = vpack.c.bf16 %v542, %v539
    %v816 = vpack.c.bf16 %v550, %v547
    %v817 = vpack.c.bf16 %v558, %v555
    %v818 = vpack.c.bf16 %v566, %v563
    %v819 = vpack.c.bf16 %v574, %v571
    %v820 = vpack.c.bf16 %v582, %v579
    %v821 = vpack.c.bf16 %v590, %v587
    %v822 = vpack.c.bf16 %v598, %v595
    %v823 = vpack.c.bf16 %v606, %v603
    %v824 = vpack.c.bf16 %v614, %v611
    %v825 = vpack.c.bf16 %v622, %v619
    %v826 = vpack.c.bf16 %v630, %v627
    %v827 = vpack.c.bf16 %v638, %v635
    %v828 = vpack.c.bf16 %v646, %v643
    %v829 = vpack.c.bf16 %v654, %v651
    %v830 = vpack.c.bf16 %v662, %v659
    %v831 = vpack.c.bf16 %v670, %v667
    %v832 = vpack.c.bf16 %v678, %v675
    %v833 = vpack.c.bf16 %v686, %v683
    %v834 = vpack.c.bf16 %v694, %v691
    %v835 = vpack.c.bf16 %v702, %v699
    %v836 = vpack.c.bf16 %v710, %v707
    %v837 = vpack.c.bf16 %v718, %v715
    %v838 = vpack.c.bf16 %v726, %v723
    %v839 = vpack.c.bf16 %v734, %v731
    %v840 = vpack.c.bf16 %v742, %v739
    %v841 = vpack.c.bf16 %v750, %v747
    %v842 = vpack.c.bf16 %v758, %v755
    %v843 = vpack.c.bf16 %v766, %v763
    %v844 = vpack.c.bf16 %v774, %v771
    %v845 = vpack.c.bf16 %v782, %v779
    %v846 = vpack.c.bf16 %v790, %v787
    %v847 = vpack.c.bf16 %v798, %v795
    %v848 = vpack.c.bf16 %v806, %v803
    %v849 = vld [vmem:[%s0] sm:$0xff]
    %v850 = vld [vmem:[%s0 + $0x8] sm:$0xff]
    %v851 = vld [vmem:[%s0 + $0x10] sm:$0xf]
    %v852 = vld [vmem:[%s0 + $0x14] sm:$0xff]
    %v853 = vld [vmem:[%s0 + $0x1c] sm:$0xff]
    %v854 = vld [vmem:[%s0 + $0x24] sm:$0xf]
    %v855 = vld [vmem:[%s0 + $0x28] sm:$0xff]
    %v856 = vld [vmem:[%s0 + $0x30] sm:$0xff]
    %v857 = vld [vmem:[%s0 + $0x38] sm:$0xf]
    %v858 = vld [vmem:[%s0 + $0x3c] sm:$0xff]
    %v859 = vld [vmem:[%s0 + $0x44] sm:$0xff]
    %v860 = vld [vmem:[%s0 + $0x4c] sm:$0xf]
    %v861 = vld [vmem:[%s0 + $0x50] sm:$0xff]
    %v862 = vld [vmem:[%s0 + $0x58] sm:$0xff]
    %v863 = vld [vmem:[%s0 + $0x60] sm:$0xf]
    %v864 = vld [vmem:[%s0 + $0x64] sm:$0xff]
    %v865 = vld [vmem:[%s0 + $0x6c] sm:$0xff]
    %v866 = vld [vmem:[%s0 + $0x74] sm:$0xf]
    %v867 = vld [vmem:[%s0 + $0x78] sm:$0xff]
    %v868 = vld [vmem:[%s0 + $0x80] sm:$0xff]
    %v869 = vld [vmem:[%s0 + $0x88] sm:$0xf]
    %v870 = vld [vmem:[%s0 + $0x8c] sm:$0xff]
    %v871 = vld [vmem:[%s0 + $0x94] sm:$0xff]
    %v872 = vld [vmem:[%s0 + $0x9c] sm:$0xf]
    %v873 = vld [vmem:[%s0 + $0xa0] sm:$0xff]
    %v874 = vld [vmem:[%s0 + $0xa8] sm:$0xff]
    %v875 = vld [vmem:[%s0 + $0xb0] sm:$0xf]
    %v876 = vld [vmem:[%s0 + $0xb4] sm:$0xff]
    %v877 = vld [vmem:[%s0 + $0xbc] sm:$0xff]
    %v878 = vld [vmem:[%s0 + $0xc4] sm:$0xf]
    %v879 = vld [vmem:[%s0 + $0xc8] sm:$0xff]
    %v880 = vld [vmem:[%s0 + $0xd0] sm:$0xff]
    %v881 = vld [vmem:[%s0 + $0xd8] sm:$0xf]
    %v882 = vld [vmem:[%s0 + $0xdc] sm:$0xff]
    %v883 = vld [vmem:[%s0 + $0xe4] sm:$0xff]
    %v884 = vld [vmem:[%s0 + $0xec] sm:$0xf]
    %v885 = vld [vmem:[%s0 + $0xf0] sm:$0xff]
    %v886 = vld [vmem:[%s0 + $0xf8] sm:$0xff]
    %v887 = vld [vmem:[%s0 + $0x100] sm:$0xf]
    %v888 = vld [vmem:[%s0 + $0x104] sm:$0xff]
    %v889 = vld [vmem:[%s0 + $0x10c] sm:$0xff]
    %v890 = vld [vmem:[%s0 + $0x114] sm:$0xf]
    %v891 = vld [vmem:[%s0 + $0x118] sm:$0xff]
    %v892 = vld [vmem:[%s0 + $0x120] sm:$0xff]
    %v893 = vld [vmem:[%s0 + $0x128] sm:$0xf]
    %v894 = vld [vmem:[%s0 + $0x12c] sm:$0xff]
    %v895 = vld [vmem:[%s0 + $0x134] sm:$0xff]
    %v896 = vld [vmem:[%s0 + $0x13c] sm:$0xf]
    %v897 = vld [vmem:[%s0 + $0x140] sm:$0xff]
    %v898 = vld [vmem:[%s0 + $0x148] sm:$0xff]
    %v899 = vld [vmem:[%s0 + $0x150] sm:$0xf]
    %v900 = vld [vmem:[%s0 + $0x154] sm:$0xff]
    %v901 = vld [vmem:[%s0 + $0x15c] sm:$0xff]
    %v902 = vld [vmem:[%s0 + $0x164] sm:$0xf]
    %v903 = vld [vmem:[%s0 + $0x168] sm:$0xff]
    %v904 = vld [vmem:[%s0 + $0x170] sm:$0xff]
    %v905 = vld [vmem:[%s0 + $0x178] sm:$0xf]
    %v906 = vld [vmem:[%s0 + $0x17c] sm:$0xff]
    %v907 = vld [vmem:[%s0 + $0x184] sm:$0xff]
    %v908 = vld [vmem:[%s0 + $0x18c] sm:$0xf]
    %v909 = vld [vmem:[%s0 + $0x190] sm:$0xff]
    %v910 = vld [vmem:[%s0 + $0x198] sm:$0xff]
    %v911 = vld [vmem:[%s0 + $0x1a0] sm:$0xf]
    %v912 = vld [vmem:[%s0 + $0x1a4] sm:$0xff]
    %v913 = vld [vmem:[%s0 + $0x1ac] sm:$0xff]
    %v914 = vld [vmem:[%s0 + $0x1b4] sm:$0xf]
    %v915 = vld [vmem:[%s0 + $0x1b8] sm:$0xff]
    %v916 = vld [vmem:[%s0 + $0x1c0] sm:$0xff]
    %v917 = vld [vmem:[%s0 + $0x1c8] sm:$0xf]
    %v918 = vld [vmem:[%s0 + $0x1cc] sm:$0xff]
    %v919 = vld [vmem:[%s0 + $0x1d4] sm:$0xff]
    %v920 = vld [vmem:[%s0 + $0x1dc] sm:$0xf]
    %v921 = vld [vmem:[%s0 + $0x1e0] sm:$0xff]
    %v922 = vld [vmem:[%s0 + $0x1e8] sm:$0xff]
    %v923 = vld [vmem:[%s0 + $0x1f0] sm:$0xf]
    %v924 = vld [vmem:[%s0 + $0x1f4] sm:$0xff]
    %v925 = vld [vmem:[%s0 + $0x1fc] sm:$0xff]
    %v926 = vld [vmem:[%s0 + $0x204] sm:$0xf]
    %v927 = vld [vmem:[%s0 + $0x208] sm:$0xff]
    %v928 = vld [vmem:[%s0 + $0x210] sm:$0xff]
    %v929 = vld [vmem:[%s0 + $0x218] sm:$0xf]
    %v930 = vld [vmem:[%s0 + $0x21c] sm:$0xff]
    %v931 = vld [vmem:[%s0 + $0x224] sm:$0xff]
    %v932 = vld [vmem:[%s0 + $0x22c] sm:$0xf]
    %v933 = vld [vmem:[%s0 + $0x230] sm:$0xff]
    %v934 = vld [vmem:[%s0 + $0x238] sm:$0xff]
    %v935 = vld [vmem:[%s0 + $0x240] sm:$0xf]
    %v936 = vld [vmem:[%s0 + $0x244] sm:$0xff]
    %v937 = vld [vmem:[%s0 + $0x24c] sm:$0xff]
    %v938 = vld [vmem:[%s0 + $0x254] sm:$0xf]
    %v939 = vld [vmem:[%s0 + $0x258] sm:$0xff]
    %v940 = vld [vmem:[%s0 + $0x260] sm:$0xff]
    %v941 = vld [vmem:[%s0 + $0x268] sm:$0xf]
    %v942 = vld [vmem:[%s0 + $0x26c] sm:$0xff]
    %v943 = vld [vmem:[%s0 + $0x274] sm:$0xff]
    %v944 = vld [vmem:[%s0 + $0x27c] sm:$0xf]
    %v945 = vld [vmem:[%s0 + $0x280] sm:$0xff]
    %v946 = vld [vmem:[%s0 + $0x288] sm:$0xff]
    %v947 = vld [vmem:[%s0 + $0x290] sm:$0xf]
    %v948 = vld [vmem:[%s0 + $0x294] sm:$0xff]
    %v949 = vld [vmem:[%s0 + $0x29c] sm:$0xff]
    %v950 = vld [vmem:[%s0 + $0x2a4] sm:$0xf]
    %v951 = vld [vmem:[%s0 + $0x2a8] sm:$0xff]
    %v952 = vld [vmem:[%s0 + $0x2b0] sm:$0xff]
    %v953 = vld [vmem:[%s0 + $0x2b8] sm:$0xf]
    %v954 = vld [vmem:[%s0 + $0x2bc] sm:$0xff]
    %v955 = vld [vmem:[%s0 + $0x2c4] sm:$0xff]
    %v956 = vld [vmem:[%s0 + $0x2cc] sm:$0xf]
    %v957 = vld [vmem:[%s0 + $0x2d0] sm:$0xff]
    %v958 = vld [vmem:[%s0 + $0x2d8] sm:$0xff]
    %v959 = vld [vmem:[%s0 + $0x2e0] sm:$0xf]
    %v960 = vld [vmem:[%s0 + $0x2e4] sm:$0xff]
    %v961 = vld [vmem:[%s0 + $0x2ec] sm:$0xff]
    %v962 = vld [vmem:[%s0 + $0x2f4] sm:$0xf]
    %v963 = vld [vmem:[%s0 + $0x2f8] sm:$0xff]
    %v964 = vld [vmem:[%s0 + $0x300] sm:$0xff]
    %v965 = vld [vmem:[%s0 + $0x308] sm:$0xf]
    %v966 = vld [vmem:[%s0 + $0x30c] sm:$0xff]
    %v967 = vld [vmem:[%s0 + $0x314] sm:$0xff]
    %v968 = vld [vmem:[%s0 + $0x31c] sm:$0xf]
    %v969 = vld [vmem:[%s0 + $0x320] sm:$0xff]
    %v970 = vld [vmem:[%s0 + $0x328] sm:$0xff]
    %v971 = vld [vmem:[%s0 + $0x330] sm:$0xf]
    %v972 = vld [vmem:[%s0 + $0x334] sm:$0xff]
    %v973 = vld [vmem:[%s0 + $0x33c] sm:$0xff]
    %v974 = vld [vmem:[%s0 + $0x344] sm:$0xf]
    %v975 = vld [vmem:[%s0 + $0x348] sm:$0xff]
    %v976 = vld [vmem:[%s0 + $0x350] sm:$0xff]
    %v977 = vld [vmem:[%s0 + $0x358] sm:$0xf]
    %v978 = vld [vmem:[%s0 + $0x35c] sm:$0xff]
    %v979 = vld [vmem:[%s0 + $0x364] sm:$0xff]
    %v980 = vld [vmem:[%s0 + $0x36c] sm:$0xf]
    %v981 = vld [vmem:[%s0 + $0x370] sm:$0xff]
    %v982 = vld [vmem:[%s0 + $0x378] sm:$0xff]
    %v983 = vld [vmem:[%s0 + $0x380] sm:$0xf]
    %v984 = vld [vmem:[%s0 + $0x384] sm:$0xff]
    %v985 = vld [vmem:[%s0 + $0x38c] sm:$0xff]
    %v986 = vld [vmem:[%s0 + $0x394] sm:$0xf]
    %v987 = vld [vmem:[%s0 + $0x398] sm:$0xff]
    %v988 = vld [vmem:[%s0 + $0x3a0] sm:$0xff]
    %v989 = vld [vmem:[%s0 + $0x3a8] sm:$0xf]
    %v990 = vld [vmem:[%s0 + $0x3ac] sm:$0xff]
    %v991 = vld [vmem:[%s0 + $0x3b4] sm:$0xff]
    %v992 = vld [vmem:[%s0 + $0x3bc] sm:$0xf]
    %v993 = vld [vmem:[%s0 + $0x3c0] sm:$0xff]
    %v994 = vld [vmem:[%s0 + $0x3c8] sm:$0xff]
    %v995 = vld [vmem:[%s0 + $0x3d0] sm:$0xf]
    %v996 = vld [vmem:[%s0 + $0x3d4] sm:$0xff]
    %v997 = vld [vmem:[%s0 + $0x3dc] sm:$0xff]
    %v998 = vld [vmem:[%s0 + $0x3e4] sm:$0xf]
    %v999 = vld [vmem:[%s0 + $0x3e8] sm:$0xff]
    %v1000 = vld [vmem:[%s0 + $0x3f0] sm:$0xff]
    %v1001 = vld [vmem:[%s0 + $0x3f8] sm:$0xf]
    %v1002 = vld [vmem:[%s0 + $0x3fc] sm:$0xff]
    %v1003 = vld [vmem:[%s0 + $0x404] sm:$0xff]
    %v1004 = vld [vmem:[%s0 + $0x40c] sm:$0xf]
    %v1005 = vld [vmem:[%s0 + $0x410] sm:$0xff]
    %v1006 = vld [vmem:[%s0 + $0x418] sm:$0xff]
    %v1007 = vld [vmem:[%s0 + $0x420] sm:$0xf]
    %v1008 = vld [vmem:[%s0 + $0x424] sm:$0xff]
    %v1009 = vld [vmem:[%s0 + $0x42c] sm:$0xff]
    %v1010 = vld [vmem:[%s0 + $0x434] sm:$0xf]
    %v1011 = vld [vmem:[%s0 + $0x438] sm:$0xff]
    %v1012 = vld [vmem:[%s0 + $0x440] sm:$0xff]
    %v1013 = vld [vmem:[%s0 + $0x448] sm:$0xf]
    %v1014 = vld [vmem:[%s0 + $0x44c] sm:$0xff]
    %v1015 = vld [vmem:[%s0 + $0x454] sm:$0xff]
    %v1016 = vld [vmem:[%s0 + $0x45c] sm:$0xf]
    %v1017 = vld [vmem:[%s0 + $0x460] sm:$0xff]
    %v1018 = vld [vmem:[%s0 + $0x468] sm:$0xff]
    %v1019 = vld [vmem:[%s0 + $0x470] sm:$0xf]
    %v1020 = vld [vmem:[%s0 + $0x474] sm:$0xff]
    %v1021 = vld [vmem:[%s0 + $0x47c] sm:$0xff]
    %v1022 = vld [vmem:[%s0 + $0x484] sm:$0xf]
    %v1023 = vld [vmem:[%s0 + $0x488] sm:$0xff]
    %v1024 = vld [vmem:[%s0 + $0x490] sm:$0xff]
    %v1025 = vld [vmem:[%s0 + $0x498] sm:$0xf]
    %v1026 = vld [vmem:[%s0 + $0x49c] sm:$0xff]
    %v1027 = vld [vmem:[%s0 + $0x4a4] sm:$0xff]
    %v1028 = vld [vmem:[%s0 + $0x4ac] sm:$0xf]
    %v1029 = vld [vmem:[%s0 + $0x4b0] sm:$0xff]
    %v1030 = vld [vmem:[%s0 + $0x4b8] sm:$0xff]
    %v1031 = vld [vmem:[%s0 + $0x4c0] sm:$0xf]
    %v1032 = vld [vmem:[%s0 + $0x4c4] sm:$0xff]
    %v1033 = vld [vmem:[%s0 + $0x4cc] sm:$0xff]
    %v1034 = vld [vmem:[%s0 + $0x4d4] sm:$0xf]
    %v1035 = vld [vmem:[%s0 + $0x4d8] sm:$0xff]
    %v1036 = vld [vmem:[%s0 + $0x4e0] sm:$0xff]
    %v1037 = vld [vmem:[%s0 + $0x4e8] sm:$0xf]
    %v1038 = vld [vmem:[%s0 + $0x4ec] sm:$0xff]
    %v1039 = vld [vmem:[%s0 + $0x4f4] sm:$0xff]
    %v1040 = vld [vmem:[%s0 + $0x4fc] sm:$0xf]
    %v1041 = vld [vmem:[%s0 + $0x500] sm:$0xff]
    %v1042 = vld [vmem:[%s0 + $0x508] sm:$0xff]
    %v1043 = vld [vmem:[%s0 + $0x510] sm:$0xf]
    %v1044 = vld [vmem:[%s0 + $0x514] sm:$0xff]
    %v1045 = vld [vmem:[%s0 + $0x51c] sm:$0xff]
    %v1046 = vld [vmem:[%s0 + $0x524] sm:$0xf]
    %v1047 = vld [vmem:[%s0 + $0x528] sm:$0xff]
    %v1048 = vld [vmem:[%s0 + $0x530] sm:$0xff]
    %v1049 = vld [vmem:[%s0 + $0x538] sm:$0xf]
    %v1050 = vld [vmem:[%s0 + $0x53c] sm:$0xff]
    %v1051 = vld [vmem:[%s0 + $0x544] sm:$0xff]
    %v1052 = vld [vmem:[%s0 + $0x54c] sm:$0xf]
    %v1053 = vld [vmem:[%s0 + $0x550] sm:$0xff]
    %v1054 = vld [vmem:[%s0 + $0x558] sm:$0xff]
    %v1055 = vld [vmem:[%s0 + $0x560] sm:$0xf]
    %v1056 = vld [vmem:[%s0 + $0x564] sm:$0xff]
    %v1057 = vld [vmem:[%s0 + $0x56c] sm:$0xff]
    %v1058 = vld [vmem:[%s0 + $0x574] sm:$0xf]
    %v1059 = vld [vmem:[%s0 + $0x578] sm:$0xff]
    %v1060 = vld [vmem:[%s0 + $0x580] sm:$0xff]
    %v1061 = vld [vmem:[%s0 + $0x588] sm:$0xf]
    %v1062 = vld [vmem:[%s0 + $0x58c] sm:$0xff]
    %v1063 = vld [vmem:[%s0 + $0x594] sm:$0xff]
    %v1064 = vld [vmem:[%s0 + $0x59c] sm:$0xf]
    %v1065 = vld [vmem:[%s0 + $0x5a0] sm:$0xff]
    %v1066 = vld [vmem:[%s0 + $0x5a8] sm:$0xff]
    %v1067 = vld [vmem:[%s0 + $0x5b0] sm:$0xf]
    %v1068 = vld [vmem:[%s0 + $0x5b4] sm:$0xff]
    %v1069 = vld [vmem:[%s0 + $0x5bc] sm:$0xff]
    %v1070 = vld [vmem:[%s0 + $0x5c4] sm:$0xf]
    %v1071 = vld [vmem:[%s0 + $0x5c8] sm:$0xff]
    %v1072 = vld [vmem:[%s0 + $0x5d0] sm:$0xff]
    %v1073 = vld [vmem:[%s0 + $0x5d8] sm:$0xf]
    %v1074 = vld [vmem:[%s0 + $0x5dc] sm:$0xff]
    %v1075 = vld [vmem:[%s0 + $0x5e4] sm:$0xff]
    %v1076 = vld [vmem:[%s0 + $0x5ec] sm:$0xf]
    %v1077 = vld [vmem:[%s0 + $0x5f0] sm:$0xff]
    %v1078 = vld [vmem:[%s0 + $0x5f8] sm:$0xff]
    %v1079 = vld [vmem:[%s0 + $0x600] sm:$0xf]
    %v1080 = vld [vmem:[%s0 + $0x604] sm:$0xff]
    %v1081 = vld [vmem:[%s0 + $0x60c] sm:$0xff]
    %v1082 = vld [vmem:[%s0 + $0x614] sm:$0xf]
    %v1083 = vld [vmem:[%s0 + $0x618] sm:$0xff]
    %v1084 = vld [vmem:[%s0 + $0x620] sm:$0xff]
    %v1085 = vld [vmem:[%s0 + $0x628] sm:$0xf]
    %v1086 = vld [vmem:[%s0 + $0x62c] sm:$0xff]
    %v1087 = vld [vmem:[%s0 + $0x634] sm:$0xff]
    %v1088 = vld [vmem:[%s0 + $0x63c] sm:$0xf]
    %v1090 = vlaneseq
    %v1091 = vshrl.u32 %v1090, 7
    %v1092 = vsub.s32 0, %v1091
    %v1093 = vrot.slane %v130, %v1092
    %v1335 = vunpack.c.l.b16 %v849
    %v1336 = vunpack.c.h.b16 %v849
    %v1337 = vunpack.c.l.b16 %v850
    %v1338 = vunpack.c.h.b16 %v850
    %v1339 = vunpack.c.l.b16 %v851
    %v1340 = vunpack.c.l.b16 %v852
    %v1341 = vunpack.c.h.b16 %v852
    %v1342 = vunpack.c.l.b16 %v853
    %v1343 = vunpack.c.h.b16 %v853
    %v1344 = vunpack.c.l.b16 %v854
    %v1345 = vunpack.c.l.b16 %v855
    %v1346 = vunpack.c.h.b16 %v855
    %v1347 = vunpack.c.l.b16 %v856
    %v1348 = vunpack.c.h.b16 %v856
    %v1349 = vunpack.c.l.b16 %v857
    %v1350 = vunpack.c.l.b16 %v858
    %v1351 = vunpack.c.h.b16 %v858
    %v1352 = vunpack.c.l.b16 %v859
    %v1353 = vunpack.c.h.b16 %v859
    %v1354 = vunpack.c.l.b16 %v860
    %v1355 = vunpack.c.l.b16 %v861
    %v1356 = vunpack.c.h.b16 %v861
    %v1357 = vunpack.c.l.b16 %v862
    %v1358 = vunpack.c.h.b16 %v862
    %v1359 = vunpack.c.l.b16 %v863
    %v1360 = vunpack.c.l.b16 %v864
    %v1361 = vunpack.c.h.b16 %v864
    %v1362 = vunpack.c.l.b16 %v865
    %v1363 = vunpack.c.h.b16 %v865
    %v1364 = vunpack.c.l.b16 %v866
    %v1365 = vunpack.c.l.b16 %v867
    %v1366 = vunpack.c.h.b16 %v867
    %v1367 = vunpack.c.l.b16 %v868
    %v1368 = vunpack.c.h.b16 %v868
    %v1369 = vunpack.c.l.b16 %v869
    %v1370 = vunpack.c.l.b16 %v870
    %v1371 = vunpack.c.h.b16 %v870
    %v1372 = vunpack.c.l.b16 %v871
    %v1373 = vunpack.c.h.b16 %v871
    %v1374 = vunpack.c.l.b16 %v872
    %v1375 = vunpack.c.l.b16 %v873
    %v1376 = vunpack.c.h.b16 %v873
    %v1377 = vunpack.c.l.b16 %v874
    %v1378 = vunpack.c.h.b16 %v874
    %v1379 = vunpack.c.l.b16 %v875
    %v1380 = vunpack.c.l.b16 %v876
    %v1381 = vunpack.c.h.b16 %v876
    %v1382 = vunpack.c.l.b16 %v877
    %v1383 = vunpack.c.h.b16 %v877
    %v1384 = vunpack.c.l.b16 %v878
    %v1385 = vunpack.c.l.b16 %v879
    %v1386 = vunpack.c.h.b16 %v879
    %v1387 = vunpack.c.l.b16 %v880
    %v1388 = vunpack.c.h.b16 %v880
    %v1389 = vunpack.c.l.b16 %v881
    %v1390 = vunpack.c.l.b16 %v882
    %v1391 = vunpack.c.h.b16 %v882
    %v1392 = vunpack.c.l.b16 %v883
    %v1393 = vunpack.c.h.b16 %v883
    %v1394 = vunpack.c.l.b16 %v884
    %v1395 = vunpack.c.l.b16 %v885
    %v1396 = vunpack.c.h.b16 %v885
    %v1397 = vunpack.c.l.b16 %v886
    %v1398 = vunpack.c.h.b16 %v886
    %v1399 = vunpack.c.l.b16 %v887
    %v1400 = vunpack.c.l.b16 %v888
    %v1401 = vunpack.c.h.b16 %v888
    %v1402 = vunpack.c.l.b16 %v889
    %v1403 = vunpack.c.h.b16 %v889
    %v1404 = vunpack.c.l.b16 %v890
    %v1405 = vunpack.c.l.b16 %v891
    %v1406 = vunpack.c.h.b16 %v891
    %v1407 = vunpack.c.l.b16 %v892
    %v1408 = vunpack.c.h.b16 %v892
    %v1409 = vunpack.c.l.b16 %v893
    %v1410 = vunpack.c.l.b16 %v894
    %v1411 = vunpack.c.h.b16 %v894
    %v1412 = vunpack.c.l.b16 %v895
    %v1413 = vunpack.c.h.b16 %v895
    %v1414 = vunpack.c.l.b16 %v896
    %v1415 = vunpack.c.l.b16 %v897
    %v1416 = vunpack.c.h.b16 %v897
    %v1417 = vunpack.c.l.b16 %v898
    %v1418 = vunpack.c.h.b16 %v898
    %v1419 = vunpack.c.l.b16 %v899
    %v1420 = vunpack.c.l.b16 %v900
    %v1421 = vunpack.c.h.b16 %v900
    %v1422 = vunpack.c.l.b16 %v901
    %v1423 = vunpack.c.h.b16 %v901
    %v1424 = vunpack.c.l.b16 %v902
    %v1425 = vunpack.c.l.b16 %v903
    %v1426 = vunpack.c.h.b16 %v903
    %v1427 = vunpack.c.l.b16 %v904
    %v1428 = vunpack.c.h.b16 %v904
    %v1429 = vunpack.c.l.b16 %v905
    %v1430 = vunpack.c.l.b16 %v906
    %v1431 = vunpack.c.h.b16 %v906
    %v1432 = vunpack.c.l.b16 %v907
    %v1433 = vunpack.c.h.b16 %v907
    %v1434 = vunpack.c.l.b16 %v908
    %v1435 = vunpack.c.l.b16 %v909
    %v1436 = vunpack.c.h.b16 %v909
    %v1437 = vunpack.c.l.b16 %v910
    %v1438 = vunpack.c.h.b16 %v910
    %v1439 = vunpack.c.l.b16 %v911
    %v1440 = vunpack.c.l.b16 %v912
    %v1441 = vunpack.c.h.b16 %v912
    %v1442 = vunpack.c.l.b16 %v913
    %v1443 = vunpack.c.h.b16 %v913
    %v1444 = vunpack.c.l.b16 %v914
    %v1445 = vunpack.c.l.b16 %v915
    %v1446 = vunpack.c.h.b16 %v915
    %v1447 = vunpack.c.l.b16 %v916
    %v1448 = vunpack.c.h.b16 %v916
    %v1449 = vunpack.c.l.b16 %v917
    %v1450 = vunpack.c.l.b16 %v918
    %v1451 = vunpack.c.h.b16 %v918
    %v1452 = vunpack.c.l.b16 %v919
    %v1453 = vunpack.c.h.b16 %v919
    %v1454 = vunpack.c.l.b16 %v920
    %v1455 = vunpack.c.l.b16 %v921
    %v1456 = vunpack.c.h.b16 %v921
    %v1457 = vunpack.c.l.b16 %v922
    %v1458 = vunpack.c.h.b16 %v922
    %v1459 = vunpack.c.l.b16 %v923
    %v1460 = vunpack.c.l.b16 %v924
    %v1461 = vunpack.c.h.b16 %v924
    %v1462 = vunpack.c.l.b16 %v925
    %v1463 = vunpack.c.h.b16 %v925
    %v1464 = vunpack.c.l.b16 %v926
    %v1465 = vunpack.c.l.b16 %v927
    %v1466 = vunpack.c.h.b16 %v927
    %v1467 = vunpack.c.l.b16 %v928
    %v1468 = vunpack.c.h.b16 %v928
    %v1469 = vunpack.c.l.b16 %v929
    %v1470 = vunpack.c.l.b16 %v930
    %v1471 = vunpack.c.h.b16 %v930
    %v1472 = vunpack.c.l.b16 %v931
    %v1473 = vunpack.c.h.b16 %v931
    %v1474 = vunpack.c.l.b16 %v932
    %v1475 = vunpack.c.l.b16 %v933
    %v1476 = vunpack.c.h.b16 %v933
    %v1477 = vunpack.c.l.b16 %v934
    %v1478 = vunpack.c.h.b16 %v934
    %v1479 = vunpack.c.l.b16 %v935
    %v1480 = vunpack.c.l.b16 %v936
    %v1481 = vunpack.c.h.b16 %v936
    %v1482 = vunpack.c.l.b16 %v937
    %v1483 = vunpack.c.h.b16 %v937
    %v1484 = vunpack.c.l.b16 %v938
    %v1485 = vunpack.c.l.b16 %v939
    %v1486 = vunpack.c.h.b16 %v939
    %v1487 = vunpack.c.l.b16 %v940
    %v1488 = vunpack.c.h.b16 %v940
    %v1489 = vunpack.c.l.b16 %v941
    %v1490 = vunpack.c.l.b16 %v942
    %v1491 = vunpack.c.h.b16 %v942
    %v1492 = vunpack.c.l.b16 %v943
    %v1493 = vunpack.c.h.b16 %v943
    %v1494 = vunpack.c.l.b16 %v944
    %v1495 = vunpack.c.l.b16 %v945
    %v1496 = vunpack.c.h.b16 %v945
    %v1497 = vunpack.c.l.b16 %v946
    %v1498 = vunpack.c.h.b16 %v946
    %v1499 = vunpack.c.l.b16 %v947
    %v1500 = vunpack.c.l.b16 %v948
    %v1501 = vunpack.c.h.b16 %v948
    %v1502 = vunpack.c.l.b16 %v949
    %v1503 = vunpack.c.h.b16 %v949
    %v1504 = vunpack.c.l.b16 %v950
    %v1505 = vunpack.c.l.b16 %v951
    %v1506 = vunpack.c.h.b16 %v951
    %v1507 = vunpack.c.l.b16 %v952
    %v1508 = vunpack.c.h.b16 %v952
    %v1509 = vunpack.c.l.b16 %v953
    %v1510 = vunpack.c.l.b16 %v954
    %v1511 = vunpack.c.h.b16 %v954
    %v1512 = vunpack.c.l.b16 %v955
    %v1513 = vunpack.c.h.b16 %v955
    %v1514 = vunpack.c.l.b16 %v956
    %v1515 = vunpack.c.l.b16 %v957
    %v1516 = vunpack.c.h.b16 %v957
    %v1517 = vunpack.c.l.b16 %v958
    %v1518 = vunpack.c.h.b16 %v958
    %v1519 = vunpack.c.l.b16 %v959
    %v1520 = vunpack.c.l.b16 %v960
    %v1521 = vunpack.c.h.b16 %v960
    %v1522 = vunpack.c.l.b16 %v961
    %v1523 = vunpack.c.h.b16 %v961
    %v1524 = vunpack.c.l.b16 %v962
    %v1525 = vunpack.c.l.b16 %v963
    %v1526 = vunpack.c.h.b16 %v963
    %v1527 = vunpack.c.l.b16 %v964
    %v1528 = vunpack.c.h.b16 %v964
    %v1529 = vunpack.c.l.b16 %v965
    %v1530 = vunpack.c.l.b16 %v966
    %v1531 = vunpack.c.h.b16 %v966
    %v1532 = vunpack.c.l.b16 %v967
    %v1533 = vunpack.c.h.b16 %v967
    %v1534 = vunpack.c.l.b16 %v968
    %v1535 = vunpack.c.l.b16 %v969
    %v1536 = vunpack.c.h.b16 %v969
    %v1537 = vunpack.c.l.b16 %v970
    %v1538 = vunpack.c.h.b16 %v970
    %v1539 = vunpack.c.l.b16 %v971
    %v1540 = vunpack.c.l.b16 %v972
    %v1541 = vunpack.c.h.b16 %v972
    %v1542 = vunpack.c.l.b16 %v973
    %v1543 = vunpack.c.h.b16 %v973
    %v1544 = vunpack.c.l.b16 %v974
    %v1545 = vunpack.c.l.b16 %v975
    %v1546 = vunpack.c.h.b16 %v975
    %v1547 = vunpack.c.l.b16 %v976
    %v1548 = vunpack.c.h.b16 %v976
    %v1549 = vunpack.c.l.b16 %v977
    %v1550 = vunpack.c.l.b16 %v978
    %v1551 = vunpack.c.h.b16 %v978
    %v1552 = vunpack.c.l.b16 %v979
    %v1553 = vunpack.c.h.b16 %v979
    %v1554 = vunpack.c.l.b16 %v980
    %v1555 = vunpack.c.l.b16 %v981
    %v1556 = vunpack.c.h.b16 %v981
    %v1557 = vunpack.c.l.b16 %v982
    %v1558 = vunpack.c.h.b16 %v982
    %v1559 = vunpack.c.l.b16 %v983
    %v1560 = vunpack.c.l.b16 %v984
    %v1561 = vunpack.c.h.b16 %v984
    %v1562 = vunpack.c.l.b16 %v985
    %v1563 = vunpack.c.h.b16 %v985
    %v1564 = vunpack.c.l.b16 %v986
    %v1565 = vunpack.c.l.b16 %v987
    %v1566 = vunpack.c.h.b16 %v987
    %v1567 = vunpack.c.l.b16 %v988
    %v1568 = vunpack.c.h.b16 %v988
    %v1569 = vunpack.c.l.b16 %v989
    %v1570 = vunpack.c.l.b16 %v990
    %v1571 = vunpack.c.h.b16 %v990
    %v1572 = vunpack.c.l.b16 %v991
    %v1573 = vunpack.c.h.b16 %v991
    %v1574 = vunpack.c.l.b16 %v992
    %v1575 = vunpack.c.l.b16 %v993
    %v1576 = vunpack.c.h.b16 %v993
    %v1577 = vunpack.c.l.b16 %v994
    %v1578 = vunpack.c.h.b16 %v994
    %v1579 = vunpack.c.l.b16 %v995
    %v1580 = vunpack.c.l.b16 %v996
    %v1581 = vunpack.c.h.b16 %v996
    %v1582 = vunpack.c.l.b16 %v997
    %v1583 = vunpack.c.h.b16 %v997
    %v1584 = vunpack.c.l.b16 %v998
    %v1585 = vunpack.c.l.b16 %v999
    %v1586 = vunpack.c.h.b16 %v999
    %v1587 = vunpack.c.l.b16 %v1000
    %v1588 = vunpack.c.h.b16 %v1000
    %v1589 = vunpack.c.l.b16 %v1001
    %v1590 = vunpack.c.l.b16 %v1002
    %v1591 = vunpack.c.h.b16 %v1002
    %v1592 = vunpack.c.l.b16 %v1003
    %v1593 = vunpack.c.h.b16 %v1003
    %v1594 = vunpack.c.l.b16 %v1004
    %v1595 = vunpack.c.l.b16 %v1005
    %v1596 = vunpack.c.h.b16 %v1005
    %v1597 = vunpack.c.l.b16 %v1006
    %v1598 = vunpack.c.h.b16 %v1006
    %v1599 = vunpack.c.l.b16 %v1007
    %v1600 = vunpack.c.l.b16 %v1008
    %v1601 = vunpack.c.h.b16 %v1008
    %v1602 = vunpack.c.l.b16 %v1009
    %v1603 = vunpack.c.h.b16 %v1009
    %v1604 = vunpack.c.l.b16 %v1010
    %v1605 = vunpack.c.l.b16 %v1011
    %v1606 = vunpack.c.h.b16 %v1011
    %v1607 = vunpack.c.l.b16 %v1012
    %v1608 = vunpack.c.h.b16 %v1012
    %v1609 = vunpack.c.l.b16 %v1013
    %v1610 = vunpack.c.l.b16 %v1014
    %v1611 = vunpack.c.h.b16 %v1014
    %v1612 = vunpack.c.l.b16 %v1015
    %v1613 = vunpack.c.h.b16 %v1015
    %v1614 = vunpack.c.l.b16 %v1016
    %v1615 = vunpack.c.l.b16 %v1017
    %v1616 = vunpack.c.h.b16 %v1017
    %v1617 = vunpack.c.l.b16 %v1018
    %v1618 = vunpack.c.h.b16 %v1018
    %v1619 = vunpack.c.l.b16 %v1019
    %v1620 = vunpack.c.l.b16 %v1020
    %v1621 = vunpack.c.h.b16 %v1020
    %v1622 = vunpack.c.l.b16 %v1021
    %v1623 = vunpack.c.h.b16 %v1021
    %v1624 = vunpack.c.l.b16 %v1022
    %v1625 = vunpack.c.l.b16 %v1023
    %v1626 = vunpack.c.h.b16 %v1023
    %v1627 = vunpack.c.l.b16 %v1024
    %v1628 = vunpack.c.h.b16 %v1024
    %v1629 = vunpack.c.l.b16 %v1025
    %v1630 = vunpack.c.l.b16 %v1026
    %v1631 = vunpack.c.h.b16 %v1026
    %v1632 = vunpack.c.l.b16 %v1027
    %v1633 = vunpack.c.h.b16 %v1027
    %v1634 = vunpack.c.l.b16 %v1028
    %v1635 = vunpack.c.l.b16 %v1029
    %v1636 = vunpack.c.h.b16 %v1029
    %v1637 = vunpack.c.l.b16 %v1030
    %v1638 = vunpack.c.h.b16 %v1030
    %v1639 = vunpack.c.l.b16 %v1031
    %v1640 = vunpack.c.l.b16 %v1032
    %v1641 = vunpack.c.h.b16 %v1032
    %v1642 = vunpack.c.l.b16 %v1033
    %v1643 = vunpack.c.h.b16 %v1033
    %v1644 = vunpack.c.l.b16 %v1034
    %v1645 = vunpack.c.l.b16 %v1035
    %v1646 = vunpack.c.h.b16 %v1035
    %v1647 = vunpack.c.l.b16 %v1036
    %v1648 = vunpack.c.h.b16 %v1036
    %v1649 = vunpack.c.l.b16 %v1037
    %v1650 = vunpack.c.l.b16 %v1038
    %v1651 = vunpack.c.h.b16 %v1038
    %v1652 = vunpack.c.l.b16 %v1039
    %v1653 = vunpack.c.h.b16 %v1039
    %v1654 = vunpack.c.l.b16 %v1040
    %v1655 = vunpack.c.l.b16 %v1041
    %v1656 = vunpack.c.h.b16 %v1041
    %v1657 = vunpack.c.l.b16 %v1042
    %v1658 = vunpack.c.h.b16 %v1042
    %v1659 = vunpack.c.l.b16 %v1043
    %v1660 = vunpack.c.l.b16 %v1044
    %v1661 = vunpack.c.h.b16 %v1044
    %v1662 = vunpack.c.l.b16 %v1045
    %v1663 = vunpack.c.h.b16 %v1045
    %v1664 = vunpack.c.l.b16 %v1046
    %v1665 = vunpack.c.l.b16 %v1047
    %v1666 = vunpack.c.h.b16 %v1047
    %v1667 = vunpack.c.l.b16 %v1048
    %v1668 = vunpack.c.h.b16 %v1048
    %v1669 = vunpack.c.l.b16 %v1049
    %v1670 = vunpack.c.l.b16 %v1050
    %v1671 = vunpack.c.h.b16 %v1050
    %v1672 = vunpack.c.l.b16 %v1051
    %v1673 = vunpack.c.h.b16 %v1051
    %v1674 = vunpack.c.l.b16 %v1052
    %v1675 = vunpack.c.l.b16 %v1053
    %v1676 = vunpack.c.h.b16 %v1053
    %v1677 = vunpack.c.l.b16 %v1054
    %v1678 = vunpack.c.h.b16 %v1054
    %v1679 = vunpack.c.l.b16 %v1055
    %v1680 = vunpack.c.l.b16 %v1056
    %v1681 = vunpack.c.h.b16 %v1056
    %v1682 = vunpack.c.l.b16 %v1057
    %v1683 = vunpack.c.h.b16 %v1057
    %v1684 = vunpack.c.l.b16 %v1058
    %v1685 = vunpack.c.l.b16 %v1059
    %v1686 = vunpack.c.h.b16 %v1059
    %v1687 = vunpack.c.l.b16 %v1060
    %v1688 = vunpack.c.h.b16 %v1060
    %v1689 = vunpack.c.l.b16 %v1061
    %v1690 = vunpack.c.l.b16 %v1062
    %v1691 = vunpack.c.h.b16 %v1062
    %v1692 = vunpack.c.l.b16 %v1063
    %v1693 = vunpack.c.h.b16 %v1063
    %v1694 = vunpack.c.l.b16 %v1064
    %v1695 = vunpack.c.l.b16 %v1065
    %v1696 = vunpack.c.h.b16 %v1065
    %v1697 = vunpack.c.l.b16 %v1066
    %v1698 = vunpack.c.h.b16 %v1066
    %v1699 = vunpack.c.l.b16 %v1067
    %v1700 = vunpack.c.l.b16 %v1068
    %v1701 = vunpack.c.h.b16 %v1068
    %v1702 = vunpack.c.l.b16 %v1069
    %v1703 = vunpack.c.h.b16 %v1069
    %v1704 = vunpack.c.l.b16 %v1070
    %v1705 = vunpack.c.l.b16 %v1071
    %v1706 = vunpack.c.h.b16 %v1071
    %v1707 = vunpack.c.l.b16 %v1072
    %v1708 = vunpack.c.h.b16 %v1072
    %v1709 = vunpack.c.l.b16 %v1073
    %v1710 = vunpack.c.l.b16 %v1074
    %v1711 = vunpack.c.h.b16 %v1074
    %v1712 = vunpack.c.l.b16 %v1075
    %v1713 = vunpack.c.h.b16 %v1075
    %v1714 = vunpack.c.l.b16 %v1076
    %v1715 = vunpack.c.l.b16 %v1077
    %v1716 = vunpack.c.h.b16 %v1077
    %v1717 = vunpack.c.l.b16 %v1078
    %v1718 = vunpack.c.h.b16 %v1078
    %v1719 = vunpack.c.l.b16 %v1079
    %v1720 = vunpack.c.l.b16 %v1080
    %v1721 = vunpack.c.h.b16 %v1080
    %v1722 = vunpack.c.l.b16 %v1081
    %v1723 = vunpack.c.h.b16 %v1081
    %v1724 = vunpack.c.l.b16 %v1082
    %v1725 = vunpack.c.l.b16 %v1083
    %v1726 = vunpack.c.h.b16 %v1083
    %v1727 = vunpack.c.l.b16 %v1084
    %v1728 = vunpack.c.h.b16 %v1084
    %v1729 = vunpack.c.l.b16 %v1085
    %v1730 = vunpack.c.l.b16 %v1086
    %v1731 = vunpack.c.h.b16 %v1086
    %v1732 = vunpack.c.l.b16 %v1087
    %v1733 = vunpack.c.h.b16 %v1087
    %v1734 = vunpack.c.l.b16 %v1088
    %v1735 = vpack.c.b16 %v1340, %v1335
    %v1736 = vpack.c.b16 %v1341, %v1336
    %v1737 = vpack.c.b16 %v1342, %v1337
    %v1738 = vpack.c.b16 %v1343, %v1338
    %v1739 = vpack.c.b16 %v1344, %v1339
    %v1740 = vpack.c.b16 %v1350, %v1345
    %v1741 = vpack.c.b16 %v1351, %v1346
    %v1742 = vpack.c.b16 %v1352, %v1347
    %v1743 = vpack.c.b16 %v1353, %v1348
    %v1744 = vpack.c.b16 %v1354, %v1349
    %v1745 = vpack.c.b16 %v1360, %v1355
    %v1746 = vpack.c.b16 %v1361, %v1356
    %v1747 = vpack.c.b16 %v1362, %v1357
    %v1748 = vpack.c.b16 %v1363, %v1358
    %v1749 = vpack.c.b16 %v1364, %v1359
    %v1750 = vpack.c.b16 %v1370, %v1365
    %v1751 = vpack.c.b16 %v1371, %v1366
    %v1752 = vpack.c.b16 %v1372, %v1367
    %v1753 = vpack.c.b16 %v1373, %v1368
    %v1754 = vpack.c.b16 %v1374, %v1369
    %v1755 = vpack.c.b16 %v1380, %v1375
    %v1756 = vpack.c.b16 %v1381, %v1376
    %v1757 = vpack.c.b16 %v1382, %v1377
    %v1758 = vpack.c.b16 %v1383, %v1378
    %v1759 = vpack.c.b16 %v1384, %v1379
    %v1760 = vpack.c.b16 %v1390, %v1385
    %v1761 = vpack.c.b16 %v1391, %v1386
    %v1762 = vpack.c.b16 %v1392, %v1387
    %v1763 = vpack.c.b16 %v1393, %v1388
    %v1764 = vpack.c.b16 %v1394, %v1389
    %v1765 = vpack.c.b16 %v1400, %v1395
    %v1766 = vpack.c.b16 %v1401, %v1396
    %v1767 = vpack.c.b16 %v1402, %v1397
    %v1768 = vpack.c.b16 %v1403, %v1398
    %v1769 = vpack.c.b16 %v1404, %v1399
    %v1770 = vpack.c.b16 %v1410, %v1405
    %v1771 = vpack.c.b16 %v1411, %v1406
    %v1772 = vpack.c.b16 %v1412, %v1407
    %v1773 = vpack.c.b16 %v1413, %v1408
    %v1774 = vpack.c.b16 %v1414, %v1409
    %v1775 = vpack.c.b16 %v1420, %v1415
    %v1776 = vpack.c.b16 %v1421, %v1416
    %v1777 = vpack.c.b16 %v1422, %v1417
    %v1778 = vpack.c.b16 %v1423, %v1418
    %v1779 = vpack.c.b16 %v1424, %v1419
    %v1780 = vpack.c.b16 %v1430, %v1425
    %v1781 = vpack.c.b16 %v1431, %v1426
    %v1782 = vpack.c.b16 %v1432, %v1427
    %v1783 = vpack.c.b16 %v1433, %v1428
    %v1784 = vpack.c.b16 %v1434, %v1429
    %v1785 = vpack.c.b16 %v1440, %v1435
    %v1786 = vpack.c.b16 %v1441, %v1436
    %v1787 = vpack.c.b16 %v1442, %v1437
    %v1788 = vpack.c.b16 %v1443, %v1438
    %v1789 = vpack.c.b16 %v1444, %v1439
    %v1790 = vpack.c.b16 %v1450, %v1445
    %v1791 = vpack.c.b16 %v1451, %v1446
    %v1792 = vpack.c.b16 %v1452, %v1447
    %v1793 = vpack.c.b16 %v1453, %v1448
    %v1794 = vpack.c.b16 %v1454, %v1449
    %v1795 = vpack.c.b16 %v1460, %v1455
    %v1796 = vpack.c.b16 %v1461, %v1456
    %v1797 = vpack.c.b16 %v1462, %v1457
    %v1798 = vpack.c.b16 %v1463, %v1458
    %v1799 = vpack.c.b16 %v1464, %v1459
    %v1800 = vpack.c.b16 %v1470, %v1465
    %v1801 = vpack.c.b16 %v1471, %v1466
    %v1802 = vpack.c.b16 %v1472, %v1467
    %v1803 = vpack.c.b16 %v1473, %v1468
    %v1804 = vpack.c.b16 %v1474, %v1469
    %v1805 = vpack.c.b16 %v1480, %v1475
    %v1806 = vpack.c.b16 %v1481, %v1476
    %v1807 = vpack.c.b16 %v1482, %v1477
    %v1808 = vpack.c.b16 %v1483, %v1478
    %v1809 = vpack.c.b16 %v1484, %v1479
    %v1810 = vpack.c.b16 %v1490, %v1485
    %v1811 = vpack.c.b16 %v1491, %v1486
    %v1812 = vpack.c.b16 %v1492, %v1487
    %v1813 = vpack.c.b16 %v1493, %v1488
    %v1814 = vpack.c.b16 %v1494, %v1489
    %v1815 = vpack.c.b16 %v1500, %v1495
    %v1816 = vpack.c.b16 %v1501, %v1496
    %v1817 = vpack.c.b16 %v1502, %v1497
    %v1818 = vpack.c.b16 %v1503, %v1498
    %v1819 = vpack.c.b16 %v1504, %v1499
    %v1820 = vpack.c.b16 %v1510, %v1505
    %v1821 = vpack.c.b16 %v1511, %v1506
    %v1822 = vpack.c.b16 %v1512, %v1507
    %v1823 = vpack.c.b16 %v1513, %v1508
    %v1824 = vpack.c.b16 %v1514, %v1509
    %v1825 = vpack.c.b16 %v1520, %v1515
    %v1826 = vpack.c.b16 %v1521, %v1516
    %v1827 = vpack.c.b16 %v1522, %v1517
    %v1828 = vpack.c.b16 %v1523, %v1518
    %v1829 = vpack.c.b16 %v1524, %v1519
    %v1830 = vpack.c.b16 %v1530, %v1525
    %v1831 = vpack.c.b16 %v1531, %v1526
    %v1832 = vpack.c.b16 %v1532, %v1527
    %v1833 = vpack.c.b16 %v1533, %v1528
    %v1834 = vpack.c.b16 %v1534, %v1529
    %v1835 = vpack.c.b16 %v1540, %v1535
    %v1836 = vpack.c.b16 %v1541, %v1536
    %v1837 = vpack.c.b16 %v1542, %v1537
    %v1838 = vpack.c.b16 %v1543, %v1538
    %v1839 = vpack.c.b16 %v1544, %v1539
    %v1840 = vpack.c.b16 %v1550, %v1545
    %v1841 = vpack.c.b16 %v1551, %v1546
    %v1842 = vpack.c.b16 %v1552, %v1547
    %v1843 = vpack.c.b16 %v1553, %v1548
    %v1844 = vpack.c.b16 %v1554, %v1549
    %v1845 = vpack.c.b16 %v1560, %v1555
    %v1846 = vpack.c.b16 %v1561, %v1556
    %v1847 = vpack.c.b16 %v1562, %v1557
    %v1848 = vpack.c.b16 %v1563, %v1558
    %v1849 = vpack.c.b16 %v1564, %v1559
    %v1850 = vpack.c.b16 %v1570, %v1565
    %v1851 = vpack.c.b16 %v1571, %v1566
    %v1852 = vpack.c.b16 %v1572, %v1567
    %v1853 = vpack.c.b16 %v1573, %v1568
    %v1854 = vpack.c.b16 %v1574, %v1569
    %v1855 = vpack.c.b16 %v1580, %v1575
    %v1856 = vpack.c.b16 %v1581, %v1576
    %v1857 = vpack.c.b16 %v1582, %v1577
    %v1858 = vpack.c.b16 %v1583, %v1578
    %v1859 = vpack.c.b16 %v1584, %v1579
    %v1860 = vpack.c.b16 %v1590, %v1585
    %v1861 = vpack.c.b16 %v1591, %v1586
    %v1862 = vpack.c.b16 %v1592, %v1587
    %v1863 = vpack.c.b16 %v1593, %v1588
    %v1864 = vpack.c.b16 %v1594, %v1589
    %v1865 = vpack.c.b16 %v1600, %v1595
    %v1866 = vpack.c.b16 %v1601, %v1596
    %v1867 = vpack.c.b16 %v1602, %v1597
    %v1868 = vpack.c.b16 %v1603, %v1598
    %v1869 = vpack.c.b16 %v1604, %v1599
    %v1870 = vpack.c.b16 %v1610, %v1605
    %v1871 = vpack.c.b16 %v1611, %v1606
    %v1872 = vpack.c.b16 %v1612, %v1607
    %v1873 = vpack.c.b16 %v1613, %v1608
    %v1874 = vpack.c.b16 %v1614, %v1609
    %v1875 = vpack.c.b16 %v1620, %v1615
    %v1876 = vpack.c.b16 %v1621, %v1616
    %v1877 = vpack.c.b16 %v1622, %v1617
    %v1878 = vpack.c.b16 %v1623, %v1618
    %v1879 = vpack.c.b16 %v1624, %v1619
    %v1880 = vpack.c.b16 %v1630, %v1625
    %v1881 = vpack.c.b16 %v1631, %v1626
    %v1882 = vpack.c.b16 %v1632, %v1627
    %v1883 = vpack.c.b16 %v1633, %v1628
    %v1884 = vpack.c.b16 %v1634, %v1629
    %v1885 = vpack.c.b16 %v1640, %v1635
    %v1886 = vpack.c.b16 %v1641, %v1636
    %v1887 = vpack.c.b16 %v1642, %v1637
    %v1888 = vpack.c.b16 %v1643, %v1638
    %v1889 = vpack.c.b16 %v1644, %v1639
    %v1890 = vpack.c.b16 %v1650, %v1645
    %v1891 = vpack.c.b16 %v1651, %v1646
    %v1892 = vpack.c.b16 %v1652, %v1647
    %v1893 = vpack.c.b16 %v1653, %v1648
    %v1894 = vpack.c.b16 %v1654, %v1649
    %v1895 = vpack.c.b16 %v1660, %v1655
    %v1896 = vpack.c.b16 %v1661, %v1656
    %v1897 = vpack.c.b16 %v1662, %v1657
    %v1898 = vpack.c.b16 %v1663, %v1658
    %v1899 = vpack.c.b16 %v1664, %v1659
    %v1900 = vpack.c.b16 %v1670, %v1665
    %v1901 = vpack.c.b16 %v1671, %v1666
    %v1902 = vpack.c.b16 %v1672, %v1667
    %v1903 = vpack.c.b16 %v1673, %v1668
    %v1904 = vpack.c.b16 %v1674, %v1669
    %v1905 = vpack.c.b16 %v1680, %v1675
    %v1906 = vpack.c.b16 %v1681, %v1676
    %v1907 = vpack.c.b16 %v1682, %v1677
    %v1908 = vpack.c.b16 %v1683, %v1678
    %v1909 = vpack.c.b16 %v1684, %v1679
    %v1910 = vpack.c.b16 %v1690, %v1685
    %v1911 = vpack.c.b16 %v1691, %v1686
    %v1912 = vpack.c.b16 %v1692, %v1687
    %v1913 = vpack.c.b16 %v1693, %v1688
    %v1914 = vpack.c.b16 %v1694, %v1689
    %v1915 = vpack.c.b16 %v1700, %v1695
    %v1916 = vpack.c.b16 %v1701, %v1696
    %v1917 = vpack.c.b16 %v1702, %v1697
    %v1918 = vpack.c.b16 %v1703, %v1698
    %v1919 = vpack.c.b16 %v1704, %v1699
    %v1920 = vpack.c.b16 %v1710, %v1705
    %v1921 = vpack.c.b16 %v1711, %v1706
    %v1922 = vpack.c.b16 %v1712, %v1707
    %v1923 = vpack.c.b16 %v1713, %v1708
    %v1924 = vpack.c.b16 %v1714, %v1709
    %v1925 = vpack.c.b16 %v1720, %v1715
    %v1926 = vpack.c.b16 %v1721, %v1716
    %v1927 = vpack.c.b16 %v1722, %v1717
    %v1928 = vpack.c.b16 %v1723, %v1718
    %v1929 = vpack.c.b16 %v1724, %v1719
    %v1930 = vpack.c.b16 %v1730, %v1725
    %v1931 = vpack.c.b16 %v1731, %v1726
    %v1932 = vpack.c.b16 %v1732, %v1727
    %v1933 = vpack.c.b16 %v1733, %v1728
    %v1934 = vpack.c.b16 %v1734, %v1729
    %2135 = vmatprep.subr.bf16.mxu0 0
    %2136 = vmatpush1.bf16.msra.mxu0 %v809
    %2137 = vmatprep.subr.bf16.mxu0 0
    %2138 = vmatpush1.bf16.msra.mxu0 %v810
    %2139 = vmatprep.subr.bf16.mxu0 0
    %2140 = vmatpush1.bf16.msra.mxu0 %v811
    %2141 = vmatprep.subr.bf16.mxu0 0
    %2142 = vmatpush1.bf16.msra.mxu0 %v812
    %2143 = vmatprep.subr.bf16.mxu0 0
    %2144 = vmatpush1.bf16.msra.mxu0 %v813
    %2145 = vmatprep.subr.bf16.mxu0 0
    %2146 = vmatpush1.bf16.msra.mxu0 %v814
    %2147 = vmatprep.subr.bf16.mxu0 0
    %2148 = vmatpush1.bf16.msra.mxu0 %v815
    %2149 = vmatprep.subr.bf16.mxu0 0
    %2150 = vmatpush1.bf16.msra.mxu0 %v816
    %2151 = vmatprep.subr.bf16.mxu0 0
    %2152 = vmatpush1.bf16.msra.mxu0 %v817
    %2153 = vmatprep.subr.bf16.mxu0 0
    %2154 = vmatpush1.bf16.msra.mxu0 %v818
    %2155 = vmatprep.subr.bf16.mxu0 0
    %2156 = vmatpush1.bf16.msra.mxu0 %v819
    %2157 = vmatprep.subr.bf16.mxu0 0
    %2158 = vmatpush1.bf16.msra.mxu0 %v820
    %2159 = vmatprep.subr.bf16.mxu0 0
    %2160 = vmatpush1.bf16.msra.mxu0 %v821
    %2161 = vmatprep.subr.bf16.mxu0 0
    %2162 = vmatpush1.bf16.msra.mxu0 %v822
    %2163 = vmatprep.subr.bf16.mxu0 0
    %2164 = vmatpush1.bf16.msra.mxu0 %v823
    %2165 = vmatprep.subr.bf16.mxu0 0
    %2166 = vmatpush1.bf16.msra.mxu0 %v824
    %2167 = vmatprep.mubr.bf16.mxu0 %v1736
    %2168 = vmatmul.mubr.bf16.gmra.mrb[0].mxu0 %v1735
    %v2169 = vpop.f32.mrb[0].mxu0
    %v2170 = vadd.f32 %v1093, %v2169
    %v2171 = vpop.f32.mrb[0].mxu0
    %v2172 = vpop.f32.mrb[0].mxu0
    %v2173 = vadd.f32 %v1093, %v2172
    %v2174 = vpop.f32.mrb[0].mxu0
    %2175 = vmatprep.mubr.bf16.mxu0 %v1741
    %2176 = vmatmul.mubr.bf16.gmra.mrb[0].mxu0 %v1740
    %v2177 = vpop.f32.mrb[0].mxu0
    %v2178 = vadd.f32 %v1093, %v2177
    %v2179 = vpop.f32.mrb[0].mxu0
    %v2180 = vpop.f32.mrb[0].mxu0
    %v2181 = vadd.f32 %v1093, %v2180
    %v2182 = vpop.f32.mrb[0].mxu0
    %2183 = vmatprep.mubr.bf16.mxu0 %v1746
    %2184 = vmatmul.mubr.bf16.gmra.mrb[0].mxu0 %v1745
    %v2185 = vpop.f32.mrb[0].mxu0
    %v2186 = vadd.f32 %v1093, %v2185
    %v2187 = vpop.f32.mrb[0].mxu0
    %v2188 = vpop.f32.mrb[0].mxu0
    %v2189 = vadd.f32 %v1093, %v2188
    %v2190 = vpop.f32.mrb[0].mxu0
    %2191 = vmatprep.mubr.bf16.mxu0 %v1751
    %2192 = vmatmul.mubr.bf16.gmra.mrb[0].mxu0 %v1750
    %v2193 = vpop.f32.mrb[0].mxu0
    %v2194 = vadd.f32 %v1093, %v2193
    %v2195 = vpop.f32.mrb[0].mxu0
    %v2196 = vpop.f32.mrb[0].mxu0
    %v2197 = vadd.f32 %v1093, %v2196
    %v2198 = vpop.f32.mrb[0].mxu0
    %2199 = vmatprep.mubr.bf16.mxu0 %v1756
    %2200 = vmatmul.mubr.bf16.gmra.mrb[0].mxu0 %v1755
    %v2201 = vpop.f32.mrb[0].mxu0
    %v2202 = vadd.f32 %v1093, %v2201
    %v2203 = vpop.f32.mrb[0].mxu0
    %v2204 = vpop.f32.mrb[0].mxu0
    %v2205 = vadd.f32 %v1093, %v2204
    %v2206 = vpop.f32.mrb[0].mxu0
    %2207 = vmatprep.mubr.bf16.mxu0 %v1761
    %2208 = vmatmul.mubr.bf16.gmra.mrb[0].mxu0 %v1760
    %v2209 = vpop.f32.mrb[0].mxu0
    %v2210 = vadd.f32 %v1093, %v2209
    %v2211 = vpop.f32.mrb[0].mxu0
    %v2212 = vpop.f32.mrb[0].mxu0
    %v2213 = vadd.f32 %v1093, %v2212
    %v2214 = vpop.f32.mrb[0].mxu0
    %2215 = vmatprep.mubr.bf16.mxu0 %v1766
    %2216 = vmatmul.mubr.bf16.gmra.mrb[0].mxu0 %v1765
    %v2217 = vpop.f32.mrb[0].mxu0
    %v2218 = vadd.f32 %v1093, %v2217
    %v2219 = vpop.f32.mrb[0].mxu0
    %v2220 = vpop.f32.mrb[0].mxu0
    %v2221 = vadd.f32 %v1093, %v2220
    %v2222 = vpop.f32.mrb[0].mxu0
    %2223 = vmatprep.mubr.bf16.mxu0 %v1771
    %2224 = vmatmul.mubr.bf16.gmra.mrb[0].mxu0 %v1770
    %v2225 = vpop.f32.mrb[0].mxu0
    %v2226 = vadd.f32 %v1093, %v2225
    %v2227 = vpop.f32.mrb[0].mxu0
    %v2228 = vpop.f32.mrb[0].mxu0
    %v2229 = vadd.f32 %v1093, %v2228
    %v2230 = vpop.f32.mrb[0].mxu0
    %2231 = vmatprep.mubr.bf16.mxu0 %v1776
    %2232 = vmatmul.mubr.bf16.gmra.mrb[0].mxu0 %v1775
    %v2233 = vpop.f32.mrb[0].mxu0
    %v2234 = vadd.f32 %v1093, %v2233
    %v2235 = vpop.f32.mrb[0].mxu0
    %v2236 = vpop.f32.mrb[0].mxu0
    %v2237 = vadd.f32 %v1093, %v2236
    %v2238 = vpop.f32.mrb[0].mxu0
    %2239 = vmatprep.mubr.bf16.mxu0 %v1781
    %2240 = vmatmul.mubr.bf16.gmra.mrb[0].mxu0 %v1780
    %v2241 = vpop.f32.mrb[0].mxu0
    %v2242 = vadd.f32 %v1093, %v2241
    %v2243 = vpop.f32.mrb[0].mxu0
    %v2244 = vpop.f32.mrb[0].mxu0
    %v2245 = vadd.f32 %v1093, %v2244
    %v2246 = vpop.f32.mrb[0].mxu0
    %2247 = vmatprep.mubr.bf16.mxu0 %v1786
    %2248 = vmatmul.mubr.bf16.gmra.mrb[0].mxu0 %v1785
    %v2249 = vpop.f32.mrb[0].mxu0
    %v2250 = vadd.f32 %v1093, %v2249
    %v2251 = vpop.f32.mrb[0].mxu0
    %v2252 = vpop.f32.mrb[0].mxu0
    %v2253 = vadd.f32 %v1093, %v2252
    %v2254 = vpop.f32.mrb[0].mxu0
    %2255 = vmatprep.mubr.bf16.mxu0 %v1791
    %2256 = vmatmul.mubr.bf16.gmra.mrb[0].mxu0 %v1790
    %v2257 = vpop.f32.mrb[0].mxu0
    %v2258 = vadd.f32 %v1093, %v2257
    %v2259 = vpop.f32.mrb[0].mxu0
    %v2260 = vpop.f32.mrb[0].mxu0
    %v2261 = vadd.f32 %v1093, %v2260
    %v2262 = vpop.f32.mrb[0].mxu0
    %2263 = vmatprep.mubr.bf16.mxu0 %v1796
    %2264 = vmatmul.mubr.bf16.gmra.mrb[0].mxu0 %v1795
    %v2265 = vpop.f32.mrb[0].mxu0
    %v2266 = vadd.f32 %v1093, %v2265
    %v2267 = vpop.f32.mrb[0].mxu0
    %v2268 = vpop.f32.mrb[0].mxu0
    %v2269 = vadd.f32 %v1093, %v2268
    %v2270 = vpop.f32.mrb[0].mxu0
    %2271 = vmatprep.mubr.bf16.mxu0 %v1801
    %2272 = vmatmul.mubr.bf16.gmra.mrb[0].mxu0 %v1800
    %v2273 = vpop.f32.mrb[0].mxu0
    %v2274 = vadd.f32 %v1093, %v2273
    %v2275 = vpop.f32.mrb[0].mxu0
    %v2276 = vpop.f32.mrb[0].mxu0
    %v2277 = vadd.f32 %v1093, %v2276
    %v2278 = vpop.f32.mrb[0].mxu0
    %2279 = vmatprep.mubr.bf16.mxu0 %v1806
    %2280 = vmatmul.mubr.bf16.gmra.mrb[0].mxu0 %v1805
    %v2281 = vpop.f32.mrb[0].mxu0
    %v2282 = vadd.f32 %v1093, %v2281
    %v2283 = vpop.f32.mrb[0].mxu0
    %v2284 = vpop.f32.mrb[0].mxu0
    %v2285 = vadd.f32 %v1093, %v2284
    %v2286 = vpop.f32.mrb[0].mxu0
    %2287 = vmatprep.mubr.bf16.mxu0 %v1811
    %2288 = vmatmul.mubr.bf16.gmra.mrb[0].mxu0 %v1810
    %v2289 = vpop.f32.mrb[0].mxu0
    %v2290 = vadd.f32 %v1093, %v2289
    %v2291 = vpop.f32.mrb[0].mxu0
    %v2292 = vpop.f32.mrb[0].mxu0
    %v2293 = vadd.f32 %v1093, %v2292
    %v2294 = vpop.f32.mrb[0].mxu0
    %2295 = vmatprep.mubr.bf16.mxu0 %v1816
    %2296 = vmatmul.mubr.bf16.gmra.mrb[0].mxu0 %v1815
    %v2297 = vpop.f32.mrb[0].mxu0
    %v2298 = vadd.f32 %v1093, %v2297
    %v2299 = vpop.f32.mrb[0].mxu0
    %v2300 = vpop.f32.mrb[0].mxu0
    %v2301 = vadd.f32 %v1093, %v2300
    %v2302 = vpop.f32.mrb[0].mxu0
    %2303 = vmatprep.mubr.bf16.mxu0 %v1821
    %2304 = vmatmul.mubr.bf16.gmra.mrb[0].mxu0 %v1820
    %v2305 = vpop.f32.mrb[0].mxu0
    %v2306 = vadd.f32 %v1093, %v2305
    %v2307 = vpop.f32.mrb[0].mxu0
    %v2308 = vpop.f32.mrb[0].mxu0
    %v2309 = vadd.f32 %v1093, %v2308
    %v2310 = vpop.f32.mrb[0].mxu0
    %2311 = vmatprep.mubr.bf16.mxu0 %v1826
    %2312 = vmatmul.mubr.bf16.gmra.mrb[0].mxu0 %v1825
    %v2313 = vpop.f32.mrb[0].mxu0
    %v2314 = vadd.f32 %v1093, %v2313
    %v2315 = vpop.f32.mrb[0].mxu0
    %v2316 = vpop.f32.mrb[0].mxu0
    %v2317 = vadd.f32 %v1093, %v2316
    %v2318 = vpop.f32.mrb[0].mxu0
    %2319 = vmatprep.mubr.bf16.mxu0 %v1831
    %2320 = vmatmul.mubr.bf16.gmra.mrb[0].mxu0 %v1830
    %v2321 = vpop.f32.mrb[0].mxu0
    %v2322 = vadd.f32 %v1093, %v2321
    %v2323 = vpop.f32.mrb[0].mxu0
    %v2324 = vpop.f32.mrb[0].mxu0
    %v2325 = vadd.f32 %v1093, %v2324
    %v2326 = vpop.f32.mrb[0].mxu0
    %2327 = vmatprep.mubr.bf16.mxu0 %v1836
    %2328 = vmatmul.mubr.bf16.gmra.mrb[0].mxu0 %v1835
    %v2329 = vpop.f32.mrb[0].mxu0
    %v2330 = vadd.f32 %v1093, %v2329
    %v2331 = vpop.f32.mrb[0].mxu0
    %v2332 = vpop.f32.mrb[0].mxu0
    %v2333 = vadd.f32 %v1093, %v2332
    %v2334 = vpop.f32.mrb[0].mxu0
    %2335 = vmatprep.mubr.bf16.mxu0 %v1841
    %2336 = vmatmul.mubr.bf16.gmra.mrb[0].mxu0 %v1840
    %v2337 = vpop.f32.mrb[0].mxu0
    %v2338 = vadd.f32 %v1093, %v2337
    %v2339 = vpop.f32.mrb[0].mxu0
    %v2340 = vpop.f32.mrb[0].mxu0
    %v2341 = vadd.f32 %v1093, %v2340
    %v2342 = vpop.f32.mrb[0].mxu0
    %2343 = vmatprep.mubr.bf16.mxu0 %v1846
    %2344 = vmatmul.mubr.bf16.gmra.mrb[0].mxu0 %v1845
    %v2345 = vpop.f32.mrb[0].mxu0
    %v2346 = vadd.f32 %v1093, %v2345
    %v2347 = vpop.f32.mrb[0].mxu0
    %v2348 = vpop.f32.mrb[0].mxu0
    %v2349 = vadd.f32 %v1093, %v2348
    %v2350 = vpop.f32.mrb[0].mxu0
    %2351 = vmatprep.mubr.bf16.mxu0 %v1851
    %2352 = vmatmul.mubr.bf16.gmra.mrb[0].mxu0 %v1850
    %v2353 = vpop.f32.mrb[0].mxu0
    %v2354 = vadd.f32 %v1093, %v2353
    %v2355 = vpop.f32.mrb[0].mxu0
    %v2356 = vpop.f32.mrb[0].mxu0
    %v2357 = vadd.f32 %v1093, %v2356
    %v2358 = vpop.f32.mrb[0].mxu0
    %2359 = vmatprep.mubr.bf16.mxu0 %v1856
    %2360 = vmatmul.mubr.bf16.gmra.mrb[0].mxu0 %v1855
    %v2361 = vpop.f32.mrb[0].mxu0
    %v2362 = vadd.f32 %v1093, %v2361
    %v2363 = vpop.f32.mrb[0].mxu0
    %v2364 = vpop.f32.mrb[0].mxu0
    %v2365 = vadd.f32 %v1093, %v2364
    %v2366 = vpop.f32.mrb[0].mxu0
    %2367 = vmatprep.mubr.bf16.mxu0 %v1861
    %2368 = vmatmul.mubr.bf16.gmra.mrb[0].mxu0 %v1860
    %v2369 = vpop.f32.mrb[0].mxu0
    %v2370 = vadd.f32 %v1093, %v2369
    %v2371 = vpop.f32.mrb[0].mxu0
    %v2372 = vpop.f32.mrb[0].mxu0
    %v2373 = vadd.f32 %v1093, %v2372
    %v2374 = vpop.f32.mrb[0].mxu0
    %2375 = vmatprep.mubr.bf16.mxu0 %v1866
    %2376 = vmatmul.mubr.bf16.gmra.mrb[0].mxu0 %v1865
    %v2377 = vpop.f32.mrb[0].mxu0
    %v2378 = vadd.f32 %v1093, %v2377
    %v2379 = vpop.f32.mrb[0].mxu0
    %v2380 = vpop.f32.mrb[0].mxu0
    %v2381 = vadd.f32 %v1093, %v2380
    %v2382 = vpop.f32.mrb[0].mxu0
    %2383 = vmatprep.mubr.bf16.mxu0 %v1871
    %2384 = vmatmul.mubr.bf16.gmra.mrb[0].mxu0 %v1870
    %v2385 = vpop.f32.mrb[0].mxu0
    %v2386 = vadd.f32 %v1093, %v2385
    %v2387 = vpop.f32.mrb[0].mxu0
    %v2388 = vpop.f32.mrb[0].mxu0
    %v2389 = vadd.f32 %v1093, %v2388
    %v2390 = vpop.f32.mrb[0].mxu0
    %2391 = vmatprep.mubr.bf16.mxu0 %v1876
    %2392 = vmatmul.mubr.bf16.gmra.mrb[0].mxu0 %v1875
    %v2393 = vpop.f32.mrb[0].mxu0
    %v2394 = vadd.f32 %v1093, %v2393
    %v2395 = vpop.f32.mrb[0].mxu0
    %v2396 = vpop.f32.mrb[0].mxu0
    %v2397 = vadd.f32 %v1093, %v2396
    %v2398 = vpop.f32.mrb[0].mxu0
    %2399 = vmatprep.mubr.bf16.mxu0 %v1881
    %2400 = vmatmul.mubr.bf16.gmra.mrb[0].mxu0 %v1880
    %v2401 = vpop.f32.mrb[0].mxu0
    %v2402 = vadd.f32 %v1093, %v2401
    %v2403 = vpop.f32.mrb[0].mxu0
    %v2404 = vpop.f32.mrb[0].mxu0
    %v2405 = vadd.f32 %v1093, %v2404
    %v2406 = vpop.f32.mrb[0].mxu0
    %2407 = vmatprep.mubr.bf16.mxu0 %v1886
    %2408 = vmatmul.mubr.bf16.gmra.mrb[0].mxu0 %v1885
    %v2409 = vpop.f32.mrb[0].mxu0
    %v2410 = vadd.f32 %v1093, %v2409
    %v2411 = vpop.f32.mrb[0].mxu0
    %v2412 = vpop.f32.mrb[0].mxu0
    %v2413 = vadd.f32 %v1093, %v2412
    %v2414 = vpop.f32.mrb[0].mxu0
    %2415 = vmatprep.mubr.bf16.mxu0 %v1891
    %2416 = vmatmul.mubr.bf16.gmra.mrb[0].mxu0 %v1890
    %v2417 = vpop.f32.mrb[0].mxu0
    %v2418 = vadd.f32 %v1093, %v2417
    %v2419 = vpop.f32.mrb[0].mxu0
    %v2420 = vpop.f32.mrb[0].mxu0
    %v2421 = vadd.f32 %v1093, %v2420
    %v2422 = vpop.f32.mrb[0].mxu0
    %2423 = vmatprep.mubr.bf16.mxu0 %v1896
    %2424 = vmatmul.mubr.bf16.gmra.mrb[0].mxu0 %v1895
    %v2425 = vpop.f32.mrb[0].mxu0
    %v2426 = vadd.f32 %v1093, %v2425
    %v2427 = vpop.f32.mrb[0].mxu0
    %v2428 = vpop.f32.mrb[0].mxu0
    %v2429 = vadd.f32 %v1093, %v2428
    %v2430 = vpop.f32.mrb[0].mxu0
    %2431 = vmatprep.mubr.bf16.mxu0 %v1901
    %2432 = vmatmul.mubr.bf16.gmra.mrb[0].mxu0 %v1900
    %v2433 = vpop.f32.mrb[0].mxu0
    %v2434 = vadd.f32 %v1093, %v2433
    %v2435 = vpop.f32.mrb[0].mxu0
    %v2436 = vpop.f32.mrb[0].mxu0
    %v2437 = vadd.f32 %v1093, %v2436
    %v2438 = vpop.f32.mrb[0].mxu0
    %2439 = vmatprep.mubr.bf16.mxu0 %v1906
    %2440 = vmatmul.mubr.bf16.gmra.mrb[0].mxu0 %v1905
    %v2441 = vpop.f32.mrb[0].mxu0
    %v2442 = vadd.f32 %v1093, %v2441
    %v2443 = vpop.f32.mrb[0].mxu0
    %v2444 = vpop.f32.mrb[0].mxu0
    %v2445 = vadd.f32 %v1093, %v2444
    %v2446 = vpop.f32.mrb[0].mxu0
    %2447 = vmatprep.mubr.bf16.mxu0 %v1911
    %2448 = vmatmul.mubr.bf16.gmra.mrb[0].mxu0 %v1910
    %v2449 = vpop.f32.mrb[0].mxu0
    %v2450 = vadd.f32 %v1093, %v2449
    %v2451 = vpop.f32.mrb[0].mxu0
    %v2452 = vpop.f32.mrb[0].mxu0
    %v2453 = vadd.f32 %v1093, %v2452
    %v2454 = vpop.f32.mrb[0].mxu0
    %2455 = vmatprep.mubr.bf16.mxu0 %v1916
    %2456 = vmatmul.mubr.bf16.gmra.mrb[0].mxu0 %v1915
    %v2457 = vpop.f32.mrb[0].mxu0
    %v2458 = vadd.f32 %v1093, %v2457
    %v2459 = vpop.f32.mrb[0].mxu0
    %v2460 = vpop.f32.mrb[0].mxu0
    %v2461 = vadd.f32 %v1093, %v2460
    %v2462 = vpop.f32.mrb[0].mxu0
    %2463 = vmatprep.mubr.bf16.mxu0 %v1921
    %2464 = vmatmul.mubr.bf16.gmra.mrb[0].mxu0 %v1920
    %v2465 = vpop.f32.mrb[0].mxu0
    %v2466 = vadd.f32 %v1093, %v2465
    %v2467 = vpop.f32.mrb[0].mxu0
    %v2468 = vpop.f32.mrb[0].mxu0
    %v2469 = vadd.f32 %v1093, %v2468
    %v2470 = vpop.f32.mrb[0].mxu0
    %2471 = vmatprep.mubr.bf16.mxu0 %v1926
    %2472 = vmatmul.mubr.bf16.gmra.mrb[0].mxu0 %v1925
    %v2473 = vpop.f32.mrb[0].mxu0
    %v2474 = vadd.f32 %v1093, %v2473
    %v2475 = vpop.f32.mrb[0].mxu0
    %v2476 = vpop.f32.mrb[0].mxu0
    %v2477 = vadd.f32 %v1093, %v2476
    %v2478 = vpop.f32.mrb[0].mxu0
    %2479 = vmatprep.mubr.bf16.mxu0 %v1931
    %2480 = vmatmul.mubr.bf16.gmra.mrb[0].mxu0 %v1930
    %v2481 = vpop.f32.mrb[0].mxu0
    %v2482 = vadd.f32 %v1093, %v2481
    %v2483 = vpop.f32.mrb[0].mxu0
    %v2484 = vpop.f32.mrb[0].mxu0
    %v2485 = vadd.f32 %v1093, %v2484
    %v2486 = vpop.f32.mrb[0].mxu0
    %2487 = vdwg.mxu0
    %2488 = vmatprep.subr.bf16.mxu0 0
    %2489 = vmatpush1.bf16.msra.mxu0 %v825
    %2490 = vmatprep.subr.bf16.mxu0 0
    %2491 = vmatpush1.bf16.msra.mxu0 %v826
    %2492 = vmatprep.subr.bf16.mxu0 0
    %2493 = vmatpush1.bf16.msra.mxu0 %v827
    %2494 = vmatprep.subr.bf16.mxu0 0
    %2495 = vmatpush1.bf16.msra.mxu0 %v828
    %2496 = vmatprep.subr.bf16.mxu0 0
    %2497 = vmatpush1.bf16.msra.mxu0 %v829
    %2498 = vmatprep.subr.bf16.mxu0 0
    %2499 = vmatpush1.bf16.msra.mxu0 %v830
    %2500 = vmatprep.subr.bf16.mxu0 0
    %2501 = vmatpush1.bf16.msra.mxu0 %v831
    %2502 = vmatprep.subr.bf16.mxu0 0
    %2503 = vmatpush1.bf16.msra.mxu0 %v832
    %2504 = vmatprep.subr.bf16.mxu0 0
    %2505 = vmatpush1.bf16.msra.mxu0 %v833
    %2506 = vmatprep.subr.bf16.mxu0 0
    %2507 = vmatpush1.bf16.msra.mxu0 %v834
    %2508 = vmatprep.subr.bf16.mxu0 0
    %2509 = vmatpush1.bf16.msra.mxu0 %v835
    %2510 = vmatprep.subr.bf16.mxu0 0
    %2511 = vmatpush1.bf16.msra.mxu0 %v836
    %2512 = vmatprep.subr.bf16.mxu0 0
    %2513 = vmatpush1.bf16.msra.mxu0 %v837
    %2514 = vmatprep.subr.bf16.mxu0 0
    %2515 = vmatpush1.bf16.msra.mxu0 %v838
    %2516 = vmatprep.subr.bf16.mxu0 0
    %2517 = vmatpush1.bf16.msra.mxu0 %v839
    %2518 = vmatprep.subr.bf16.mxu0 0
    %2519 = vmatpush1.bf16.msra.mxu0 %v840
    %2520 = vmatprep.mubr.bf16.mxu0 %v1738
    %2521 = vmatmul.mubr.bf16.gmra.mrb[0].mxu0 %v1737
    %v2522 = vpop.f32.mrb[0].mxu0
    %v2523 = vadd.f32 %v2170, %v2522
    %v2524 = vpop.f32.mrb[0].mxu0
    %v2525 = vpop.f32.mrb[0].mxu0
    %v2526 = vadd.f32 %v2173, %v2525
    %v2527 = vpop.f32.mrb[0].mxu0
    %2528 = vmatprep.mubr.bf16.mxu0 %v1743
    %2529 = vmatmul.mubr.bf16.gmra.mrb[0].mxu0 %v1742
    %v2530 = vpop.f32.mrb[0].mxu0
    %v2531 = vadd.f32 %v2178, %v2530
    %v2532 = vpop.f32.mrb[0].mxu0
    %v2533 = vpop.f32.mrb[0].mxu0
    %v2534 = vadd.f32 %v2181, %v2533
    %v2535 = vpop.f32.mrb[0].mxu0
    %2536 = vmatprep.mubr.bf16.mxu0 %v1748
    %2537 = vmatmul.mubr.bf16.gmra.mrb[0].mxu0 %v1747
    %v2538 = vpop.f32.mrb[0].mxu0
    %v2539 = vadd.f32 %v2186, %v2538
    %v2540 = vpop.f32.mrb[0].mxu0
    %v2541 = vpop.f32.mrb[0].mxu0
    %v2542 = vadd.f32 %v2189, %v2541
    %v2543 = vpop.f32.mrb[0].mxu0
    %2544 = vmatprep.mubr.bf16.mxu0 %v1753
    %2545 = vmatmul.mubr.bf16.gmra.mrb[0].mxu0 %v1752
    %v2546 = vpop.f32.mrb[0].mxu0
    %v2547 = vadd.f32 %v2194, %v2546
    %v2548 = vpop.f32.mrb[0].mxu0
    %v2549 = vpop.f32.mrb[0].mxu0
    %v2550 = vadd.f32 %v2197, %v2549
    %v2551 = vpop.f32.mrb[0].mxu0
    %2552 = vmatprep.mubr.bf16.mxu0 %v1758
    %2553 = vmatmul.mubr.bf16.gmra.mrb[0].mxu0 %v1757
    %v2554 = vpop.f32.mrb[0].mxu0
    %v2555 = vadd.f32 %v2202, %v2554
    %v2556 = vpop.f32.mrb[0].mxu0
    %v2557 = vpop.f32.mrb[0].mxu0
    %v2558 = vadd.f32 %v2205, %v2557
    %v2559 = vpop.f32.mrb[0].mxu0
    %2560 = vmatprep.mubr.bf16.mxu0 %v1763
    %2561 = vmatmul.mubr.bf16.gmra.mrb[0].mxu0 %v1762
    %v2562 = vpop.f32.mrb[0].mxu0
    %v2563 = vadd.f32 %v2210, %v2562
    %v2564 = vpop.f32.mrb[0].mxu0
    %v2565 = vpop.f32.mrb[0].mxu0
    %v2566 = vadd.f32 %v2213, %v2565
    %v2567 = vpop.f32.mrb[0].mxu0
    %2568 = vmatprep.mubr.bf16.mxu0 %v1768
    %2569 = vmatmul.mubr.bf16.gmra.mrb[0].mxu0 %v1767
    %v2570 = vpop.f32.mrb[0].mxu0
    %v2571 = vadd.f32 %v2218, %v2570
    %v2572 = vpop.f32.mrb[0].mxu0
    %v2573 = vpop.f32.mrb[0].mxu0
    %v2574 = vadd.f32 %v2221, %v2573
    %v2575 = vpop.f32.mrb[0].mxu0
    %2576 = vmatprep.mubr.bf16.mxu0 %v1773
    %2577 = vmatmul.mubr.bf16.gmra.mrb[0].mxu0 %v1772
    %v2578 = vpop.f32.mrb[0].mxu0
    %v2579 = vadd.f32 %v2226, %v2578
    %v2580 = vpop.f32.mrb[0].mxu0
    %v2581 = vpop.f32.mrb[0].mxu0
    %v2582 = vadd.f32 %v2229, %v2581
    %v2583 = vpop.f32.mrb[0].mxu0
    %2584 = vmatprep.mubr.bf16.mxu0 %v1778
    %2585 = vmatmul.mubr.bf16.gmra.mrb[0].mxu0 %v1777
    %v2586 = vpop.f32.mrb[0].mxu0
    %v2587 = vadd.f32 %v2234, %v2586
    %v2588 = vpop.f32.mrb[0].mxu0
    %v2589 = vpop.f32.mrb[0].mxu0
    %v2590 = vadd.f32 %v2237, %v2589
    %v2591 = vpop.f32.mrb[0].mxu0
    %2592 = vmatprep.mubr.bf16.mxu0 %v1783
    %2593 = vmatmul.mubr.bf16.gmra.mrb[0].mxu0 %v1782
    %v2594 = vpop.f32.mrb[0].mxu0
    %v2595 = vadd.f32 %v2242, %v2594
    %v2596 = vpop.f32.mrb[0].mxu0
    %v2597 = vpop.f32.mrb[0].mxu0
    %v2598 = vadd.f32 %v2245, %v2597
    %v2599 = vpop.f32.mrb[0].mxu0
    %2600 = vmatprep.mubr.bf16.mxu0 %v1788
    %2601 = vmatmul.mubr.bf16.gmra.mrb[0].mxu0 %v1787
    %v2602 = vpop.f32.mrb[0].mxu0
    %v2603 = vadd.f32 %v2250, %v2602
    %v2604 = vpop.f32.mrb[0].mxu0
    %v2605 = vpop.f32.mrb[0].mxu0
    %v2606 = vadd.f32 %v2253, %v2605
    %v2607 = vpop.f32.mrb[0].mxu0
    %2608 = vmatprep.mubr.bf16.mxu0 %v1793
    %2609 = vmatmul.mubr.bf16.gmra.mrb[0].mxu0 %v1792
    %v2610 = vpop.f32.mrb[0].mxu0
    %v2611 = vadd.f32 %v2258, %v2610
    %v2612 = vpop.f32.mrb[0].mxu0
    %v2613 = vpop.f32.mrb[0].mxu0
    %v2614 = vadd.f32 %v2261, %v2613
    %v2615 = vpop.f32.mrb[0].mxu0
    %2616 = vmatprep.mubr.bf16.mxu0 %v1798
    %2617 = vmatmul.mubr.bf16.gmra.mrb[0].mxu0 %v1797
    %v2618 = vpop.f32.mrb[0].mxu0
    %v2619 = vadd.f32 %v2266, %v2618
    %v2620 = vpop.f32.mrb[0].mxu0
    %v2621 = vpop.f32.mrb[0].mxu0
    %v2622 = vadd.f32 %v2269, %v2621
    %v2623 = vpop.f32.mrb[0].mxu0
    %2624 = vmatprep.mubr.bf16.mxu0 %v1803
    %2625 = vmatmul.mubr.bf16.gmra.mrb[0].mxu0 %v1802
    %v2626 = vpop.f32.mrb[0].mxu0
    %v2627 = vadd.f32 %v2274, %v2626
    %v2628 = vpop.f32.mrb[0].mxu0
    %v2629 = vpop.f32.mrb[0].mxu0
    %v2630 = vadd.f32 %v2277, %v2629
    %v2631 = vpop.f32.mrb[0].mxu0
    %2632 = vmatprep.mubr.bf16.mxu0 %v1808
    %2633 = vmatmul.mubr.bf16.gmra.mrb[0].mxu0 %v1807
    %v2634 = vpop.f32.mrb[0].mxu0
    %v2635 = vadd.f32 %v2282, %v2634
    %v2636 = vpop.f32.mrb[0].mxu0
    %v2637 = vpop.f32.mrb[0].mxu0
    %v2638 = vadd.f32 %v2285, %v2637
    %v2639 = vpop.f32.mrb[0].mxu0
    %2640 = vmatprep.mubr.bf16.mxu0 %v1813
    %2641 = vmatmul.mubr.bf16.gmra.mrb[0].mxu0 %v1812
    %v2642 = vpop.f32.mrb[0].mxu0
    %v2643 = vadd.f32 %v2290, %v2642
    %v2644 = vpop.f32.mrb[0].mxu0
    %v2645 = vpop.f32.mrb[0].mxu0
    %v2646 = vadd.f32 %v2293, %v2645
    %v2647 = vpop.f32.mrb[0].mxu0
    %2648 = vmatprep.mubr.bf16.mxu0 %v1818
    %2649 = vmatmul.mubr.bf16.gmra.mrb[0].mxu0 %v1817
    %v2650 = vpop.f32.mrb[0].mxu0
    %v2651 = vadd.f32 %v2298, %v2650
    %v2652 = vpop.f32.mrb[0].mxu0
    %v2653 = vpop.f32.mrb[0].mxu0
    %v2654 = vadd.f32 %v2301, %v2653
    %v2655 = vpop.f32.mrb[0].mxu0
    %2656 = vmatprep.mubr.bf16.mxu0 %v1823
    %2657 = vmatmul.mubr.bf16.gmra.mrb[0].mxu0 %v1822
    %v2658 = vpop.f32.mrb[0].mxu0
    %v2659 = vadd.f32 %v2306, %v2658
    %v2660 = vpop.f32.mrb[0].mxu0
    %v2661 = vpop.f32.mrb[0].mxu0
    %v2662 = vadd.f32 %v2309, %v2661
    %v2663 = vpop.f32.mrb[0].mxu0
    %2664 = vmatprep.mubr.bf16.mxu0 %v1828
    %2665 = vmatmul.mubr.bf16.gmra.mrb[0].mxu0 %v1827
    %v2666 = vpop.f32.mrb[0].mxu0
    %v2667 = vadd.f32 %v2314, %v2666
    %v2668 = vpop.f32.mrb[0].mxu0
    %v2669 = vpop.f32.mrb[0].mxu0
    %v2670 = vadd.f32 %v2317, %v2669
    %v2671 = vpop.f32.mrb[0].mxu0
    %2672 = vmatprep.mubr.bf16.mxu0 %v1833
    %2673 = vmatmul.mubr.bf16.gmra.mrb[0].mxu0 %v1832
    %v2674 = vpop.f32.mrb[0].mxu0
    %v2675 = vadd.f32 %v2322, %v2674
    %v2676 = vpop.f32.mrb[0].mxu0
    %v2677 = vpop.f32.mrb[0].mxu0
    %v2678 = vadd.f32 %v2325, %v2677
    %v2679 = vpop.f32.mrb[0].mxu0
    %2680 = vmatprep.mubr.bf16.mxu0 %v1838
    %2681 = vmatmul.mubr.bf16.gmra.mrb[0].mxu0 %v1837
    %v2682 = vpop.f32.mrb[0].mxu0
    %v2683 = vadd.f32 %v2330, %v2682
    %v2684 = vpop.f32.mrb[0].mxu0
    %v2685 = vpop.f32.mrb[0].mxu0
    %v2686 = vadd.f32 %v2333, %v2685
    %v2687 = vpop.f32.mrb[0].mxu0
    %2688 = vmatprep.mubr.bf16.mxu0 %v1843
    %2689 = vmatmul.mubr.bf16.gmra.mrb[0].mxu0 %v1842
    %v2690 = vpop.f32.mrb[0].mxu0
    %v2691 = vadd.f32 %v2338, %v2690
    %v2692 = vpop.f32.mrb[0].mxu0
    %v2693 = vpop.f32.mrb[0].mxu0
    %v2694 = vadd.f32 %v2341, %v2693
    %v2695 = vpop.f32.mrb[0].mxu0
    %2696 = vmatprep.mubr.bf16.mxu0 %v1848
    %2697 = vmatmul.mubr.bf16.gmra.mrb[0].mxu0 %v1847
    %v2698 = vpop.f32.mrb[0].mxu0
    %v2699 = vadd.f32 %v2346, %v2698
    %v2700 = vpop.f32.mrb[0].mxu0
    %v2701 = vpop.f32.mrb[0].mxu0
    %v2702 = vadd.f32 %v2349, %v2701
    %v2703 = vpop.f32.mrb[0].mxu0
    %2704 = vmatprep.mubr.bf16.mxu0 %v1853
    %2705 = vmatmul.mubr.bf16.gmra.mrb[0].mxu0 %v1852
    %v2706 = vpop.f32.mrb[0].mxu0
    %v2707 = vadd.f32 %v2354, %v2706
    %v2708 = vpop.f32.mrb[0].mxu0
    %v2709 = vpop.f32.mrb[0].mxu0
    %v2710 = vadd.f32 %v2357, %v2709
    %v2711 = vpop.f32.mrb[0].mxu0
    %2712 = vmatprep.mubr.bf16.mxu0 %v1858
    %2713 = vmatmul.mubr.bf16.gmra.mrb[0].mxu0 %v1857
    %v2714 = vpop.f32.mrb[0].mxu0
    %v2715 = vadd.f32 %v2362, %v2714
    %v2716 = vpop.f32.mrb[0].mxu0
    %v2717 = vpop.f32.mrb[0].mxu0
    %v2718 = vadd.f32 %v2365, %v2717
    %v2719 = vpop.f32.mrb[0].mxu0
    %2720 = vmatprep.mubr.bf16.mxu0 %v1863
    %2721 = vmatmul.mubr.bf16.gmra.mrb[0].mxu0 %v1862
    %v2722 = vpop.f32.mrb[0].mxu0
    %v2723 = vadd.f32 %v2370, %v2722
    %v2724 = vpop.f32.mrb[0].mxu0
    %v2725 = vpop.f32.mrb[0].mxu0
    %v2726 = vadd.f32 %v2373, %v2725
    %v2727 = vpop.f32.mrb[0].mxu0
    %2728 = vmatprep.mubr.bf16.mxu0 %v1868
    %2729 = vmatmul.mubr.bf16.gmra.mrb[0].mxu0 %v1867
    %v2730 = vpop.f32.mrb[0].mxu0
    %v2731 = vadd.f32 %v2378, %v2730
    %v2732 = vpop.f32.mrb[0].mxu0
    %v2733 = vpop.f32.mrb[0].mxu0
    %v2734 = vadd.f32 %v2381, %v2733
    %v2735 = vpop.f32.mrb[0].mxu0
    %2736 = vmatprep.mubr.bf16.mxu0 %v1873
    %2737 = vmatmul.mubr.bf16.gmra.mrb[0].mxu0 %v1872
    %v2738 = vpop.f32.mrb[0].mxu0
    %v2739 = vadd.f32 %v2386, %v2738
    %v2740 = vpop.f32.mrb[0].mxu0
    %v2741 = vpop.f32.mrb[0].mxu0
    %v2742 = vadd.f32 %v2389, %v2741
    %v2743 = vpop.f32.mrb[0].mxu0
    %2744 = vmatprep.mubr.bf16.mxu0 %v1878
    %2745 = vmatmul.mubr.bf16.gmra.mrb[0].mxu0 %v1877
    %v2746 = vpop.f32.mrb[0].mxu0
    %v2747 = vadd.f32 %v2394, %v2746
    %v2748 = vpop.f32.mrb[0].mxu0
    %v2749 = vpop.f32.mrb[0].mxu0
    %v2750 = vadd.f32 %v2397, %v2749
    %v2751 = vpop.f32.mrb[0].mxu0
    %2752 = vmatprep.mubr.bf16.mxu0 %v1883
    %2753 = vmatmul.mubr.bf16.gmra.mrb[0].mxu0 %v1882
    %v2754 = vpop.f32.mrb[0].mxu0
    %v2755 = vadd.f32 %v2402, %v2754
    %v2756 = vpop.f32.mrb[0].mxu0
    %v2757 = vpop.f32.mrb[0].mxu0
    %v2758 = vadd.f32 %v2405, %v2757
    %v2759 = vpop.f32.mrb[0].mxu0
    %2760 = vmatprep.mubr.bf16.mxu0 %v1888
    %2761 = vmatmul.mubr.bf16.gmra.mrb[0].mxu0 %v1887
    %v2762 = vpop.f32.mrb[0].mxu0
    %v2763 = vadd.f32 %v2410, %v2762
    %v2764 = vpop.f32.mrb[0].mxu0
    %v2765 = vpop.f32.mrb[0].mxu0
    %v2766 = vadd.f32 %v2413, %v2765
    %v2767 = vpop.f32.mrb[0].mxu0
    %2768 = vmatprep.mubr.bf16.mxu0 %v1893
    %2769 = vmatmul.mubr.bf16.gmra.mrb[0].mxu0 %v1892
    %v2770 = vpop.f32.mrb[0].mxu0
    %v2771 = vadd.f32 %v2418, %v2770
    %v2772 = vpop.f32.mrb[0].mxu0
    %v2773 = vpop.f32.mrb[0].mxu0
    %v2774 = vadd.f32 %v2421, %v2773
    %v2775 = vpop.f32.mrb[0].mxu0
    %2776 = vmatprep.mubr.bf16.mxu0 %v1898
    %2777 = vmatmul.mubr.bf16.gmra.mrb[0].mxu0 %v1897
    %v2778 = vpop.f32.mrb[0].mxu0
    %v2779 = vadd.f32 %v2426, %v2778
    %v2780 = vpop.f32.mrb[0].mxu0
    %v2781 = vpop.f32.mrb[0].mxu0
    %v2782 = vadd.f32 %v2429, %v2781
    %v2783 = vpop.f32.mrb[0].mxu0
    %2784 = vmatprep.mubr.bf16.mxu0 %v1903
    %2785 = vmatmul.mubr.bf16.gmra.mrb[0].mxu0 %v1902
    %v2786 = vpop.f32.mrb[0].mxu0
    %v2787 = vadd.f32 %v2434, %v2786
    %v2788 = vpop.f32.mrb[0].mxu0
    %v2789 = vpop.f32.mrb[0].mxu0
    %v2790 = vadd.f32 %v2437, %v2789
    %v2791 = vpop.f32.mrb[0].mxu0
    %2792 = vmatprep.mubr.bf16.mxu0 %v1908
    %2793 = vmatmul.mubr.bf16.gmra.mrb[0].mxu0 %v1907
    %v2794 = vpop.f32.mrb[0].mxu0
    %v2795 = vadd.f32 %v2442, %v2794
    %v2796 = vpop.f32.mrb[0].mxu0
    %v2797 = vpop.f32.mrb[0].mxu0
    %v2798 = vadd.f32 %v2445, %v2797
    %v2799 = vpop.f32.mrb[0].mxu0
    %2800 = vmatprep.mubr.bf16.mxu0 %v1913
    %2801 = vmatmul.mubr.bf16.gmra.mrb[0].mxu0 %v1912
    %v2802 = vpop.f32.mrb[0].mxu0
    %v2803 = vadd.f32 %v2450, %v2802
    %v2804 = vpop.f32.mrb[0].mxu0
    %v2805 = vpop.f32.mrb[0].mxu0
    %v2806 = vadd.f32 %v2453, %v2805
    %v2807 = vpop.f32.mrb[0].mxu0
    %2808 = vmatprep.mubr.bf16.mxu0 %v1918
    %2809 = vmatmul.mubr.bf16.gmra.mrb[0].mxu0 %v1917
    %v2810 = vpop.f32.mrb[0].mxu0
    %v2811 = vadd.f32 %v2458, %v2810
    %v2812 = vpop.f32.mrb[0].mxu0
    %v2813 = vpop.f32.mrb[0].mxu0
    %v2814 = vadd.f32 %v2461, %v2813
    %v2815 = vpop.f32.mrb[0].mxu0
    %2816 = vmatprep.mubr.bf16.mxu0 %v1923
    %2817 = vmatmul.mubr.bf16.gmra.mrb[0].mxu0 %v1922
    %v2818 = vpop.f32.mrb[0].mxu0
    %v2819 = vadd.f32 %v2466, %v2818
    %v2820 = vpop.f32.mrb[0].mxu0
    %v2821 = vpop.f32.mrb[0].mxu0
    %v2822 = vadd.f32 %v2469, %v2821
    %v2823 = vpop.f32.mrb[0].mxu0
    %2824 = vmatprep.mubr.bf16.mxu0 %v1928
    %2825 = vmatmul.mubr.bf16.gmra.mrb[0].mxu0 %v1927
    %v2826 = vpop.f32.mrb[0].mxu0
    %v2827 = vadd.f32 %v2474, %v2826
    %v2828 = vpop.f32.mrb[0].mxu0
    %v2829 = vpop.f32.mrb[0].mxu0
    %v2830 = vadd.f32 %v2477, %v2829
    %v2831 = vpop.f32.mrb[0].mxu0
    %2832 = vmatprep.mubr.bf16.mxu0 %v1933
    %2833 = vmatmul.mubr.bf16.gmra.mrb[0].mxu0 %v1932
    %v2834 = vpop.f32.mrb[0].mxu0
    %v2835 = vadd.f32 %v2482, %v2834
    %v2836 = vpop.f32.mrb[0].mxu0
    %v2837 = vpop.f32.mrb[0].mxu0
    %v2838 = vadd.f32 %v2485, %v2837
    %v2839 = vpop.f32.mrb[0].mxu0
    %2840 = vdwg.mxu0
    %2841 = vmatprep.subr.bf16.mxu0 0
    %2842 = vmatpush1.bf16.msra.mxu0 %v841
    %2843 = vmatprep.subr.bf16.mxu0 0
    %2844 = vmatpush1.bf16.msra.mxu0 %v842
    %2845 = vmatprep.subr.bf16.mxu0 0
    %2846 = vmatpush1.bf16.msra.mxu0 %v843
    %2847 = vmatprep.subr.bf16.mxu0 0
    %2848 = vmatpush1.bf16.msra.mxu0 %v844
    %2849 = vmatprep.subr.bf16.mxu0 0
    %2850 = vmatpush1.bf16.msra.mxu0 %v845
    %2851 = vmatprep.subr.bf16.mxu0 0
    %2852 = vmatpush1.bf16.msra.mxu0 %v846
    %2853 = vmatprep.subr.bf16.mxu0 0
    %2854 = vmatpush1.bf16.msra.mxu0 %v847
    %2855 = vmatprep.subr.bf16.mxu0 0
    %2856 = vmatpush1.bf16.msra.mxu0 %v848
    %2857 = vmatprep.subr.bf16.mxu0 0
    %2858 = vmatpush1.bf16.msra.mxu0 0
    %2859 = vmatprep.subr.bf16.mxu0 0
    %2860 = vmatpush1.bf16.msra.mxu0 0
    %2861 = vmatprep.subr.bf16.mxu0 0
    %2862 = vmatpush1.bf16.msra.mxu0 0
    %2863 = vmatprep.subr.bf16.mxu0 0
    %2864 = vmatpush1.bf16.msra.mxu0 0
    %2865 = vmatprep.subr.bf16.mxu0 0
    %2866 = vmatpush1.bf16.msra.mxu0 0
    %2867 = vmatprep.subr.bf16.mxu0 0
    %2868 = vmatpush1.bf16.msra.mxu0 0
    %2869 = vmatprep.subr.bf16.mxu0 0
    %2870 = vmatpush1.bf16.msra.mxu0 0
    %2871 = vmatprep.subr.bf16.mxu0 0
    %2872 = vmatpush1.bf16.msra.mxu0 0
    %2873 = vmatprep.mubr.bf16.mxu0 0
    %2874 = vmatmul.mubr.bf16.gmra.mrb[0].mxu0 %v1739
    %v2875 = vpop.f32.mrb[0].mxu0
    %v2876 = vadd.f32 %v2523, %v2875
    %v2877 = vpop.f32.mrb[0].mxu0
    %v2878 = vpop.f32.mrb[0].mxu0
    %v2879 = vadd.f32 %v2526, %v2878
    %v2880 = vpop.f32.mrb[0].mxu0
    %2881 = vmatprep.mubr.bf16.mxu0 0
    %2882 = vmatmul.mubr.bf16.gmra.mrb[0].mxu0 %v1744
    %v2883 = vpop.f32.mrb[0].mxu0
    %v2884 = vadd.f32 %v2531, %v2883
    %v2885 = vpop.f32.mrb[0].mxu0
    %v2886 = vpop.f32.mrb[0].mxu0
    %v2887 = vadd.f32 %v2534, %v2886
    %v2888 = vpop.f32.mrb[0].mxu0
    %2889 = vmatprep.mubr.bf16.mxu0 0
    %2890 = vmatmul.mubr.bf16.gmra.mrb[0].mxu0 %v1749
    %v2891 = vpop.f32.mrb[0].mxu0
    %v2892 = vadd.f32 %v2539, %v2891
    %v2893 = vpop.f32.mrb[0].mxu0
    %v2894 = vpop.f32.mrb[0].mxu0
    %v2895 = vadd.f32 %v2542, %v2894
    %v2896 = vpop.f32.mrb[0].mxu0
    %2897 = vmatprep.mubr.bf16.mxu0 0
    %2898 = vmatmul.mubr.bf16.gmra.mrb[0].mxu0 %v1754
    %v2899 = vpop.f32.mrb[0].mxu0
    %v2900 = vadd.f32 %v2547, %v2899
    %v2901 = vpop.f32.mrb[0].mxu0
    %v2902 = vpop.f32.mrb[0].mxu0
    %v2903 = vadd.f32 %v2550, %v2902
    %v2904 = vpop.f32.mrb[0].mxu0
    %2905 = vmatprep.mubr.bf16.mxu0 0
    %2906 = vmatmul.mubr.bf16.gmra.mrb[0].mxu0 %v1759
    %v2907 = vpop.f32.mrb[0].mxu0
    %v2908 = vadd.f32 %v2555, %v2907
    %v2909 = vpop.f32.mrb[0].mxu0
    %v2910 = vpop.f32.mrb[0].mxu0
    %v2911 = vadd.f32 %v2558, %v2910
    %v2912 = vpop.f32.mrb[0].mxu0
    %2913 = vmatprep.mubr.bf16.mxu0 0
    %2914 = vmatmul.mubr.bf16.gmra.mrb[0].mxu0 %v1764
    %v2915 = vpop.f32.mrb[0].mxu0
    %v2916 = vadd.f32 %v2563, %v2915
    %v2917 = vpop.f32.mrb[0].mxu0
    %v2918 = vpop.f32.mrb[0].mxu0
    %v2919 = vadd.f32 %v2566, %v2918
    %v2920 = vpop.f32.mrb[0].mxu0
    %2921 = vmatprep.mubr.bf16.mxu0 0
    %2922 = vmatmul.mubr.bf16.gmra.mrb[0].mxu0 %v1769
    %v2923 = vpop.f32.mrb[0].mxu0
    %v2924 = vadd.f32 %v2571, %v2923
    %v2925 = vpop.f32.mrb[0].mxu0
    %v2926 = vpop.f32.mrb[0].mxu0
    %v2927 = vadd.f32 %v2574, %v2926
    %v2928 = vpop.f32.mrb[0].mxu0
    %2929 = vmatprep.mubr.bf16.mxu0 0
    %2930 = vmatmul.mubr.bf16.gmra.mrb[0].mxu0 %v1774
    %v2931 = vpop.f32.mrb[0].mxu0
    %v2932 = vadd.f32 %v2579, %v2931
    %v2933 = vpop.f32.mrb[0].mxu0
    %v2934 = vpop.f32.mrb[0].mxu0
    %v2935 = vadd.f32 %v2582, %v2934
    %v2936 = vpop.f32.mrb[0].mxu0
    %2937 = vmatprep.mubr.bf16.mxu0 0
    %2938 = vmatmul.mubr.bf16.gmra.mrb[0].mxu0 %v1779
    %v2939 = vpop.f32.mrb[0].mxu0
    %v2940 = vadd.f32 %v2587, %v2939
    %v2941 = vpop.f32.mrb[0].mxu0
    %v2942 = vpop.f32.mrb[0].mxu0
    %v2943 = vadd.f32 %v2590, %v2942
    %v2944 = vpop.f32.mrb[0].mxu0
    %2945 = vmatprep.mubr.bf16.mxu0 0
    %2946 = vmatmul.mubr.bf16.gmra.mrb[0].mxu0 %v1784
    %v2947 = vpop.f32.mrb[0].mxu0
    %v2948 = vadd.f32 %v2595, %v2947
    %v2949 = vpop.f32.mrb[0].mxu0
    %v2950 = vpop.f32.mrb[0].mxu0
    %v2951 = vadd.f32 %v2598, %v2950
    %v2952 = vpop.f32.mrb[0].mxu0
    %2953 = vmatprep.mubr.bf16.mxu0 0
    %2954 = vmatmul.mubr.bf16.gmra.mrb[0].mxu0 %v1789
    %v2955 = vpop.f32.mrb[0].mxu0
    %v2956 = vadd.f32 %v2603, %v2955
    %v2957 = vpop.f32.mrb[0].mxu0
    %v2958 = vpop.f32.mrb[0].mxu0
    %v2959 = vadd.f32 %v2606, %v2958
    %v2960 = vpop.f32.mrb[0].mxu0
    %2961 = vmatprep.mubr.bf16.mxu0 0
    %2962 = vmatmul.mubr.bf16.gmra.mrb[0].mxu0 %v1794
    %v2963 = vpop.f32.mrb[0].mxu0
    %v2964 = vadd.f32 %v2611, %v2963
    %v2965 = vpop.f32.mrb[0].mxu0
    %v2966 = vpop.f32.mrb[0].mxu0
    %v2967 = vadd.f32 %v2614, %v2966
    %v2968 = vpop.f32.mrb[0].mxu0
    %2969 = vmatprep.mubr.bf16.mxu0 0
    %2970 = vmatmul.mubr.bf16.gmra.mrb[0].mxu0 %v1799
    %v2971 = vpop.f32.mrb[0].mxu0
    %v2972 = vadd.f32 %v2619, %v2971
    %v2973 = vpop.f32.mrb[0].mxu0
    %v2974 = vpop.f32.mrb[0].mxu0
    %v2975 = vadd.f32 %v2622, %v2974
    %v2976 = vpop.f32.mrb[0].mxu0
    %2977 = vmatprep.mubr.bf16.mxu0 0
    %2978 = vmatmul.mubr.bf16.gmra.mrb[0].mxu0 %v1804
    %v2979 = vpop.f32.mrb[0].mxu0
    %v2980 = vadd.f32 %v2627, %v2979
    %v2981 = vpop.f32.mrb[0].mxu0
    %v2982 = vpop.f32.mrb[0].mxu0
    %v2983 = vadd.f32 %v2630, %v2982
    %v2984 = vpop.f32.mrb[0].mxu0
    %2985 = vmatprep.mubr.bf16.mxu0 0
    %2986 = vmatmul.mubr.bf16.gmra.mrb[0].mxu0 %v1809
    %v2987 = vpop.f32.mrb[0].mxu0
    %v2988 = vadd.f32 %v2635, %v2987
    %v2989 = vpop.f32.mrb[0].mxu0
    %v2990 = vpop.f32.mrb[0].mxu0
    %v2991 = vadd.f32 %v2638, %v2990
    %v2992 = vpop.f32.mrb[0].mxu0
    %2993 = vmatprep.mubr.bf16.mxu0 0
    %2994 = vmatmul.mubr.bf16.gmra.mrb[0].mxu0 %v1814
    %v2995 = vpop.f32.mrb[0].mxu0
    %v2996 = vadd.f32 %v2643, %v2995
    %v2997 = vpop.f32.mrb[0].mxu0
    %v2998 = vpop.f32.mrb[0].mxu0
    %v2999 = vadd.f32 %v2646, %v2998
    %v3000 = vpop.f32.mrb[0].mxu0
    %3001 = vmatprep.mubr.bf16.mxu0 0
    %3002 = vmatmul.mubr.bf16.gmra.mrb[0].mxu0 %v1819
    %v3003 = vpop.f32.mrb[0].mxu0
    %v3004 = vadd.f32 %v2651, %v3003
    %v3005 = vpop.f32.mrb[0].mxu0
    %v3006 = vpop.f32.mrb[0].mxu0
    %v3007 = vadd.f32 %v2654, %v3006
    %v3008 = vpop.f32.mrb[0].mxu0
    %3009 = vmatprep.mubr.bf16.mxu0 0
    %3010 = vmatmul.mubr.bf16.gmra.mrb[0].mxu0 %v1824
    %v3011 = vpop.f32.mrb[0].mxu0
    %v3012 = vadd.f32 %v2659, %v3011
    %v3013 = vpop.f32.mrb[0].mxu0
    %v3014 = vpop.f32.mrb[0].mxu0
    %v3015 = vadd.f32 %v2662, %v3014
    %v3016 = vpop.f32.mrb[0].mxu0
    %3017 = vmatprep.mubr.bf16.mxu0 0
    %3018 = vmatmul.mubr.bf16.gmra.mrb[0].mxu0 %v1829
    %v3019 = vpop.f32.mrb[0].mxu0
    %v3020 = vadd.f32 %v2667, %v3019
    %v3021 = vpop.f32.mrb[0].mxu0
    %v3022 = vpop.f32.mrb[0].mxu0
    %v3023 = vadd.f32 %v2670, %v3022
    %v3024 = vpop.f32.mrb[0].mxu0
    %3025 = vmatprep.mubr.bf16.mxu0 0
    %3026 = vmatmul.mubr.bf16.gmra.mrb[0].mxu0 %v1834
    %v3027 = vpop.f32.mrb[0].mxu0
    %v3028 = vadd.f32 %v2675, %v3027
    %v3029 = vpop.f32.mrb[0].mxu0
    %v3030 = vpop.f32.mrb[0].mxu0
    %v3031 = vadd.f32 %v2678, %v3030
    %v3032 = vpop.f32.mrb[0].mxu0
    %3033 = vmatprep.mubr.bf16.mxu0 0
    %3034 = vmatmul.mubr.bf16.gmra.mrb[0].mxu0 %v1839
    %v3035 = vpop.f32.mrb[0].mxu0
    %v3036 = vadd.f32 %v2683, %v3035
    %v3037 = vpop.f32.mrb[0].mxu0
    %v3038 = vpop.f32.mrb[0].mxu0
    %v3039 = vadd.f32 %v2686, %v3038
    %v3040 = vpop.f32.mrb[0].mxu0
    %3041 = vmatprep.mubr.bf16.mxu0 0
    %3042 = vmatmul.mubr.bf16.gmra.mrb[0].mxu0 %v1844
    %v3043 = vpop.f32.mrb[0].mxu0
    %v3044 = vadd.f32 %v2691, %v3043
    %v3045 = vpop.f32.mrb[0].mxu0
    %v3046 = vpop.f32.mrb[0].mxu0
    %v3047 = vadd.f32 %v2694, %v3046
    %v3048 = vpop.f32.mrb[0].mxu0
    %3049 = vmatprep.mubr.bf16.mxu0 0
    %3050 = vmatmul.mubr.bf16.gmra.mrb[0].mxu0 %v1849
    %v3051 = vpop.f32.mrb[0].mxu0
    %v3052 = vadd.f32 %v2699, %v3051
    %v3053 = vpop.f32.mrb[0].mxu0
    %v3054 = vpop.f32.mrb[0].mxu0
    %v3055 = vadd.f32 %v2702, %v3054
    %v3056 = vpop.f32.mrb[0].mxu0
    %3057 = vmatprep.mubr.bf16.mxu0 0
    %3058 = vmatmul.mubr.bf16.gmra.mrb[0].mxu0 %v1854
    %v3059 = vpop.f32.mrb[0].mxu0
    %v3060 = vadd.f32 %v2707, %v3059
    %v3061 = vpop.f32.mrb[0].mxu0
    %v3062 = vpop.f32.mrb[0].mxu0
    %v3063 = vadd.f32 %v2710, %v3062
    %v3064 = vpop.f32.mrb[0].mxu0
    %3065 = vmatprep.mubr.bf16.mxu0 0
    %3066 = vmatmul.mubr.bf16.gmra.mrb[0].mxu0 %v1859
    %v3067 = vpop.f32.mrb[0].mxu0
    %v3068 = vadd.f32 %v2715, %v3067
    %v3069 = vpop.f32.mrb[0].mxu0
    %v3070 = vpop.f32.mrb[0].mxu0
    %v3071 = vadd.f32 %v2718, %v3070
    %v3072 = vpop.f32.mrb[0].mxu0
    %3073 = vmatprep.mubr.bf16.mxu0 0
    %3074 = vmatmul.mubr.bf16.gmra.mrb[0].mxu0 %v1864
    %v3075 = vpop.f32.mrb[0].mxu0
    %v3076 = vadd.f32 %v2723, %v3075
    %v3077 = vpop.f32.mrb[0].mxu0
    %v3078 = vpop.f32.mrb[0].mxu0
    %v3079 = vadd.f32 %v2726, %v3078
    %v3080 = vpop.f32.mrb[0].mxu0
    %3081 = vmatprep.mubr.bf16.mxu0 0
    %3082 = vmatmul.mubr.bf16.gmra.mrb[0].mxu0 %v1869
    %v3083 = vpop.f32.mrb[0].mxu0
    %v3084 = vadd.f32 %v2731, %v3083
    %v3085 = vpop.f32.mrb[0].mxu0
    %v3086 = vpop.f32.mrb[0].mxu0
    %v3087 = vadd.f32 %v2734, %v3086
    %v3088 = vpop.f32.mrb[0].mxu0
    %3089 = vmatprep.mubr.bf16.mxu0 0
    %3090 = vmatmul.mubr.bf16.gmra.mrb[0].mxu0 %v1874
    %v3091 = vpop.f32.mrb[0].mxu0
    %v3092 = vadd.f32 %v2739, %v3091
    %v3093 = vpop.f32.mrb[0].mxu0
    %v3094 = vpop.f32.mrb[0].mxu0
    %v3095 = vadd.f32 %v2742, %v3094
    %v3096 = vpop.f32.mrb[0].mxu0
    %3097 = vmatprep.mubr.bf16.mxu0 0
    %3098 = vmatmul.mubr.bf16.gmra.mrb[0].mxu0 %v1879
    %v3099 = vpop.f32.mrb[0].mxu0
    %v3100 = vadd.f32 %v2747, %v3099
    %v3101 = vpop.f32.mrb[0].mxu0
    %v3102 = vpop.f32.mrb[0].mxu0
    %v3103 = vadd.f32 %v2750, %v3102
    %v3104 = vpop.f32.mrb[0].mxu0
    %3105 = vmatprep.mubr.bf16.mxu0 0
    %3106 = vmatmul.mubr.bf16.gmra.mrb[0].mxu0 %v1884
    %v3107 = vpop.f32.mrb[0].mxu0
    %v3108 = vadd.f32 %v2755, %v3107
    %v3109 = vpop.f32.mrb[0].mxu0
    %v3110 = vpop.f32.mrb[0].mxu0
    %v3111 = vadd.f32 %v2758, %v3110
    %v3112 = vpop.f32.mrb[0].mxu0
    %3113 = vmatprep.mubr.bf16.mxu0 0
    %3114 = vmatmul.mubr.bf16.gmra.mrb[0].mxu0 %v1889
    %v3115 = vpop.f32.mrb[0].mxu0
    %v3116 = vadd.f32 %v2763, %v3115
    %v3117 = vpop.f32.mrb[0].mxu0
    %v3118 = vpop.f32.mrb[0].mxu0
    %v3119 = vadd.f32 %v2766, %v3118
    %v3120 = vpop.f32.mrb[0].mxu0
    %3121 = vmatprep.mubr.bf16.mxu0 0
    %3122 = vmatmul.mubr.bf16.gmra.mrb[0].mxu0 %v1894
    %v3123 = vpop.f32.mrb[0].mxu0
    %v3124 = vadd.f32 %v2771, %v3123
    %v3125 = vpop.f32.mrb[0].mxu0
    %v3126 = vpop.f32.mrb[0].mxu0
    %v3127 = vadd.f32 %v2774, %v3126
    %v3128 = vpop.f32.mrb[0].mxu0
    %3129 = vmatprep.mubr.bf16.mxu0 0
    %3130 = vmatmul.mubr.bf16.gmra.mrb[0].mxu0 %v1899
    %v3131 = vpop.f32.mrb[0].mxu0
    %v3132 = vadd.f32 %v2779, %v3131
    %v3133 = vpop.f32.mrb[0].mxu0
    %v3134 = vpop.f32.mrb[0].mxu0
    %v3135 = vadd.f32 %v2782, %v3134
    %v3136 = vpop.f32.mrb[0].mxu0
    %3137 = vmatprep.mubr.bf16.mxu0 0
    %3138 = vmatmul.mubr.bf16.gmra.mrb[0].mxu0 %v1904
    %v3139 = vpop.f32.mrb[0].mxu0
    %v3140 = vadd.f32 %v2787, %v3139
    %v3141 = vpop.f32.mrb[0].mxu0
    %v3142 = vpop.f32.mrb[0].mxu0
    %v3143 = vadd.f32 %v2790, %v3142
    %v3144 = vpop.f32.mrb[0].mxu0
    %3145 = vmatprep.mubr.bf16.mxu0 0
    %3146 = vmatmul.mubr.bf16.gmra.mrb[0].mxu0 %v1909
    %v3147 = vpop.f32.mrb[0].mxu0
    %v3148 = vadd.f32 %v2795, %v3147
    %v3149 = vpop.f32.mrb[0].mxu0
    %v3150 = vpop.f32.mrb[0].mxu0
    %v3151 = vadd.f32 %v2798, %v3150
    %v3152 = vpop.f32.mrb[0].mxu0
    %3153 = vmatprep.mubr.bf16.mxu0 0
    %3154 = vmatmul.mubr.bf16.gmra.mrb[0].mxu0 %v1914
    %v3155 = vpop.f32.mrb[0].mxu0
    %v3156 = vadd.f32 %v2803, %v3155
    %v3157 = vpop.f32.mrb[0].mxu0
    %v3158 = vpop.f32.mrb[0].mxu0
    %v3159 = vadd.f32 %v2806, %v3158
    %v3160 = vpop.f32.mrb[0].mxu0
    %3161 = vmatprep.mubr.bf16.mxu0 0
    %3162 = vmatmul.mubr.bf16.gmra.mrb[0].mxu0 %v1919
    %v3163 = vpop.f32.mrb[0].mxu0
    %v3164 = vadd.f32 %v2811, %v3163
    %v3165 = vpop.f32.mrb[0].mxu0
    %v3166 = vpop.f32.mrb[0].mxu0
    %v3167 = vadd.f32 %v2814, %v3166
    %v3168 = vpop.f32.mrb[0].mxu0
    %3169 = vmatprep.mubr.bf16.mxu0 0
    %3170 = vmatmul.mubr.bf16.gmra.mrb[0].mxu0 %v1924
    %v3171 = vpop.f32.mrb[0].mxu0
    %v3172 = vadd.f32 %v2819, %v3171
    %v3173 = vpop.f32.mrb[0].mxu0
    %v3174 = vpop.f32.mrb[0].mxu0
    %v3175 = vadd.f32 %v2822, %v3174
    %v3176 = vpop.f32.mrb[0].mxu0
    %3177 = vmatprep.mubr.bf16.mxu0 0
    %3178 = vmatmul.mubr.bf16.gmra.mrb[0].mxu0 %v1929
    %v3179 = vpop.f32.mrb[0].mxu0
    %v3180 = vadd.f32 %v2827, %v3179
    %v3181 = vpop.f32.mrb[0].mxu0
    %v3182 = vpop.f32.mrb[0].mxu0
    %v3183 = vadd.f32 %v2830, %v3182
    %v3184 = vpop.f32.mrb[0].mxu0
    %3185 = vmatprep.mubr.bf16.mxu0 0
    %3186 = vmatmul.mubr.bf16.gmra.mrb[0].mxu0 %v1934
    %v3187 = vpop.f32.mrb[0].mxu0
    %v3188 = vadd.f32 %v2835, %v3187
    %v3189 = vpop.f32.mrb[0].mxu0
    %v3190 = vpop.f32.mrb[0].mxu0
    %v3191 = vadd.f32 %v2838, %v3190
    %v3192 = vpop.f32.mrb[0].mxu0
    %3193 = vdwg.mxu0
    %vm3194 = vcmp.gt.f32.partialorder %v2876, 0.0
    %vm3195 = vcmp.gt.f32.partialorder %v2879, 0.0
    %vm3196 = vcmp.gt.f32.partialorder %v2884, 0.0
    %vm3197 = vcmp.gt.f32.partialorder %v2887, 0.0
    %vm3198 = vcmp.gt.f32.partialorder %v2892, 0.0
    %vm3199 = vcmp.gt.f32.partialorder %v2895, 0.0
    %vm3200 = vcmp.gt.f32.partialorder %v2900, 0.0
    %vm3201 = vcmp.gt.f32.partialorder %v2903, 0.0
    %vm3202 = vcmp.gt.f32.partialorder %v2908, 0.0
    %vm3203 = vcmp.gt.f32.partialorder %v2911, 0.0
    %vm3204 = vcmp.gt.f32.partialorder %v2916, 0.0
    %vm3205 = vcmp.gt.f32.partialorder %v2919, 0.0
    %vm3206 = vcmp.gt.f32.partialorder %v2924, 0.0
    %vm3207 = vcmp.gt.f32.partialorder %v2927, 0.0
    %vm3208 = vcmp.gt.f32.partialorder %v2932, 0.0
    %vm3209 = vcmp.gt.f32.partialorder %v2935, 0.0
    %vm3210 = vcmp.gt.f32.partialorder %v2940, 0.0
    %vm3211 = vcmp.gt.f32.partialorder %v2943, 0.0
    %vm3212 = vcmp.gt.f32.partialorder %v2948, 0.0
    %vm3213 = vcmp.gt.f32.partialorder %v2951, 0.0
    %vm3214 = vcmp.gt.f32.partialorder %v2956, 0.0
    %vm3215 = vcmp.gt.f32.partialorder %v2959, 0.0
    %vm3216 = vcmp.gt.f32.partialorder %v2964, 0.0
    %vm3217 = vcmp.gt.f32.partialorder %v2967, 0.0
    %vm3218 = vcmp.gt.f32.partialorder %v2972, 0.0
    %vm3219 = vcmp.gt.f32.partialorder %v2975, 0.0
    %vm3220 = vcmp.gt.f32.partialorder %v2980, 0.0
    %vm3221 = vcmp.gt.f32.partialorder %v2983, 0.0
    %vm3222 = vcmp.gt.f32.partialorder %v2988, 0.0
    %vm3223 = vcmp.gt.f32.partialorder %v2991, 0.0
    %vm3224 = vcmp.gt.f32.partialorder %v2996, 0.0
    %vm3225 = vcmp.gt.f32.partialorder %v2999, 0.0
    %vm3226 = vcmp.gt.f32.partialorder %v3004, 0.0
    %vm3227 = vcmp.gt.f32.partialorder %v3007, 0.0
    %vm3228 = vcmp.gt.f32.partialorder %v3012, 0.0
    %vm3229 = vcmp.gt.f32.partialorder %v3015, 0.0
    %vm3230 = vcmp.gt.f32.partialorder %v3020, 0.0
    %vm3231 = vcmp.gt.f32.partialorder %v3023, 0.0
    %vm3232 = vcmp.gt.f32.partialorder %v3028, 0.0
    %vm3233 = vcmp.gt.f32.partialorder %v3031, 0.0
    %vm3234 = vcmp.gt.f32.partialorder %v3036, 0.0
    %vm3235 = vcmp.gt.f32.partialorder %v3039, 0.0
    %vm3236 = vcmp.gt.f32.partialorder %v3044, 0.0
    %vm3237 = vcmp.gt.f32.partialorder %v3047, 0.0
    %vm3238 = vcmp.gt.f32.partialorder %v3052, 0.0
    %vm3239 = vcmp.gt.f32.partialorder %v3055, 0.0
    %vm3240 = vcmp.gt.f32.partialorder %v3060, 0.0
    %vm3241 = vcmp.gt.f32.partialorder %v3063, 0.0
    %vm3242 = vcmp.gt.f32.partialorder %v3068, 0.0
    %vm3243 = vcmp.gt.f32.partialorder %v3071, 0.0
    %vm3244 = vcmp.gt.f32.partialorder %v3076, 0.0
    %vm3245 = vcmp.gt.f32.partialorder %v3079, 0.0
    %vm3246 = vcmp.gt.f32.partialorder %v3084, 0.0
    %vm3247 = vcmp.gt.f32.partialorder %v3087, 0.0
    %vm3248 = vcmp.gt.f32.partialorder %v3092, 0.0
    %vm3249 = vcmp.gt.f32.partialorder %v3095, 0.0
    %vm3250 = vcmp.gt.f32.partialorder %v3100, 0.0
    %vm3251 = vcmp.gt.f32.partialorder %v3103, 0.0
    %vm3252 = vcmp.gt.f32.partialorder %v3108, 0.0
    %vm3253 = vcmp.gt.f32.partialorder %v3111, 0.0
    %vm3254 = vcmp.gt.f32.partialorder %v3116, 0.0
    %vm3255 = vcmp.gt.f32.partialorder %v3119, 0.0
    %vm3256 = vcmp.gt.f32.partialorder %v3124, 0.0
    %vm3257 = vcmp.gt.f32.partialorder %v3127, 0.0
    %vm3258 = vcmp.gt.f32.partialorder %v3132, 0.0
    %vm3259 = vcmp.gt.f32.partialorder %v3135, 0.0
    %vm3260 = vcmp.gt.f32.partialorder %v3140, 0.0
    %vm3261 = vcmp.gt.f32.partialorder %v3143, 0.0
    %vm3262 = vcmp.gt.f32.partialorder %v3148, 0.0
    %vm3263 = vcmp.gt.f32.partialorder %v3151, 0.0
    %vm3264 = vcmp.gt.f32.partialorder %v3156, 0.0
    %vm3265 = vcmp.gt.f32.partialorder %v3159, 0.0
    %vm3266 = vcmp.gt.f32.partialorder %v3164, 0.0
    %vm3267 = vcmp.gt.f32.partialorder %v3167, 0.0
    %vm3268 = vcmp.gt.f32.partialorder %v3172, 0.0
    %vm3269 = vcmp.gt.f32.partialorder %v3175, 0.0
    %vm3270 = vcmp.gt.f32.partialorder %v3180, 0.0
    %vm3271 = vcmp.gt.f32.partialorder %v3183, 0.0
    %vm3272 = vcmp.gt.f32.partialorder %v3188, 0.0
    %vm3273 = vcmp.gt.f32.partialorder %v3191, 0.0
    %v3274 = vmul.f32 %v2876, 0.01
    %v3275 = vmul.f32 %v2879, 0.01
    %v3276 = vmul.f32 %v2884, 0.01
    %v3277 = vmul.f32 %v2887, 0.01
    %v3278 = vmul.f32 %v2892, 0.01
    %v3279 = vmul.f32 %v2895, 0.01
    %v3280 = vmul.f32 %v2900, 0.01
    %v3281 = vmul.f32 %v2903, 0.01
    %v3282 = vmul.f32 %v2908, 0.01
    %v3283 = vmul.f32 %v2911, 0.01
    %v3284 = vmul.f32 %v2916, 0.01
    %v3285 = vmul.f32 %v2919, 0.01
    %v3286 = vmul.f32 %v2924, 0.01
    %v3287 = vmul.f32 %v2927, 0.01
    %v3288 = vmul.f32 %v2932, 0.01
    %v3289 = vmul.f32 %v2935, 0.01
    %v3290 = vmul.f32 %v2940, 0.01
    %v3291 = vmul.f32 %v2943, 0.01
    %v3292 = vmul.f32 %v2948, 0.01
    %v3293 = vmul.f32 %v2951, 0.01
    %v3294 = vmul.f32 %v2956, 0.01
    %v3295 = vmul.f32 %v2959, 0.01
    %v3296 = vmul.f32 %v2964, 0.01
    %v3297 = vmul.f32 %v2967, 0.01
    %v3298 = vmul.f32 %v2972, 0.01
    %v3299 = vmul.f32 %v2975, 0.01
    %v3300 = vmul.f32 %v2980, 0.01
    %v3301 = vmul.f32 %v2983, 0.01
    %v3302 = vmul.f32 %v2988, 0.01
    %v3303 = vmul.f32 %v2991, 0.01
    %v3304 = vmul.f32 %v2996, 0.01
    %v3305 = vmul.f32 %v2999, 0.01
    %v3306 = vmul.f32 %v3004, 0.01
    %v3307 = vmul.f32 %v3007, 0.01
    %v3308 = vmul.f32 %v3012, 0.01
    %v3309 = vmul.f32 %v3015, 0.01
    %v3310 = vmul.f32 %v3020, 0.01
    %v3311 = vmul.f32 %v3023, 0.01
    %v3312 = vmul.f32 %v3028, 0.01
    %v3313 = vmul.f32 %v3031, 0.01
    %v3314 = vmul.f32 %v3036, 0.01
    %v3315 = vmul.f32 %v3039, 0.01
    %v3316 = vmul.f32 %v3044, 0.01
    %v3317 = vmul.f32 %v3047, 0.01
    %v3318 = vmul.f32 %v3052, 0.01
    %v3319 = vmul.f32 %v3055, 0.01
    %v3320 = vmul.f32 %v3060, 0.01
    %v3321 = vmul.f32 %v3063, 0.01
    %v3322 = vmul.f32 %v3068, 0.01
    %v3323 = vmul.f32 %v3071, 0.01
    %v3324 = vmul.f32 %v3076, 0.01
    %v3325 = vmul.f32 %v3079, 0.01
    %v3326 = vmul.f32 %v3084, 0.01
    %v3327 = vmul.f32 %v3087, 0.01
    %v3328 = vmul.f32 %v3092, 0.01
    %v3329 = vmul.f32 %v3095, 0.01
    %v3330 = vmul.f32 %v3100, 0.01
    %v3331 = vmul.f32 %v3103, 0.01
    %v3332 = vmul.f32 %v3108, 0.01
    %v3333 = vmul.f32 %v3111, 0.01
    %v3334 = vmul.f32 %v3116, 0.01
    %v3335 = vmul.f32 %v3119, 0.01
    %v3336 = vmul.f32 %v3124, 0.01
    %v3337 = vmul.f32 %v3127, 0.01
    %v3338 = vmul.f32 %v3132, 0.01
    %v3339 = vmul.f32 %v3135, 0.01
    %v3340 = vmul.f32 %v3140, 0.01
    %v3341 = vmul.f32 %v3143, 0.01
    %v3342 = vmul.f32 %v3148, 0.01
    %v3343 = vmul.f32 %v3151, 0.01
    %v3344 = vmul.f32 %v3156, 0.01
    %v3345 = vmul.f32 %v3159, 0.01
    %v3346 = vmul.f32 %v3164, 0.01
    %v3347 = vmul.f32 %v3167, 0.01
    %v3348 = vmul.f32 %v3172, 0.01
    %v3349 = vmul.f32 %v3175, 0.01
    %v3350 = vmul.f32 %v3180, 0.01
    %v3351 = vmul.f32 %v3183, 0.01
    %v3352 = vmul.f32 %v3188, 0.01
    %v3353 = vmul.f32 %v3191, 0.01
    %v3354 = vsel %vm3194, %v2876, %v3274
    %v3355 = vsel %vm3195, %v2879, %v3275
    %v3356 = vsel %vm3196, %v2884, %v3276
    %v3357 = vsel %vm3197, %v2887, %v3277
    %v3358 = vsel %vm3198, %v2892, %v3278
    %v3359 = vsel %vm3199, %v2895, %v3279
    %v3360 = vsel %vm3200, %v2900, %v3280
    %v3361 = vsel %vm3201, %v2903, %v3281
    %v3362 = vsel %vm3202, %v2908, %v3282
    %v3363 = vsel %vm3203, %v2911, %v3283
    %v3364 = vsel %vm3204, %v2916, %v3284
    %v3365 = vsel %vm3205, %v2919, %v3285
    %v3366 = vsel %vm3206, %v2924, %v3286
    %v3367 = vsel %vm3207, %v2927, %v3287
    %v3368 = vsel %vm3208, %v2932, %v3288
    %v3369 = vsel %vm3209, %v2935, %v3289
    %v3370 = vsel %vm3210, %v2940, %v3290
    %v3371 = vsel %vm3211, %v2943, %v3291
    %v3372 = vsel %vm3212, %v2948, %v3292
    %v3373 = vsel %vm3213, %v2951, %v3293
    %v3374 = vsel %vm3214, %v2956, %v3294
    %v3375 = vsel %vm3215, %v2959, %v3295
    %v3376 = vsel %vm3216, %v2964, %v3296
    %v3377 = vsel %vm3217, %v2967, %v3297
    %v3378 = vsel %vm3218, %v2972, %v3298
    %v3379 = vsel %vm3219, %v2975, %v3299
    %v3380 = vsel %vm3220, %v2980, %v3300
    %v3381 = vsel %vm3221, %v2983, %v3301
    %v3382 = vsel %vm3222, %v2988, %v3302
    %v3383 = vsel %vm3223, %v2991, %v3303
    %v3384 = vsel %vm3224, %v2996, %v3304
    %v3385 = vsel %vm3225, %v2999, %v3305
    %v3386 = vsel %vm3226, %v3004, %v3306
    %v3387 = vsel %vm3227, %v3007, %v3307
    %v3388 = vsel %vm3228, %v3012, %v3308
    %v3389 = vsel %vm3229, %v3015, %v3309
    %v3390 = vsel %vm3230, %v3020, %v3310
    %v3391 = vsel %vm3231, %v3023, %v3311
    %v3392 = vsel %vm3232, %v3028, %v3312
    %v3393 = vsel %vm3233, %v3031, %v3313
    %v3394 = vsel %vm3234, %v3036, %v3314
    %v3395 = vsel %vm3235, %v3039, %v3315
    %v3396 = vsel %vm3236, %v3044, %v3316
    %v3397 = vsel %vm3237, %v3047, %v3317
    %v3398 = vsel %vm3238, %v3052, %v3318
    %v3399 = vsel %vm3239, %v3055, %v3319
    %v3400 = vsel %vm3240, %v3060, %v3320
    %v3401 = vsel %vm3241, %v3063, %v3321
    %v3402 = vsel %vm3242, %v3068, %v3322
    %v3403 = vsel %vm3243, %v3071, %v3323
    %v3404 = vsel %vm3244, %v3076, %v3324
    %v3405 = vsel %vm3245, %v3079, %v3325
    %v3406 = vsel %vm3246, %v3084, %v3326
    %v3407 = vsel %vm3247, %v3087, %v3327
    %v3408 = vsel %vm3248, %v3092, %v3328
    %v3409 = vsel %vm3249, %v3095, %v3329
    %v3410 = vsel %vm3250, %v3100, %v3330
    %v3411 = vsel %vm3251, %v3103, %v3331
    %v3412 = vsel %vm3252, %v3108, %v3332
    %v3413 = vsel %vm3253, %v3111, %v3333
    %v3414 = vsel %vm3254, %v3116, %v3334
    %v3415 = vsel %vm3255, %v3119, %v3335
    %v3416 = vsel %vm3256, %v3124, %v3336
    %v3417 = vsel %vm3257, %v3127, %v3337
    %v3418 = vsel %vm3258, %v3132, %v3338
    %v3419 = vsel %vm3259, %v3135, %v3339
    %v3420 = vsel %vm3260, %v3140, %v3340
    %v3421 = vsel %vm3261, %v3143, %v3341
    %v3422 = vsel %vm3262, %v3148, %v3342
    %v3423 = vsel %vm3263, %v3151, %v3343
    %v3424 = vsel %vm3264, %v3156, %v3344
    %v3425 = vsel %vm3265, %v3159, %v3345
    %v3426 = vsel %vm3266, %v3164, %v3346
    %v3427 = vsel %vm3267, %v3167, %v3347
    %v3428 = vsel %vm3268, %v3172, %v3348
    %v3429 = vsel %vm3269, %v3175, %v3349
    %v3430 = vsel %vm3270, %v3180, %v3350
    %v3431 = vsel %vm3271, %v3183, %v3351
    %v3432 = vsel %vm3272, %v3188, %v3352
    %v3433 = vsel %vm3273, %v3191, %v3353
    %v3434 = vpack.c.bf16 %v3355, %v3354
    %v3435 = vpack.c.bf16 %v3357, %v3356
    %v3436 = vpack.c.bf16 %v3359, %v3358
    %v3437 = vpack.c.bf16 %v3361, %v3360
    %v3438 = vpack.c.bf16 %v3363, %v3362
    %v3439 = vpack.c.bf16 %v3365, %v3364
    %v3440 = vpack.c.bf16 %v3367, %v3366
    %v3441 = vpack.c.bf16 %v3369, %v3368
    %v3442 = vpack.c.bf16 %v3371, %v3370
    %v3443 = vpack.c.bf16 %v3373, %v3372
    %v3444 = vpack.c.bf16 %v3375, %v3374
    %v3445 = vpack.c.bf16 %v3377, %v3376
    %v3446 = vpack.c.bf16 %v3379, %v3378
    %v3447 = vpack.c.bf16 %v3381, %v3380
    %v3448 = vpack.c.bf16 %v3383, %v3382
    %v3449 = vpack.c.bf16 %v3385, %v3384
    %v3450 = vpack.c.bf16 %v3387, %v3386
    %v3451 = vpack.c.bf16 %v3389, %v3388
    %v3452 = vpack.c.bf16 %v3391, %v3390
    %v3453 = vpack.c.bf16 %v3393, %v3392
    %v3454 = vpack.c.bf16 %v3395, %v3394
    %v3455 = vpack.c.bf16 %v3397, %v3396
    %v3456 = vpack.c.bf16 %v3399, %v3398
    %v3457 = vpack.c.bf16 %v3401, %v3400
    %v3458 = vpack.c.bf16 %v3403, %v3402
    %v3459 = vpack.c.bf16 %v3405, %v3404
    %v3460 = vpack.c.bf16 %v3407, %v3406
    %v3461 = vpack.c.bf16 %v3409, %v3408
    %v3462 = vpack.c.bf16 %v3411, %v3410
    %v3463 = vpack.c.bf16 %v3413, %v3412
    %v3464 = vpack.c.bf16 %v3415, %v3414
    %v3465 = vpack.c.bf16 %v3417, %v3416
    %v3466 = vpack.c.bf16 %v3419, %v3418
    %v3467 = vpack.c.bf16 %v3421, %v3420
    %v3468 = vpack.c.bf16 %v3423, %v3422
    %v3469 = vpack.c.bf16 %v3425, %v3424
    %v3470 = vpack.c.bf16 %v3427, %v3426
    %v3471 = vpack.c.bf16 %v3429, %v3428
    %v3472 = vpack.c.bf16 %v3431, %v3430
    %v3473 = vpack.c.bf16 %v3433, %v3432
    %v3474 = vld [vmem:[%s4] sm:$0xf]
    %v3475 = vld [vmem:[%s4 + $0x4] sm:$0xf]
    %v3476 = vld [vmem:[%s4 + $0x8] sm:$0xf]
    %v3477 = vld [vmem:[%s4 + $0xc] sm:$0xf]
    %v3478 = vld [vmem:[%s4 + $0x10] sm:$0xf]
    %v3479 = vld [vmem:[%s4 + $0x14] sm:$0xf]
    %v3480 = vld [vmem:[%s4 + $0x18] sm:$0xf]
    %v3481 = vld [vmem:[%s4 + $0x1c] sm:$0xf]
    %v3482 = vld [vmem:[%s5] sm:$0x1]
    %v3491 = vunpack.c.l.b16 %v3474
    %v3492 = vunpack.c.l.b16 %v3475
    %v3493 = vunpack.c.l.b16 %v3476
    %v3494 = vunpack.c.l.b16 %v3477
    %v3495 = vunpack.c.l.b16 %v3478
    %v3496 = vunpack.c.l.b16 %v3479
    %v3497 = vunpack.c.l.b16 %v3480
    %v3498 = vunpack.c.l.b16 %v3481
    %v3499 = vpack.c.b16 %v3492, %v3491
    %v3500 = vpack.c.b16 %v3494, %v3493
    %v3501 = vpack.c.b16 %v3496, %v3495
    %v3502 = vpack.c.b16 %v3498, %v3497
    %vm3507 = vcmask 523264
    %v3509 = vsel %vm3507, %v3434, 0
    %v3512 = vsel %vm3507, %v3435, 0
    %v3515 = vsel %vm3507, %v3436, 0
    %v3518 = vsel %vm3507, %v3437, 0
    %v3521 = vsel %vm3507, %v3438, 0
    %v3524 = vsel %vm3507, %v3439, 0
    %v3527 = vsel %vm3507, %v3440, 0
    %v3530 = vsel %vm3507, %v3441, 0
    %v3533 = vsel %vm3507, %v3442, 0
    %v3536 = vsel %vm3507, %v3443, 0
    %v3539 = vsel %vm3507, %v3444, 0
    %v3542 = vsel %vm3507, %v3445, 0
    %v3545 = vsel %vm3507, %v3446, 0
    %v3548 = vsel %vm3507, %v3447, 0
    %v3551 = vsel %vm3507, %v3448, 0
    %v3554 = vsel %vm3507, %v3449, 0
    %v3557 = vsel %vm3507, %v3450, 0
    %v3560 = vsel %vm3507, %v3451, 0
    %v3563 = vsel %vm3507, %v3452, 0
    %v3566 = vsel %vm3507, %v3453, 0
    %v3569 = vsel %vm3507, %v3454, 0
    %v3572 = vsel %vm3507, %v3455, 0
    %v3575 = vsel %vm3507, %v3456, 0
    %v3578 = vsel %vm3507, %v3457, 0
    %v3581 = vsel %vm3507, %v3458, 0
    %v3584 = vsel %vm3507, %v3459, 0
    %v3587 = vsel %vm3507, %v3460, 0
    %v3590 = vsel %vm3507, %v3461, 0
    %v3593 = vsel %vm3507, %v3462, 0
    %v3596 = vsel %vm3507, %v3463, 0
    %v3599 = vsel %vm3507, %v3464, 0
    %v3602 = vsel %vm3507, %v3465, 0
    %v3605 = vsel %vm3507, %v3466, 0
    %v3608 = vsel %vm3507, %v3467, 0
    %v3611 = vsel %vm3507, %v3468, 0
    %v3614 = vsel %vm3507, %v3469, 0
    %v3617 = vsel %vm3507, %v3470, 0
    %v3620 = vsel %vm3507, %v3471, 0
    %v3623 = vsel %vm3507, %v3472, 0
    %v3626 = vsel %vm3507, %v3473, 0
    %3628 = vmatprep.subr.bf16.mxu0 0
    %3629 = vmatpush1.bf16.msra.mxu0 %v3499
    %3630 = vmatprep.subr.bf16.mxu0 0
    %3631 = vmatpush1.bf16.msra.mxu0 %v3500
    %3632 = vmatprep.subr.bf16.mxu0 0
    %3633 = vmatpush1.bf16.msra.mxu0 %v3501
    %3634 = vmatprep.subr.bf16.mxu0 0
    %3635 = vmatpush1.bf16.msra.mxu0 %v3502
    %3636 = vmatprep.subr.bf16.mxu0 0
    %3637 = vmatpush1.bf16.msra.mxu0 0
    %3638 = vmatprep.subr.bf16.mxu0 0
    %3639 = vmatpush1.bf16.msra.mxu0 0
    %3640 = vmatprep.subr.bf16.mxu0 0
    %3641 = vmatpush1.bf16.msra.mxu0 0
    %3642 = vmatprep.subr.bf16.mxu0 0
    %3643 = vmatpush1.bf16.msra.mxu0 0
    %3644 = vmatprep.subr.bf16.mxu0 0
    %3645 = vmatpush1.bf16.msra.mxu0 0
    %3646 = vmatprep.subr.bf16.mxu0 0
    %3647 = vmatpush1.bf16.msra.mxu0 0
    %3648 = vmatprep.subr.bf16.mxu0 0
    %3649 = vmatpush1.bf16.msra.mxu0 0
    %3650 = vmatprep.subr.bf16.mxu0 0
    %3651 = vmatpush1.bf16.msra.mxu0 0
    %3652 = vmatprep.subr.bf16.mxu0 0
    %3653 = vmatpush1.bf16.msra.mxu0 0
    %3654 = vmatprep.subr.bf16.mxu0 0
    %3655 = vmatpush1.bf16.msra.mxu0 0
    %3656 = vmatprep.subr.bf16.mxu0 0
    %3657 = vmatpush1.bf16.msra.mxu0 0
    %3658 = vmatprep.subr.bf16.mxu0 0
    %3659 = vmatpush1.bf16.msra.mxu0 0
    %3660 = vmatprep.mubr.bf16.mxu0 0
    %3661 = vmatmul.mubr.bf16.gmra.mrb[0].mxu0 %v3509
    %v3662 = vpop.f32.mrb[0].mxu0
    %v3663 = vadd.f32 0.0, %v3662
    %v3664 = vpop.f32.mrb[0].mxu0
    %v3665 = vpop.f32.mrb[0].mxu0
    %v3666 = vadd.f32 0.0, %v3665
    %v3667 = vpop.f32.mrb[0].mxu0
    %3668 = vmatprep.mubr.bf16.mxu0 0
    %3669 = vmatmul.mubr.bf16.gmra.mrb[0].mxu0 %v3512
    %v3670 = vpop.f32.mrb[0].mxu0
    %v3671 = vadd.f32 0.0, %v3670
    %v3672 = vpop.f32.mrb[0].mxu0
    %v3673 = vpop.f32.mrb[0].mxu0
    %v3674 = vadd.f32 0.0, %v3673
    %v3675 = vpop.f32.mrb[0].mxu0
    %3676 = vmatprep.mubr.bf16.mxu0 0
    %3677 = vmatmul.mubr.bf16.gmra.mrb[0].mxu0 %v3515
    %v3678 = vpop.f32.mrb[0].mxu0
    %v3679 = vadd.f32 0.0, %v3678
    %v3680 = vpop.f32.mrb[0].mxu0
    %v3681 = vpop.f32.mrb[0].mxu0
    %v3682 = vadd.f32 0.0, %v3681
    %v3683 = vpop.f32.mrb[0].mxu0
    %3684 = vmatprep.mubr.bf16.mxu0 0
    %3685 = vmatmul.mubr.bf16.gmra.mrb[0].mxu0 %v3518
    %v3686 = vpop.f32.mrb[0].mxu0
    %v3687 = vadd.f32 0.0, %v3686
    %v3688 = vpop.f32.mrb[0].mxu0
    %v3689 = vpop.f32.mrb[0].mxu0
    %v3690 = vadd.f32 0.0, %v3689
    %v3691 = vpop.f32.mrb[0].mxu0
    %3692 = vmatprep.mubr.bf16.mxu0 0
    %3693 = vmatmul.mubr.bf16.gmra.mrb[0].mxu0 %v3521
    %v3694 = vpop.f32.mrb[0].mxu0
    %v3695 = vadd.f32 0.0, %v3694
    %v3696 = vpop.f32.mrb[0].mxu0
    %v3697 = vpop.f32.mrb[0].mxu0
    %v3698 = vadd.f32 0.0, %v3697
    %v3699 = vpop.f32.mrb[0].mxu0
    %3700 = vmatprep.mubr.bf16.mxu0 0
    %3701 = vmatmul.mubr.bf16.gmra.mrb[0].mxu0 %v3524
    %v3702 = vpop.f32.mrb[0].mxu0
    %v3703 = vadd.f32 0.0, %v3702
    %v3704 = vpop.f32.mrb[0].mxu0
    %v3705 = vpop.f32.mrb[0].mxu0
    %v3706 = vadd.f32 0.0, %v3705
    %v3707 = vpop.f32.mrb[0].mxu0
    %3708 = vmatprep.mubr.bf16.mxu0 0
    %3709 = vmatmul.mubr.bf16.gmra.mrb[0].mxu0 %v3527
    %v3710 = vpop.f32.mrb[0].mxu0
    %v3711 = vadd.f32 0.0, %v3710
    %v3712 = vpop.f32.mrb[0].mxu0
    %v3713 = vpop.f32.mrb[0].mxu0
    %v3714 = vadd.f32 0.0, %v3713
    %v3715 = vpop.f32.mrb[0].mxu0
    %3716 = vmatprep.mubr.bf16.mxu0 0
    %3717 = vmatmul.mubr.bf16.gmra.mrb[0].mxu0 %v3530
    %v3718 = vpop.f32.mrb[0].mxu0
    %v3719 = vadd.f32 0.0, %v3718
    %v3720 = vpop.f32.mrb[0].mxu0
    %v3721 = vpop.f32.mrb[0].mxu0
    %v3722 = vadd.f32 0.0, %v3721
    %v3723 = vpop.f32.mrb[0].mxu0
    %3724 = vmatprep.mubr.bf16.mxu0 0
    %3725 = vmatmul.mubr.bf16.gmra.mrb[0].mxu0 %v3533
    %v3726 = vpop.f32.mrb[0].mxu0
    %v3727 = vadd.f32 0.0, %v3726
    %v3728 = vpop.f32.mrb[0].mxu0
    %v3729 = vpop.f32.mrb[0].mxu0
    %v3730 = vadd.f32 0.0, %v3729
    %v3731 = vpop.f32.mrb[0].mxu0
    %3732 = vmatprep.mubr.bf16.mxu0 0
    %3733 = vmatmul.mubr.bf16.gmra.mrb[0].mxu0 %v3536
    %v3734 = vpop.f32.mrb[0].mxu0
    %v3735 = vadd.f32 0.0, %v3734
    %v3736 = vpop.f32.mrb[0].mxu0
    %v3737 = vpop.f32.mrb[0].mxu0
    %v3738 = vadd.f32 0.0, %v3737
    %v3739 = vpop.f32.mrb[0].mxu0
    %3740 = vmatprep.mubr.bf16.mxu0 0
    %3741 = vmatmul.mubr.bf16.gmra.mrb[0].mxu0 %v3539
    %v3742 = vpop.f32.mrb[0].mxu0
    %v3743 = vadd.f32 0.0, %v3742
    %v3744 = vpop.f32.mrb[0].mxu0
    %v3745 = vpop.f32.mrb[0].mxu0
    %v3746 = vadd.f32 0.0, %v3745
    %v3747 = vpop.f32.mrb[0].mxu0
    %3748 = vmatprep.mubr.bf16.mxu0 0
    %3749 = vmatmul.mubr.bf16.gmra.mrb[0].mxu0 %v3542
    %v3750 = vpop.f32.mrb[0].mxu0
    %v3751 = vadd.f32 0.0, %v3750
    %v3752 = vpop.f32.mrb[0].mxu0
    %v3753 = vpop.f32.mrb[0].mxu0
    %v3754 = vadd.f32 0.0, %v3753
    %v3755 = vpop.f32.mrb[0].mxu0
    %3756 = vmatprep.mubr.bf16.mxu0 0
    %3757 = vmatmul.mubr.bf16.gmra.mrb[0].mxu0 %v3545
    %v3758 = vpop.f32.mrb[0].mxu0
    %v3759 = vadd.f32 0.0, %v3758
    %v3760 = vpop.f32.mrb[0].mxu0
    %v3761 = vpop.f32.mrb[0].mxu0
    %v3762 = vadd.f32 0.0, %v3761
    %v3763 = vpop.f32.mrb[0].mxu0
    %3764 = vmatprep.mubr.bf16.mxu0 0
    %3765 = vmatmul.mubr.bf16.gmra.mrb[0].mxu0 %v3548
    %v3766 = vpop.f32.mrb[0].mxu0
    %v3767 = vadd.f32 0.0, %v3766
    %v3768 = vpop.f32.mrb[0].mxu0
    %v3769 = vpop.f32.mrb[0].mxu0
    %v3770 = vadd.f32 0.0, %v3769
    %v3771 = vpop.f32.mrb[0].mxu0
    %3772 = vmatprep.mubr.bf16.mxu0 0
    %3773 = vmatmul.mubr.bf16.gmra.mrb[0].mxu0 %v3551
    %v3774 = vpop.f32.mrb[0].mxu0
    %v3775 = vadd.f32 0.0, %v3774
    %v3776 = vpop.f32.mrb[0].mxu0
    %v3777 = vpop.f32.mrb[0].mxu0
    %v3778 = vadd.f32 0.0, %v3777
    %v3779 = vpop.f32.mrb[0].mxu0
    %3780 = vmatprep.mubr.bf16.mxu0 0
    %3781 = vmatmul.mubr.bf16.gmra.mrb[0].mxu0 %v3554
    %v3782 = vpop.f32.mrb[0].mxu0
    %v3783 = vadd.f32 0.0, %v3782
    %v3784 = vpop.f32.mrb[0].mxu0
    %v3785 = vpop.f32.mrb[0].mxu0
    %v3786 = vadd.f32 0.0, %v3785
    %v3787 = vpop.f32.mrb[0].mxu0
    %3788 = vmatprep.mubr.bf16.mxu0 0
    %3789 = vmatmul.mubr.bf16.gmra.mrb[0].mxu0 %v3557
    %v3790 = vpop.f32.mrb[0].mxu0
    %v3791 = vadd.f32 0.0, %v3790
    %v3792 = vpop.f32.mrb[0].mxu0
    %v3793 = vpop.f32.mrb[0].mxu0
    %v3794 = vadd.f32 0.0, %v3793
    %v3795 = vpop.f32.mrb[0].mxu0
    %3796 = vmatprep.mubr.bf16.mxu0 0
    %3797 = vmatmul.mubr.bf16.gmra.mrb[0].mxu0 %v3560
    %v3798 = vpop.f32.mrb[0].mxu0
    %v3799 = vadd.f32 0.0, %v3798
    %v3800 = vpop.f32.mrb[0].mxu0
    %v3801 = vpop.f32.mrb[0].mxu0
    %v3802 = vadd.f32 0.0, %v3801
    %v3803 = vpop.f32.mrb[0].mxu0
    %3804 = vmatprep.mubr.bf16.mxu0 0
    %3805 = vmatmul.mubr.bf16.gmra.mrb[0].mxu0 %v3563
    %v3806 = vpop.f32.mrb[0].mxu0
    %v3807 = vadd.f32 0.0, %v3806
    %v3808 = vpop.f32.mrb[0].mxu0
    %v3809 = vpop.f32.mrb[0].mxu0
    %v3810 = vadd.f32 0.0, %v3809
    %v3811 = vpop.f32.mrb[0].mxu0
    %3812 = vmatprep.mubr.bf16.mxu0 0
    %3813 = vmatmul.mubr.bf16.gmra.mrb[0].mxu0 %v3566
    %v3814 = vpop.f32.mrb[0].mxu0
    %v3815 = vadd.f32 0.0, %v3814
    %v3816 = vpop.f32.mrb[0].mxu0
    %v3817 = vpop.f32.mrb[0].mxu0
    %v3818 = vadd.f32 0.0, %v3817
    %v3819 = vpop.f32.mrb[0].mxu0
    %3820 = vmatprep.mubr.bf16.mxu0 0
    %3821 = vmatmul.mubr.bf16.gmra.mrb[0].mxu0 %v3569
    %v3822 = vpop.f32.mrb[0].mxu0
    %v3823 = vadd.f32 0.0, %v3822
    %v3824 = vpop.f32.mrb[0].mxu0
    %v3825 = vpop.f32.mrb[0].mxu0
    %v3826 = vadd.f32 0.0, %v3825
    %v3827 = vpop.f32.mrb[0].mxu0
    %3828 = vmatprep.mubr.bf16.mxu0 0
    %3829 = vmatmul.mubr.bf16.gmra.mrb[0].mxu0 %v3572
    %v3830 = vpop.f32.mrb[0].mxu0
    %v3831 = vadd.f32 0.0, %v3830
    %v3832 = vpop.f32.mrb[0].mxu0
    %v3833 = vpop.f32.mrb[0].mxu0
    %v3834 = vadd.f32 0.0, %v3833
    %v3835 = vpop.f32.mrb[0].mxu0
    %3836 = vmatprep.mubr.bf16.mxu0 0
    %3837 = vmatmul.mubr.bf16.gmra.mrb[0].mxu0 %v3575
    %v3838 = vpop.f32.mrb[0].mxu0
    %v3839 = vadd.f32 0.0, %v3838
    %v3840 = vpop.f32.mrb[0].mxu0
    %v3841 = vpop.f32.mrb[0].mxu0
    %v3842 = vadd.f32 0.0, %v3841
    %v3843 = vpop.f32.mrb[0].mxu0
    %3844 = vmatprep.mubr.bf16.mxu0 0
    %3845 = vmatmul.mubr.bf16.gmra.mrb[0].mxu0 %v3578
    %v3846 = vpop.f32.mrb[0].mxu0
    %v3847 = vadd.f32 0.0, %v3846
    %v3848 = vpop.f32.mrb[0].mxu0
    %v3849 = vpop.f32.mrb[0].mxu0
    %v3850 = vadd.f32 0.0, %v3849
    %v3851 = vpop.f32.mrb[0].mxu0
    %3852 = vmatprep.mubr.bf16.mxu0 0
    %3853 = vmatmul.mubr.bf16.gmra.mrb[0].mxu0 %v3581
    %v3854 = vpop.f32.mrb[0].mxu0
    %v3855 = vadd.f32 0.0, %v3854
    %v3856 = vpop.f32.mrb[0].mxu0
    %v3857 = vpop.f32.mrb[0].mxu0
    %v3858 = vadd.f32 0.0, %v3857
    %v3859 = vpop.f32.mrb[0].mxu0
    %3860 = vmatprep.mubr.bf16.mxu0 0
    %3861 = vmatmul.mubr.bf16.gmra.mrb[0].mxu0 %v3584
    %v3862 = vpop.f32.mrb[0].mxu0
    %v3863 = vadd.f32 0.0, %v3862
    %v3864 = vpop.f32.mrb[0].mxu0
    %v3865 = vpop.f32.mrb[0].mxu0
    %v3866 = vadd.f32 0.0, %v3865
    %v3867 = vpop.f32.mrb[0].mxu0
    %3868 = vmatprep.mubr.bf16.mxu0 0
    %3869 = vmatmul.mubr.bf16.gmra.mrb[0].mxu0 %v3587
    %v3870 = vpop.f32.mrb[0].mxu0
    %v3871 = vadd.f32 0.0, %v3870
    %v3872 = vpop.f32.mrb[0].mxu0
    %v3873 = vpop.f32.mrb[0].mxu0
    %v3874 = vadd.f32 0.0, %v3873
    %v3875 = vpop.f32.mrb[0].mxu0
    %3876 = vmatprep.mubr.bf16.mxu0 0
    %3877 = vmatmul.mubr.bf16.gmra.mrb[0].mxu0 %v3590
    %v3878 = vpop.f32.mrb[0].mxu0
    %v3879 = vadd.f32 0.0, %v3878
    %v3880 = vpop.f32.mrb[0].mxu0
    %v3881 = vpop.f32.mrb[0].mxu0
    %v3882 = vadd.f32 0.0, %v3881
    %v3883 = vpop.f32.mrb[0].mxu0
    %3884 = vmatprep.mubr.bf16.mxu0 0
    %3885 = vmatmul.mubr.bf16.gmra.mrb[0].mxu0 %v3593
    %v3886 = vpop.f32.mrb[0].mxu0
    %v3887 = vadd.f32 0.0, %v3886
    %v3888 = vpop.f32.mrb[0].mxu0
    %v3889 = vpop.f32.mrb[0].mxu0
    %v3890 = vadd.f32 0.0, %v3889
    %v3891 = vpop.f32.mrb[0].mxu0
    %3892 = vmatprep.mubr.bf16.mxu0 0
    %3893 = vmatmul.mubr.bf16.gmra.mrb[0].mxu0 %v3596
    %v3894 = vpop.f32.mrb[0].mxu0
    %v3895 = vadd.f32 0.0, %v3894
    %v3896 = vpop.f32.mrb[0].mxu0
    %v3897 = vpop.f32.mrb[0].mxu0
    %v3898 = vadd.f32 0.0, %v3897
    %v3899 = vpop.f32.mrb[0].mxu0
    %3900 = vmatprep.mubr.bf16.mxu0 0
    %3901 = vmatmul.mubr.bf16.gmra.mrb[0].mxu0 %v3599
    %v3902 = vpop.f32.mrb[0].mxu0
    %v3903 = vadd.f32 0.0, %v3902
    %v3904 = vpop.f32.mrb[0].mxu0
    %v3905 = vpop.f32.mrb[0].mxu0
    %v3906 = vadd.f32 0.0, %v3905
    %v3907 = vpop.f32.mrb[0].mxu0
    %3908 = vmatprep.mubr.bf16.mxu0 0
    %3909 = vmatmul.mubr.bf16.gmra.mrb[0].mxu0 %v3602
    %v3910 = vpop.f32.mrb[0].mxu0
    %v3911 = vadd.f32 0.0, %v3910
    %v3912 = vpop.f32.mrb[0].mxu0
    %v3913 = vpop.f32.mrb[0].mxu0
    %v3914 = vadd.f32 0.0, %v3913
    %v3915 = vpop.f32.mrb[0].mxu0
    %3916 = vmatprep.mubr.bf16.mxu0 0
    %3917 = vmatmul.mubr.bf16.gmra.mrb[0].mxu0 %v3605
    %v3918 = vpop.f32.mrb[0].mxu0
    %v3919 = vadd.f32 0.0, %v3918
    %v3920 = vpop.f32.mrb[0].mxu0
    %v3921 = vpop.f32.mrb[0].mxu0
    %v3922 = vadd.f32 0.0, %v3921
    %v3923 = vpop.f32.mrb[0].mxu0
    %3924 = vmatprep.mubr.bf16.mxu0 0
    %3925 = vmatmul.mubr.bf16.gmra.mrb[0].mxu0 %v3608
    %v3926 = vpop.f32.mrb[0].mxu0
    %v3927 = vadd.f32 0.0, %v3926
    %v3928 = vpop.f32.mrb[0].mxu0
    %v3929 = vpop.f32.mrb[0].mxu0
    %v3930 = vadd.f32 0.0, %v3929
    %v3931 = vpop.f32.mrb[0].mxu0
    %3932 = vmatprep.mubr.bf16.mxu0 0
    %3933 = vmatmul.mubr.bf16.gmra.mrb[0].mxu0 %v3611
    %v3934 = vpop.f32.mrb[0].mxu0
    %v3935 = vadd.f32 0.0, %v3934
    %v3936 = vpop.f32.mrb[0].mxu0
    %v3937 = vpop.f32.mrb[0].mxu0
    %v3938 = vadd.f32 0.0, %v3937
    %v3939 = vpop.f32.mrb[0].mxu0
    %3940 = vmatprep.mubr.bf16.mxu0 0
    %3941 = vmatmul.mubr.bf16.gmra.mrb[0].mxu0 %v3614
    %v3942 = vpop.f32.mrb[0].mxu0
    %v3943 = vadd.f32 0.0, %v3942
    %v3944 = vpop.f32.mrb[0].mxu0
    %v3945 = vpop.f32.mrb[0].mxu0
    %v3946 = vadd.f32 0.0, %v3945
    %v3947 = vpop.f32.mrb[0].mxu0
    %3948 = vmatprep.mubr.bf16.mxu0 0
    %3949 = vmatmul.mubr.bf16.gmra.mrb[0].mxu0 %v3617
    %v3950 = vpop.f32.mrb[0].mxu0
    %v3951 = vadd.f32 0.0, %v3950
    %v3952 = vpop.f32.mrb[0].mxu0
    %v3953 = vpop.f32.mrb[0].mxu0
    %v3954 = vadd.f32 0.0, %v3953
    %v3955 = vpop.f32.mrb[0].mxu0
    %3956 = vmatprep.mubr.bf16.mxu0 0
    %3957 = vmatmul.mubr.bf16.gmra.mrb[0].mxu0 %v3620
    %v3958 = vpop.f32.mrb[0].mxu0
    %v3959 = vadd.f32 0.0, %v3958
    %v3960 = vpop.f32.mrb[0].mxu0
    %v3961 = vpop.f32.mrb[0].mxu0
    %v3962 = vadd.f32 0.0, %v3961
    %v3963 = vpop.f32.mrb[0].mxu0
    %3964 = vmatprep.mubr.bf16.mxu0 0
    %3965 = vmatmul.mubr.bf16.gmra.mrb[0].mxu0 %v3623
    %v3966 = vpop.f32.mrb[0].mxu0
    %v3967 = vadd.f32 0.0, %v3966
    %v3968 = vpop.f32.mrb[0].mxu0
    %v3969 = vpop.f32.mrb[0].mxu0
    %v3970 = vadd.f32 0.0, %v3969
    %v3971 = vpop.f32.mrb[0].mxu0
    %3972 = vmatprep.mubr.bf16.mxu0 0
    %3973 = vmatmul.mubr.bf16.gmra.mrb[0].mxu0 %v3626
    %v3974 = vpop.f32.mrb[0].mxu0
    %v3975 = vadd.f32 0.0, %v3974
    %v3976 = vpop.f32.mrb[0].mxu0
    %v3977 = vpop.f32.mrb[0].mxu0
    %v3978 = vadd.f32 0.0, %v3977
    %v3979 = vpop.f32.mrb[0].mxu0
    %3980 = vdwg.mxu0
    %v3981 = vpack.c.bf16 %v3666, %v3663
    %v3982 = vpack.c.bf16 %v3674, %v3671
    %v3983 = vpack.c.bf16 %v3682, %v3679
    %v3984 = vpack.c.bf16 %v3690, %v3687
    %v3985 = vpack.c.bf16 %v3698, %v3695
    %v3986 = vpack.c.bf16 %v3706, %v3703
    %v3987 = vpack.c.bf16 %v3714, %v3711
    %v3988 = vpack.c.bf16 %v3722, %v3719
    %v3989 = vpack.c.bf16 %v3730, %v3727
    %v3990 = vpack.c.bf16 %v3738, %v3735
    %v3991 = vpack.c.bf16 %v3746, %v3743
    %v3992 = vpack.c.bf16 %v3754, %v3751
    %v3993 = vpack.c.bf16 %v3762, %v3759
    %v3994 = vpack.c.bf16 %v3770, %v3767
    %v3995 = vpack.c.bf16 %v3778, %v3775
    %v3996 = vpack.c.bf16 %v3786, %v3783
    %v3997 = vpack.c.bf16 %v3794, %v3791
    %v3998 = vpack.c.bf16 %v3802, %v3799
    %v3999 = vpack.c.bf16 %v3810, %v3807
    %v4000 = vpack.c.bf16 %v3818, %v3815
    %v4001 = vpack.c.bf16 %v3826, %v3823
    %v4002 = vpack.c.bf16 %v3834, %v3831
    %v4003 = vpack.c.bf16 %v3842, %v3839
    %v4004 = vpack.c.bf16 %v3850, %v3847
    %v4005 = vpack.c.bf16 %v3858, %v3855
    %v4006 = vpack.c.bf16 %v3866, %v3863
    %v4007 = vpack.c.bf16 %v3874, %v3871
    %v4008 = vpack.c.bf16 %v3882, %v3879
    %v4009 = vpack.c.bf16 %v3890, %v3887
    %v4010 = vpack.c.bf16 %v3898, %v3895
    %v4011 = vpack.c.bf16 %v3906, %v3903
    %v4012 = vpack.c.bf16 %v3914, %v3911
    %v4013 = vpack.c.bf16 %v3922, %v3919
    %v4014 = vpack.c.bf16 %v3930, %v3927
    %v4015 = vpack.c.bf16 %v3938, %v3935
    %v4016 = vpack.c.bf16 %v3946, %v3943
    %v4017 = vpack.c.bf16 %v3954, %v3951
    %v4018 = vpack.c.bf16 %v3962, %v3959
    %v4019 = vpack.c.bf16 %v3970, %v3967
    %v4020 = vpack.c.bf16 %v3978, %v3975
    %v4022 = vlaneseq
    %v4023 = vshrl.u32 %v4022, 7
    %v4024 = vsub.s32 0, %v4023
    %v4025 = vrot.slane %v3482, %v4024
    %4027 = vmatprep.subr.bf16.mxu0 0
    %4028 = vmatpush1.bf16.msra.mxu0 %v3981
    %4029 = vmatprep.subr.bf16.mxu0 0
    %4030 = vmatpush1.bf16.msra.mxu0 %v3982
    %4031 = vmatprep.subr.bf16.mxu0 0
    %4032 = vmatpush1.bf16.msra.mxu0 %v3983
    %4033 = vmatprep.subr.bf16.mxu0 0
    %4034 = vmatpush1.bf16.msra.mxu0 %v3984
    %4035 = vmatprep.subr.bf16.mxu0 0
    %4036 = vmatpush1.bf16.msra.mxu0 %v3985
    %4037 = vmatprep.subr.bf16.mxu0 0
    %4038 = vmatpush1.bf16.msra.mxu0 %v3986
    %4039 = vmatprep.subr.bf16.mxu0 0
    %4040 = vmatpush1.bf16.msra.mxu0 %v3987
    %4041 = vmatprep.subr.bf16.mxu0 0
    %4042 = vmatpush1.bf16.msra.mxu0 %v3988
    %4043 = vmatprep.subr.bf16.mxu0 0
    %4044 = vmatpush1.bf16.msra.mxu0 %v3989
    %4045 = vmatprep.subr.bf16.mxu0 0
    %4046 = vmatpush1.bf16.msra.mxu0 %v3990
    %4047 = vmatprep.subr.bf16.mxu0 0
    %4048 = vmatpush1.bf16.msra.mxu0 %v3991
    %4049 = vmatprep.subr.bf16.mxu0 0
    %4050 = vmatpush1.bf16.msra.mxu0 %v3992
    %4051 = vmatprep.subr.bf16.mxu0 0
    %4052 = vmatpush1.bf16.msra.mxu0 %v3993
    %4053 = vmatprep.subr.bf16.mxu0 0
    %4054 = vmatpush1.bf16.msra.mxu0 %v3994
    %4055 = vmatprep.subr.bf16.mxu0 0
    %4056 = vmatpush1.bf16.msra.mxu0 %v3995
    %4057 = vmatprep.subr.bf16.mxu0 0
    %4058 = vmatpush1.bf16.msra.mxu0 %v3996
    %4059 = vmatprep.mubr.bf16.mxu0 %v1736
    %4060 = vmatmul.mubr.bf16.gmra.mrb[0].mxu0 %v1735
    %v4061 = vpop.f32.mrb[0].mxu0
    %v4062 = vadd.f32 %v4025, %v4061
    %v4063 = vpop.f32.mrb[0].mxu0
    %v4064 = vpop.f32.mrb[0].mxu0
    %v4065 = vadd.f32 %v4025, %v4064
    %v4066 = vpop.f32.mrb[0].mxu0
    %4067 = vmatprep.mubr.bf16.mxu0 %v1741
    %4068 = vmatmul.mubr.bf16.gmra.mrb[0].mxu0 %v1740
    %v4069 = vpop.f32.mrb[0].mxu0
    %v4070 = vadd.f32 %v4025, %v4069
    %v4071 = vpop.f32.mrb[0].mxu0
    %v4072 = vpop.f32.mrb[0].mxu0
    %v4073 = vadd.f32 %v4025, %v4072
    %v4074 = vpop.f32.mrb[0].mxu0
    %4075 = vmatprep.mubr.bf16.mxu0 %v1746
    %4076 = vmatmul.mubr.bf16.gmra.mrb[0].mxu0 %v1745
    %v4077 = vpop.f32.mrb[0].mxu0
    %v4078 = vadd.f32 %v4025, %v4077
    %v4079 = vpop.f32.mrb[0].mxu0
    %v4080 = vpop.f32.mrb[0].mxu0
    %v4081 = vadd.f32 %v4025, %v4080
    %v4082 = vpop.f32.mrb[0].mxu0
    %4083 = vmatprep.mubr.bf16.mxu0 %v1751
    %4084 = vmatmul.mubr.bf16.gmra.mrb[0].mxu0 %v1750
    %v4085 = vpop.f32.mrb[0].mxu0
    %v4086 = vadd.f32 %v4025, %v4085
    %v4087 = vpop.f32.mrb[0].mxu0
    %v4088 = vpop.f32.mrb[0].mxu0
    %v4089 = vadd.f32 %v4025, %v4088
    %v4090 = vpop.f32.mrb[0].mxu0
    %4091 = vmatprep.mubr.bf16.mxu0 %v1756
    %4092 = vmatmul.mubr.bf16.gmra.mrb[0].mxu0 %v1755
    %v4093 = vpop.f32.mrb[0].mxu0
    %v4094 = vadd.f32 %v4025, %v4093
    %v4095 = vpop.f32.mrb[0].mxu0
    %v4096 = vpop.f32.mrb[0].mxu0
    %v4097 = vadd.f32 %v4025, %v4096
    %v4098 = vpop.f32.mrb[0].mxu0
    %4099 = vmatprep.mubr.bf16.mxu0 %v1761
    %4100 = vmatmul.mubr.bf16.gmra.mrb[0].mxu0 %v1760
    %v4101 = vpop.f32.mrb[0].mxu0
    %v4102 = vadd.f32 %v4025, %v4101
    %v4103 = vpop.f32.mrb[0].mxu0
    %v4104 = vpop.f32.mrb[0].mxu0
    %v4105 = vadd.f32 %v4025, %v4104
    %v4106 = vpop.f32.mrb[0].mxu0
    %4107 = vmatprep.mubr.bf16.mxu0 %v1766
    %4108 = vmatmul.mubr.bf16.gmra.mrb[0].mxu0 %v1765
    %v4109 = vpop.f32.mrb[0].mxu0
    %v4110 = vadd.f32 %v4025, %v4109
    %v4111 = vpop.f32.mrb[0].mxu0
    %v4112 = vpop.f32.mrb[0].mxu0
    %v4113 = vadd.f32 %v4025, %v4112
    %v4114 = vpop.f32.mrb[0].mxu0
    %4115 = vmatprep.mubr.bf16.mxu0 %v1771
    %4116 = vmatmul.mubr.bf16.gmra.mrb[0].mxu0 %v1770
    %v4117 = vpop.f32.mrb[0].mxu0
    %v4118 = vadd.f32 %v4025, %v4117
    %v4119 = vpop.f32.mrb[0].mxu0
    %v4120 = vpop.f32.mrb[0].mxu0
    %v4121 = vadd.f32 %v4025, %v4120
    %v4122 = vpop.f32.mrb[0].mxu0
    %4123 = vmatprep.mubr.bf16.mxu0 %v1776
    %4124 = vmatmul.mubr.bf16.gmra.mrb[0].mxu0 %v1775
    %v4125 = vpop.f32.mrb[0].mxu0
    %v4126 = vadd.f32 %v4025, %v4125
    %v4127 = vpop.f32.mrb[0].mxu0
    %v4128 = vpop.f32.mrb[0].mxu0
    %v4129 = vadd.f32 %v4025, %v4128
    %v4130 = vpop.f32.mrb[0].mxu0
    %4131 = vmatprep.mubr.bf16.mxu0 %v1781
    %4132 = vmatmul.mubr.bf16.gmra.mrb[0].mxu0 %v1780
    %v4133 = vpop.f32.mrb[0].mxu0
    %v4134 = vadd.f32 %v4025, %v4133
    %v4135 = vpop.f32.mrb[0].mxu0
    %v4136 = vpop.f32.mrb[0].mxu0
    %v4137 = vadd.f32 %v4025, %v4136
    %v4138 = vpop.f32.mrb[0].mxu0
    %4139 = vmatprep.mubr.bf16.mxu0 %v1786
    %4140 = vmatmul.mubr.bf16.gmra.mrb[0].mxu0 %v1785
    %v4141 = vpop.f32.mrb[0].mxu0
    %v4142 = vadd.f32 %v4025, %v4141
    %v4143 = vpop.f32.mrb[0].mxu0
    %v4144 = vpop.f32.mrb[0].mxu0
    %v4145 = vadd.f32 %v4025, %v4144
    %v4146 = vpop.f32.mrb[0].mxu0
    %4147 = vmatprep.mubr.bf16.mxu0 %v1791
    %4148 = vmatmul.mubr.bf16.gmra.mrb[0].mxu0 %v1790
    %v4149 = vpop.f32.mrb[0].mxu0
    %v4150 = vadd.f32 %v4025, %v4149
    %v4151 = vpop.f32.mrb[0].mxu0
    %v4152 = vpop.f32.mrb[0].mxu0
    %v4153 = vadd.f32 %v4025, %v4152
    %v4154 = vpop.f32.mrb[0].mxu0
    %4155 = vmatprep.mubr.bf16.mxu0 %v1796
    %4156 = vmatmul.mubr.bf16.gmra.mrb[0].mxu0 %v1795
    %v4157 = vpop.f32.mrb[0].mxu0
    %v4158 = vadd.f32 %v4025, %v4157
    %v4159 = vpop.f32.mrb[0].mxu0
    %v4160 = vpop.f32.mrb[0].mxu0
    %v4161 = vadd.f32 %v4025, %v4160
    %v4162 = vpop.f32.mrb[0].mxu0
    %4163 = vmatprep.mubr.bf16.mxu0 %v1801
    %4164 = vmatmul.mubr.bf16.gmra.mrb[0].mxu0 %v1800
    %v4165 = vpop.f32.mrb[0].mxu0
    %v4166 = vadd.f32 %v4025, %v4165
    %v4167 = vpop.f32.mrb[0].mxu0
    %v4168 = vpop.f32.mrb[0].mxu0
    %v4169 = vadd.f32 %v4025, %v4168
    %v4170 = vpop.f32.mrb[0].mxu0
    %4171 = vmatprep.mubr.bf16.mxu0 %v1806
    %4172 = vmatmul.mubr.bf16.gmra.mrb[0].mxu0 %v1805
    %v4173 = vpop.f32.mrb[0].mxu0
    %v4174 = vadd.f32 %v4025, %v4173
    %v4175 = vpop.f32.mrb[0].mxu0
    %v4176 = vpop.f32.mrb[0].mxu0
    %v4177 = vadd.f32 %v4025, %v4176
    %v4178 = vpop.f32.mrb[0].mxu0
    %4179 = vmatprep.mubr.bf16.mxu0 %v1811
    %4180 = vmatmul.mubr.bf16.gmra.mrb[0].mxu0 %v1810
    %v4181 = vpop.f32.mrb[0].mxu0
    %v4182 = vadd.f32 %v4025, %v4181
    %v4183 = vpop.f32.mrb[0].mxu0
    %v4184 = vpop.f32.mrb[0].mxu0
    %v4185 = vadd.f32 %v4025, %v4184
    %v4186 = vpop.f32.mrb[0].mxu0
    %4187 = vmatprep.mubr.bf16.mxu0 %v1816
    %4188 = vmatmul.mubr.bf16.gmra.mrb[0].mxu0 %v1815
    %v4189 = vpop.f32.mrb[0].mxu0
    %v4190 = vadd.f32 %v4025, %v4189
    %v4191 = vpop.f32.mrb[0].mxu0
    %v4192 = vpop.f32.mrb[0].mxu0
    %v4193 = vadd.f32 %v4025, %v4192
    %v4194 = vpop.f32.mrb[0].mxu0
    %4195 = vmatprep.mubr.bf16.mxu0 %v1821
    %4196 = vmatmul.mubr.bf16.gmra.mrb[0].mxu0 %v1820
    %v4197 = vpop.f32.mrb[0].mxu0
    %v4198 = vadd.f32 %v4025, %v4197
    %v4199 = vpop.f32.mrb[0].mxu0
    %v4200 = vpop.f32.mrb[0].mxu0
    %v4201 = vadd.f32 %v4025, %v4200
    %v4202 = vpop.f32.mrb[0].mxu0
    %4203 = vmatprep.mubr.bf16.mxu0 %v1826
    %4204 = vmatmul.mubr.bf16.gmra.mrb[0].mxu0 %v1825
    %v4205 = vpop.f32.mrb[0].mxu0
    %v4206 = vadd.f32 %v4025, %v4205
    %v4207 = vpop.f32.mrb[0].mxu0
    %v4208 = vpop.f32.mrb[0].mxu0
    %v4209 = vadd.f32 %v4025, %v4208
    %v4210 = vpop.f32.mrb[0].mxu0
    %4211 = vmatprep.mubr.bf16.mxu0 %v1831
    %4212 = vmatmul.mubr.bf16.gmra.mrb[0].mxu0 %v1830
    %v4213 = vpop.f32.mrb[0].mxu0
    %v4214 = vadd.f32 %v4025, %v4213
    %v4215 = vpop.f32.mrb[0].mxu0
    %v4216 = vpop.f32.mrb[0].mxu0
    %v4217 = vadd.f32 %v4025, %v4216
    %v4218 = vpop.f32.mrb[0].mxu0
    %4219 = vmatprep.mubr.bf16.mxu0 %v1836
    %4220 = vmatmul.mubr.bf16.gmra.mrb[0].mxu0 %v1835
    %v4221 = vpop.f32.mrb[0].mxu0
    %v4222 = vadd.f32 %v4025, %v4221
    %v4223 = vpop.f32.mrb[0].mxu0
    %v4224 = vpop.f32.mrb[0].mxu0
    %v4225 = vadd.f32 %v4025, %v4224
    %v4226 = vpop.f32.mrb[0].mxu0
    %4227 = vmatprep.mubr.bf16.mxu0 %v1841
    %4228 = vmatmul.mubr.bf16.gmra.mrb[0].mxu0 %v1840
    %v4229 = vpop.f32.mrb[0].mxu0
    %v4230 = vadd.f32 %v4025, %v4229
    %v4231 = vpop.f32.mrb[0].mxu0
    %v4232 = vpop.f32.mrb[0].mxu0
    %v4233 = vadd.f32 %v4025, %v4232
    %v4234 = vpop.f32.mrb[0].mxu0
    %4235 = vmatprep.mubr.bf16.mxu0 %v1846
    %4236 = vmatmul.mubr.bf16.gmra.mrb[0].mxu0 %v1845
    %v4237 = vpop.f32.mrb[0].mxu0
    %v4238 = vadd.f32 %v4025, %v4237
    %v4239 = vpop.f32.mrb[0].mxu0
    %v4240 = vpop.f32.mrb[0].mxu0
    %v4241 = vadd.f32 %v4025, %v4240
    %v4242 = vpop.f32.mrb[0].mxu0
    %4243 = vmatprep.mubr.bf16.mxu0 %v1851
    %4244 = vmatmul.mubr.bf16.gmra.mrb[0].mxu0 %v1850
    %v4245 = vpop.f32.mrb[0].mxu0
    %v4246 = vadd.f32 %v4025, %v4245
    %v4247 = vpop.f32.mrb[0].mxu0
    %v4248 = vpop.f32.mrb[0].mxu0
    %v4249 = vadd.f32 %v4025, %v4248
    %v4250 = vpop.f32.mrb[0].mxu0
    %4251 = vmatprep.mubr.bf16.mxu0 %v1856
    %4252 = vmatmul.mubr.bf16.gmra.mrb[0].mxu0 %v1855
    %v4253 = vpop.f32.mrb[0].mxu0
    %v4254 = vadd.f32 %v4025, %v4253
    %v4255 = vpop.f32.mrb[0].mxu0
    %v4256 = vpop.f32.mrb[0].mxu0
    %v4257 = vadd.f32 %v4025, %v4256
    %v4258 = vpop.f32.mrb[0].mxu0
    %4259 = vmatprep.mubr.bf16.mxu0 %v1861
    %4260 = vmatmul.mubr.bf16.gmra.mrb[0].mxu0 %v1860
    %v4261 = vpop.f32.mrb[0].mxu0
    %v4262 = vadd.f32 %v4025, %v4261
    %v4263 = vpop.f32.mrb[0].mxu0
    %v4264 = vpop.f32.mrb[0].mxu0
    %v4265 = vadd.f32 %v4025, %v4264
    %v4266 = vpop.f32.mrb[0].mxu0
    %4267 = vmatprep.mubr.bf16.mxu0 %v1866
    %4268 = vmatmul.mubr.bf16.gmra.mrb[0].mxu0 %v1865
    %v4269 = vpop.f32.mrb[0].mxu0
    %v4270 = vadd.f32 %v4025, %v4269
    %v4271 = vpop.f32.mrb[0].mxu0
    %v4272 = vpop.f32.mrb[0].mxu0
    %v4273 = vadd.f32 %v4025, %v4272
    %v4274 = vpop.f32.mrb[0].mxu0
    %4275 = vmatprep.mubr.bf16.mxu0 %v1871
    %4276 = vmatmul.mubr.bf16.gmra.mrb[0].mxu0 %v1870
    %v4277 = vpop.f32.mrb[0].mxu0
    %v4278 = vadd.f32 %v4025, %v4277
    %v4279 = vpop.f32.mrb[0].mxu0
    %v4280 = vpop.f32.mrb[0].mxu0
    %v4281 = vadd.f32 %v4025, %v4280
    %v4282 = vpop.f32.mrb[0].mxu0
    %4283 = vmatprep.mubr.bf16.mxu0 %v1876
    %4284 = vmatmul.mubr.bf16.gmra.mrb[0].mxu0 %v1875
    %v4285 = vpop.f32.mrb[0].mxu0
    %v4286 = vadd.f32 %v4025, %v4285
    %v4287 = vpop.f32.mrb[0].mxu0
    %v4288 = vpop.f32.mrb[0].mxu0
    %v4289 = vadd.f32 %v4025, %v4288
    %v4290 = vpop.f32.mrb[0].mxu0
    %4291 = vmatprep.mubr.bf16.mxu0 %v1881
    %4292 = vmatmul.mubr.bf16.gmra.mrb[0].mxu0 %v1880
    %v4293 = vpop.f32.mrb[0].mxu0
    %v4294 = vadd.f32 %v4025, %v4293
    %v4295 = vpop.f32.mrb[0].mxu0
    %v4296 = vpop.f32.mrb[0].mxu0
    %v4297 = vadd.f32 %v4025, %v4296
    %v4298 = vpop.f32.mrb[0].mxu0
    %4299 = vmatprep.mubr.bf16.mxu0 %v1886
    %4300 = vmatmul.mubr.bf16.gmra.mrb[0].mxu0 %v1885
    %v4301 = vpop.f32.mrb[0].mxu0
    %v4302 = vadd.f32 %v4025, %v4301
    %v4303 = vpop.f32.mrb[0].mxu0
    %v4304 = vpop.f32.mrb[0].mxu0
    %v4305 = vadd.f32 %v4025, %v4304
    %v4306 = vpop.f32.mrb[0].mxu0
    %4307 = vmatprep.mubr.bf16.mxu0 %v1891
    %4308 = vmatmul.mubr.bf16.gmra.mrb[0].mxu0 %v1890
    %v4309 = vpop.f32.mrb[0].mxu0
    %v4310 = vadd.f32 %v4025, %v4309
    %v4311 = vpop.f32.mrb[0].mxu0
    %v4312 = vpop.f32.mrb[0].mxu0
    %v4313 = vadd.f32 %v4025, %v4312
    %v4314 = vpop.f32.mrb[0].mxu0
    %4315 = vmatprep.mubr.bf16.mxu0 %v1896
    %4316 = vmatmul.mubr.bf16.gmra.mrb[0].mxu0 %v1895
    %v4317 = vpop.f32.mrb[0].mxu0
    %v4318 = vadd.f32 %v4025, %v4317
    %v4319 = vpop.f32.mrb[0].mxu0
    %v4320 = vpop.f32.mrb[0].mxu0
    %v4321 = vadd.f32 %v4025, %v4320
    %v4322 = vpop.f32.mrb[0].mxu0
    %4323 = vmatprep.mubr.bf16.mxu0 %v1901
    %4324 = vmatmul.mubr.bf16.gmra.mrb[0].mxu0 %v1900
    %v4325 = vpop.f32.mrb[0].mxu0
    %v4326 = vadd.f32 %v4025, %v4325
    %v4327 = vpop.f32.mrb[0].mxu0
    %v4328 = vpop.f32.mrb[0].mxu0
    %v4329 = vadd.f32 %v4025, %v4328
    %v4330 = vpop.f32.mrb[0].mxu0
    %4331 = vmatprep.mubr.bf16.mxu0 %v1906
    %4332 = vmatmul.mubr.bf16.gmra.mrb[0].mxu0 %v1905
    %v4333 = vpop.f32.mrb[0].mxu0
    %v4334 = vadd.f32 %v4025, %v4333
    %v4335 = vpop.f32.mrb[0].mxu0
    %v4336 = vpop.f32.mrb[0].mxu0
    %v4337 = vadd.f32 %v4025, %v4336
    %v4338 = vpop.f32.mrb[0].mxu0
    %4339 = vmatprep.mubr.bf16.mxu0 %v1911
    %4340 = vmatmul.mubr.bf16.gmra.mrb[0].mxu0 %v1910
    %v4341 = vpop.f32.mrb[0].mxu0
    %v4342 = vadd.f32 %v4025, %v4341
    %v4343 = vpop.f32.mrb[0].mxu0
    %v4344 = vpop.f32.mrb[0].mxu0
    %v4345 = vadd.f32 %v4025, %v4344
    %v4346 = vpop.f32.mrb[0].mxu0
    %4347 = vmatprep.mubr.bf16.mxu0 %v1916
    %4348 = vmatmul.mubr.bf16.gmra.mrb[0].mxu0 %v1915
    %v4349 = vpop.f32.mrb[0].mxu0
    %v4350 = vadd.f32 %v4025, %v4349
    %v4351 = vpop.f32.mrb[0].mxu0
    %v4352 = vpop.f32.mrb[0].mxu0
    %v4353 = vadd.f32 %v4025, %v4352
    %v4354 = vpop.f32.mrb[0].mxu0
    %4355 = vmatprep.mubr.bf16.mxu0 %v1921
    %4356 = vmatmul.mubr.bf16.gmra.mrb[0].mxu0 %v1920
    %v4357 = vpop.f32.mrb[0].mxu0
    %v4358 = vadd.f32 %v4025, %v4357
    %v4359 = vpop.f32.mrb[0].mxu0
    %v4360 = vpop.f32.mrb[0].mxu0
    %v4361 = vadd.f32 %v4025, %v4360
    %v4362 = vpop.f32.mrb[0].mxu0
    %4363 = vmatprep.mubr.bf16.mxu0 %v1926
    %4364 = vmatmul.mubr.bf16.gmra.mrb[0].mxu0 %v1925
    %v4365 = vpop.f32.mrb[0].mxu0
    %v4366 = vadd.f32 %v4025, %v4365
    %v4367 = vpop.f32.mrb[0].mxu0
    %v4368 = vpop.f32.mrb[0].mxu0
    %v4369 = vadd.f32 %v4025, %v4368
    %v4370 = vpop.f32.mrb[0].mxu0
    %4371 = vmatprep.mubr.bf16.mxu0 %v1931
    %4372 = vmatmul.mubr.bf16.gmra.mrb[0].mxu0 %v1930
    %v4373 = vpop.f32.mrb[0].mxu0
    %v4374 = vadd.f32 %v4025, %v4373
    %v4375 = vpop.f32.mrb[0].mxu0
    %v4376 = vpop.f32.mrb[0].mxu0
    %v4377 = vadd.f32 %v4025, %v4376
    %v4378 = vpop.f32.mrb[0].mxu0
    %4379 = vdwg.mxu0
    %4380 = vmatprep.subr.bf16.mxu0 0
    %4381 = vmatpush1.bf16.msra.mxu0 %v3997
    %4382 = vmatprep.subr.bf16.mxu0 0
    %4383 = vmatpush1.bf16.msra.mxu0 %v3998
    %4384 = vmatprep.subr.bf16.mxu0 0
    %4385 = vmatpush1.bf16.msra.mxu0 %v3999
    %4386 = vmatprep.subr.bf16.mxu0 0
    %4387 = vmatpush1.bf16.msra.mxu0 %v4000
    %4388 = vmatprep.subr.bf16.mxu0 0
    %4389 = vmatpush1.bf16.msra.mxu0 %v4001
    %4390 = vmatprep.subr.bf16.mxu0 0
    %4391 = vmatpush1.bf16.msra.mxu0 %v4002
    %4392 = vmatprep.subr.bf16.mxu0 0
    %4393 = vmatpush1.bf16.msra.mxu0 %v4003
    %4394 = vmatprep.subr.bf16.mxu0 0
    %4395 = vmatpush1.bf16.msra.mxu0 %v4004
    %4396 = vmatprep.subr.bf16.mxu0 0
    %4397 = vmatpush1.bf16.msra.mxu0 %v4005
    %4398 = vmatprep.subr.bf16.mxu0 0
    %4399 = vmatpush1.bf16.msra.mxu0 %v4006
    %4400 = vmatprep.subr.bf16.mxu0 0
    %4401 = vmatpush1.bf16.msra.mxu0 %v4007
    %4402 = vmatprep.subr.bf16.mxu0 0
    %4403 = vmatpush1.bf16.msra.mxu0 %v4008
    %4404 = vmatprep.subr.bf16.mxu0 0
    %4405 = vmatpush1.bf16.msra.mxu0 %v4009
    %4406 = vmatprep.subr.bf16.mxu0 0
    %4407 = vmatpush1.bf16.msra.mxu0 %v4010
    %4408 = vmatprep.subr.bf16.mxu0 0
    %4409 = vmatpush1.bf16.msra.mxu0 %v4011
    %4410 = vmatprep.subr.bf16.mxu0 0
    %4411 = vmatpush1.bf16.msra.mxu0 %v4012
    %4412 = vmatprep.mubr.bf16.mxu0 %v1738
    %4413 = vmatmul.mubr.bf16.gmra.mrb[0].mxu0 %v1737
    %v4414 = vpop.f32.mrb[0].mxu0
    %v4415 = vadd.f32 %v4062, %v4414
    %v4416 = vpop.f32.mrb[0].mxu0
    %v4417 = vpop.f32.mrb[0].mxu0
    %v4418 = vadd.f32 %v4065, %v4417
    %v4419 = vpop.f32.mrb[0].mxu0
    %4420 = vmatprep.mubr.bf16.mxu0 %v1743
    %4421 = vmatmul.mubr.bf16.gmra.mrb[0].mxu0 %v1742
    %v4422 = vpop.f32.mrb[0].mxu0
    %v4423 = vadd.f32 %v4070, %v4422
    %v4424 = vpop.f32.mrb[0].mxu0
    %v4425 = vpop.f32.mrb[0].mxu0
    %v4426 = vadd.f32 %v4073, %v4425
    %v4427 = vpop.f32.mrb[0].mxu0
    %4428 = vmatprep.mubr.bf16.mxu0 %v1748
    %4429 = vmatmul.mubr.bf16.gmra.mrb[0].mxu0 %v1747
    %v4430 = vpop.f32.mrb[0].mxu0
    %v4431 = vadd.f32 %v4078, %v4430
    %v4432 = vpop.f32.mrb[0].mxu0
    %v4433 = vpop.f32.mrb[0].mxu0
    %v4434 = vadd.f32 %v4081, %v4433
    %v4435 = vpop.f32.mrb[0].mxu0
    %4436 = vmatprep.mubr.bf16.mxu0 %v1753
    %4437 = vmatmul.mubr.bf16.gmra.mrb[0].mxu0 %v1752
    %v4438 = vpop.f32.mrb[0].mxu0
    %v4439 = vadd.f32 %v4086, %v4438
    %v4440 = vpop.f32.mrb[0].mxu0
    %v4441 = vpop.f32.mrb[0].mxu0
    %v4442 = vadd.f32 %v4089, %v4441
    %v4443 = vpop.f32.mrb[0].mxu0
    %4444 = vmatprep.mubr.bf16.mxu0 %v1758
    %4445 = vmatmul.mubr.bf16.gmra.mrb[0].mxu0 %v1757
    %v4446 = vpop.f32.mrb[0].mxu0
    %v4447 = vadd.f32 %v4094, %v4446
    %v4448 = vpop.f32.mrb[0].mxu0
    %v4449 = vpop.f32.mrb[0].mxu0
    %v4450 = vadd.f32 %v4097, %v4449
    %v4451 = vpop.f32.mrb[0].mxu0
    %4452 = vmatprep.mubr.bf16.mxu0 %v1763
    %4453 = vmatmul.mubr.bf16.gmra.mrb[0].mxu0 %v1762
    %v4454 = vpop.f32.mrb[0].mxu0
    %v4455 = vadd.f32 %v4102, %v4454
    %v4456 = vpop.f32.mrb[0].mxu0
    %v4457 = vpop.f32.mrb[0].mxu0
    %v4458 = vadd.f32 %v4105, %v4457
    %v4459 = vpop.f32.mrb[0].mxu0
    %4460 = vmatprep.mubr.bf16.mxu0 %v1768
    %4461 = vmatmul.mubr.bf16.gmra.mrb[0].mxu0 %v1767
    %v4462 = vpop.f32.mrb[0].mxu0
    %v4463 = vadd.f32 %v4110, %v4462
    %v4464 = vpop.f32.mrb[0].mxu0
    %v4465 = vpop.f32.mrb[0].mxu0
    %v4466 = vadd.f32 %v4113, %v4465
    %v4467 = vpop.f32.mrb[0].mxu0
    %4468 = vmatprep.mubr.bf16.mxu0 %v1773
    %4469 = vmatmul.mubr.bf16.gmra.mrb[0].mxu0 %v1772
    %v4470 = vpop.f32.mrb[0].mxu0
    %v4471 = vadd.f32 %v4118, %v4470
    %v4472 = vpop.f32.mrb[0].mxu0
    %v4473 = vpop.f32.mrb[0].mxu0
    %v4474 = vadd.f32 %v4121, %v4473
    %v4475 = vpop.f32.mrb[0].mxu0
    %4476 = vmatprep.mubr.bf16.mxu0 %v1778
    %4477 = vmatmul.mubr.bf16.gmra.mrb[0].mxu0 %v1777
    %v4478 = vpop.f32.mrb[0].mxu0
    %v4479 = vadd.f32 %v4126, %v4478
    %v4480 = vpop.f32.mrb[0].mxu0
    %v4481 = vpop.f32.mrb[0].mxu0
    %v4482 = vadd.f32 %v4129, %v4481
    %v4483 = vpop.f32.mrb[0].mxu0
    %4484 = vmatprep.mubr.bf16.mxu0 %v1783
    %4485 = vmatmul.mubr.bf16.gmra.mrb[0].mxu0 %v1782
    %v4486 = vpop.f32.mrb[0].mxu0
    %v4487 = vadd.f32 %v4134, %v4486
    %v4488 = vpop.f32.mrb[0].mxu0
    %v4489 = vpop.f32.mrb[0].mxu0
    %v4490 = vadd.f32 %v4137, %v4489
    %v4491 = vpop.f32.mrb[0].mxu0
    %4492 = vmatprep.mubr.bf16.mxu0 %v1788
    %4493 = vmatmul.mubr.bf16.gmra.mrb[0].mxu0 %v1787
    %v4494 = vpop.f32.mrb[0].mxu0
    %v4495 = vadd.f32 %v4142, %v4494
    %v4496 = vpop.f32.mrb[0].mxu0
    %v4497 = vpop.f32.mrb[0].mxu0
    %v4498 = vadd.f32 %v4145, %v4497
    %v4499 = vpop.f32.mrb[0].mxu0
    %4500 = vmatprep.mubr.bf16.mxu0 %v1793
    %4501 = vmatmul.mubr.bf16.gmra.mrb[0].mxu0 %v1792
    %v4502 = vpop.f32.mrb[0].mxu0
    %v4503 = vadd.f32 %v4150, %v4502
    %v4504 = vpop.f32.mrb[0].mxu0
    %v4505 = vpop.f32.mrb[0].mxu0
    %v4506 = vadd.f32 %v4153, %v4505
    %v4507 = vpop.f32.mrb[0].mxu0
    %4508 = vmatprep.mubr.bf16.mxu0 %v1798
    %4509 = vmatmul.mubr.bf16.gmra.mrb[0].mxu0 %v1797
    %v4510 = vpop.f32.mrb[0].mxu0
    %v4511 = vadd.f32 %v4158, %v4510
    %v4512 = vpop.f32.mrb[0].mxu0
    %v4513 = vpop.f32.mrb[0].mxu0
    %v4514 = vadd.f32 %v4161, %v4513
    %v4515 = vpop.f32.mrb[0].mxu0
    %4516 = vmatprep.mubr.bf16.mxu0 %v1803
    %4517 = vmatmul.mubr.bf16.gmra.mrb[0].mxu0 %v1802
    %v4518 = vpop.f32.mrb[0].mxu0
    %v4519 = vadd.f32 %v4166, %v4518
    %v4520 = vpop.f32.mrb[0].mxu0
    %v4521 = vpop.f32.mrb[0].mxu0
    %v4522 = vadd.f32 %v4169, %v4521
    %v4523 = vpop.f32.mrb[0].mxu0
    %4524 = vmatprep.mubr.bf16.mxu0 %v1808
    %4525 = vmatmul.mubr.bf16.gmra.mrb[0].mxu0 %v1807
    %v4526 = vpop.f32.mrb[0].mxu0
    %v4527 = vadd.f32 %v4174, %v4526
    %v4528 = vpop.f32.mrb[0].mxu0
    %v4529 = vpop.f32.mrb[0].mxu0
    %v4530 = vadd.f32 %v4177, %v4529
    %v4531 = vpop.f32.mrb[0].mxu0
    %4532 = vmatprep.mubr.bf16.mxu0 %v1813
    %4533 = vmatmul.mubr.bf16.gmra.mrb[0].mxu0 %v1812
    %v4534 = vpop.f32.mrb[0].mxu0
    %v4535 = vadd.f32 %v4182, %v4534
    %v4536 = vpop.f32.mrb[0].mxu0
    %v4537 = vpop.f32.mrb[0].mxu0
    %v4538 = vadd.f32 %v4185, %v4537
    %v4539 = vpop.f32.mrb[0].mxu0
    %4540 = vmatprep.mubr.bf16.mxu0 %v1818
    %4541 = vmatmul.mubr.bf16.gmra.mrb[0].mxu0 %v1817
    %v4542 = vpop.f32.mrb[0].mxu0
    %v4543 = vadd.f32 %v4190, %v4542
    %v4544 = vpop.f32.mrb[0].mxu0
    %v4545 = vpop.f32.mrb[0].mxu0
    %v4546 = vadd.f32 %v4193, %v4545
    %v4547 = vpop.f32.mrb[0].mxu0
    %4548 = vmatprep.mubr.bf16.mxu0 %v1823
    %4549 = vmatmul.mubr.bf16.gmra.mrb[0].mxu0 %v1822
    %v4550 = vpop.f32.mrb[0].mxu0
    %v4551 = vadd.f32 %v4198, %v4550
    %v4552 = vpop.f32.mrb[0].mxu0
    %v4553 = vpop.f32.mrb[0].mxu0
    %v4554 = vadd.f32 %v4201, %v4553
    %v4555 = vpop.f32.mrb[0].mxu0
    %4556 = vmatprep.mubr.bf16.mxu0 %v1828
    %4557 = vmatmul.mubr.bf16.gmra.mrb[0].mxu0 %v1827
    %v4558 = vpop.f32.mrb[0].mxu0
    %v4559 = vadd.f32 %v4206, %v4558
    %v4560 = vpop.f32.mrb[0].mxu0
    %v4561 = vpop.f32.mrb[0].mxu0
    %v4562 = vadd.f32 %v4209, %v4561
    %v4563 = vpop.f32.mrb[0].mxu0
    %4564 = vmatprep.mubr.bf16.mxu0 %v1833
    %4565 = vmatmul.mubr.bf16.gmra.mrb[0].mxu0 %v1832
    %v4566 = vpop.f32.mrb[0].mxu0
    %v4567 = vadd.f32 %v4214, %v4566
    %v4568 = vpop.f32.mrb[0].mxu0
    %v4569 = vpop.f32.mrb[0].mxu0
    %v4570 = vadd.f32 %v4217, %v4569
    %v4571 = vpop.f32.mrb[0].mxu0
    %4572 = vmatprep.mubr.bf16.mxu0 %v1838
    %4573 = vmatmul.mubr.bf16.gmra.mrb[0].mxu0 %v1837
    %v4574 = vpop.f32.mrb[0].mxu0
    %v4575 = vadd.f32 %v4222, %v4574
    %v4576 = vpop.f32.mrb[0].mxu0
    %v4577 = vpop.f32.mrb[0].mxu0
    %v4578 = vadd.f32 %v4225, %v4577
    %v4579 = vpop.f32.mrb[0].mxu0
    %4580 = vmatprep.mubr.bf16.mxu0 %v1843
    %4581 = vmatmul.mubr.bf16.gmra.mrb[0].mxu0 %v1842
    %v4582 = vpop.f32.mrb[0].mxu0
    %v4583 = vadd.f32 %v4230, %v4582
    %v4584 = vpop.f32.mrb[0].mxu0
    %v4585 = vpop.f32.mrb[0].mxu0
    %v4586 = vadd.f32 %v4233, %v4585
    %v4587 = vpop.f32.mrb[0].mxu0
    %4588 = vmatprep.mubr.bf16.mxu0 %v1848
    %4589 = vmatmul.mubr.bf16.gmra.mrb[0].mxu0 %v1847
    %v4590 = vpop.f32.mrb[0].mxu0
    %v4591 = vadd.f32 %v4238, %v4590
    %v4592 = vpop.f32.mrb[0].mxu0
    %v4593 = vpop.f32.mrb[0].mxu0
    %v4594 = vadd.f32 %v4241, %v4593
    %v4595 = vpop.f32.mrb[0].mxu0
    %4596 = vmatprep.mubr.bf16.mxu0 %v1853
    %4597 = vmatmul.mubr.bf16.gmra.mrb[0].mxu0 %v1852
    %v4598 = vpop.f32.mrb[0].mxu0
    %v4599 = vadd.f32 %v4246, %v4598
    %v4600 = vpop.f32.mrb[0].mxu0
    %v4601 = vpop.f32.mrb[0].mxu0
    %v4602 = vadd.f32 %v4249, %v4601
    %v4603 = vpop.f32.mrb[0].mxu0
    %4604 = vmatprep.mubr.bf16.mxu0 %v1858
    %4605 = vmatmul.mubr.bf16.gmra.mrb[0].mxu0 %v1857
    %v4606 = vpop.f32.mrb[0].mxu0
    %v4607 = vadd.f32 %v4254, %v4606
    %v4608 = vpop.f32.mrb[0].mxu0
    %v4609 = vpop.f32.mrb[0].mxu0
    %v4610 = vadd.f32 %v4257, %v4609
    %v4611 = vpop.f32.mrb[0].mxu0
    %4612 = vmatprep.mubr.bf16.mxu0 %v1863
    %4613 = vmatmul.mubr.bf16.gmra.mrb[0].mxu0 %v1862
    %v4614 = vpop.f32.mrb[0].mxu0
    %v4615 = vadd.f32 %v4262, %v4614
    %v4616 = vpop.f32.mrb[0].mxu0
    %v4617 = vpop.f32.mrb[0].mxu0
    %v4618 = vadd.f32 %v4265, %v4617
    %v4619 = vpop.f32.mrb[0].mxu0
    %4620 = vmatprep.mubr.bf16.mxu0 %v1868
    %4621 = vmatmul.mubr.bf16.gmra.mrb[0].mxu0 %v1867
    %v4622 = vpop.f32.mrb[0].mxu0
    %v4623 = vadd.f32 %v4270, %v4622
    %v4624 = vpop.f32.mrb[0].mxu0
    %v4625 = vpop.f32.mrb[0].mxu0
    %v4626 = vadd.f32 %v4273, %v4625
    %v4627 = vpop.f32.mrb[0].mxu0
    %4628 = vmatprep.mubr.bf16.mxu0 %v1873
    %4629 = vmatmul.mubr.bf16.gmra.mrb[0].mxu0 %v1872
    %v4630 = vpop.f32.mrb[0].mxu0
    %v4631 = vadd.f32 %v4278, %v4630
    %v4632 = vpop.f32.mrb[0].mxu0
    %v4633 = vpop.f32.mrb[0].mxu0
    %v4634 = vadd.f32 %v4281, %v4633
    %v4635 = vpop.f32.mrb[0].mxu0
    %4636 = vmatprep.mubr.bf16.mxu0 %v1878
    %4637 = vmatmul.mubr.bf16.gmra.mrb[0].mxu0 %v1877
    %v4638 = vpop.f32.mrb[0].mxu0
    %v4639 = vadd.f32 %v4286, %v4638
    %v4640 = vpop.f32.mrb[0].mxu0
    %v4641 = vpop.f32.mrb[0].mxu0
    %v4642 = vadd.f32 %v4289, %v4641
    %v4643 = vpop.f32.mrb[0].mxu0
    %4644 = vmatprep.mubr.bf16.mxu0 %v1883
    %4645 = vmatmul.mubr.bf16.gmra.mrb[0].mxu0 %v1882
    %v4646 = vpop.f32.mrb[0].mxu0
    %v4647 = vadd.f32 %v4294, %v4646
    %v4648 = vpop.f32.mrb[0].mxu0
    %v4649 = vpop.f32.mrb[0].mxu0
    %v4650 = vadd.f32 %v4297, %v4649
    %v4651 = vpop.f32.mrb[0].mxu0
    %4652 = vmatprep.mubr.bf16.mxu0 %v1888
    %4653 = vmatmul.mubr.bf16.gmra.mrb[0].mxu0 %v1887
    %v4654 = vpop.f32.mrb[0].mxu0
    %v4655 = vadd.f32 %v4302, %v4654
    %v4656 = vpop.f32.mrb[0].mxu0
    %v4657 = vpop.f32.mrb[0].mxu0
    %v4658 = vadd.f32 %v4305, %v4657
    %v4659 = vpop.f32.mrb[0].mxu0
    %4660 = vmatprep.mubr.bf16.mxu0 %v1893
    %4661 = vmatmul.mubr.bf16.gmra.mrb[0].mxu0 %v1892
    %v4662 = vpop.f32.mrb[0].mxu0
    %v4663 = vadd.f32 %v4310, %v4662
    %v4664 = vpop.f32.mrb[0].mxu0
    %v4665 = vpop.f32.mrb[0].mxu0
    %v4666 = vadd.f32 %v4313, %v4665
    %v4667 = vpop.f32.mrb[0].mxu0
    %4668 = vmatprep.mubr.bf16.mxu0 %v1898
    %4669 = vmatmul.mubr.bf16.gmra.mrb[0].mxu0 %v1897
    %v4670 = vpop.f32.mrb[0].mxu0
    %v4671 = vadd.f32 %v4318, %v4670
    %v4672 = vpop.f32.mrb[0].mxu0
    %v4673 = vpop.f32.mrb[0].mxu0
    %v4674 = vadd.f32 %v4321, %v4673
    %v4675 = vpop.f32.mrb[0].mxu0
    %4676 = vmatprep.mubr.bf16.mxu0 %v1903
    %4677 = vmatmul.mubr.bf16.gmra.mrb[0].mxu0 %v1902
    %v4678 = vpop.f32.mrb[0].mxu0
    %v4679 = vadd.f32 %v4326, %v4678
    %v4680 = vpop.f32.mrb[0].mxu0
    %v4681 = vpop.f32.mrb[0].mxu0
    %v4682 = vadd.f32 %v4329, %v4681
    %v4683 = vpop.f32.mrb[0].mxu0
    %4684 = vmatprep.mubr.bf16.mxu0 %v1908
    %4685 = vmatmul.mubr.bf16.gmra.mrb[0].mxu0 %v1907
    %v4686 = vpop.f32.mrb[0].mxu0
    %v4687 = vadd.f32 %v4334, %v4686
    %v4688 = vpop.f32.mrb[0].mxu0
    %v4689 = vpop.f32.mrb[0].mxu0
    %v4690 = vadd.f32 %v4337, %v4689
    %v4691 = vpop.f32.mrb[0].mxu0
    %4692 = vmatprep.mubr.bf16.mxu0 %v1913
    %4693 = vmatmul.mubr.bf16.gmra.mrb[0].mxu0 %v1912
    %v4694 = vpop.f32.mrb[0].mxu0
    %v4695 = vadd.f32 %v4342, %v4694
    %v4696 = vpop.f32.mrb[0].mxu0
    %v4697 = vpop.f32.mrb[0].mxu0
    %v4698 = vadd.f32 %v4345, %v4697
    %v4699 = vpop.f32.mrb[0].mxu0
    %4700 = vmatprep.mubr.bf16.mxu0 %v1918
    %4701 = vmatmul.mubr.bf16.gmra.mrb[0].mxu0 %v1917
    %v4702 = vpop.f32.mrb[0].mxu0
    %v4703 = vadd.f32 %v4350, %v4702
    %v4704 = vpop.f32.mrb[0].mxu0
    %v4705 = vpop.f32.mrb[0].mxu0
    %v4706 = vadd.f32 %v4353, %v4705
    %v4707 = vpop.f32.mrb[0].mxu0
    %4708 = vmatprep.mubr.bf16.mxu0 %v1923
    %4709 = vmatmul.mubr.bf16.gmra.mrb[0].mxu0 %v1922
    %v4710 = vpop.f32.mrb[0].mxu0
    %v4711 = vadd.f32 %v4358, %v4710
    %v4712 = vpop.f32.mrb[0].mxu0
    %v4713 = vpop.f32.mrb[0].mxu0
    %v4714 = vadd.f32 %v4361, %v4713
    %v4715 = vpop.f32.mrb[0].mxu0
    %4716 = vmatprep.mubr.bf16.mxu0 %v1928
    %4717 = vmatmul.mubr.bf16.gmra.mrb[0].mxu0 %v1927
    %v4718 = vpop.f32.mrb[0].mxu0
    %v4719 = vadd.f32 %v4366, %v4718
    %v4720 = vpop.f32.mrb[0].mxu0
    %v4721 = vpop.f32.mrb[0].mxu0
    %v4722 = vadd.f32 %v4369, %v4721
    %v4723 = vpop.f32.mrb[0].mxu0
    %4724 = vmatprep.mubr.bf16.mxu0 %v1933
    %4725 = vmatmul.mubr.bf16.gmra.mrb[0].mxu0 %v1932
    %v4726 = vpop.f32.mrb[0].mxu0
    %v4727 = vadd.f32 %v4374, %v4726
    %v4728 = vpop.f32.mrb[0].mxu0
    %v4729 = vpop.f32.mrb[0].mxu0
    %v4730 = vadd.f32 %v4377, %v4729
    %v4731 = vpop.f32.mrb[0].mxu0
    %4732 = vdwg.mxu0
    %4733 = vmatprep.subr.bf16.mxu0 0
    %4734 = vmatpush1.bf16.msra.mxu0 %v4013
    %4735 = vmatprep.subr.bf16.mxu0 0
    %4736 = vmatpush1.bf16.msra.mxu0 %v4014
    %4737 = vmatprep.subr.bf16.mxu0 0
    %4738 = vmatpush1.bf16.msra.mxu0 %v4015
    %4739 = vmatprep.subr.bf16.mxu0 0
    %4740 = vmatpush1.bf16.msra.mxu0 %v4016
    %4741 = vmatprep.subr.bf16.mxu0 0
    %4742 = vmatpush1.bf16.msra.mxu0 %v4017
    %4743 = vmatprep.subr.bf16.mxu0 0
    %4744 = vmatpush1.bf16.msra.mxu0 %v4018
    %4745 = vmatprep.subr.bf16.mxu0 0
    %4746 = vmatpush1.bf16.msra.mxu0 %v4019
    %4747 = vmatprep.subr.bf16.mxu0 0
    %4748 = vmatpush1.bf16.msra.mxu0 %v4020
    %4749 = vmatprep.subr.bf16.mxu0 0
    %4750 = vmatpush1.bf16.msra.mxu0 0
    %4751 = vmatprep.subr.bf16.mxu0 0
    %4752 = vmatpush1.bf16.msra.mxu0 0
    %4753 = vmatprep.subr.bf16.mxu0 0
    %4754 = vmatpush1.bf16.msra.mxu0 0
    %4755 = vmatprep.subr.bf16.mxu0 0
    %4756 = vmatpush1.bf16.msra.mxu0 0
    %4757 = vmatprep.subr.bf16.mxu0 0
    %4758 = vmatpush1.bf16.msra.mxu0 0
    %4759 = vmatprep.subr.bf16.mxu0 0
    %4760 = vmatpush1.bf16.msra.mxu0 0
    %4761 = vmatprep.subr.bf16.mxu0 0
    %4762 = vmatpush1.bf16.msra.mxu0 0
    %4763 = vmatprep.subr.bf16.mxu0 0
    %4764 = vmatpush1.bf16.msra.mxu0 0
    %4765 = vmatprep.mubr.bf16.mxu0 0
    %4766 = vmatmul.mubr.bf16.gmra.mrb[0].mxu0 %v1739
    %v4767 = vpop.f32.mrb[0].mxu0
    %v4768 = vadd.f32 %v4415, %v4767
    %v4769 = vpop.f32.mrb[0].mxu0
    %v4770 = vpop.f32.mrb[0].mxu0
    %v4771 = vadd.f32 %v4418, %v4770
    %v4772 = vpop.f32.mrb[0].mxu0
    %4773 = vmatprep.mubr.bf16.mxu0 0
    %4774 = vmatmul.mubr.bf16.gmra.mrb[0].mxu0 %v1744
    %v4775 = vpop.f32.mrb[0].mxu0
    %v4776 = vadd.f32 %v4423, %v4775
    %v4777 = vpop.f32.mrb[0].mxu0
    %v4778 = vpop.f32.mrb[0].mxu0
    %v4779 = vadd.f32 %v4426, %v4778
    %v4780 = vpop.f32.mrb[0].mxu0
    %4781 = vmatprep.mubr.bf16.mxu0 0
    %4782 = vmatmul.mubr.bf16.gmra.mrb[0].mxu0 %v1749
    %v4783 = vpop.f32.mrb[0].mxu0
    %v4784 = vadd.f32 %v4431, %v4783
    %v4785 = vpop.f32.mrb[0].mxu0
    %v4786 = vpop.f32.mrb[0].mxu0
    %v4787 = vadd.f32 %v4434, %v4786
    %v4788 = vpop.f32.mrb[0].mxu0
    %4789 = vmatprep.mubr.bf16.mxu0 0
    %4790 = vmatmul.mubr.bf16.gmra.mrb[0].mxu0 %v1754
    %v4791 = vpop.f32.mrb[0].mxu0
    %v4792 = vadd.f32 %v4439, %v4791
    %v4793 = vpop.f32.mrb[0].mxu0
    %v4794 = vpop.f32.mrb[0].mxu0
    %v4795 = vadd.f32 %v4442, %v4794
    %v4796 = vpop.f32.mrb[0].mxu0
    %4797 = vmatprep.mubr.bf16.mxu0 0
    %4798 = vmatmul.mubr.bf16.gmra.mrb[0].mxu0 %v1759
    %v4799 = vpop.f32.mrb[0].mxu0
    %v4800 = vadd.f32 %v4447, %v4799
    %v4801 = vpop.f32.mrb[0].mxu0
    %v4802 = vpop.f32.mrb[0].mxu0
    %v4803 = vadd.f32 %v4450, %v4802
    %v4804 = vpop.f32.mrb[0].mxu0
    %4805 = vmatprep.mubr.bf16.mxu0 0
    %4806 = vmatmul.mubr.bf16.gmra.mrb[0].mxu0 %v1764
    %v4807 = vpop.f32.mrb[0].mxu0
    %v4808 = vadd.f32 %v4455, %v4807
    %v4809 = vpop.f32.mrb[0].mxu0
    %v4810 = vpop.f32.mrb[0].mxu0
    %v4811 = vadd.f32 %v4458, %v4810
    %v4812 = vpop.f32.mrb[0].mxu0
    %4813 = vmatprep.mubr.bf16.mxu0 0
    %4814 = vmatmul.mubr.bf16.gmra.mrb[0].mxu0 %v1769
    %v4815 = vpop.f32.mrb[0].mxu0
    %v4816 = vadd.f32 %v4463, %v4815
    %v4817 = vpop.f32.mrb[0].mxu0
    %v4818 = vpop.f32.mrb[0].mxu0
    %v4819 = vadd.f32 %v4466, %v4818
    %v4820 = vpop.f32.mrb[0].mxu0
    %4821 = vmatprep.mubr.bf16.mxu0 0
    %4822 = vmatmul.mubr.bf16.gmra.mrb[0].mxu0 %v1774
    %v4823 = vpop.f32.mrb[0].mxu0
    %v4824 = vadd.f32 %v4471, %v4823
    %v4825 = vpop.f32.mrb[0].mxu0
    %v4826 = vpop.f32.mrb[0].mxu0
    %v4827 = vadd.f32 %v4474, %v4826
    %v4828 = vpop.f32.mrb[0].mxu0
    %4829 = vmatprep.mubr.bf16.mxu0 0
    %4830 = vmatmul.mubr.bf16.gmra.mrb[0].mxu0 %v1779
    %v4831 = vpop.f32.mrb[0].mxu0
    %v4832 = vadd.f32 %v4479, %v4831
    %v4833 = vpop.f32.mrb[0].mxu0
    %v4834 = vpop.f32.mrb[0].mxu0
    %v4835 = vadd.f32 %v4482, %v4834
    %v4836 = vpop.f32.mrb[0].mxu0
    %4837 = vmatprep.mubr.bf16.mxu0 0
    %4838 = vmatmul.mubr.bf16.gmra.mrb[0].mxu0 %v1784
    %v4839 = vpop.f32.mrb[0].mxu0
    %v4840 = vadd.f32 %v4487, %v4839
    %v4841 = vpop.f32.mrb[0].mxu0
    %v4842 = vpop.f32.mrb[0].mxu0
    %v4843 = vadd.f32 %v4490, %v4842
    %v4844 = vpop.f32.mrb[0].mxu0
    %4845 = vmatprep.mubr.bf16.mxu0 0
    %4846 = vmatmul.mubr.bf16.gmra.mrb[0].mxu0 %v1789
    %v4847 = vpop.f32.mrb[0].mxu0
    %v4848 = vadd.f32 %v4495, %v4847
    %v4849 = vpop.f32.mrb[0].mxu0
    %v4850 = vpop.f32.mrb[0].mxu0
    %v4851 = vadd.f32 %v4498, %v4850
    %v4852 = vpop.f32.mrb[0].mxu0
    %4853 = vmatprep.mubr.bf16.mxu0 0
    %4854 = vmatmul.mubr.bf16.gmra.mrb[0].mxu0 %v1794
    %v4855 = vpop.f32.mrb[0].mxu0
    %v4856 = vadd.f32 %v4503, %v4855
    %v4857 = vpop.f32.mrb[0].mxu0
    %v4858 = vpop.f32.mrb[0].mxu0
    %v4859 = vadd.f32 %v4506, %v4858
    %v4860 = vpop.f32.mrb[0].mxu0
    %4861 = vmatprep.mubr.bf16.mxu0 0
    %4862 = vmatmul.mubr.bf16.gmra.mrb[0].mxu0 %v1799
    %v4863 = vpop.f32.mrb[0].mxu0
    %v4864 = vadd.f32 %v4511, %v4863
    %v4865 = vpop.f32.mrb[0].mxu0
    %v4866 = vpop.f32.mrb[0].mxu0
    %v4867 = vadd.f32 %v4514, %v4866
    %v4868 = vpop.f32.mrb[0].mxu0
    %4869 = vmatprep.mubr.bf16.mxu0 0
    %4870 = vmatmul.mubr.bf16.gmra.mrb[0].mxu0 %v1804
    %v4871 = vpop.f32.mrb[0].mxu0
    %v4872 = vadd.f32 %v4519, %v4871
    %v4873 = vpop.f32.mrb[0].mxu0
    %v4874 = vpop.f32.mrb[0].mxu0
    %v4875 = vadd.f32 %v4522, %v4874
    %v4876 = vpop.f32.mrb[0].mxu0
    %4877 = vmatprep.mubr.bf16.mxu0 0
    %4878 = vmatmul.mubr.bf16.gmra.mrb[0].mxu0 %v1809
    %v4879 = vpop.f32.mrb[0].mxu0
    %v4880 = vadd.f32 %v4527, %v4879
    %v4881 = vpop.f32.mrb[0].mxu0
    %v4882 = vpop.f32.mrb[0].mxu0
    %v4883 = vadd.f32 %v4530, %v4882
    %v4884 = vpop.f32.mrb[0].mxu0
    %4885 = vmatprep.mubr.bf16.mxu0 0
    %4886 = vmatmul.mubr.bf16.gmra.mrb[0].mxu0 %v1814
    %v4887 = vpop.f32.mrb[0].mxu0
    %v4888 = vadd.f32 %v4535, %v4887
    %v4889 = vpop.f32.mrb[0].mxu0
    %v4890 = vpop.f32.mrb[0].mxu0
    %v4891 = vadd.f32 %v4538, %v4890
    %v4892 = vpop.f32.mrb[0].mxu0
    %4893 = vmatprep.mubr.bf16.mxu0 0
    %4894 = vmatmul.mubr.bf16.gmra.mrb[0].mxu0 %v1819
    %v4895 = vpop.f32.mrb[0].mxu0
    %v4896 = vadd.f32 %v4543, %v4895
    %v4897 = vpop.f32.mrb[0].mxu0
    %v4898 = vpop.f32.mrb[0].mxu0
    %v4899 = vadd.f32 %v4546, %v4898
    %v4900 = vpop.f32.mrb[0].mxu0
    %4901 = vmatprep.mubr.bf16.mxu0 0
    %4902 = vmatmul.mubr.bf16.gmra.mrb[0].mxu0 %v1824
    %v4903 = vpop.f32.mrb[0].mxu0
    %v4904 = vadd.f32 %v4551, %v4903
    %v4905 = vpop.f32.mrb[0].mxu0
    %v4906 = vpop.f32.mrb[0].mxu0
    %v4907 = vadd.f32 %v4554, %v4906
    %v4908 = vpop.f32.mrb[0].mxu0
    %4909 = vmatprep.mubr.bf16.mxu0 0
    %4910 = vmatmul.mubr.bf16.gmra.mrb[0].mxu0 %v1829
    %v4911 = vpop.f32.mrb[0].mxu0
    %v4912 = vadd.f32 %v4559, %v4911
    %v4913 = vpop.f32.mrb[0].mxu0
    %v4914 = vpop.f32.mrb[0].mxu0
    %v4915 = vadd.f32 %v4562, %v4914
    %v4916 = vpop.f32.mrb[0].mxu0
    %4917 = vmatprep.mubr.bf16.mxu0 0
    %4918 = vmatmul.mubr.bf16.gmra.mrb[0].mxu0 %v1834
    %v4919 = vpop.f32.mrb[0].mxu0
    %v4920 = vadd.f32 %v4567, %v4919
    %v4921 = vpop.f32.mrb[0].mxu0
    %v4922 = vpop.f32.mrb[0].mxu0
    %v4923 = vadd.f32 %v4570, %v4922
    %v4924 = vpop.f32.mrb[0].mxu0
    %4925 = vmatprep.mubr.bf16.mxu0 0
    %4926 = vmatmul.mubr.bf16.gmra.mrb[0].mxu0 %v1839
    %v4927 = vpop.f32.mrb[0].mxu0
    %v4928 = vadd.f32 %v4575, %v4927
    %v4929 = vpop.f32.mrb[0].mxu0
    %v4930 = vpop.f32.mrb[0].mxu0
    %v4931 = vadd.f32 %v4578, %v4930
    %v4932 = vpop.f32.mrb[0].mxu0
    %4933 = vmatprep.mubr.bf16.mxu0 0
    %4934 = vmatmul.mubr.bf16.gmra.mrb[0].mxu0 %v1844
    %v4935 = vpop.f32.mrb[0].mxu0
    %v4936 = vadd.f32 %v4583, %v4935
    %v4937 = vpop.f32.mrb[0].mxu0
    %v4938 = vpop.f32.mrb[0].mxu0
    %v4939 = vadd.f32 %v4586, %v4938
    %v4940 = vpop.f32.mrb[0].mxu0
    %4941 = vmatprep.mubr.bf16.mxu0 0
    %4942 = vmatmul.mubr.bf16.gmra.mrb[0].mxu0 %v1849
    %v4943 = vpop.f32.mrb[0].mxu0
    %v4944 = vadd.f32 %v4591, %v4943
    %v4945 = vpop.f32.mrb[0].mxu0
    %v4946 = vpop.f32.mrb[0].mxu0
    %v4947 = vadd.f32 %v4594, %v4946
    %v4948 = vpop.f32.mrb[0].mxu0
    %4949 = vmatprep.mubr.bf16.mxu0 0
    %4950 = vmatmul.mubr.bf16.gmra.mrb[0].mxu0 %v1854
    %v4951 = vpop.f32.mrb[0].mxu0
    %v4952 = vadd.f32 %v4599, %v4951
    %v4953 = vpop.f32.mrb[0].mxu0
    %v4954 = vpop.f32.mrb[0].mxu0
    %v4955 = vadd.f32 %v4602, %v4954
    %v4956 = vpop.f32.mrb[0].mxu0
    %4957 = vmatprep.mubr.bf16.mxu0 0
    %4958 = vmatmul.mubr.bf16.gmra.mrb[0].mxu0 %v1859
    %v4959 = vpop.f32.mrb[0].mxu0
    %v4960 = vadd.f32 %v4607, %v4959
    %v4961 = vpop.f32.mrb[0].mxu0
    %v4962 = vpop.f32.mrb[0].mxu0
    %v4963 = vadd.f32 %v4610, %v4962
    %v4964 = vpop.f32.mrb[0].mxu0
    %4965 = vmatprep.mubr.bf16.mxu0 0
    %4966 = vmatmul.mubr.bf16.gmra.mrb[0].mxu0 %v1864
    %v4967 = vpop.f32.mrb[0].mxu0
    %v4968 = vadd.f32 %v4615, %v4967
    %v4969 = vpop.f32.mrb[0].mxu0
    %v4970 = vpop.f32.mrb[0].mxu0
    %v4971 = vadd.f32 %v4618, %v4970
    %v4972 = vpop.f32.mrb[0].mxu0
    %4973 = vmatprep.mubr.bf16.mxu0 0
    %4974 = vmatmul.mubr.bf16.gmra.mrb[0].mxu0 %v1869
    %v4975 = vpop.f32.mrb[0].mxu0
    %v4976 = vadd.f32 %v4623, %v4975
    %v4977 = vpop.f32.mrb[0].mxu0
    %v4978 = vpop.f32.mrb[0].mxu0
    %v4979 = vadd.f32 %v4626, %v4978
    %v4980 = vpop.f32.mrb[0].mxu0
    %4981 = vmatprep.mubr.bf16.mxu0 0
    %4982 = vmatmul.mubr.bf16.gmra.mrb[0].mxu0 %v1874
    %v4983 = vpop.f32.mrb[0].mxu0
    %v4984 = vadd.f32 %v4631, %v4983
    %v4985 = vpop.f32.mrb[0].mxu0
    %v4986 = vpop.f32.mrb[0].mxu0
    %v4987 = vadd.f32 %v4634, %v4986
    %v4988 = vpop.f32.mrb[0].mxu0
    %4989 = vmatprep.mubr.bf16.mxu0 0
    %4990 = vmatmul.mubr.bf16.gmra.mrb[0].mxu0 %v1879
    %v4991 = vpop.f32.mrb[0].mxu0
    %v4992 = vadd.f32 %v4639, %v4991
    %v4993 = vpop.f32.mrb[0].mxu0
    %v4994 = vpop.f32.mrb[0].mxu0
    %v4995 = vadd.f32 %v4642, %v4994
    %v4996 = vpop.f32.mrb[0].mxu0
    %4997 = vmatprep.mubr.bf16.mxu0 0
    %4998 = vmatmul.mubr.bf16.gmra.mrb[0].mxu0 %v1884
    %v4999 = vpop.f32.mrb[0].mxu0
    %v5000 = vadd.f32 %v4647, %v4999
    %v5001 = vpop.f32.mrb[0].mxu0
    %v5002 = vpop.f32.mrb[0].mxu0
    %v5003 = vadd.f32 %v4650, %v5002
    %v5004 = vpop.f32.mrb[0].mxu0
    %5005 = vmatprep.mubr.bf16.mxu0 0
    %5006 = vmatmul.mubr.bf16.gmra.mrb[0].mxu0 %v1889
    %v5007 = vpop.f32.mrb[0].mxu0
    %v5008 = vadd.f32 %v4655, %v5007
    %v5009 = vpop.f32.mrb[0].mxu0
    %v5010 = vpop.f32.mrb[0].mxu0
    %v5011 = vadd.f32 %v4658, %v5010
    %v5012 = vpop.f32.mrb[0].mxu0
    %5013 = vmatprep.mubr.bf16.mxu0 0
    %5014 = vmatmul.mubr.bf16.gmra.mrb[0].mxu0 %v1894
    %v5015 = vpop.f32.mrb[0].mxu0
    %v5016 = vadd.f32 %v4663, %v5015
    %v5017 = vpop.f32.mrb[0].mxu0
    %v5018 = vpop.f32.mrb[0].mxu0
    %v5019 = vadd.f32 %v4666, %v5018
    %v5020 = vpop.f32.mrb[0].mxu0
    %5021 = vmatprep.mubr.bf16.mxu0 0
    %5022 = vmatmul.mubr.bf16.gmra.mrb[0].mxu0 %v1899
    %v5023 = vpop.f32.mrb[0].mxu0
    %v5024 = vadd.f32 %v4671, %v5023
    %v5025 = vpop.f32.mrb[0].mxu0
    %v5026 = vpop.f32.mrb[0].mxu0
    %v5027 = vadd.f32 %v4674, %v5026
    %v5028 = vpop.f32.mrb[0].mxu0
    %5029 = vmatprep.mubr.bf16.mxu0 0
    %5030 = vmatmul.mubr.bf16.gmra.mrb[0].mxu0 %v1904
    %v5031 = vpop.f32.mrb[0].mxu0
    %v5032 = vadd.f32 %v4679, %v5031
    %v5033 = vpop.f32.mrb[0].mxu0
    %v5034 = vpop.f32.mrb[0].mxu0
    %v5035 = vadd.f32 %v4682, %v5034
    %v5036 = vpop.f32.mrb[0].mxu0
    %5037 = vmatprep.mubr.bf16.mxu0 0
    %5038 = vmatmul.mubr.bf16.gmra.mrb[0].mxu0 %v1909
    %v5039 = vpop.f32.mrb[0].mxu0
    %v5040 = vadd.f32 %v4687, %v5039
    %v5041 = vpop.f32.mrb[0].mxu0
    %v5042 = vpop.f32.mrb[0].mxu0
    %v5043 = vadd.f32 %v4690, %v5042
    %v5044 = vpop.f32.mrb[0].mxu0
    %5045 = vmatprep.mubr.bf16.mxu0 0
    %5046 = vmatmul.mubr.bf16.gmra.mrb[0].mxu0 %v1914
    %v5047 = vpop.f32.mrb[0].mxu0
    %v5048 = vadd.f32 %v4695, %v5047
    %v5049 = vpop.f32.mrb[0].mxu0
    %v5050 = vpop.f32.mrb[0].mxu0
    %v5051 = vadd.f32 %v4698, %v5050
    %v5052 = vpop.f32.mrb[0].mxu0
    %5053 = vmatprep.mubr.bf16.mxu0 0
    %5054 = vmatmul.mubr.bf16.gmra.mrb[0].mxu0 %v1919
    %v5055 = vpop.f32.mrb[0].mxu0
    %v5056 = vadd.f32 %v4703, %v5055
    %v5057 = vpop.f32.mrb[0].mxu0
    %v5058 = vpop.f32.mrb[0].mxu0
    %v5059 = vadd.f32 %v4706, %v5058
    %v5060 = vpop.f32.mrb[0].mxu0
    %5061 = vmatprep.mubr.bf16.mxu0 0
    %5062 = vmatmul.mubr.bf16.gmra.mrb[0].mxu0 %v1924
    %v5063 = vpop.f32.mrb[0].mxu0
    %v5064 = vadd.f32 %v4711, %v5063
    %v5065 = vpop.f32.mrb[0].mxu0
    %v5066 = vpop.f32.mrb[0].mxu0
    %v5067 = vadd.f32 %v4714, %v5066
    %v5068 = vpop.f32.mrb[0].mxu0
    %5069 = vmatprep.mubr.bf16.mxu0 0
    %5070 = vmatmul.mubr.bf16.gmra.mrb[0].mxu0 %v1929
    %v5071 = vpop.f32.mrb[0].mxu0
    %v5072 = vadd.f32 %v4719, %v5071
    %v5073 = vpop.f32.mrb[0].mxu0
    %v5074 = vpop.f32.mrb[0].mxu0
    %v5075 = vadd.f32 %v4722, %v5074
    %v5076 = vpop.f32.mrb[0].mxu0
    %5077 = vmatprep.mubr.bf16.mxu0 0
    %5078 = vmatmul.mubr.bf16.gmra.mrb[0].mxu0 %v1934
    %v5079 = vpop.f32.mrb[0].mxu0
    %v5080 = vadd.f32 %v4727, %v5079
    %v5081 = vpop.f32.mrb[0].mxu0
    %v5082 = vpop.f32.mrb[0].mxu0
    %v5083 = vadd.f32 %v4730, %v5082
    %v5084 = vpop.f32.mrb[0].mxu0
    %5085 = vdwg.mxu0
    %5086 = vst [vmem:[%s12] sm:$0xff] %v4768
    %5087 = vst [vmem:[%s12 + $0x8] sm:$0xff] %v4771
    %5088 = vst [vmem:[%s12 + $0x10] sm:$0xff] %v4776
    %5089 = vst [vmem:[%s12 + $0x18] sm:$0xff] %v4779
    %5090 = vst [vmem:[%s12 + $0x20] sm:$0xff] %v4784
    %5091 = vst [vmem:[%s12 + $0x28] sm:$0xff] %v4787
    %5092 = vst [vmem:[%s12 + $0x30] sm:$0xff] %v4792
    %5093 = vst [vmem:[%s12 + $0x38] sm:$0xff] %v4795
    %5094 = vst [vmem:[%s12 + $0x40] sm:$0xff] %v4800
    %5095 = vst [vmem:[%s12 + $0x48] sm:$0xff] %v4803
    %5096 = vst [vmem:[%s12 + $0x50] sm:$0xff] %v4808
    %5097 = vst [vmem:[%s12 + $0x58] sm:$0xff] %v4811
    %5098 = vst [vmem:[%s12 + $0x60] sm:$0xff] %v4816
    %5099 = vst [vmem:[%s12 + $0x68] sm:$0xff] %v4819
    %5100 = vst [vmem:[%s12 + $0x70] sm:$0xff] %v4824
    %5101 = vst [vmem:[%s12 + $0x78] sm:$0xff] %v4827
    %5102 = vst [vmem:[%s12 + $0x80] sm:$0xff] %v4832
    %5103 = vst [vmem:[%s12 + $0x88] sm:$0xff] %v4835
    %5104 = vst [vmem:[%s12 + $0x90] sm:$0xff] %v4840
    %5105 = vst [vmem:[%s12 + $0x98] sm:$0xff] %v4843
    %5106 = vst [vmem:[%s12 + $0xa0] sm:$0xff] %v4848
    %5107 = vst [vmem:[%s12 + $0xa8] sm:$0xff] %v4851
    %5108 = vst [vmem:[%s12 + $0xb0] sm:$0xff] %v4856
    %5109 = vst [vmem:[%s12 + $0xb8] sm:$0xff] %v4859
    %5110 = vst [vmem:[%s12 + $0xc0] sm:$0xff] %v4864
    %5111 = vst [vmem:[%s12 + $0xc8] sm:$0xff] %v4867
    %5112 = vst [vmem:[%s12 + $0xd0] sm:$0xff] %v4872
    %5113 = vst [vmem:[%s12 + $0xd8] sm:$0xff] %v4875
    %5114 = vst [vmem:[%s12 + $0xe0] sm:$0xff] %v4880
    %5115 = vst [vmem:[%s12 + $0xe8] sm:$0xff] %v4883
    %5116 = vst [vmem:[%s12 + $0xf0] sm:$0xff] %v4888
    %5117 = vst [vmem:[%s12 + $0xf8] sm:$0xff] %v4891
    %5118 = vst [vmem:[%s12 + $0x100] sm:$0xff] %v4896
    %5119 = vst [vmem:[%s12 + $0x108] sm:$0xff] %v4899
    %5120 = vst [vmem:[%s12 + $0x110] sm:$0xff] %v4904
    %5121 = vst [vmem:[%s12 + $0x118] sm:$0xff] %v4907
    %5122 = vst [vmem:[%s12 + $0x120] sm:$0xff] %v4912
    %5123 = vst [vmem:[%s12 + $0x128] sm:$0xff] %v4915
    %5124 = vst [vmem:[%s12 + $0x130] sm:$0xff] %v4920
    %5125 = vst [vmem:[%s12 + $0x138] sm:$0xff] %v4923
    %5126 = vst [vmem:[%s12 + $0x140] sm:$0xff] %v4928
    %5127 = vst [vmem:[%s12 + $0x148] sm:$0xff] %v4931
    %5128 = vst [vmem:[%s12 + $0x150] sm:$0xff] %v4936
    %5129 = vst [vmem:[%s12 + $0x158] sm:$0xff] %v4939
    %5130 = vst [vmem:[%s12 + $0x160] sm:$0xff] %v4944
    %5131 = vst [vmem:[%s12 + $0x168] sm:$0xff] %v4947
    %5132 = vst [vmem:[%s12 + $0x170] sm:$0xff] %v4952
    %5133 = vst [vmem:[%s12 + $0x178] sm:$0xff] %v4955
    %5134 = vst [vmem:[%s12 + $0x180] sm:$0xff] %v4960
    %5135 = vst [vmem:[%s12 + $0x188] sm:$0xff] %v4963
    %5136 = vst [vmem:[%s12 + $0x190] sm:$0xff] %v4968
    %5137 = vst [vmem:[%s12 + $0x198] sm:$0xff] %v4971
    %5138 = vst [vmem:[%s12 + $0x1a0] sm:$0xff] %v4976
    %5139 = vst [vmem:[%s12 + $0x1a8] sm:$0xff] %v4979
    %5140 = vst [vmem:[%s12 + $0x1b0] sm:$0xff] %v4984
    %5141 = vst [vmem:[%s12 + $0x1b8] sm:$0xff] %v4987
    %5142 = vst [vmem:[%s12 + $0x1c0] sm:$0xff] %v4992
    %5143 = vst [vmem:[%s12 + $0x1c8] sm:$0xff] %v4995
    %5144 = vst [vmem:[%s12 + $0x1d0] sm:$0xff] %v5000
    %5145 = vst [vmem:[%s12 + $0x1d8] sm:$0xff] %v5003
    %5146 = vst [vmem:[%s12 + $0x1e0] sm:$0xff] %v5008
    %5147 = vst [vmem:[%s12 + $0x1e8] sm:$0xff] %v5011
    %5148 = vst [vmem:[%s12 + $0x1f0] sm:$0xff] %v5016
    %5149 = vst [vmem:[%s12 + $0x1f8] sm:$0xff] %v5019
    %5150 = vst [vmem:[%s12 + $0x200] sm:$0xff] %v5024
    %5151 = vst [vmem:[%s12 + $0x208] sm:$0xff] %v5027
    %5152 = vst [vmem:[%s12 + $0x210] sm:$0xff] %v5032
    %5153 = vst [vmem:[%s12 + $0x218] sm:$0xff] %v5035
    %5154 = vst [vmem:[%s12 + $0x220] sm:$0xff] %v5040
    %5155 = vst [vmem:[%s12 + $0x228] sm:$0xff] %v5043
    %5156 = vst [vmem:[%s12 + $0x230] sm:$0xff] %v5048
    %5157 = vst [vmem:[%s12 + $0x238] sm:$0xff] %v5051
    %5158 = vst [vmem:[%s12 + $0x240] sm:$0xff] %v5056
    %5159 = vst [vmem:[%s12 + $0x248] sm:$0xff] %v5059
    %5160 = vst [vmem:[%s12 + $0x250] sm:$0xff] %v5064
    %5161 = vst [vmem:[%s12 + $0x258] sm:$0xff] %v5067
    %5162 = vst [vmem:[%s12 + $0x260] sm:$0xff] %v5072
    %5163 = vst [vmem:[%s12 + $0x268] sm:$0xff] %v5075
    %5164 = vst [vmem:[%s12 + $0x270] sm:$0xff] %v5080
    %5165 = vst [vmem:[%s12 + $0x278] sm:$0xff] %v5083
    %vm5166 = vcmp.gt.f32.partialorder %v4768, 0.0
    %vm5167 = vcmp.gt.f32.partialorder %v4771, 0.0
    %vm5168 = vcmp.gt.f32.partialorder %v4776, 0.0
    %vm5169 = vcmp.gt.f32.partialorder %v4779, 0.0
    %vm5170 = vcmp.gt.f32.partialorder %v4784, 0.0
    %vm5171 = vcmp.gt.f32.partialorder %v4787, 0.0
    %vm5172 = vcmp.gt.f32.partialorder %v4792, 0.0
    %vm5173 = vcmp.gt.f32.partialorder %v4795, 0.0
    %vm5174 = vcmp.gt.f32.partialorder %v4800, 0.0
    %vm5175 = vcmp.gt.f32.partialorder %v4803, 0.0
    %vm5176 = vcmp.gt.f32.partialorder %v4808, 0.0
    %vm5177 = vcmp.gt.f32.partialorder %v4811, 0.0
    %vm5178 = vcmp.gt.f32.partialorder %v4816, 0.0
    %vm5179 = vcmp.gt.f32.partialorder %v4819, 0.0
    %vm5180 = vcmp.gt.f32.partialorder %v4824, 0.0
    %vm5181 = vcmp.gt.f32.partialorder %v4827, 0.0
    %vm5182 = vcmp.gt.f32.partialorder %v4832, 0.0
    %vm5183 = vcmp.gt.f32.partialorder %v4835, 0.0
    %vm5184 = vcmp.gt.f32.partialorder %v4840, 0.0
    %vm5185 = vcmp.gt.f32.partialorder %v4843, 0.0
    %vm5186 = vcmp.gt.f32.partialorder %v4848, 0.0
    %vm5187 = vcmp.gt.f32.partialorder %v4851, 0.0
    %vm5188 = vcmp.gt.f32.partialorder %v4856, 0.0
    %vm5189 = vcmp.gt.f32.partialorder %v4859, 0.0
    %vm5190 = vcmp.gt.f32.partialorder %v4864, 0.0
    %vm5191 = vcmp.gt.f32.partialorder %v4867, 0.0
    %vm5192 = vcmp.gt.f32.partialorder %v4872, 0.0
    %vm5193 = vcmp.gt.f32.partialorder %v4875, 0.0
    %vm5194 = vcmp.gt.f32.partialorder %v4880, 0.0
    %vm5195 = vcmp.gt.f32.partialorder %v4883, 0.0
    %vm5196 = vcmp.gt.f32.partialorder %v4888, 0.0
    %vm5197 = vcmp.gt.f32.partialorder %v4891, 0.0
    %vm5198 = vcmp.gt.f32.partialorder %v4896, 0.0
    %vm5199 = vcmp.gt.f32.partialorder %v4899, 0.0
    %vm5200 = vcmp.gt.f32.partialorder %v4904, 0.0
    %vm5201 = vcmp.gt.f32.partialorder %v4907, 0.0
    %vm5202 = vcmp.gt.f32.partialorder %v4912, 0.0
    %vm5203 = vcmp.gt.f32.partialorder %v4915, 0.0
    %vm5204 = vcmp.gt.f32.partialorder %v4920, 0.0
    %vm5205 = vcmp.gt.f32.partialorder %v4923, 0.0
    %vm5206 = vcmp.gt.f32.partialorder %v4928, 0.0
    %vm5207 = vcmp.gt.f32.partialorder %v4931, 0.0
    %vm5208 = vcmp.gt.f32.partialorder %v4936, 0.0
    %vm5209 = vcmp.gt.f32.partialorder %v4939, 0.0
    %vm5210 = vcmp.gt.f32.partialorder %v4944, 0.0
    %vm5211 = vcmp.gt.f32.partialorder %v4947, 0.0
    %vm5212 = vcmp.gt.f32.partialorder %v4952, 0.0
    %vm5213 = vcmp.gt.f32.partialorder %v4955, 0.0
    %vm5214 = vcmp.gt.f32.partialorder %v4960, 0.0
    %vm5215 = vcmp.gt.f32.partialorder %v4963, 0.0
    %vm5216 = vcmp.gt.f32.partialorder %v4968, 0.0
    %vm5217 = vcmp.gt.f32.partialorder %v4971, 0.0
    %vm5218 = vcmp.gt.f32.partialorder %v4976, 0.0
    %vm5219 = vcmp.gt.f32.partialorder %v4979, 0.0
    %vm5220 = vcmp.gt.f32.partialorder %v4984, 0.0
    %vm5221 = vcmp.gt.f32.partialorder %v4987, 0.0
    %vm5222 = vcmp.gt.f32.partialorder %v4992, 0.0
    %vm5223 = vcmp.gt.f32.partialorder %v4995, 0.0
    %vm5224 = vcmp.gt.f32.partialorder %v5000, 0.0
    %vm5225 = vcmp.gt.f32.partialorder %v5003, 0.0
    %vm5226 = vcmp.gt.f32.partialorder %v5008, 0.0
    %vm5227 = vcmp.gt.f32.partialorder %v5011, 0.0
    %vm5228 = vcmp.gt.f32.partialorder %v5016, 0.0
    %vm5229 = vcmp.gt.f32.partialorder %v5019, 0.0
    %vm5230 = vcmp.gt.f32.partialorder %v5024, 0.0
    %vm5231 = vcmp.gt.f32.partialorder %v5027, 0.0
    %vm5232 = vcmp.gt.f32.partialorder %v5032, 0.0
    %vm5233 = vcmp.gt.f32.partialorder %v5035, 0.0
    %vm5234 = vcmp.gt.f32.partialorder %v5040, 0.0
    %vm5235 = vcmp.gt.f32.partialorder %v5043, 0.0
    %vm5236 = vcmp.gt.f32.partialorder %v5048, 0.0
    %vm5237 = vcmp.gt.f32.partialorder %v5051, 0.0
    %vm5238 = vcmp.gt.f32.partialorder %v5056, 0.0
    %vm5239 = vcmp.gt.f32.partialorder %v5059, 0.0
    %vm5240 = vcmp.gt.f32.partialorder %v5064, 0.0
    %vm5241 = vcmp.gt.f32.partialorder %v5067, 0.0
    %vm5242 = vcmp.gt.f32.partialorder %v5072, 0.0
    %vm5243 = vcmp.gt.f32.partialorder %v5075, 0.0
    %vm5244 = vcmp.gt.f32.partialorder %v5080, 0.0
    %vm5245 = vcmp.gt.f32.partialorder %v5083, 0.0
    %v5246 = vmul.f32 %v4768, 0.01
    %v5247 = vmul.f32 %v4771, 0.01
    %v5248 = vmul.f32 %v4776, 0.01
    %v5249 = vmul.f32 %v4779, 0.01
    %v5250 = vmul.f32 %v4784, 0.01
    %v5251 = vmul.f32 %v4787, 0.01
    %v5252 = vmul.f32 %v4792, 0.01
    %v5253 = vmul.f32 %v4795, 0.01
    %v5254 = vmul.f32 %v4800, 0.01
    %v5255 = vmul.f32 %v4803, 0.01
    %v5256 = vmul.f32 %v4808, 0.01
    %v5257 = vmul.f32 %v4811, 0.01
    %v5258 = vmul.f32 %v4816, 0.01
    %v5259 = vmul.f32 %v4819, 0.01
    %v5260 = vmul.f32 %v4824, 0.01
    %v5261 = vmul.f32 %v4827, 0.01
    %v5262 = vmul.f32 %v4832, 0.01
    %v5263 = vmul.f32 %v4835, 0.01
    %v5264 = vmul.f32 %v4840, 0.01
    %v5265 = vmul.f32 %v4843, 0.01
    %v5266 = vmul.f32 %v4848, 0.01
    %v5267 = vmul.f32 %v4851, 0.01
    %v5268 = vmul.f32 %v4856, 0.01
    %v5269 = vmul.f32 %v4859, 0.01
    %v5270 = vmul.f32 %v4864, 0.01
    %v5271 = vmul.f32 %v4867, 0.01
    %v5272 = vmul.f32 %v4872, 0.01
    %v5273 = vmul.f32 %v4875, 0.01
    %v5274 = vmul.f32 %v4880, 0.01
    %v5275 = vmul.f32 %v4883, 0.01
    %v5276 = vmul.f32 %v4888, 0.01
    %v5277 = vmul.f32 %v4891, 0.01
    %v5278 = vmul.f32 %v4896, 0.01
    %v5279 = vmul.f32 %v4899, 0.01
    %v5280 = vmul.f32 %v4904, 0.01
    %v5281 = vmul.f32 %v4907, 0.01
    %v5282 = vmul.f32 %v4912, 0.01
    %v5283 = vmul.f32 %v4915, 0.01
    %v5284 = vmul.f32 %v4920, 0.01
    %v5285 = vmul.f32 %v4923, 0.01
    %v5286 = vmul.f32 %v4928, 0.01
    %v5287 = vmul.f32 %v4931, 0.01
    %v5288 = vmul.f32 %v4936, 0.01
    %v5289 = vmul.f32 %v4939, 0.01
    %v5290 = vmul.f32 %v4944, 0.01
    %v5291 = vmul.f32 %v4947, 0.01
    %v5292 = vmul.f32 %v4952, 0.01
    %v5293 = vmul.f32 %v4955, 0.01
    %v5294 = vmul.f32 %v4960, 0.01
    %v5295 = vmul.f32 %v4963, 0.01
    %v5296 = vmul.f32 %v4968, 0.01
    %v5297 = vmul.f32 %v4971, 0.01
    %v5298 = vmul.f32 %v4976, 0.01
    %v5299 = vmul.f32 %v4979, 0.01
    %v5300 = vmul.f32 %v4984, 0.01
    %v5301 = vmul.f32 %v4987, 0.01
    %v5302 = vmul.f32 %v4992, 0.01
    %v5303 = vmul.f32 %v4995, 0.01
    %v5304 = vmul.f32 %v5000, 0.01
    %v5305 = vmul.f32 %v5003, 0.01
    %v5306 = vmul.f32 %v5008, 0.01
    %v5307 = vmul.f32 %v5011, 0.01
    %v5308 = vmul.f32 %v5016, 0.01
    %v5309 = vmul.f32 %v5019, 0.01
    %v5310 = vmul.f32 %v5024, 0.01
    %v5311 = vmul.f32 %v5027, 0.01
    %v5312 = vmul.f32 %v5032, 0.01
    %v5313 = vmul.f32 %v5035, 0.01
    %v5314 = vmul.f32 %v5040, 0.01
    %v5315 = vmul.f32 %v5043, 0.01
    %v5316 = vmul.f32 %v5048, 0.01
    %v5317 = vmul.f32 %v5051, 0.01
    %v5318 = vmul.f32 %v5056, 0.01
    %v5319 = vmul.f32 %v5059, 0.01
    %v5320 = vmul.f32 %v5064, 0.01
    %v5321 = vmul.f32 %v5067, 0.01
    %v5322 = vmul.f32 %v5072, 0.01
    %v5323 = vmul.f32 %v5075, 0.01
    %v5324 = vmul.f32 %v5080, 0.01
    %v5325 = vmul.f32 %v5083, 0.01
    %v5326 = vsel %vm5166, %v4768, %v5246
    %v5327 = vsel %vm5167, %v4771, %v5247
    %v5328 = vsel %vm5168, %v4776, %v5248
    %v5329 = vsel %vm5169, %v4779, %v5249
    %v5330 = vsel %vm5170, %v4784, %v5250
    %v5331 = vsel %vm5171, %v4787, %v5251
    %v5332 = vsel %vm5172, %v4792, %v5252
    %v5333 = vsel %vm5173, %v4795, %v5253
    %v5334 = vsel %vm5174, %v4800, %v5254
    %v5335 = vsel %vm5175, %v4803, %v5255
    %v5336 = vsel %vm5176, %v4808, %v5256
    %v5337 = vsel %vm5177, %v4811, %v5257
    %v5338 = vsel %vm5178, %v4816, %v5258
    %v5339 = vsel %vm5179, %v4819, %v5259
    %v5340 = vsel %vm5180, %v4824, %v5260
    %v5341 = vsel %vm5181, %v4827, %v5261
    %v5342 = vsel %vm5182, %v4832, %v5262
    %v5343 = vsel %vm5183, %v4835, %v5263
    %v5344 = vsel %vm5184, %v4840, %v5264
    %v5345 = vsel %vm5185, %v4843, %v5265
    %v5346 = vsel %vm5186, %v4848, %v5266
    %v5347 = vsel %vm5187, %v4851, %v5267
    %v5348 = vsel %vm5188, %v4856, %v5268
    %v5349 = vsel %vm5189, %v4859, %v5269
    %v5350 = vsel %vm5190, %v4864, %v5270
    %v5351 = vsel %vm5191, %v4867, %v5271
    %v5352 = vsel %vm5192, %v4872, %v5272
    %v5353 = vsel %vm5193, %v4875, %v5273
    %v5354 = vsel %vm5194, %v4880, %v5274
    %v5355 = vsel %vm5195, %v4883, %v5275
    %v5356 = vsel %vm5196, %v4888, %v5276
    %v5357 = vsel %vm5197, %v4891, %v5277
    %v5358 = vsel %vm5198, %v4896, %v5278
    %v5359 = vsel %vm5199, %v4899, %v5279
    %v5360 = vsel %vm5200, %v4904, %v5280
    %v5361 = vsel %vm5201, %v4907, %v5281
    %v5362 = vsel %vm5202, %v4912, %v5282
    %v5363 = vsel %vm5203, %v4915, %v5283
    %v5364 = vsel %vm5204, %v4920, %v5284
    %v5365 = vsel %vm5205, %v4923, %v5285
    %v5366 = vsel %vm5206, %v4928, %v5286
    %v5367 = vsel %vm5207, %v4931, %v5287
    %v5368 = vsel %vm5208, %v4936, %v5288
    %v5369 = vsel %vm5209, %v4939, %v5289
    %v5370 = vsel %vm5210, %v4944, %v5290
    %v5371 = vsel %vm5211, %v4947, %v5291
    %v5372 = vsel %vm5212, %v4952, %v5292
    %v5373 = vsel %vm5213, %v4955, %v5293
    %v5374 = vsel %vm5214, %v4960, %v5294
    %v5375 = vsel %vm5215, %v4963, %v5295
    %v5376 = vsel %vm5216, %v4968, %v5296
    %v5377 = vsel %vm5217, %v4971, %v5297
    %v5378 = vsel %vm5218, %v4976, %v5298
    %v5379 = vsel %vm5219, %v4979, %v5299
    %v5380 = vsel %vm5220, %v4984, %v5300
    %v5381 = vsel %vm5221, %v4987, %v5301
    %v5382 = vsel %vm5222, %v4992, %v5302
    %v5383 = vsel %vm5223, %v4995, %v5303
    %v5384 = vsel %vm5224, %v5000, %v5304
    %v5385 = vsel %vm5225, %v5003, %v5305
    %v5386 = vsel %vm5226, %v5008, %v5306
    %v5387 = vsel %vm5227, %v5011, %v5307
    %v5388 = vsel %vm5228, %v5016, %v5308
    %v5389 = vsel %vm5229, %v5019, %v5309
    %v5390 = vsel %vm5230, %v5024, %v5310
    %v5391 = vsel %vm5231, %v5027, %v5311
    %v5392 = vsel %vm5232, %v5032, %v5312
    %v5393 = vsel %vm5233, %v5035, %v5313
    %v5394 = vsel %vm5234, %v5040, %v5314
    %v5395 = vsel %vm5235, %v5043, %v5315
    %v5396 = vsel %vm5236, %v5048, %v5316
    %v5397 = vsel %vm5237, %v5051, %v5317
    %v5398 = vsel %vm5238, %v5056, %v5318
    %v5399 = vsel %vm5239, %v5059, %v5319
    %v5400 = vsel %vm5240, %v5064, %v5320
    %v5401 = vsel %vm5241, %v5067, %v5321
    %v5402 = vsel %vm5242, %v5072, %v5322
    %v5403 = vsel %vm5243, %v5075, %v5323
    %v5404 = vsel %vm5244, %v5080, %v5324
    %v5405 = vsel %vm5245, %v5083, %v5325
    %v5406 = vld [vmem:[%s6] sm:$0xff]
    %v5407 = vld [vmem:[%s6 + $0x8] sm:$0xff]
    %v5408 = vld [vmem:[%s6 + $0x10] sm:$0xff]
    %v5409 = vld [vmem:[%s6 + $0x18] sm:$0xff]
    %v5410 = vld [vmem:[%s6 + $0x20] sm:$0xff]
    %v5411 = vld [vmem:[%s6 + $0x28] sm:$0xff]
    %v5412 = vld [vmem:[%s6 + $0x30] sm:$0xff]
    %v5413 = vld [vmem:[%s6 + $0x38] sm:$0xff]
    %v5414 = vld [vmem:[%s6 + $0x40] sm:$0xff]
    %v5415 = vld [vmem:[%s6 + $0x48] sm:$0xff]
    %v5416 = vld [vmem:[%s6 + $0x50] sm:$0xff]
    %v5417 = vld [vmem:[%s6 + $0x58] sm:$0xff]
    %v5418 = vld [vmem:[%s6 + $0x60] sm:$0xff]
    %v5419 = vld [vmem:[%s6 + $0x68] sm:$0xff]
    %v5420 = vld [vmem:[%s6 + $0x70] sm:$0xff]
    %v5421 = vld [vmem:[%s6 + $0x78] sm:$0xff]
    %v5422 = vld [vmem:[%s6 + $0x80] sm:$0xff]
    %v5423 = vld [vmem:[%s6 + $0x88] sm:$0xff]
    %v5424 = vld [vmem:[%s6 + $0x90] sm:$0xff]
    %v5425 = vld [vmem:[%s6 + $0x98] sm:$0xff]
    %v5426 = vld [vmem:[%s6 + $0xa0] sm:$0xff]
    %v5427 = vld [vmem:[%s6 + $0xa8] sm:$0xff]
    %v5428 = vld [vmem:[%s6 + $0xb0] sm:$0xff]
    %v5429 = vld [vmem:[%s6 + $0xb8] sm:$0xff]
    %v5430 = vld [vmem:[%s6 + $0xc0] sm:$0xff]
    %v5431 = vld [vmem:[%s6 + $0xc8] sm:$0xff]
    %v5432 = vld [vmem:[%s6 + $0xd0] sm:$0xff]
    %v5433 = vld [vmem:[%s6 + $0xd8] sm:$0xff]
    %v5434 = vld [vmem:[%s6 + $0xe0] sm:$0xff]
    %v5435 = vld [vmem:[%s6 + $0xe8] sm:$0xff]
    %v5436 = vld [vmem:[%s6 + $0xf0] sm:$0xff]
    %v5437 = vld [vmem:[%s6 + $0xf8] sm:$0xff]
    %v5438 = vld [vmem:[%s6 + $0x100] sm:$0xff]
    %v5439 = vld [vmem:[%s6 + $0x108] sm:$0xff]
    %v5440 = vld [vmem:[%s6 + $0x110] sm:$0xff]
    %v5441 = vld [vmem:[%s6 + $0x118] sm:$0xff]
    %v5442 = vld [vmem:[%s6 + $0x120] sm:$0xff]
    %v5443 = vld [vmem:[%s6 + $0x128] sm:$0xff]
    %v5444 = vld [vmem:[%s6 + $0x130] sm:$0xff]
    %v5445 = vld [vmem:[%s6 + $0x138] sm:$0xff]
    %v5446 = vld [vmem:[%s6 + $0x140] sm:$0xff]
    %v5447 = vld [vmem:[%s6 + $0x148] sm:$0xff]
    %v5448 = vld [vmem:[%s6 + $0x150] sm:$0xff]
    %v5449 = vld [vmem:[%s6 + $0x158] sm:$0xff]
    %v5450 = vld [vmem:[%s6 + $0x160] sm:$0xff]
    %v5451 = vld [vmem:[%s6 + $0x168] sm:$0xff]
    %v5452 = vld [vmem:[%s6 + $0x170] sm:$0xff]
    %v5453 = vld [vmem:[%s6 + $0x178] sm:$0xff]
    %v5454 = vld [vmem:[%s6 + $0x180] sm:$0xff]
    %v5455 = vld [vmem:[%s6 + $0x188] sm:$0xff]
    %v5456 = vld [vmem:[%s6 + $0x190] sm:$0xff]
    %v5457 = vld [vmem:[%s6 + $0x198] sm:$0xff]
    %v5458 = vld [vmem:[%s6 + $0x1a0] sm:$0xff]
    %v5459 = vld [vmem:[%s6 + $0x1a8] sm:$0xff]
    %v5460 = vld [vmem:[%s6 + $0x1b0] sm:$0xff]
    %v5461 = vld [vmem:[%s6 + $0x1b8] sm:$0xff]
    %v5462 = vld [vmem:[%s6 + $0x1c0] sm:$0xff]
    %v5463 = vld [vmem:[%s6 + $0x1c8] sm:$0xff]
    %v5464 = vld [vmem:[%s6 + $0x1d0] sm:$0xff]
    %v5465 = vld [vmem:[%s6 + $0x1d8] sm:$0xff]
    %v5466 = vld [vmem:[%s6 + $0x1e0] sm:$0xff]
    %v5467 = vld [vmem:[%s6 + $0x1e8] sm:$0xff]
    %v5468 = vld [vmem:[%s6 + $0x1f0] sm:$0xff]
    %v5469 = vld [vmem:[%s6 + $0x1f8] sm:$0xff]
    %v5470 = vld [vmem:[%s6 + $0x200] sm:$0xff]
    %v5471 = vld [vmem:[%s6 + $0x208] sm:$0xff]
    %v5472 = vld [vmem:[%s6 + $0x210] sm:$0xff]
    %v5473 = vld [vmem:[%s6 + $0x218] sm:$0xff]
    %v5474 = vld [vmem:[%s6 + $0x220] sm:$0xff]
    %v5475 = vld [vmem:[%s6 + $0x228] sm:$0xff]
    %v5476 = vld [vmem:[%s6 + $0x230] sm:$0xff]
    %v5477 = vld [vmem:[%s6 + $0x238] sm:$0xff]
    %v5478 = vld [vmem:[%s6 + $0x240] sm:$0xff]
    %v5479 = vld [vmem:[%s6 + $0x248] sm:$0xff]
    %v5480 = vld [vmem:[%s6 + $0x250] sm:$0xff]
    %v5481 = vld [vmem:[%s6 + $0x258] sm:$0xff]
    %v5482 = vld [vmem:[%s6 + $0x260] sm:$0xff]
    %v5483 = vld [vmem:[%s6 + $0x268] sm:$0xff]
    %v5484 = vld [vmem:[%s6 + $0x270] sm:$0xff]
    %v5485 = vld [vmem:[%s6 + $0x278] sm:$0xff]
    %v5486 = vld [vmem:[%s6 + $0x280] sm:$0xff]
    %v5487 = vld [vmem:[%s6 + $0x288] sm:$0xff]
    %v5488 = vld [vmem:[%s6 + $0x290] sm:$0xff]
    %v5489 = vld [vmem:[%s6 + $0x298] sm:$0xff]
    %v5490 = vld [vmem:[%s6 + $0x2a0] sm:$0xff]
    %v5491 = vld [vmem:[%s6 + $0x2a8] sm:$0xff]
    %v5492 = vld [vmem:[%s6 + $0x2b0] sm:$0xff]
    %v5493 = vld [vmem:[%s6 + $0x2b8] sm:$0xff]
    %v5494 = vld [vmem:[%s6 + $0x2c0] sm:$0xff]
    %v5495 = vld [vmem:[%s6 + $0x2c8] sm:$0xff]
    %v5496 = vld [vmem:[%s6 + $0x2d0] sm:$0xff]
    %v5497 = vld [vmem:[%s6 + $0x2d8] sm:$0xff]
    %v5498 = vld [vmem:[%s6 + $0x2e0] sm:$0xff]
    %v5499 = vld [vmem:[%s6 + $0x2e8] sm:$0xff]
    %v5500 = vld [vmem:[%s6 + $0x2f0] sm:$0xff]
    %v5501 = vld [vmem:[%s6 + $0x2f8] sm:$0xff]
    %v5502 = vld [vmem:[%s6 + $0x300] sm:$0xff]
    %v5503 = vld [vmem:[%s6 + $0x308] sm:$0xff]
    %v5504 = vld [vmem:[%s6 + $0x310] sm:$0xff]
    %v5505 = vld [vmem:[%s6 + $0x318] sm:$0xff]
    %v5506 = vld [vmem:[%s6 + $0x320] sm:$0xff]
    %v5507 = vld [vmem:[%s6 + $0x328] sm:$0xff]
    %v5508 = vld [vmem:[%s6 + $0x330] sm:$0xff]
    %v5509 = vld [vmem:[%s6 + $0x338] sm:$0xff]
    %v5510 = vld [vmem:[%s6 + $0x340] sm:$0xff]
    %v5511 = vld [vmem:[%s6 + $0x348] sm:$0xff]
    %v5512 = vld [vmem:[%s6 + $0x350] sm:$0xff]
    %v5513 = vld [vmem:[%s6 + $0x358] sm:$0xff]
    %v5514 = vld [vmem:[%s6 + $0x360] sm:$0xff]
    %v5515 = vld [vmem:[%s6 + $0x368] sm:$0xff]
    %v5516 = vld [vmem:[%s6 + $0x370] sm:$0xff]
    %v5517 = vld [vmem:[%s6 + $0x378] sm:$0xff]
    %v5518 = vld [vmem:[%s6 + $0x380] sm:$0xff]
    %v5519 = vld [vmem:[%s6 + $0x388] sm:$0xff]
    %v5520 = vld [vmem:[%s6 + $0x390] sm:$0xff]
    %v5521 = vld [vmem:[%s6 + $0x398] sm:$0xff]
    %v5522 = vld [vmem:[%s6 + $0x3a0] sm:$0xff]
    %v5523 = vld [vmem:[%s6 + $0x3a8] sm:$0xff]
    %v5524 = vld [vmem:[%s6 + $0x3b0] sm:$0xff]
    %v5525 = vld [vmem:[%s6 + $0x3b8] sm:$0xff]
    %v5526 = vld [vmem:[%s6 + $0x3c0] sm:$0xff]
    %v5527 = vld [vmem:[%s6 + $0x3c8] sm:$0xff]
    %v5528 = vld [vmem:[%s6 + $0x3d0] sm:$0xff]
    %v5529 = vld [vmem:[%s6 + $0x3d8] sm:$0xff]
    %v5530 = vld [vmem:[%s6 + $0x3e0] sm:$0xff]
    %v5531 = vld [vmem:[%s6 + $0x3e8] sm:$0xff]
    %v5532 = vld [vmem:[%s6 + $0x3f0] sm:$0xff]
    %v5533 = vld [vmem:[%s6 + $0x3f8] sm:$0xff]
    %v5534 = vld [vmem:[%s6 + $0x400] sm:$0xff]
    %v5535 = vld [vmem:[%s6 + $0x408] sm:$0xff]
    %v5536 = vld [vmem:[%s6 + $0x410] sm:$0xff]
    %v5537 = vld [vmem:[%s6 + $0x418] sm:$0xff]
    %v5538 = vld [vmem:[%s6 + $0x420] sm:$0xff]
    %v5539 = vld [vmem:[%s6 + $0x428] sm:$0xff]
    %v5540 = vld [vmem:[%s6 + $0x430] sm:$0xff]
    %v5541 = vld [vmem:[%s6 + $0x438] sm:$0xff]
    %v5542 = vld [vmem:[%s6 + $0x440] sm:$0xff]
    %v5543 = vld [vmem:[%s6 + $0x448] sm:$0xff]
    %v5544 = vld [vmem:[%s6 + $0x450] sm:$0xff]
    %v5545 = vld [vmem:[%s6 + $0x458] sm:$0xff]
    %v5546 = vld [vmem:[%s6 + $0x460] sm:$0xff]
    %v5547 = vld [vmem:[%s6 + $0x468] sm:$0xff]
    %v5548 = vld [vmem:[%s6 + $0x470] sm:$0xff]
    %v5549 = vld [vmem:[%s6 + $0x478] sm:$0xff]
    %v5550 = vld [vmem:[%s6 + $0x480] sm:$0xff]
    %v5551 = vld [vmem:[%s6 + $0x488] sm:$0xff]
    %v5552 = vld [vmem:[%s6 + $0x490] sm:$0xff]
    %v5553 = vld [vmem:[%s6 + $0x498] sm:$0xff]
    %v5554 = vld [vmem:[%s6 + $0x4a0] sm:$0xff]
    %v5555 = vld [vmem:[%s6 + $0x4a8] sm:$0xff]
    %v5556 = vld [vmem:[%s6 + $0x4b0] sm:$0xff]
    %v5557 = vld [vmem:[%s6 + $0x4b8] sm:$0xff]
    %v5558 = vld [vmem:[%s6 + $0x4c0] sm:$0xff]
    %v5559 = vld [vmem:[%s6 + $0x4c8] sm:$0xff]
    %v5560 = vld [vmem:[%s6 + $0x4d0] sm:$0xff]
    %v5561 = vld [vmem:[%s6 + $0x4d8] sm:$0xff]
    %v5562 = vld [vmem:[%s6 + $0x4e0] sm:$0xff]
    %v5563 = vld [vmem:[%s6 + $0x4e8] sm:$0xff]
    %v5564 = vld [vmem:[%s6 + $0x4f0] sm:$0xff]
    %v5565 = vld [vmem:[%s6 + $0x4f8] sm:$0xff]
    %5567 = vset.pattern.permute.xlu0 64
    %5568 = vperm.xlu0 %5567, %v5326
    %v5569 = vpop.permute.xlu0 %5568
    %5572 = vset.pattern.permute.xlu0 64
    %5573 = vperm.xlu0 %5572, %v5327
    %v5574 = vpop.permute.xlu0 %5573
    %5577 = vset.pattern.permute.xlu0 64
    %5578 = vperm.xlu0 %5577, %v5328
    %v5579 = vpop.permute.xlu0 %5578
    %5582 = vset.pattern.permute.xlu0 64
    %5583 = vperm.xlu0 %5582, %v5329
    %v5584 = vpop.permute.xlu0 %5583
    %5587 = vset.pattern.permute.xlu0 64
    %5588 = vperm.xlu0 %5587, %v5330
    %v5589 = vpop.permute.xlu0 %5588
    %5592 = vset.pattern.permute.xlu0 64
    %5593 = vperm.xlu0 %5592, %v5331
    %v5594 = vpop.permute.xlu0 %5593
    %5597 = vset.pattern.permute.xlu0 64
    %5598 = vperm.xlu0 %5597, %v5332
    %v5599 = vpop.permute.xlu0 %5598
    %5602 = vset.pattern.permute.xlu0 64
    %5603 = vperm.xlu0 %5602, %v5333
    %v5604 = vpop.permute.xlu0 %5603
    %5607 = vset.pattern.permute.xlu0 64
    %5608 = vperm.xlu0 %5607, %v5334
    %v5609 = vpop.permute.xlu0 %5608
    %5612 = vset.pattern.permute.xlu0 64
    %5613 = vperm.xlu0 %5612, %v5335
    %v5614 = vpop.permute.xlu0 %5613
    %5617 = vset.pattern.permute.xlu0 64
    %5618 = vperm.xlu0 %5617, %v5336
    %v5619 = vpop.permute.xlu0 %5618
    %5622 = vset.pattern.permute.xlu0 64
    %5623 = vperm.xlu0 %5622, %v5337
    %v5624 = vpop.permute.xlu0 %5623
    %5627 = vset.pattern.permute.xlu0 64
    %5628 = vperm.xlu0 %5627, %v5338
    %v5629 = vpop.permute.xlu0 %5628
    %5632 = vset.pattern.permute.xlu0 64
    %5633 = vperm.xlu0 %5632, %v5339
    %v5634 = vpop.permute.xlu0 %5633
    %5637 = vset.pattern.permute.xlu0 64
    %5638 = vperm.xlu0 %5637, %v5340
    %v5639 = vpop.permute.xlu0 %5638
    %5642 = vset.pattern.permute.xlu0 64
    %5643 = vperm.xlu0 %5642, %v5341
    %v5644 = vpop.permute.xlu0 %5643
    %5647 = vset.pattern.permute.xlu0 64
    %5648 = vperm.xlu0 %5647, %v5342
    %v5649 = vpop.permute.xlu0 %5648
    %5652 = vset.pattern.permute.xlu0 64
    %5653 = vperm.xlu0 %5652, %v5343
    %v5654 = vpop.permute.xlu0 %5653
    %5657 = vset.pattern.permute.xlu0 64
    %5658 = vperm.xlu0 %5657, %v5344
    %v5659 = vpop.permute.xlu0 %5658
    %5662 = vset.pattern.permute.xlu0 64
    %5663 = vperm.xlu0 %5662, %v5345
    %v5664 = vpop.permute.xlu0 %5663
    %5667 = vset.pattern.permute.xlu0 64
    %5668 = vperm.xlu0 %5667, %v5346
    %v5669 = vpop.permute.xlu0 %5668
    %5672 = vset.pattern.permute.xlu0 64
    %5673 = vperm.xlu0 %5672, %v5347
    %v5674 = vpop.permute.xlu0 %5673
    %5677 = vset.pattern.permute.xlu0 64
    %5678 = vperm.xlu0 %5677, %v5348
    %v5679 = vpop.permute.xlu0 %5678
    %5682 = vset.pattern.permute.xlu0 64
    %5683 = vperm.xlu0 %5682, %v5349
    %v5684 = vpop.permute.xlu0 %5683
    %5687 = vset.pattern.permute.xlu0 64
    %5688 = vperm.xlu0 %5687, %v5350
    %v5689 = vpop.permute.xlu0 %5688
    %5692 = vset.pattern.permute.xlu0 64
    %5693 = vperm.xlu0 %5692, %v5351
    %v5694 = vpop.permute.xlu0 %5693
    %5697 = vset.pattern.permute.xlu0 64
    %5698 = vperm.xlu0 %5697, %v5352
    %v5699 = vpop.permute.xlu0 %5698
    %5702 = vset.pattern.permute.xlu0 64
    %5703 = vperm.xlu0 %5702, %v5353
    %v5704 = vpop.permute.xlu0 %5703
    %5707 = vset.pattern.permute.xlu0 64
    %5708 = vperm.xlu0 %5707, %v5354
    %v5709 = vpop.permute.xlu0 %5708
    %5712 = vset.pattern.permute.xlu0 64
    %5713 = vperm.xlu0 %5712, %v5355
    %v5714 = vpop.permute.xlu0 %5713
    %5717 = vset.pattern.permute.xlu0 64
    %5718 = vperm.xlu0 %5717, %v5356
    %v5719 = vpop.permute.xlu0 %5718
    %5722 = vset.pattern.permute.xlu0 64
    %5723 = vperm.xlu0 %5722, %v5357
    %v5724 = vpop.permute.xlu0 %5723
    %5727 = vset.pattern.permute.xlu0 64
    %5728 = vperm.xlu0 %5727, %v5358
    %v5729 = vpop.permute.xlu0 %5728
    %5732 = vset.pattern.permute.xlu0 64
    %5733 = vperm.xlu0 %5732, %v5359
    %v5734 = vpop.permute.xlu0 %5733
    %5737 = vset.pattern.permute.xlu0 64
    %5738 = vperm.xlu0 %5737, %v5360
    %v5739 = vpop.permute.xlu0 %5738
    %5742 = vset.pattern.permute.xlu0 64
    %5743 = vperm.xlu0 %5742, %v5361
    %v5744 = vpop.permute.xlu0 %5743
    %5747 = vset.pattern.permute.xlu0 64
    %5748 = vperm.xlu0 %5747, %v5362
    %v5749 = vpop.permute.xlu0 %5748
    %5752 = vset.pattern.permute.xlu0 64
    %5753 = vperm.xlu0 %5752, %v5363
    %v5754 = vpop.permute.xlu0 %5753
    %5757 = vset.pattern.permute.xlu0 64
    %5758 = vperm.xlu0 %5757, %v5364
    %v5759 = vpop.permute.xlu0 %5758
    %5762 = vset.pattern.permute.xlu0 64
    %5763 = vperm.xlu0 %5762, %v5365
    %v5764 = vpop.permute.xlu0 %5763
    %5767 = vset.pattern.permute.xlu0 64
    %5768 = vperm.xlu0 %5767, %v5366
    %v5769 = vpop.permute.xlu0 %5768
    %5772 = vset.pattern.permute.xlu0 64
    %5773 = vperm.xlu0 %5772, %v5367
    %v5774 = vpop.permute.xlu0 %5773
    %5777 = vset.pattern.permute.xlu0 64
    %5778 = vperm.xlu0 %5777, %v5368
    %v5779 = vpop.permute.xlu0 %5778
    %5782 = vset.pattern.permute.xlu0 64
    %5783 = vperm.xlu0 %5782, %v5369
    %v5784 = vpop.permute.xlu0 %5783
    %5787 = vset.pattern.permute.xlu0 64
    %5788 = vperm.xlu0 %5787, %v5370
    %v5789 = vpop.permute.xlu0 %5788
    %5792 = vset.pattern.permute.xlu0 64
    %5793 = vperm.xlu0 %5792, %v5371
    %v5794 = vpop.permute.xlu0 %5793
    %5797 = vset.pattern.permute.xlu0 64
    %5798 = vperm.xlu0 %5797, %v5372
    %v5799 = vpop.permute.xlu0 %5798
    %5802 = vset.pattern.permute.xlu0 64
    %5803 = vperm.xlu0 %5802, %v5373
    %v5804 = vpop.permute.xlu0 %5803
    %5807 = vset.pattern.permute.xlu0 64
    %5808 = vperm.xlu0 %5807, %v5374
    %v5809 = vpop.permute.xlu0 %5808
    %5812 = vset.pattern.permute.xlu0 64
    %5813 = vperm.xlu0 %5812, %v5375
    %v5814 = vpop.permute.xlu0 %5813
    %5817 = vset.pattern.permute.xlu0 64
    %5818 = vperm.xlu0 %5817, %v5376
    %v5819 = vpop.permute.xlu0 %5818
    %5822 = vset.pattern.permute.xlu0 64
    %5823 = vperm.xlu0 %5822, %v5377
    %v5824 = vpop.permute.xlu0 %5823
    %5827 = vset.pattern.permute.xlu0 64
    %5828 = vperm.xlu0 %5827, %v5378
    %v5829 = vpop.permute.xlu0 %5828
    %5832 = vset.pattern.permute.xlu0 64
    %5833 = vperm.xlu0 %5832, %v5379
    %v5834 = vpop.permute.xlu0 %5833
    %5837 = vset.pattern.permute.xlu0 64
    %5838 = vperm.xlu0 %5837, %v5380
    %v5839 = vpop.permute.xlu0 %5838
    %5842 = vset.pattern.permute.xlu0 64
    %5843 = vperm.xlu0 %5842, %v5381
    %v5844 = vpop.permute.xlu0 %5843
    %5847 = vset.pattern.permute.xlu0 64
    %5848 = vperm.xlu0 %5847, %v5382
    %v5849 = vpop.permute.xlu0 %5848
    %5852 = vset.pattern.permute.xlu0 64
    %5853 = vperm.xlu0 %5852, %v5383
    %v5854 = vpop.permute.xlu0 %5853
    %5857 = vset.pattern.permute.xlu0 64
    %5858 = vperm.xlu0 %5857, %v5384
    %v5859 = vpop.permute.xlu0 %5858
    %5862 = vset.pattern.permute.xlu0 64
    %5863 = vperm.xlu0 %5862, %v5385
    %v5864 = vpop.permute.xlu0 %5863
    %5867 = vset.pattern.permute.xlu0 64
    %5868 = vperm.xlu0 %5867, %v5386
    %v5869 = vpop.permute.xlu0 %5868
    %5872 = vset.pattern.permute.xlu0 64
    %5873 = vperm.xlu0 %5872, %v5387
    %v5874 = vpop.permute.xlu0 %5873
    %5877 = vset.pattern.permute.xlu0 64
    %5878 = vperm.xlu0 %5877, %v5388
    %v5879 = vpop.permute.xlu0 %5878
    %5882 = vset.pattern.permute.xlu0 64
    %5883 = vperm.xlu0 %5882, %v5389
    %v5884 = vpop.permute.xlu0 %5883
    %5887 = vset.pattern.permute.xlu0 64
    %5888 = vperm.xlu0 %5887, %v5390
    %v5889 = vpop.permute.xlu0 %5888
    %5892 = vset.pattern.permute.xlu0 64
    %5893 = vperm.xlu0 %5892, %v5391
    %v5894 = vpop.permute.xlu0 %5893
    %5897 = vset.pattern.permute.xlu0 64
    %5898 = vperm.xlu0 %5897, %v5392
    %v5899 = vpop.permute.xlu0 %5898
    %5902 = vset.pattern.permute.xlu0 64
    %5903 = vperm.xlu0 %5902, %v5393
    %v5904 = vpop.permute.xlu0 %5903
    %5907 = vset.pattern.permute.xlu0 64
    %5908 = vperm.xlu0 %5907, %v5394
    %v5909 = vpop.permute.xlu0 %5908
    %5912 = vset.pattern.permute.xlu0 64
    %5913 = vperm.xlu0 %5912, %v5395
    %v5914 = vpop.permute.xlu0 %5913
    %5917 = vset.pattern.permute.xlu0 64
    %5918 = vperm.xlu0 %5917, %v5396
    %v5919 = vpop.permute.xlu0 %5918
    %5922 = vset.pattern.permute.xlu0 64
    %5923 = vperm.xlu0 %5922, %v5397
    %v5924 = vpop.permute.xlu0 %5923
    %5927 = vset.pattern.permute.xlu0 64
    %5928 = vperm.xlu0 %5927, %v5398
    %v5929 = vpop.permute.xlu0 %5928
    %5932 = vset.pattern.permute.xlu0 64
    %5933 = vperm.xlu0 %5932, %v5399
    %v5934 = vpop.permute.xlu0 %5933
    %5937 = vset.pattern.permute.xlu0 64
    %5938 = vperm.xlu0 %5937, %v5400
    %v5939 = vpop.permute.xlu0 %5938
    %5942 = vset.pattern.permute.xlu0 64
    %5943 = vperm.xlu0 %5942, %v5401
    %v5944 = vpop.permute.xlu0 %5943
    %5947 = vset.pattern.permute.xlu0 64
    %5948 = vperm.xlu0 %5947, %v5402
    %v5949 = vpop.permute.xlu0 %5948
    %5952 = vset.pattern.permute.xlu0 64
    %5953 = vperm.xlu0 %5952, %v5403
    %v5954 = vpop.permute.xlu0 %5953
    %5957 = vset.pattern.permute.xlu0 64
    %5958 = vperm.xlu0 %5957, %v5404
    %v5959 = vpop.permute.xlu0 %5958
    %5962 = vset.pattern.permute.xlu0 64
    %5963 = vperm.xlu0 %5962, %v5405
    %v5964 = vpop.permute.xlu0 %5963
    %v5966 = vmul.f32 %v5569, %v5406
    %v5967 = vmul.f32 %v5569, %v5407
    %v5968 = vmul.f32 %v5574, %v5408
    %v5969 = vmul.f32 %v5574, %v5409
    %v5970 = vmul.f32 %v5579, %v5410
    %v5971 = vmul.f32 %v5579, %v5411
    %v5972 = vmul.f32 %v5584, %v5412
    %v5973 = vmul.f32 %v5584, %v5413
    %v5974 = vmul.f32 %v5589, %v5414
    %v5975 = vmul.f32 %v5589, %v5415
    %v5976 = vmul.f32 %v5594, %v5416
    %v5977 = vmul.f32 %v5594, %v5417
    %v5978 = vmul.f32 %v5599, %v5418
    %v5979 = vmul.f32 %v5599, %v5419
    %v5980 = vmul.f32 %v5604, %v5420
    %v5981 = vmul.f32 %v5604, %v5421
    %v5982 = vmul.f32 %v5609, %v5422
    %v5983 = vmul.f32 %v5609, %v5423
    %v5984 = vmul.f32 %v5614, %v5424
    %v5985 = vmul.f32 %v5614, %v5425
    %v5986 = vmul.f32 %v5619, %v5426
    %v5987 = vmul.f32 %v5619, %v5427
    %v5988 = vmul.f32 %v5624, %v5428
    %v5989 = vmul.f32 %v5624, %v5429
    %v5990 = vmul.f32 %v5629, %v5430
    %v5991 = vmul.f32 %v5629, %v5431
    %v5992 = vmul.f32 %v5634, %v5432
    %v5993 = vmul.f32 %v5634, %v5433
    %v5994 = vmul.f32 %v5639, %v5434
    %v5995 = vmul.f32 %v5639, %v5435
    %v5996 = vmul.f32 %v5644, %v5436
    %v5997 = vmul.f32 %v5644, %v5437
    %v5998 = vmul.f32 %v5649, %v5438
    %v5999 = vmul.f32 %v5649, %v5439
    %v6000 = vmul.f32 %v5654, %v5440
    %v6001 = vmul.f32 %v5654, %v5441
    %v6002 = vmul.f32 %v5659, %v5442
    %v6003 = vmul.f32 %v5659, %v5443
    %v6004 = vmul.f32 %v5664, %v5444
    %v6005 = vmul.f32 %v5664, %v5445
    %v6006 = vmul.f32 %v5669, %v5446
    %v6007 = vmul.f32 %v5669, %v5447
    %v6008 = vmul.f32 %v5674, %v5448
    %v6009 = vmul.f32 %v5674, %v5449
    %v6010 = vmul.f32 %v5679, %v5450
    %v6011 = vmul.f32 %v5679, %v5451
    %v6012 = vmul.f32 %v5684, %v5452
    %v6013 = vmul.f32 %v5684, %v5453
    %v6014 = vmul.f32 %v5689, %v5454
    %v6015 = vmul.f32 %v5689, %v5455
    %v6016 = vmul.f32 %v5694, %v5456
    %v6017 = vmul.f32 %v5694, %v5457
    %v6018 = vmul.f32 %v5699, %v5458
    %v6019 = vmul.f32 %v5699, %v5459
    %v6020 = vmul.f32 %v5704, %v5460
    %v6021 = vmul.f32 %v5704, %v5461
    %v6022 = vmul.f32 %v5709, %v5462
    %v6023 = vmul.f32 %v5709, %v5463
    %v6024 = vmul.f32 %v5714, %v5464
    %v6025 = vmul.f32 %v5714, %v5465
    %v6026 = vmul.f32 %v5719, %v5466
    %v6027 = vmul.f32 %v5719, %v5467
    %v6028 = vmul.f32 %v5724, %v5468
    %v6029 = vmul.f32 %v5724, %v5469
    %v6030 = vmul.f32 %v5729, %v5470
    %v6031 = vmul.f32 %v5729, %v5471
    %v6032 = vmul.f32 %v5734, %v5472
    %v6033 = vmul.f32 %v5734, %v5473
    %v6034 = vmul.f32 %v5739, %v5474
    %v6035 = vmul.f32 %v5739, %v5475
    %v6036 = vmul.f32 %v5744, %v5476
    %v6037 = vmul.f32 %v5744, %v5477
    %v6038 = vmul.f32 %v5749, %v5478
    %v6039 = vmul.f32 %v5749, %v5479
    %v6040 = vmul.f32 %v5754, %v5480
    %v6041 = vmul.f32 %v5754, %v5481
    %v6042 = vmul.f32 %v5759, %v5482
    %v6043 = vmul.f32 %v5759, %v5483
    %v6044 = vmul.f32 %v5764, %v5484
    %v6045 = vmul.f32 %v5764, %v5485
    %v6046 = vmul.f32 %v5769, %v5486
    %v6047 = vmul.f32 %v5769, %v5487
    %v6048 = vmul.f32 %v5774, %v5488
    %v6049 = vmul.f32 %v5774, %v5489
    %v6050 = vmul.f32 %v5779, %v5490
    %v6051 = vmul.f32 %v5779, %v5491
    %v6052 = vmul.f32 %v5784, %v5492
    %v6053 = vmul.f32 %v5784, %v5493
    %v6054 = vmul.f32 %v5789, %v5494
    %v6055 = vmul.f32 %v5789, %v5495
    %v6056 = vmul.f32 %v5794, %v5496
    %v6057 = vmul.f32 %v5794, %v5497
    %v6058 = vmul.f32 %v5799, %v5498
    %v6059 = vmul.f32 %v5799, %v5499
    %v6060 = vmul.f32 %v5804, %v5500
    %v6061 = vmul.f32 %v5804, %v5501
    %v6062 = vmul.f32 %v5809, %v5502
    %v6063 = vmul.f32 %v5809, %v5503
    %v6064 = vmul.f32 %v5814, %v5504
    %v6065 = vmul.f32 %v5814, %v5505
    %v6066 = vmul.f32 %v5819, %v5506
    %v6067 = vmul.f32 %v5819, %v5507
    %v6068 = vmul.f32 %v5824, %v5508
    %v6069 = vmul.f32 %v5824, %v5509
    %v6070 = vmul.f32 %v5829, %v5510
    %v6071 = vmul.f32 %v5829, %v5511
    %v6072 = vmul.f32 %v5834, %v5512
    %v6073 = vmul.f32 %v5834, %v5513
    %v6074 = vmul.f32 %v5839, %v5514
    %v6075 = vmul.f32 %v5839, %v5515
    %v6076 = vmul.f32 %v5844, %v5516
    %v6077 = vmul.f32 %v5844, %v5517
    %v6078 = vmul.f32 %v5849, %v5518
    %v6079 = vmul.f32 %v5849, %v5519
    %v6080 = vmul.f32 %v5854, %v5520
    %v6081 = vmul.f32 %v5854, %v5521
    %v6082 = vmul.f32 %v5859, %v5522
    %v6083 = vmul.f32 %v5859, %v5523
    %v6084 = vmul.f32 %v5864, %v5524
    %v6085 = vmul.f32 %v5864, %v5525
    %v6086 = vmul.f32 %v5869, %v5526
    %v6087 = vmul.f32 %v5869, %v5527
    %v6088 = vmul.f32 %v5874, %v5528
    %v6089 = vmul.f32 %v5874, %v5529
    %v6090 = vmul.f32 %v5879, %v5530
    %v6091 = vmul.f32 %v5879, %v5531
    %v6092 = vmul.f32 %v5884, %v5532
    %v6093 = vmul.f32 %v5884, %v5533
    %v6094 = vmul.f32 %v5889, %v5534
    %v6095 = vmul.f32 %v5889, %v5535
    %v6096 = vmul.f32 %v5894, %v5536
    %v6097 = vmul.f32 %v5894, %v5537
    %v6098 = vmul.f32 %v5899, %v5538
    %v6099 = vmul.f32 %v5899, %v5539
    %v6100 = vmul.f32 %v5904, %v5540
    %v6101 = vmul.f32 %v5904, %v5541
    %v6102 = vmul.f32 %v5909, %v5542
    %v6103 = vmul.f32 %v5909, %v5543
    %v6104 = vmul.f32 %v5914, %v5544
    %v6105 = vmul.f32 %v5914, %v5545
    %v6106 = vmul.f32 %v5919, %v5546
    %v6107 = vmul.f32 %v5919, %v5547
    %v6108 = vmul.f32 %v5924, %v5548
    %v6109 = vmul.f32 %v5924, %v5549
    %v6110 = vmul.f32 %v5929, %v5550
    %v6111 = vmul.f32 %v5929, %v5551
    %v6112 = vmul.f32 %v5934, %v5552
    %v6113 = vmul.f32 %v5934, %v5553
    %v6114 = vmul.f32 %v5939, %v5554
    %v6115 = vmul.f32 %v5939, %v5555
    %v6116 = vmul.f32 %v5944, %v5556
    %v6117 = vmul.f32 %v5944, %v5557
    %v6118 = vmul.f32 %v5949, %v5558
    %v6119 = vmul.f32 %v5949, %v5559
    %v6120 = vmul.f32 %v5954, %v5560
    %v6121 = vmul.f32 %v5954, %v5561
    %v6122 = vmul.f32 %v5959, %v5562
    %v6123 = vmul.f32 %v5959, %v5563
    %v6124 = vmul.f32 %v5964, %v5564
    %v6125 = vmul.f32 %v5964, %v5565
    %v6126 = vadd.f32 %v5966, %v5968
    %v6127 = vadd.f32 %v6126, %v5970
    %v6128 = vadd.f32 %v6127, %v5972
    %v6129 = vadd.f32 %v6128, %v5974
    %v6130 = vadd.f32 %v6129, %v5976
    %v6131 = vadd.f32 %v6130, %v5978
    %v6132 = vadd.f32 %v6131, %v5980
    %v6133 = vadd.f32 %v6132, %v5982
    %v6134 = vadd.f32 %v6133, %v5984
    %v6135 = vadd.f32 %v6134, %v5986
    %v6136 = vadd.f32 %v6135, %v5988
    %v6137 = vadd.f32 %v6136, %v5990
    %v6138 = vadd.f32 %v6137, %v5992
    %v6139 = vadd.f32 %v6138, %v5994
    %v6140 = vadd.f32 %v6139, %v5996
    %v6141 = vadd.f32 %v6140, %v5998
    %v6142 = vadd.f32 %v6141, %v6000
    %v6143 = vadd.f32 %v6142, %v6002
    %v6144 = vadd.f32 %v6143, %v6004
    %v6145 = vadd.f32 %v6144, %v6006
    %v6146 = vadd.f32 %v6145, %v6008
    %v6147 = vadd.f32 %v6146, %v6010
    %v6148 = vadd.f32 %v6147, %v6012
    %v6149 = vadd.f32 %v6148, %v6014
    %v6150 = vadd.f32 %v6149, %v6016
    %v6151 = vadd.f32 %v6150, %v6018
    %v6152 = vadd.f32 %v6151, %v6020
    %v6153 = vadd.f32 %v6152, %v6022
    %v6154 = vadd.f32 %v6153, %v6024
    %v6155 = vadd.f32 %v6154, %v6026
    %v6156 = vadd.f32 %v6155, %v6028
    %v6157 = vadd.f32 %v6156, %v6030
    %v6158 = vadd.f32 %v6157, %v6032
    %v6159 = vadd.f32 %v6158, %v6034
    %v6160 = vadd.f32 %v6159, %v6036
    %v6161 = vadd.f32 %v6160, %v6038
    %v6162 = vadd.f32 %v6161, %v6040
    %v6163 = vadd.f32 %v6162, %v6042
    %v6164 = vadd.f32 %v6163, %v6044
    %v6165 = vadd.f32 %v6164, %v6046
    %v6166 = vadd.f32 %v6165, %v6048
    %v6167 = vadd.f32 %v6166, %v6050
    %v6168 = vadd.f32 %v6167, %v6052
    %v6169 = vadd.f32 %v6168, %v6054
    %v6170 = vadd.f32 %v6169, %v6056
    %v6171 = vadd.f32 %v6170, %v6058
    %v6172 = vadd.f32 %v6171, %v6060
    %v6173 = vadd.f32 %v6172, %v6062
    %v6174 = vadd.f32 %v6173, %v6064
    %v6175 = vadd.f32 %v6174, %v6066
    %v6176 = vadd.f32 %v6175, %v6068
    %v6177 = vadd.f32 %v6176, %v6070
    %v6178 = vadd.f32 %v6177, %v6072
    %v6179 = vadd.f32 %v6178, %v6074
    %v6180 = vadd.f32 %v6179, %v6076
    %v6181 = vadd.f32 %v6180, %v6078
    %v6182 = vadd.f32 %v6181, %v6080
    %v6183 = vadd.f32 %v6182, %v6082
    %v6184 = vadd.f32 %v6183, %v6084
    %v6185 = vadd.f32 %v6184, %v6086
    %v6186 = vadd.f32 %v6185, %v6088
    %v6187 = vadd.f32 %v6186, %v6090
    %v6188 = vadd.f32 %v6187, %v6092
    %v6189 = vadd.f32 %v6188, %v6094
    %v6190 = vadd.f32 %v6189, %v6096
    %v6191 = vadd.f32 %v6190, %v6098
    %v6192 = vadd.f32 %v6191, %v6100
    %v6193 = vadd.f32 %v6192, %v6102
    %v6194 = vadd.f32 %v6193, %v6104
    %v6195 = vadd.f32 %v6194, %v6106
    %v6196 = vadd.f32 %v6195, %v6108
    %v6197 = vadd.f32 %v6196, %v6110
    %v6198 = vadd.f32 %v6197, %v6112
    %v6199 = vadd.f32 %v6198, %v6114
    %v6200 = vadd.f32 %v6199, %v6116
    %v6201 = vadd.f32 %v6200, %v6118
    %v6202 = vadd.f32 %v6201, %v6120
    %v6203 = vadd.f32 %v6202, %v6122
    %v6204 = vadd.f32 %v6203, %v6124
    %v6205 = vrot.slane %v6204, 4
    %v6206 = vadd.f32 %v6204, %v6205
    %v6207 = vrot.slane %v6206, 2
    %v6208 = vadd.f32 %v6206, %v6207
    %v6209 = vrot.slane %v6208, 1
    %v6210 = vadd.f32 %v6208, %v6209
    %v6211 = vsel %vm3507, %v5967, 0.0
    %v6212 = vsel %vm3507, %v5969, 0.0
    %v6213 = vadd.f32 %v6211, %v6212
    %v6214 = vsel %vm3507, %v5971, 0.0
    %v6215 = vadd.f32 %v6213, %v6214
    %v6216 = vsel %vm3507, %v5973, 0.0
    %v6217 = vadd.f32 %v6215, %v6216
    %v6218 = vsel %vm3507, %v5975, 0.0
    %v6219 = vadd.f32 %v6217, %v6218
    %v6220 = vsel %vm3507, %v5977, 0.0
    %v6221 = vadd.f32 %v6219, %v6220
    %v6222 = vsel %vm3507, %v5979, 0.0
    %v6223 = vadd.f32 %v6221, %v6222
    %v6224 = vsel %vm3507, %v5981, 0.0
    %v6225 = vadd.f32 %v6223, %v6224
    %v6226 = vsel %vm3507, %v5983, 0.0
    %v6227 = vadd.f32 %v6225, %v6226
    %v6228 = vsel %vm3507, %v5985, 0.0
    %v6229 = vadd.f32 %v6227, %v6228
    %v6230 = vsel %vm3507, %v5987, 0.0
    %v6231 = vadd.f32 %v6229, %v6230
    %v6232 = vsel %vm3507, %v5989, 0.0
    %v6233 = vadd.f32 %v6231, %v6232
    %v6234 = vsel %vm3507, %v5991, 0.0
    %v6235 = vadd.f32 %v6233, %v6234
    %v6236 = vsel %vm3507, %v5993, 0.0
    %v6237 = vadd.f32 %v6235, %v6236
    %v6238 = vsel %vm3507, %v5995, 0.0
    %v6239 = vadd.f32 %v6237, %v6238
    %v6240 = vsel %vm3507, %v5997, 0.0
    %v6241 = vadd.f32 %v6239, %v6240
    %v6242 = vsel %vm3507, %v5999, 0.0
    %v6243 = vadd.f32 %v6241, %v6242
    %v6244 = vsel %vm3507, %v6001, 0.0
    %v6245 = vadd.f32 %v6243, %v6244
    %v6246 = vsel %vm3507, %v6003, 0.0
    %v6247 = vadd.f32 %v6245, %v6246
    %v6248 = vsel %vm3507, %v6005, 0.0
    %v6249 = vadd.f32 %v6247, %v6248
    %v6250 = vsel %vm3507, %v6007, 0.0
    %v6251 = vadd.f32 %v6249, %v6250
    %v6252 = vsel %vm3507, %v6009, 0.0
    %v6253 = vadd.f32 %v6251, %v6252
    %v6254 = vsel %vm3507, %v6011, 0.0
    %v6255 = vadd.f32 %v6253, %v6254
    %v6256 = vsel %vm3507, %v6013, 0.0
    %v6257 = vadd.f32 %v6255, %v6256
    %v6258 = vsel %vm3507, %v6015, 0.0
    %v6259 = vadd.f32 %v6257, %v6258
    %v6260 = vsel %vm3507, %v6017, 0.0
    %v6261 = vadd.f32 %v6259, %v6260
    %v6262 = vsel %vm3507, %v6019, 0.0
    %v6263 = vadd.f32 %v6261, %v6262
    %v6264 = vsel %vm3507, %v6021, 0.0
    %v6265 = vadd.f32 %v6263, %v6264
    %v6266 = vsel %vm3507, %v6023, 0.0
    %v6267 = vadd.f32 %v6265, %v6266
    %v6268 = vsel %vm3507, %v6025, 0.0
    %v6269 = vadd.f32 %v6267, %v6268
    %v6270 = vsel %vm3507, %v6027, 0.0
    %v6271 = vadd.f32 %v6269, %v6270
    %v6272 = vsel %vm3507, %v6029, 0.0
    %v6273 = vadd.f32 %v6271, %v6272
    %v6274 = vsel %vm3507, %v6031, 0.0
    %v6275 = vadd.f32 %v6273, %v6274
    %v6276 = vsel %vm3507, %v6033, 0.0
    %v6277 = vadd.f32 %v6275, %v6276
    %v6278 = vsel %vm3507, %v6035, 0.0
    %v6279 = vadd.f32 %v6277, %v6278
    %v6280 = vsel %vm3507, %v6037, 0.0
    %v6281 = vadd.f32 %v6279, %v6280
    %v6282 = vsel %vm3507, %v6039, 0.0
    %v6283 = vadd.f32 %v6281, %v6282
    %v6284 = vsel %vm3507, %v6041, 0.0
    %v6285 = vadd.f32 %v6283, %v6284
    %v6286 = vsel %vm3507, %v6043, 0.0
    %v6287 = vadd.f32 %v6285, %v6286
    %v6288 = vsel %vm3507, %v6045, 0.0
    %v6289 = vadd.f32 %v6287, %v6288
    %v6290 = vsel %vm3507, %v6047, 0.0
    %v6291 = vadd.f32 %v6289, %v6290
    %v6292 = vsel %vm3507, %v6049, 0.0
    %v6293 = vadd.f32 %v6291, %v6292
    %v6294 = vsel %vm3507, %v6051, 0.0
    %v6295 = vadd.f32 %v6293, %v6294
    %v6296 = vsel %vm3507, %v6053, 0.0
    %v6297 = vadd.f32 %v6295, %v6296
    %v6298 = vsel %vm3507, %v6055, 0.0
    %v6299 = vadd.f32 %v6297, %v6298
    %v6300 = vsel %vm3507, %v6057, 0.0
    %v6301 = vadd.f32 %v6299, %v6300
    %v6302 = vsel %vm3507, %v6059, 0.0
    %v6303 = vadd.f32 %v6301, %v6302
    %v6304 = vsel %vm3507, %v6061, 0.0
    %v6305 = vadd.f32 %v6303, %v6304
    %v6306 = vsel %vm3507, %v6063, 0.0
    %v6307 = vadd.f32 %v6305, %v6306
    %v6308 = vsel %vm3507, %v6065, 0.0
    %v6309 = vadd.f32 %v6307, %v6308
    %v6310 = vsel %vm3507, %v6067, 0.0
    %v6311 = vadd.f32 %v6309, %v6310
    %v6312 = vsel %vm3507, %v6069, 0.0
    %v6313 = vadd.f32 %v6311, %v6312
    %v6314 = vsel %vm3507, %v6071, 0.0
    %v6315 = vadd.f32 %v6313, %v6314
    %v6316 = vsel %vm3507, %v6073, 0.0
    %v6317 = vadd.f32 %v6315, %v6316
    %v6318 = vsel %vm3507, %v6075, 0.0
    %v6319 = vadd.f32 %v6317, %v6318
    %v6320 = vsel %vm3507, %v6077, 0.0
    %v6321 = vadd.f32 %v6319, %v6320
    %v6322 = vsel %vm3507, %v6079, 0.0
    %v6323 = vadd.f32 %v6321, %v6322
    %v6324 = vsel %vm3507, %v6081, 0.0
    %v6325 = vadd.f32 %v6323, %v6324
    %v6326 = vsel %vm3507, %v6083, 0.0
    %v6327 = vadd.f32 %v6325, %v6326
    %v6328 = vsel %vm3507, %v6085, 0.0
    %v6329 = vadd.f32 %v6327, %v6328
    %v6330 = vsel %vm3507, %v6087, 0.0
    %v6331 = vadd.f32 %v6329, %v6330
    %v6332 = vsel %vm3507, %v6089, 0.0
    %v6333 = vadd.f32 %v6331, %v6332
    %v6334 = vsel %vm3507, %v6091, 0.0
    %v6335 = vadd.f32 %v6333, %v6334
    %v6336 = vsel %vm3507, %v6093, 0.0
    %v6337 = vadd.f32 %v6335, %v6336
    %v6338 = vsel %vm3507, %v6095, 0.0
    %v6339 = vadd.f32 %v6337, %v6338
    %v6340 = vsel %vm3507, %v6097, 0.0
    %v6341 = vadd.f32 %v6339, %v6340
    %v6342 = vsel %vm3507, %v6099, 0.0
    %v6343 = vadd.f32 %v6341, %v6342
    %v6344 = vsel %vm3507, %v6101, 0.0
    %v6345 = vadd.f32 %v6343, %v6344
    %v6346 = vsel %vm3507, %v6103, 0.0
    %v6347 = vadd.f32 %v6345, %v6346
    %v6348 = vsel %vm3507, %v6105, 0.0
    %v6349 = vadd.f32 %v6347, %v6348
    %v6350 = vsel %vm3507, %v6107, 0.0
    %v6351 = vadd.f32 %v6349, %v6350
    %v6352 = vsel %vm3507, %v6109, 0.0
    %v6353 = vadd.f32 %v6351, %v6352
    %v6354 = vsel %vm3507, %v6111, 0.0
    %v6355 = vadd.f32 %v6353, %v6354
    %v6356 = vsel %vm3507, %v6113, 0.0
    %v6357 = vadd.f32 %v6355, %v6356
    %v6358 = vsel %vm3507, %v6115, 0.0
    %v6359 = vadd.f32 %v6357, %v6358
    %v6360 = vsel %vm3507, %v6117, 0.0
    %v6361 = vadd.f32 %v6359, %v6360
    %v6362 = vsel %vm3507, %v6119, 0.0
    %v6363 = vadd.f32 %v6361, %v6362
    %v6364 = vsel %vm3507, %v6121, 0.0
    %v6365 = vadd.f32 %v6363, %v6364
    %v6366 = vsel %vm3507, %v6123, 0.0
    %v6367 = vadd.f32 %v6365, %v6366
    %v6368 = vsel %vm3507, %v6125, 0.0
    %v6369 = vadd.f32 %v6367, %v6368
    %v6370 = vrot.slane %v6369, 4
    %v6371 = vadd.f32 %v6369, %v6370
    %v6372 = vrot.slane %v6371, 2
    %v6373 = vadd.f32 %v6371, %v6372
    %v6374 = vrot.slane %v6373, 1
    %v6375 = vadd.f32 %v6373, %v6374
    %v6376 = vld [vmem:[%s7] sm:$0x3]
    %v6378 = vlaneseq
    %v6379 = vshrl.u32 %v6378, 7
    %v6380 = vsub.s32 0, %v6379
    %v6381 = vrot.slane %v6376, %v6380
    %v6382 = vlaneseq
    %v6383 = vshrl.u32 %v6382, 7
    %v6384 = vsub.s32 1, %v6383
    %v6385 = vrot.slane %v6376, %v6384
    %v6388 = vadd.f32 %v6210, %v6381
    %v6389 = vadd.f32 %v6375, %v6385
    %v6390 = vld [vmem:[%s9] sm:$0x3]
    %v6391 = vadd.f32 %v6388, %v6390
    %v6392 = vxor.u32 %v6391, 2147483648
    %v6393 = vmul.f32 %v6392, 1.442695
    %v6394 = vpow.pop %v6393
    %v6395 = vadd.f32 %v6394, 1.0
    %v6396 = vrcp.pop %v6395
    %v6397 = vmul.f32 1.0, %v6396
    %v6399 = vlaneseq
    %v6400 = vshrl.u32 %v6399, 7
    %v6401 = vsub.s32 1, %v6400
    %v6402 = vrot.slane %v6390, %v6401
    %v6404 = vmul.f32 %v6397, %v6402
    %v6405 = vadd.f32 %v6389, %v6404
    %v6406 = vtanh.pop %v6405
    %v6407 = vsub.f32 1.0, %v6397
    %6409 = vrot.lane.b32.xlu0 %v6406, 64
    %v6410 = vpop.permute.xlu0 %6409
    %v6412 = vmul.f32 %v6407, %v6410
    %v6413 = vld [vmem:[%s10] sm:$0x1]
    %v6415 = vlaneseq
    %v6416 = vshrl.u32 %v6415, 7
    %v6417 = vsub.s32 0, %v6416
    %v6418 = vrot.slane %v6413, %v6417
    %6419 = vrot.lane.b32.xlu0 %v6418, 64
    %v6420 = vpop.permute.xlu0 %6419
    %v6422 = vmul.f32 %v6412, %v6420
    %6424 = vrot.lane.b32.xlu0 %v6422, 64
    %v6425 = vpop.permute.xlu0 %6424
    %vm6427 = vcmask 516096
    %v6428 = vsel %vm6427, %v6425, 0.0
    %6429 = vadd.xlane.f32.xlu0 %v6428
    %v6430 = vpop.xlane.xlu0 %6429
    %v6431 = vld [vmem:[#allocation2] sm:$0x1]
    %v6432 = vadd.f32 %v6430, %v6431
    %v6433 = vxor.u32 %v6432, 2147483648
    %v6434 = vmul.f32 %v6433, 1.442695
    %v6435 = vpow.pop %v6434
    %v6436 = vadd.f32 %v6435, 1.0
    %v6437 = vrcp.pop %v6436
    %v6438 = vmul.f32 1.0, %v6437
    %v6439 = vadd.f32 %v6438, 0.0
    %s6440 = vtos %v6439
    %v6441 = vld [vmem:[%s8] sm:$0xff]
    %v6442 = vld [vmem:[%s8 + $0x8] sm:$0xff]
    %v6443 = vld [vmem:[%s8 + $0x10] sm:$0xff]
    %v6444 = vld [vmem:[%s8 + $0x18] sm:$0xff]
    %v6445 = vld [vmem:[%s8 + $0x20] sm:$0xff]
    %v6446 = vld [vmem:[%s8 + $0x28] sm:$0xff]
    %v6447 = vld [vmem:[%s8 + $0x30] sm:$0xff]
    %v6448 = vld [vmem:[%s8 + $0x38] sm:$0xff]
    %v6449 = vld [vmem:[%s8 + $0x40] sm:$0xff]
    %v6450 = vld [vmem:[%s8 + $0x48] sm:$0xff]
    %v6451 = vld [vmem:[%s8 + $0x50] sm:$0xff]
    %v6452 = vld [vmem:[%s8 + $0x58] sm:$0xff]
    %v6453 = vld [vmem:[%s8 + $0x60] sm:$0xff]
    %v6454 = vld [vmem:[%s8 + $0x68] sm:$0xff]
    %v6455 = vld [vmem:[%s8 + $0x70] sm:$0xff]
    %v6456 = vld [vmem:[%s8 + $0x78] sm:$0xff]
    %6458 = vrot.lane.b32.xlu0 %v6412, 64
    %v6459 = vpop.permute.xlu0 %6458
    %v6460 = vlaneseq
    %v6461 = vshrl.u32 %v6460, 7
    %v6462 = vsub.s32 0, %v6461
    %v6463 = vrot.slane %v6390, %v6462
    %v6465 = vsel %vm3507, %v6459, 0
    %6467 = vmatprep.subr.mxu0 %v6442
    %6468 = vmatpush1.msra.mxu0 %v6441
    %6469 = vmatprep.subr.mxu0 %v6444
    %6470 = vmatpush1.msra.mxu0 %v6443
    %6471 = vmatprep.subr.mxu0 %v6446
    %6472 = vmatpush1.msra.mxu0 %v6445
    %6473 = vmatprep.subr.mxu0 %v6448
    %6474 = vmatpush1.msra.mxu0 %v6447
    %6475 = vmatprep.subr.mxu0 %v6450
    %6476 = vmatpush1.msra.mxu0 %v6449
    %6477 = vmatprep.subr.mxu0 %v6452
    %6478 = vmatpush1.msra.mxu0 %v6451
    %6479 = vmatprep.subr.mxu0 %v6454
    %6480 = vmatpush1.msra.mxu0 %v6453
    %6481 = vmatprep.subr.mxu0 %v6456
    %6482 = vmatpush1.msra.mxu0 %v6455
    %6483 = vmatprep.subr.mxu0 0.0
    %6484 = vmatpush1.msra.mxu0 0.0
    %6485 = vmatprep.subr.mxu0 0.0
    %6486 = vmatpush1.msra.mxu0 0.0
    %6487 = vmatprep.subr.mxu0 0.0
    %6488 = vmatpush1.msra.mxu0 0.0
    %6489 = vmatprep.subr.mxu0 0.0
    %6490 = vmatpush1.msra.mxu0 0.0
    %6491 = vmatprep.subr.mxu0 0.0
    %6492 = vmatpush1.msra.mxu0 0.0
    %6493 = vmatprep.subr.mxu0 0.0
    %6494 = vmatpush1.msra.mxu0 0.0
    %6495 = vmatprep.subr.mxu0 0.0
    %6496 = vmatpush1.msra.mxu0 0.0
    %6497 = vmatprep.subr.mxu0 0.0
    %6498 = vmatpush1.msra.mxu0 0.0
    %6499 = vmatprep.subr.mxu0 0.0
    %6500 = vmatpush1.msra.mxu0 0.0
    %6501 = vmatprep.subr.mxu0 0.0
    %6502 = vmatpush1.msra.mxu0 0.0
    %6503 = vmatprep.subr.mxu0 0.0
    %6504 = vmatpush1.msra.mxu0 0.0
    %6505 = vmatprep.subr.mxu0 0.0
    %6506 = vmatpush1.msra.mxu0 0.0
    %6507 = vmatprep.subr.mxu0 0.0
    %6508 = vmatpush1.msra.mxu0 0.0
    %6509 = vmatprep.subr.mxu0 0.0
    %6510 = vmatpush1.msra.mxu0 0.0
    %6511 = vmatprep.subr.mxu0 0.0
    %6512 = vmatpush1.msra.mxu0 0.0
    %6513 = vmatprep.subr.mxu0 0.0
    %6514 = vmatpush1.msra.mxu0 0.0
    %6515 = vmatprep.subr.mxu0 0.0
    %6516 = vmatpush1.msra.mxu0 0.0
    %6517 = vmatprep.subr.mxu0 0.0
    %6518 = vmatpush1.msra.mxu0 0.0
    %6519 = vmatprep.subr.mxu0 0.0
    %6520 = vmatpush1.msra.mxu0 0.0
    %6521 = vmatprep.subr.mxu0 0.0
    %6522 = vmatpush1.msra.mxu0 0.0
    %6523 = vmatprep.subr.mxu0 0.0
    %6524 = vmatpush1.msra.mxu0 0.0
    %6525 = vmatprep.subr.mxu0 0.0
    %6526 = vmatpush1.msra.mxu0 0.0
    %6527 = vmatprep.subr.mxu0 0.0
    %6528 = vmatpush1.msra.mxu0 0.0
    %6529 = vmatprep.subr.mxu0 0.0
    %6530 = vmatpush1.msra.mxu0 0.0
    %6531 = vmatprep.mubr.f32.mxu0 0.0
    %6532 = vmatmul.mubr.f32.gmra.mrb[0].mxu0 %v6465
    %v6533 = vpop.f32.mrb[0].mxu0
    %v6534 = vadd.f32 %v6463, %v6533
    %v6535 = vpop.f32.mrb[0].mxu0
    %v6536 = vadd.f32 %v6402, %v6535
    %6537 = vdwg.mxu0
    // While loop
    $region50: #{lastgcn_forward.1} parent=1 // loop_pre_header
      _
    $region51: #{lastgcn_forward.1} parent=1 // loop_header
      %s6539 = sphi %s6440, %s11148
      %s6540 = sphi 0, %s11149
      %s6541 = sphi %s6440, %s11147
      %p6542 = scmp.lt.f32.partialorder %s6539, 0.999
      %p6543 = scmp.lt.s32.totalorder %s6540, 30
      %p6544 = pnand %p6542, %p6543
      %p6545 = pneg %p6544
    $region52: #{lastgcn_forward.1} parent=1 // loop_header_branch
      %6547 = sbr.rel (%p6544) target = $region56
    $region53: #{lastgcn_forward.1} parent=1 // loop_body
      %v6548 = vld [vmem:[%s12] sm:$0xff]
      %v6549 = vld [vmem:[%s12 + $0x8] sm:$0xff]
      %v6550 = vld [vmem:[%s12 + $0x10] sm:$0xff]
      %v6551 = vld [vmem:[%s12 + $0x18] sm:$0xff]
      %v6552 = vld [vmem:[%s12 + $0x20] sm:$0xff]
      %v6553 = vld [vmem:[%s12 + $0x28] sm:$0xff]
      %v6554 = vld [vmem:[%s12 + $0x30] sm:$0xff]
      %v6555 = vld [vmem:[%s12 + $0x38] sm:$0xff]
      %v6556 = vld [vmem:[%s12 + $0x40] sm:$0xff]
      %v6557 = vld [vmem:[%s12 + $0x48] sm:$0xff]
      %v6558 = vld [vmem:[%s12 + $0x50] sm:$0xff]
      %v6559 = vld [vmem:[%s12 + $0x58] sm:$0xff]
      %v6560 = vld [vmem:[%s12 + $0x60] sm:$0xff]
      %v6561 = vld [vmem:[%s12 + $0x68] sm:$0xff]
      %v6562 = vld [vmem:[%s12 + $0x70] sm:$0xff]
      %v6563 = vld [vmem:[%s12 + $0x78] sm:$0xff]
      %v6564 = vld [vmem:[%s12 + $0x80] sm:$0xff]
      %v6565 = vld [vmem:[%s12 + $0x88] sm:$0xff]
      %v6566 = vld [vmem:[%s12 + $0x90] sm:$0xff]
      %v6567 = vld [vmem:[%s12 + $0x98] sm:$0xff]
      %v6568 = vld [vmem:[%s12 + $0xa0] sm:$0xff]
      %v6569 = vld [vmem:[%s12 + $0xa8] sm:$0xff]
      %v6570 = vld [vmem:[%s12 + $0xb0] sm:$0xff]
      %v6571 = vld [vmem:[%s12 + $0xb8] sm:$0xff]
      %v6572 = vld [vmem:[%s12 + $0xc0] sm:$0xff]
      %v6573 = vld [vmem:[%s12 + $0xc8] sm:$0xff]
      %v6574 = vld [vmem:[%s12 + $0xd0] sm:$0xff]
      %v6575 = vld [vmem:[%s12 + $0xd8] sm:$0xff]
      %v6576 = vld [vmem:[%s12 + $0xe0] sm:$0xff]
      %v6577 = vld [vmem:[%s12 + $0xe8] sm:$0xff]
      %v6578 = vld [vmem:[%s12 + $0xf0] sm:$0xff]
      %v6579 = vld [vmem:[%s12 + $0xf8] sm:$0xff]
      %v6580 = vld [vmem:[%s12 + $0x100] sm:$0xff]
      %v6581 = vld [vmem:[%s12 + $0x108] sm:$0xff]
      %v6582 = vld [vmem:[%s12 + $0x110] sm:$0xff]
      %v6583 = vld [vmem:[%s12 + $0x118] sm:$0xff]
      %v6584 = vld [vmem:[%s12 + $0x120] sm:$0xff]
      %v6585 = vld [vmem:[%s12 + $0x128] sm:$0xff]
      %v6586 = vld [vmem:[%s12 + $0x130] sm:$0xff]
      %v6587 = vld [vmem:[%s12 + $0x138] sm:$0xff]
      %v6588 = vld [vmem:[%s12 + $0x140] sm:$0xff]
      %v6589 = vld [vmem:[%s12 + $0x148] sm:$0xff]
      %v6590 = vld [vmem:[%s12 + $0x150] sm:$0xff]
      %v6591 = vld [vmem:[%s12 + $0x158] sm:$0xff]
      %v6592 = vld [vmem:[%s12 + $0x160] sm:$0xff]
      %v6593 = vld [vmem:[%s12 + $0x168] sm:$0xff]
      %v6594 = vld [vmem:[%s12 + $0x170] sm:$0xff]
      %v6595 = vld [vmem:[%s12 + $0x178] sm:$0xff]
      %v6596 = vld [vmem:[%s12 + $0x180] sm:$0xff]
      %v6597 = vld [vmem:[%s12 + $0x188] sm:$0xff]
      %v6598 = vld [vmem:[%s12 + $0x190] sm:$0xff]
      %v6599 = vld [vmem:[%s12 + $0x198] sm:$0xff]
      %v6600 = vld [vmem:[%s12 + $0x1a0] sm:$0xff]
      %v6601 = vld [vmem:[%s12 + $0x1a8] sm:$0xff]
      %v6602 = vld [vmem:[%s12 + $0x1b0] sm:$0xff]
      %v6603 = vld [vmem:[%s12 + $0x1b8] sm:$0xff]
      %v6604 = vld [vmem:[%s12 + $0x1c0] sm:$0xff]
      %v6605 = vld [vmem:[%s12 + $0x1c8] sm:$0xff]
      %v6606 = vld [vmem:[%s12 + $0x1d0] sm:$0xff]
      %v6607 = vld [vmem:[%s12 + $0x1d8] sm:$0xff]
      %v6608 = vld [vmem:[%s12 + $0x1e0] sm:$0xff]
      %v6609 = vld [vmem:[%s12 + $0x1e8] sm:$0xff]
      %v6610 = vld [vmem:[%s12 + $0x1f0] sm:$0xff]
      %v6611 = vld [vmem:[%s12 + $0x1f8] sm:$0xff]
      %v6612 = vld [vmem:[%s12 + $0x200] sm:$0xff]
      %v6613 = vld [vmem:[%s12 + $0x208] sm:$0xff]
      %v6614 = vld [vmem:[%s12 + $0x210] sm:$0xff]
      %v6615 = vld [vmem:[%s12 + $0x218] sm:$0xff]
      %v6616 = vld [vmem:[%s12 + $0x220] sm:$0xff]
      %v6617 = vld [vmem:[%s12 + $0x228] sm:$0xff]
      %v6618 = vld [vmem:[%s12 + $0x230] sm:$0xff]
      %v6619 = vld [vmem:[%s12 + $0x238] sm:$0xff]
      %v6620 = vld [vmem:[%s12 + $0x240] sm:$0xff]
      %v6621 = vld [vmem:[%s12 + $0x248] sm:$0xff]
      %v6622 = vld [vmem:[%s12 + $0x250] sm:$0xff]
      %v6623 = vld [vmem:[%s12 + $0x258] sm:$0xff]
      %v6624 = vld [vmem:[%s12 + $0x260] sm:$0xff]
      %v6625 = vld [vmem:[%s12 + $0x268] sm:$0xff]
      %v6626 = vld [vmem:[%s12 + $0x270] sm:$0xff]
      %v6627 = vld [vmem:[%s12 + $0x278] sm:$0xff]
      %vm6628 = vcmp.gt.f32.partialorder %v6548, 0.0
      %vm6629 = vcmp.gt.f32.partialorder %v6549, 0.0
      %vm6630 = vcmp.gt.f32.partialorder %v6550, 0.0
      %vm6631 = vcmp.gt.f32.partialorder %v6551, 0.0
      %vm6632 = vcmp.gt.f32.partialorder %v6552, 0.0
      %vm6633 = vcmp.gt.f32.partialorder %v6553, 0.0
      %vm6634 = vcmp.gt.f32.partialorder %v6554, 0.0
      %vm6635 = vcmp.gt.f32.partialorder %v6555, 0.0
      %vm6636 = vcmp.gt.f32.partialorder %v6556, 0.0
      %vm6637 = vcmp.gt.f32.partialorder %v6557, 0.0
      %vm6638 = vcmp.gt.f32.partialorder %v6558, 0.0
      %vm6639 = vcmp.gt.f32.partialorder %v6559, 0.0
      %vm6640 = vcmp.gt.f32.partialorder %v6560, 0.0
      %vm6641 = vcmp.gt.f32.partialorder %v6561, 0.0
      %vm6642 = vcmp.gt.f32.partialorder %v6562, 0.0
      %vm6643 = vcmp.gt.f32.partialorder %v6563, 0.0
      %vm6644 = vcmp.gt.f32.partialorder %v6564, 0.0
      %vm6645 = vcmp.gt.f32.partialorder %v6565, 0.0
      %vm6646 = vcmp.gt.f32.partialorder %v6566, 0.0
      %vm6647 = vcmp.gt.f32.partialorder %v6567, 0.0
      %vm6648 = vcmp.gt.f32.partialorder %v6568, 0.0
      %vm6649 = vcmp.gt.f32.partialorder %v6569, 0.0
      %vm6650 = vcmp.gt.f32.partialorder %v6570, 0.0
      %vm6651 = vcmp.gt.f32.partialorder %v6571, 0.0
      %vm6652 = vcmp.gt.f32.partialorder %v6572, 0.0
      %vm6653 = vcmp.gt.f32.partialorder %v6573, 0.0
      %vm6654 = vcmp.gt.f32.partialorder %v6574, 0.0
      %vm6655 = vcmp.gt.f32.partialorder %v6575, 0.0
      %vm6656 = vcmp.gt.f32.partialorder %v6576, 0.0
      %vm6657 = vcmp.gt.f32.partialorder %v6577, 0.0
      %vm6658 = vcmp.gt.f32.partialorder %v6578, 0.0
      %vm6659 = vcmp.gt.f32.partialorder %v6579, 0.0
      %vm6660 = vcmp.gt.f32.partialorder %v6580, 0.0
      %vm6661 = vcmp.gt.f32.partialorder %v6581, 0.0
      %vm6662 = vcmp.gt.f32.partialorder %v6582, 0.0
      %vm6663 = vcmp.gt.f32.partialorder %v6583, 0.0
      %vm6664 = vcmp.gt.f32.partialorder %v6584, 0.0
      %vm6665 = vcmp.gt.f32.partialorder %v6585, 0.0
      %vm6666 = vcmp.gt.f32.partialorder %v6586, 0.0
      %vm6667 = vcmp.gt.f32.partialorder %v6587, 0.0
      %vm6668 = vcmp.gt.f32.partialorder %v6588, 0.0
      %vm6669 = vcmp.gt.f32.partialorder %v6589, 0.0
      %vm6670 = vcmp.gt.f32.partialorder %v6590, 0.0
      %vm6671 = vcmp.gt.f32.partialorder %v6591, 0.0
      %vm6672 = vcmp.gt.f32.partialorder %v6592, 0.0
      %vm6673 = vcmp.gt.f32.partialorder %v6593, 0.0
      %vm6674 = vcmp.gt.f32.partialorder %v6594, 0.0
      %vm6675 = vcmp.gt.f32.partialorder %v6595, 0.0
      %vm6676 = vcmp.gt.f32.partialorder %v6596, 0.0
      %vm6677 = vcmp.gt.f32.partialorder %v6597, 0.0
      %vm6678 = vcmp.gt.f32.partialorder %v6598, 0.0
      %vm6679 = vcmp.gt.f32.partialorder %v6599, 0.0
      %vm6680 = vcmp.gt.f32.partialorder %v6600, 0.0
      %vm6681 = vcmp.gt.f32.partialorder %v6601, 0.0
      %vm6682 = vcmp.gt.f32.partialorder %v6602, 0.0
      %vm6683 = vcmp.gt.f32.partialorder %v6603, 0.0
      %vm6684 = vcmp.gt.f32.partialorder %v6604, 0.0
      %vm6685 = vcmp.gt.f32.partialorder %v6605, 0.0
      %vm6686 = vcmp.gt.f32.partialorder %v6606, 0.0
      %vm6687 = vcmp.gt.f32.partialorder %v6607, 0.0
      %vm6688 = vcmp.gt.f32.partialorder %v6608, 0.0
      %vm6689 = vcmp.gt.f32.partialorder %v6609, 0.0
      %vm6690 = vcmp.gt.f32.partialorder %v6610, 0.0
      %vm6691 = vcmp.gt.f32.partialorder %v6611, 0.0
      %vm6692 = vcmp.gt.f32.partialorder %v6612, 0.0
      %vm6693 = vcmp.gt.f32.partialorder %v6613, 0.0
      %vm6694 = vcmp.gt.f32.partialorder %v6614, 0.0
      %vm6695 = vcmp.gt.f32.partialorder %v6615, 0.0
      %vm6696 = vcmp.gt.f32.partialorder %v6616, 0.0
      %vm6697 = vcmp.gt.f32.partialorder %v6617, 0.0
      %vm6698 = vcmp.gt.f32.partialorder %v6618, 0.0
      %vm6699 = vcmp.gt.f32.partialorder %v6619, 0.0
      %vm6700 = vcmp.gt.f32.partialorder %v6620, 0.0
      %vm6701 = vcmp.gt.f32.partialorder %v6621, 0.0
      %vm6702 = vcmp.gt.f32.partialorder %v6622, 0.0
      %vm6703 = vcmp.gt.f32.partialorder %v6623, 0.0
      %vm6704 = vcmp.gt.f32.partialorder %v6624, 0.0
      %vm6705 = vcmp.gt.f32.partialorder %v6625, 0.0
      %vm6706 = vcmp.gt.f32.partialorder %v6626, 0.0
      %vm6707 = vcmp.gt.f32.partialorder %v6627, 0.0
      %v6708 = vmul.f32 %v6548, 0.01
      %v6709 = vmul.f32 %v6549, 0.01
      %v6710 = vmul.f32 %v6550, 0.01
      %v6711 = vmul.f32 %v6551, 0.01
      %v6712 = vmul.f32 %v6552, 0.01
      %v6713 = vmul.f32 %v6553, 0.01
      %v6714 = vmul.f32 %v6554, 0.01
      %v6715 = vmul.f32 %v6555, 0.01
      %v6716 = vmul.f32 %v6556, 0.01
      %v6717 = vmul.f32 %v6557, 0.01
      %v6718 = vmul.f32 %v6558, 0.01
      %v6719 = vmul.f32 %v6559, 0.01
      %v6720 = vmul.f32 %v6560, 0.01
      %v6721 = vmul.f32 %v6561, 0.01
      %v6722 = vmul.f32 %v6562, 0.01
      %v6723 = vmul.f32 %v6563, 0.01
      %v6724 = vmul.f32 %v6564, 0.01
      %v6725 = vmul.f32 %v6565, 0.01
      %v6726 = vmul.f32 %v6566, 0.01
      %v6727 = vmul.f32 %v6567, 0.01
      %v6728 = vmul.f32 %v6568, 0.01
      %v6729 = vmul.f32 %v6569, 0.01
      %v6730 = vmul.f32 %v6570, 0.01
      %v6731 = vmul.f32 %v6571, 0.01
      %v6732 = vmul.f32 %v6572, 0.01
      %v6733 = vmul.f32 %v6573, 0.01
      %v6734 = vmul.f32 %v6574, 0.01
      %v6735 = vmul.f32 %v6575, 0.01
      %v6736 = vmul.f32 %v6576, 0.01
      %v6737 = vmul.f32 %v6577, 0.01
      %v6738 = vmul.f32 %v6578, 0.01
      %v6739 = vmul.f32 %v6579, 0.01
      %v6740 = vmul.f32 %v6580, 0.01
      %v6741 = vmul.f32 %v6581, 0.01
      %v6742 = vmul.f32 %v6582, 0.01
      %v6743 = vmul.f32 %v6583, 0.01
      %v6744 = vmul.f32 %v6584, 0.01
      %v6745 = vmul.f32 %v6585, 0.01
      %v6746 = vmul.f32 %v6586, 0.01
      %v6747 = vmul.f32 %v6587, 0.01
      %v6748 = vmul.f32 %v6588, 0.01
      %v6749 = vmul.f32 %v6589, 0.01
      %v6750 = vmul.f32 %v6590, 0.01
      %v6751 = vmul.f32 %v6591, 0.01
      %v6752 = vmul.f32 %v6592, 0.01
      %v6753 = vmul.f32 %v6593, 0.01
      %v6754 = vmul.f32 %v6594, 0.01
      %v6755 = vmul.f32 %v6595, 0.01
      %v6756 = vmul.f32 %v6596, 0.01
      %v6757 = vmul.f32 %v6597, 0.01
      %v6758 = vmul.f32 %v6598, 0.01
      %v6759 = vmul.f32 %v6599, 0.01
      %v6760 = vmul.f32 %v6600, 0.01
      %v6761 = vmul.f32 %v6601, 0.01
      %v6762 = vmul.f32 %v6602, 0.01
      %v6763 = vmul.f32 %v6603, 0.01
      %v6764 = vmul.f32 %v6604, 0.01
      %v6765 = vmul.f32 %v6605, 0.01
      %v6766 = vmul.f32 %v6606, 0.01
      %v6767 = vmul.f32 %v6607, 0.01
      %v6768 = vmul.f32 %v6608, 0.01
      %v6769 = vmul.f32 %v6609, 0.01
      %v6770 = vmul.f32 %v6610, 0.01
      %v6771 = vmul.f32 %v6611, 0.01
      %v6772 = vmul.f32 %v6612, 0.01
      %v6773 = vmul.f32 %v6613, 0.01
      %v6774 = vmul.f32 %v6614, 0.01
      %v6775 = vmul.f32 %v6615, 0.01
      %v6776 = vmul.f32 %v6616, 0.01
      %v6777 = vmul.f32 %v6617, 0.01
      %v6778 = vmul.f32 %v6618, 0.01
      %v6779 = vmul.f32 %v6619, 0.01
      %v6780 = vmul.f32 %v6620, 0.01
      %v6781 = vmul.f32 %v6621, 0.01
      %v6782 = vmul.f32 %v6622, 0.01
      %v6783 = vmul.f32 %v6623, 0.01
      %v6784 = vmul.f32 %v6624, 0.01
      %v6785 = vmul.f32 %v6625, 0.01
      %v6786 = vmul.f32 %v6626, 0.01
      %v6787 = vmul.f32 %v6627, 0.01
      %v6788 = vsel %vm6628, %v6548, %v6708
      %v6789 = vsel %vm6629, %v6549, %v6709
      %v6790 = vsel %vm6630, %v6550, %v6710
      %v6791 = vsel %vm6631, %v6551, %v6711
      %v6792 = vsel %vm6632, %v6552, %v6712
      %v6793 = vsel %vm6633, %v6553, %v6713
      %v6794 = vsel %vm6634, %v6554, %v6714
      %v6795 = vsel %vm6635, %v6555, %v6715
      %v6796 = vsel %vm6636, %v6556, %v6716
      %v6797 = vsel %vm6637, %v6557, %v6717
      %v6798 = vsel %vm6638, %v6558, %v6718
      %v6799 = vsel %vm6639, %v6559, %v6719
      %v6800 = vsel %vm6640, %v6560, %v6720
      %v6801 = vsel %vm6641, %v6561, %v6721
      %v6802 = vsel %vm6642, %v6562, %v6722
      %v6803 = vsel %vm6643, %v6563, %v6723
      %v6804 = vsel %vm6644, %v6564, %v6724
      %v6805 = vsel %vm6645, %v6565, %v6725
      %v6806 = vsel %vm6646, %v6566, %v6726
      %v6807 = vsel %vm6647, %v6567, %v6727
      %v6808 = vsel %vm6648, %v6568, %v6728
      %v6809 = vsel %vm6649, %v6569, %v6729
      %v6810 = vsel %vm6650, %v6570, %v6730
      %v6811 = vsel %vm6651, %v6571, %v6731
      %v6812 = vsel %vm6652, %v6572, %v6732
      %v6813 = vsel %vm6653, %v6573, %v6733
      %v6814 = vsel %vm6654, %v6574, %v6734
      %v6815 = vsel %vm6655, %v6575, %v6735
      %v6816 = vsel %vm6656, %v6576, %v6736
      %v6817 = vsel %vm6657, %v6577, %v6737
      %v6818 = vsel %vm6658, %v6578, %v6738
      %v6819 = vsel %vm6659, %v6579, %v6739
      %v6820 = vsel %vm6660, %v6580, %v6740
      %v6821 = vsel %vm6661, %v6581, %v6741
      %v6822 = vsel %vm6662, %v6582, %v6742
      %v6823 = vsel %vm6663, %v6583, %v6743
      %v6824 = vsel %vm6664, %v6584, %v6744
      %v6825 = vsel %vm6665, %v6585, %v6745
      %v6826 = vsel %vm6666, %v6586, %v6746
      %v6827 = vsel %vm6667, %v6587, %v6747
      %v6828 = vsel %vm6668, %v6588, %v6748
      %v6829 = vsel %vm6669, %v6589, %v6749
      %v6830 = vsel %vm6670, %v6590, %v6750
      %v6831 = vsel %vm6671, %v6591, %v6751
      %v6832 = vsel %vm6672, %v6592, %v6752
      %v6833 = vsel %vm6673, %v6593, %v6753
      %v6834 = vsel %vm6674, %v6594, %v6754
      %v6835 = vsel %vm6675, %v6595, %v6755
      %v6836 = vsel %vm6676, %v6596, %v6756
      %v6837 = vsel %vm6677, %v6597, %v6757
      %v6838 = vsel %vm6678, %v6598, %v6758
      %v6839 = vsel %vm6679, %v6599, %v6759
      %v6840 = vsel %vm6680, %v6600, %v6760
      %v6841 = vsel %vm6681, %v6601, %v6761
      %v6842 = vsel %vm6682, %v6602, %v6762
      %v6843 = vsel %vm6683, %v6603, %v6763
      %v6844 = vsel %vm6684, %v6604, %v6764
      %v6845 = vsel %vm6685, %v6605, %v6765
      %v6846 = vsel %vm6686, %v6606, %v6766
      %v6847 = vsel %vm6687, %v6607, %v6767
      %v6848 = vsel %vm6688, %v6608, %v6768
      %v6849 = vsel %vm6689, %v6609, %v6769
      %v6850 = vsel %vm6690, %v6610, %v6770
      %v6851 = vsel %vm6691, %v6611, %v6771
      %v6852 = vsel %vm6692, %v6612, %v6772
      %v6853 = vsel %vm6693, %v6613, %v6773
      %v6854 = vsel %vm6694, %v6614, %v6774
      %v6855 = vsel %vm6695, %v6615, %v6775
      %v6856 = vsel %vm6696, %v6616, %v6776
      %v6857 = vsel %vm6697, %v6617, %v6777
      %v6858 = vsel %vm6698, %v6618, %v6778
      %v6859 = vsel %vm6699, %v6619, %v6779
      %v6860 = vsel %vm6700, %v6620, %v6780
      %v6861 = vsel %vm6701, %v6621, %v6781
      %v6862 = vsel %vm6702, %v6622, %v6782
      %v6863 = vsel %vm6703, %v6623, %v6783
      %v6864 = vsel %vm6704, %v6624, %v6784
      %v6865 = vsel %vm6705, %v6625, %v6785
      %v6866 = vsel %vm6706, %v6626, %v6786
      %v6867 = vsel %vm6707, %v6627, %v6787
      %v6868 = vpack.c.bf16 %v6789, %v6788
      %v6869 = vpack.c.bf16 %v6791, %v6790
      %v6870 = vpack.c.bf16 %v6793, %v6792
      %v6871 = vpack.c.bf16 %v6795, %v6794
      %v6872 = vpack.c.bf16 %v6797, %v6796
      %v6873 = vpack.c.bf16 %v6799, %v6798
      %v6874 = vpack.c.bf16 %v6801, %v6800
      %v6875 = vpack.c.bf16 %v6803, %v6802
      %v6876 = vpack.c.bf16 %v6805, %v6804
      %v6877 = vpack.c.bf16 %v6807, %v6806
      %v6878 = vpack.c.bf16 %v6809, %v6808
      %v6879 = vpack.c.bf16 %v6811, %v6810
      %v6880 = vpack.c.bf16 %v6813, %v6812
      %v6881 = vpack.c.bf16 %v6815, %v6814
      %v6882 = vpack.c.bf16 %v6817, %v6816
      %v6883 = vpack.c.bf16 %v6819, %v6818
      %v6884 = vpack.c.bf16 %v6821, %v6820
      %v6885 = vpack.c.bf16 %v6823, %v6822
      %v6886 = vpack.c.bf16 %v6825, %v6824
      %v6887 = vpack.c.bf16 %v6827, %v6826
      %v6888 = vpack.c.bf16 %v6829, %v6828
      %v6889 = vpack.c.bf16 %v6831, %v6830
      %v6890 = vpack.c.bf16 %v6833, %v6832
      %v6891 = vpack.c.bf16 %v6835, %v6834
      %v6892 = vpack.c.bf16 %v6837, %v6836
      %v6893 = vpack.c.bf16 %v6839, %v6838
      %v6894 = vpack.c.bf16 %v6841, %v6840
      %v6895 = vpack.c.bf16 %v6843, %v6842
      %v6896 = vpack.c.bf16 %v6845, %v6844
      %v6897 = vpack.c.bf16 %v6847, %v6846
      %v6898 = vpack.c.bf16 %v6849, %v6848
      %v6899 = vpack.c.bf16 %v6851, %v6850
      %v6900 = vpack.c.bf16 %v6853, %v6852
      %v6901 = vpack.c.bf16 %v6855, %v6854
      %v6902 = vpack.c.bf16 %v6857, %v6856
      %v6903 = vpack.c.bf16 %v6859, %v6858
      %v6904 = vpack.c.bf16 %v6861, %v6860
      %v6905 = vpack.c.bf16 %v6863, %v6862
      %v6906 = vpack.c.bf16 %v6865, %v6864
      %v6907 = vpack.c.bf16 %v6867, %v6866
      %v6908 = vld [vmem:[%s4] sm:$0xf]
      %v6909 = vld [vmem:[%s4 + $0x4] sm:$0xf]
      %v6910 = vld [vmem:[%s4 + $0x8] sm:$0xf]
      %v6911 = vld [vmem:[%s4 + $0xc] sm:$0xf]
      %v6912 = vld [vmem:[%s4 + $0x10] sm:$0xf]
      %v6913 = vld [vmem:[%s4 + $0x14] sm:$0xf]
      %v6914 = vld [vmem:[%s4 + $0x18] sm:$0xf]
      %v6915 = vld [vmem:[%s4 + $0x1c] sm:$0xf]
      %v6916 = vld [vmem:[%s5] sm:$0x1]
      %v6925 = vunpack.c.l.b16 %v6908
      %v6926 = vunpack.c.l.b16 %v6909
      %v6927 = vunpack.c.l.b16 %v6910
      %v6928 = vunpack.c.l.b16 %v6911
      %v6929 = vunpack.c.l.b16 %v6912
      %v6930 = vunpack.c.l.b16 %v6913
      %v6931 = vunpack.c.l.b16 %v6914
      %v6932 = vunpack.c.l.b16 %v6915
      %v6933 = vpack.c.b16 %v6926, %v6925
      %v6934 = vpack.c.b16 %v6928, %v6927
      %v6935 = vpack.c.b16 %v6930, %v6929
      %v6936 = vpack.c.b16 %v6932, %v6931
      %v6942 = vsel %vm3507, %v6868, 0
      %v6945 = vsel %vm3507, %v6869, 0
      %v6948 = vsel %vm3507, %v6870, 0
      %v6951 = vsel %vm3507, %v6871, 0
      %v6954 = vsel %vm3507, %v6872, 0
      %v6957 = vsel %vm3507, %v6873, 0
      %v6960 = vsel %vm3507, %v6874, 0
      %v6963 = vsel %vm3507, %v6875, 0
      %v6966 = vsel %vm3507, %v6876, 0
      %v6969 = vsel %vm3507, %v6877, 0
      %v6972 = vsel %vm3507, %v6878, 0
      %v6975 = vsel %vm3507, %v6879, 0
      %v6978 = vsel %vm3507, %v6880, 0
      %v6981 = vsel %vm3507, %v6881, 0
      %v6984 = vsel %vm3507, %v6882, 0
      %v6987 = vsel %vm3507, %v6883, 0
      %v6990 = vsel %vm3507, %v6884, 0
      %v6993 = vsel %vm3507, %v6885, 0
      %v6996 = vsel %vm3507, %v6886, 0
      %v6999 = vsel %vm3507, %v6887, 0
      %v7002 = vsel %vm3507, %v6888, 0
      %v7005 = vsel %vm3507, %v6889, 0
      %v7008 = vsel %vm3507, %v6890, 0
      %v7011 = vsel %vm3507, %v6891, 0
      %v7014 = vsel %vm3507, %v6892, 0
      %v7017 = vsel %vm3507, %v6893, 0
      %v7020 = vsel %vm3507, %v6894, 0
      %v7023 = vsel %vm3507, %v6895, 0
      %v7026 = vsel %vm3507, %v6896, 0
      %v7029 = vsel %vm3507, %v6897, 0
      %v7032 = vsel %vm3507, %v6898, 0
      %v7035 = vsel %vm3507, %v6899, 0
      %v7038 = vsel %vm3507, %v6900, 0
      %v7041 = vsel %vm3507, %v6901, 0
      %v7044 = vsel %vm3507, %v6902, 0
      %v7047 = vsel %vm3507, %v6903, 0
      %v7050 = vsel %vm3507, %v6904, 0
      %v7053 = vsel %vm3507, %v6905, 0
      %v7056 = vsel %vm3507, %v6906, 0
      %v7059 = vsel %vm3507, %v6907, 0
      %7061 = vmatprep.subr.bf16.mxu0 0
      %7062 = vmatpush1.bf16.msra.mxu0 %v6933
      %7063 = vmatprep.subr.bf16.mxu0 0
      %7064 = vmatpush1.bf16.msra.mxu0 %v6934
      %7065 = vmatprep.subr.bf16.mxu0 0
      %7066 = vmatpush1.bf16.msra.mxu0 %v6935
      %7067 = vmatprep.subr.bf16.mxu0 0
      %7068 = vmatpush1.bf16.msra.mxu0 %v6936
      %7069 = vmatprep.subr.bf16.mxu0 0
      %7070 = vmatpush1.bf16.msra.mxu0 0
      %7071 = vmatprep.subr.bf16.mxu0 0
      %7072 = vmatpush1.bf16.msra.mxu0 0
      %7073 = vmatprep.subr.bf16.mxu0 0
      %7074 = vmatpush1.bf16.msra.mxu0 0
      %7075 = vmatprep.subr.bf16.mxu0 0
      %7076 = vmatpush1.bf16.msra.mxu0 0
      %7077 = vmatprep.subr.bf16.mxu0 0
      %7078 = vmatpush1.bf16.msra.mxu0 0
      %7079 = vmatprep.subr.bf16.mxu0 0
      %7080 = vmatpush1.bf16.msra.mxu0 0
      %7081 = vmatprep.subr.bf16.mxu0 0
      %7082 = vmatpush1.bf16.msra.mxu0 0
      %7083 = vmatprep.subr.bf16.mxu0 0
      %7084 = vmatpush1.bf16.msra.mxu0 0
      %7085 = vmatprep.subr.bf16.mxu0 0
      %7086 = vmatpush1.bf16.msra.mxu0 0
      %7087 = vmatprep.subr.bf16.mxu0 0
      %7088 = vmatpush1.bf16.msra.mxu0 0
      %7089 = vmatprep.subr.bf16.mxu0 0
      %7090 = vmatpush1.bf16.msra.mxu0 0
      %7091 = vmatprep.subr.bf16.mxu0 0
      %7092 = vmatpush1.bf16.msra.mxu0 0
      %7093 = vmatprep.mubr.bf16.mxu0 0
      %7094 = vmatmul.mubr.bf16.gmra.mrb[0].mxu0 %v6942
      %v7095 = vpop.f32.mrb[0].mxu0
      %v7096 = vadd.f32 0.0, %v7095
      %v7097 = vpop.f32.mrb[0].mxu0
      %v7098 = vpop.f32.mrb[0].mxu0
      %v7099 = vadd.f32 0.0, %v7098
      %v7100 = vpop.f32.mrb[0].mxu0
      %7101 = vmatprep.mubr.bf16.mxu0 0
      %7102 = vmatmul.mubr.bf16.gmra.mrb[0].mxu0 %v6945
      %v7103 = vpop.f32.mrb[0].mxu0
      %v7104 = vadd.f32 0.0, %v7103
      %v7105 = vpop.f32.mrb[0].mxu0
      %v7106 = vpop.f32.mrb[0].mxu0
      %v7107 = vadd.f32 0.0, %v7106
      %v7108 = vpop.f32.mrb[0].mxu0
      %7109 = vmatprep.mubr.bf16.mxu0 0
      %7110 = vmatmul.mubr.bf16.gmra.mrb[0].mxu0 %v6948
      %v7111 = vpop.f32.mrb[0].mxu0
      %v7112 = vadd.f32 0.0, %v7111
      %v7113 = vpop.f32.mrb[0].mxu0
      %v7114 = vpop.f32.mrb[0].mxu0
      %v7115 = vadd.f32 0.0, %v7114
      %v7116 = vpop.f32.mrb[0].mxu0
      %7117 = vmatprep.mubr.bf16.mxu0 0
      %7118 = vmatmul.mubr.bf16.gmra.mrb[0].mxu0 %v6951
      %v7119 = vpop.f32.mrb[0].mxu0
      %v7120 = vadd.f32 0.0, %v7119
      %v7121 = vpop.f32.mrb[0].mxu0
      %v7122 = vpop.f32.mrb[0].mxu0
      %v7123 = vadd.f32 0.0, %v7122
      %v7124 = vpop.f32.mrb[0].mxu0
      %7125 = vmatprep.mubr.bf16.mxu0 0
      %7126 = vmatmul.mubr.bf16.gmra.mrb[0].mxu0 %v6954
      %v7127 = vpop.f32.mrb[0].mxu0
      %v7128 = vadd.f32 0.0, %v7127
      %v7129 = vpop.f32.mrb[0].mxu0
      %v7130 = vpop.f32.mrb[0].mxu0
      %v7131 = vadd.f32 0.0, %v7130
      %v7132 = vpop.f32.mrb[0].mxu0
      %7133 = vmatprep.mubr.bf16.mxu0 0
      %7134 = vmatmul.mubr.bf16.gmra.mrb[0].mxu0 %v6957
      %v7135 = vpop.f32.mrb[0].mxu0
      %v7136 = vadd.f32 0.0, %v7135
      %v7137 = vpop.f32.mrb[0].mxu0
      %v7138 = vpop.f32.mrb[0].mxu0
      %v7139 = vadd.f32 0.0, %v7138
      %v7140 = vpop.f32.mrb[0].mxu0
      %7141 = vmatprep.mubr.bf16.mxu0 0
      %7142 = vmatmul.mubr.bf16.gmra.mrb[0].mxu0 %v6960
      %v7143 = vpop.f32.mrb[0].mxu0
      %v7144 = vadd.f32 0.0, %v7143
      %v7145 = vpop.f32.mrb[0].mxu0
      %v7146 = vpop.f32.mrb[0].mxu0
      %v7147 = vadd.f32 0.0, %v7146
      %v7148 = vpop.f32.mrb[0].mxu0
      %7149 = vmatprep.mubr.bf16.mxu0 0
      %7150 = vmatmul.mubr.bf16.gmra.mrb[0].mxu0 %v6963
      %v7151 = vpop.f32.mrb[0].mxu0
      %v7152 = vadd.f32 0.0, %v7151
      %v7153 = vpop.f32.mrb[0].mxu0
      %v7154 = vpop.f32.mrb[0].mxu0
      %v7155 = vadd.f32 0.0, %v7154
      %v7156 = vpop.f32.mrb[0].mxu0
      %7157 = vmatprep.mubr.bf16.mxu0 0
      %7158 = vmatmul.mubr.bf16.gmra.mrb[0].mxu0 %v6966
      %v7159 = vpop.f32.mrb[0].mxu0
      %v7160 = vadd.f32 0.0, %v7159
      %v7161 = vpop.f32.mrb[0].mxu0
      %v7162 = vpop.f32.mrb[0].mxu0
      %v7163 = vadd.f32 0.0, %v7162
      %v7164 = vpop.f32.mrb[0].mxu0
      %7165 = vmatprep.mubr.bf16.mxu0 0
      %7166 = vmatmul.mubr.bf16.gmra.mrb[0].mxu0 %v6969
      %v7167 = vpop.f32.mrb[0].mxu0
      %v7168 = vadd.f32 0.0, %v7167
      %v7169 = vpop.f32.mrb[0].mxu0
      %v7170 = vpop.f32.mrb[0].mxu0
      %v7171 = vadd.f32 0.0, %v7170
      %v7172 = vpop.f32.mrb[0].mxu0
      %7173 = vmatprep.mubr.bf16.mxu0 0
      %7174 = vmatmul.mubr.bf16.gmra.mrb[0].mxu0 %v6972
      %v7175 = vpop.f32.mrb[0].mxu0
      %v7176 = vadd.f32 0.0, %v7175
      %v7177 = vpop.f32.mrb[0].mxu0
      %v7178 = vpop.f32.mrb[0].mxu0
      %v7179 = vadd.f32 0.0, %v7178
      %v7180 = vpop.f32.mrb[0].mxu0
      %7181 = vmatprep.mubr.bf16.mxu0 0
      %7182 = vmatmul.mubr.bf16.gmra.mrb[0].mxu0 %v6975
      %v7183 = vpop.f32.mrb[0].mxu0
      %v7184 = vadd.f32 0.0, %v7183
      %v7185 = vpop.f32.mrb[0].mxu0
      %v7186 = vpop.f32.mrb[0].mxu0
      %v7187 = vadd.f32 0.0, %v7186
      %v7188 = vpop.f32.mrb[0].mxu0
      %7189 = vmatprep.mubr.bf16.mxu0 0
      %7190 = vmatmul.mubr.bf16.gmra.mrb[0].mxu0 %v6978
      %v7191 = vpop.f32.mrb[0].mxu0
      %v7192 = vadd.f32 0.0, %v7191
      %v7193 = vpop.f32.mrb[0].mxu0
      %v7194 = vpop.f32.mrb[0].mxu0
      %v7195 = vadd.f32 0.0, %v7194
      %v7196 = vpop.f32.mrb[0].mxu0
      %7197 = vmatprep.mubr.bf16.mxu0 0
      %7198 = vmatmul.mubr.bf16.gmra.mrb[0].mxu0 %v6981
      %v7199 = vpop.f32.mrb[0].mxu0
      %v7200 = vadd.f32 0.0, %v7199
      %v7201 = vpop.f32.mrb[0].mxu0
      %v7202 = vpop.f32.mrb[0].mxu0
      %v7203 = vadd.f32 0.0, %v7202
      %v7204 = vpop.f32.mrb[0].mxu0
      %7205 = vmatprep.mubr.bf16.mxu0 0
      %7206 = vmatmul.mubr.bf16.gmra.mrb[0].mxu0 %v6984
      %v7207 = vpop.f32.mrb[0].mxu0
      %v7208 = vadd.f32 0.0, %v7207
      %v7209 = vpop.f32.mrb[0].mxu0
      %v7210 = vpop.f32.mrb[0].mxu0
      %v7211 = vadd.f32 0.0, %v7210
      %v7212 = vpop.f32.mrb[0].mxu0
      %7213 = vmatprep.mubr.bf16.mxu0 0
      %7214 = vmatmul.mubr.bf16.gmra.mrb[0].mxu0 %v6987
      %v7215 = vpop.f32.mrb[0].mxu0
      %v7216 = vadd.f32 0.0, %v7215
      %v7217 = vpop.f32.mrb[0].mxu0
      %v7218 = vpop.f32.mrb[0].mxu0
      %v7219 = vadd.f32 0.0, %v7218
      %v7220 = vpop.f32.mrb[0].mxu0
      %7221 = vmatprep.mubr.bf16.mxu0 0
      %7222 = vmatmul.mubr.bf16.gmra.mrb[0].mxu0 %v6990
      %v7223 = vpop.f32.mrb[0].mxu0
      %v7224 = vadd.f32 0.0, %v7223
      %v7225 = vpop.f32.mrb[0].mxu0
      %v7226 = vpop.f32.mrb[0].mxu0
      %v7227 = vadd.f32 0.0, %v7226
      %v7228 = vpop.f32.mrb[0].mxu0
      %7229 = vmatprep.mubr.bf16.mxu0 0
      %7230 = vmatmul.mubr.bf16.gmra.mrb[0].mxu0 %v6993
      %v7231 = vpop.f32.mrb[0].mxu0
      %v7232 = vadd.f32 0.0, %v7231
      %v7233 = vpop.f32.mrb[0].mxu0
      %v7234 = vpop.f32.mrb[0].mxu0
      %v7235 = vadd.f32 0.0, %v7234
      %v7236 = vpop.f32.mrb[0].mxu0
      %7237 = vmatprep.mubr.bf16.mxu0 0
      %7238 = vmatmul.mubr.bf16.gmra.mrb[0].mxu0 %v6996
      %v7239 = vpop.f32.mrb[0].mxu0
      %v7240 = vadd.f32 0.0, %v7239
      %v7241 = vpop.f32.mrb[0].mxu0
      %v7242 = vpop.f32.mrb[0].mxu0
      %v7243 = vadd.f32 0.0, %v7242
      %v7244 = vpop.f32.mrb[0].mxu0
      %7245 = vmatprep.mubr.bf16.mxu0 0
      %7246 = vmatmul.mubr.bf16.gmra.mrb[0].mxu0 %v6999
      %v7247 = vpop.f32.mrb[0].mxu0
      %v7248 = vadd.f32 0.0, %v7247
      %v7249 = vpop.f32.mrb[0].mxu0
      %v7250 = vpop.f32.mrb[0].mxu0
      %v7251 = vadd.f32 0.0, %v7250
      %v7252 = vpop.f32.mrb[0].mxu0
      %7253 = vmatprep.mubr.bf16.mxu0 0
      %7254 = vmatmul.mubr.bf16.gmra.mrb[0].mxu0 %v7002
      %v7255 = vpop.f32.mrb[0].mxu0
      %v7256 = vadd.f32 0.0, %v7255
      %v7257 = vpop.f32.mrb[0].mxu0
      %v7258 = vpop.f32.mrb[0].mxu0
      %v7259 = vadd.f32 0.0, %v7258
      %v7260 = vpop.f32.mrb[0].mxu0
      %7261 = vmatprep.mubr.bf16.mxu0 0
      %7262 = vmatmul.mubr.bf16.gmra.mrb[0].mxu0 %v7005
      %v7263 = vpop.f32.mrb[0].mxu0
      %v7264 = vadd.f32 0.0, %v7263
      %v7265 = vpop.f32.mrb[0].mxu0
      %v7266 = vpop.f32.mrb[0].mxu0
      %v7267 = vadd.f32 0.0, %v7266
      %v7268 = vpop.f32.mrb[0].mxu0
      %7269 = vmatprep.mubr.bf16.mxu0 0
      %7270 = vmatmul.mubr.bf16.gmra.mrb[0].mxu0 %v7008
      %v7271 = vpop.f32.mrb[0].mxu0
      %v7272 = vadd.f32 0.0, %v7271
      %v7273 = vpop.f32.mrb[0].mxu0
      %v7274 = vpop.f32.mrb[0].mxu0
      %v7275 = vadd.f32 0.0, %v7274
      %v7276 = vpop.f32.mrb[0].mxu0
      %7277 = vmatprep.mubr.bf16.mxu0 0
      %7278 = vmatmul.mubr.bf16.gmra.mrb[0].mxu0 %v7011
      %v7279 = vpop.f32.mrb[0].mxu0
      %v7280 = vadd.f32 0.0, %v7279
      %v7281 = vpop.f32.mrb[0].mxu0
      %v7282 = vpop.f32.mrb[0].mxu0
      %v7283 = vadd.f32 0.0, %v7282
      %v7284 = vpop.f32.mrb[0].mxu0
      %7285 = vmatprep.mubr.bf16.mxu0 0
      %7286 = vmatmul.mubr.bf16.gmra.mrb[0].mxu0 %v7014
      %v7287 = vpop.f32.mrb[0].mxu0
      %v7288 = vadd.f32 0.0, %v7287
      %v7289 = vpop.f32.mrb[0].mxu0
      %v7290 = vpop.f32.mrb[0].mxu0
      %v7291 = vadd.f32 0.0, %v7290
      %v7292 = vpop.f32.mrb[0].mxu0
      %7293 = vmatprep.mubr.bf16.mxu0 0
      %7294 = vmatmul.mubr.bf16.gmra.mrb[0].mxu0 %v7017
      %v7295 = vpop.f32.mrb[0].mxu0
      %v7296 = vadd.f32 0.0, %v7295
      %v7297 = vpop.f32.mrb[0].mxu0
      %v7298 = vpop.f32.mrb[0].mxu0
      %v7299 = vadd.f32 0.0, %v7298
      %v7300 = vpop.f32.mrb[0].mxu0
      %7301 = vmatprep.mubr.bf16.mxu0 0
      %7302 = vmatmul.mubr.bf16.gmra.mrb[0].mxu0 %v7020
      %v7303 = vpop.f32.mrb[0].mxu0
      %v7304 = vadd.f32 0.0, %v7303
      %v7305 = vpop.f32.mrb[0].mxu0
      %v7306 = vpop.f32.mrb[0].mxu0
      %v7307 = vadd.f32 0.0, %v7306
      %v7308 = vpop.f32.mrb[0].mxu0
      %7309 = vmatprep.mubr.bf16.mxu0 0
      %7310 = vmatmul.mubr.bf16.gmra.mrb[0].mxu0 %v7023
      %v7311 = vpop.f32.mrb[0].mxu0
      %v7312 = vadd.f32 0.0, %v7311
      %v7313 = vpop.f32.mrb[0].mxu0
      %v7314 = vpop.f32.mrb[0].mxu0
      %v7315 = vadd.f32 0.0, %v7314
      %v7316 = vpop.f32.mrb[0].mxu0
      %7317 = vmatprep.mubr.bf16.mxu0 0
      %7318 = vmatmul.mubr.bf16.gmra.mrb[0].mxu0 %v7026
      %v7319 = vpop.f32.mrb[0].mxu0
      %v7320 = vadd.f32 0.0, %v7319
      %v7321 = vpop.f32.mrb[0].mxu0
      %v7322 = vpop.f32.mrb[0].mxu0
      %v7323 = vadd.f32 0.0, %v7322
      %v7324 = vpop.f32.mrb[0].mxu0
      %7325 = vmatprep.mubr.bf16.mxu0 0
      %7326 = vmatmul.mubr.bf16.gmra.mrb[0].mxu0 %v7029
      %v7327 = vpop.f32.mrb[0].mxu0
      %v7328 = vadd.f32 0.0, %v7327
      %v7329 = vpop.f32.mrb[0].mxu0
      %v7330 = vpop.f32.mrb[0].mxu0
      %v7331 = vadd.f32 0.0, %v7330
      %v7332 = vpop.f32.mrb[0].mxu0
      %7333 = vmatprep.mubr.bf16.mxu0 0
      %7334 = vmatmul.mubr.bf16.gmra.mrb[0].mxu0 %v7032
      %v7335 = vpop.f32.mrb[0].mxu0
      %v7336 = vadd.f32 0.0, %v7335
      %v7337 = vpop.f32.mrb[0].mxu0
      %v7338 = vpop.f32.mrb[0].mxu0
      %v7339 = vadd.f32 0.0, %v7338
      %v7340 = vpop.f32.mrb[0].mxu0
      %7341 = vmatprep.mubr.bf16.mxu0 0
      %7342 = vmatmul.mubr.bf16.gmra.mrb[0].mxu0 %v7035
      %v7343 = vpop.f32.mrb[0].mxu0
      %v7344 = vadd.f32 0.0, %v7343
      %v7345 = vpop.f32.mrb[0].mxu0
      %v7346 = vpop.f32.mrb[0].mxu0
      %v7347 = vadd.f32 0.0, %v7346
      %v7348 = vpop.f32.mrb[0].mxu0
      %7349 = vmatprep.mubr.bf16.mxu0 0
      %7350 = vmatmul.mubr.bf16.gmra.mrb[0].mxu0 %v7038
      %v7351 = vpop.f32.mrb[0].mxu0
      %v7352 = vadd.f32 0.0, %v7351
      %v7353 = vpop.f32.mrb[0].mxu0
      %v7354 = vpop.f32.mrb[0].mxu0
      %v7355 = vadd.f32 0.0, %v7354
      %v7356 = vpop.f32.mrb[0].mxu0
      %7357 = vmatprep.mubr.bf16.mxu0 0
      %7358 = vmatmul.mubr.bf16.gmra.mrb[0].mxu0 %v7041
      %v7359 = vpop.f32.mrb[0].mxu0
      %v7360 = vadd.f32 0.0, %v7359
      %v7361 = vpop.f32.mrb[0].mxu0
      %v7362 = vpop.f32.mrb[0].mxu0
      %v7363 = vadd.f32 0.0, %v7362
      %v7364 = vpop.f32.mrb[0].mxu0
      %7365 = vmatprep.mubr.bf16.mxu0 0
      %7366 = vmatmul.mubr.bf16.gmra.mrb[0].mxu0 %v7044
      %v7367 = vpop.f32.mrb[0].mxu0
      %v7368 = vadd.f32 0.0, %v7367
      %v7369 = vpop.f32.mrb[0].mxu0
      %v7370 = vpop.f32.mrb[0].mxu0
      %v7371 = vadd.f32 0.0, %v7370
      %v7372 = vpop.f32.mrb[0].mxu0
      %7373 = vmatprep.mubr.bf16.mxu0 0
      %7374 = vmatmul.mubr.bf16.gmra.mrb[0].mxu0 %v7047
      %v7375 = vpop.f32.mrb[0].mxu0
      %v7376 = vadd.f32 0.0, %v7375
      %v7377 = vpop.f32.mrb[0].mxu0
      %v7378 = vpop.f32.mrb[0].mxu0
      %v7379 = vadd.f32 0.0, %v7378
      %v7380 = vpop.f32.mrb[0].mxu0
      %7381 = vmatprep.mubr.bf16.mxu0 0
      %7382 = vmatmul.mubr.bf16.gmra.mrb[0].mxu0 %v7050
      %v7383 = vpop.f32.mrb[0].mxu0
      %v7384 = vadd.f32 0.0, %v7383
      %v7385 = vpop.f32.mrb[0].mxu0
      %v7386 = vpop.f32.mrb[0].mxu0
      %v7387 = vadd.f32 0.0, %v7386
      %v7388 = vpop.f32.mrb[0].mxu0
      %7389 = vmatprep.mubr.bf16.mxu0 0
      %7390 = vmatmul.mubr.bf16.gmra.mrb[0].mxu0 %v7053
      %v7391 = vpop.f32.mrb[0].mxu0
      %v7392 = vadd.f32 0.0, %v7391
      %v7393 = vpop.f32.mrb[0].mxu0
      %v7394 = vpop.f32.mrb[0].mxu0
      %v7395 = vadd.f32 0.0, %v7394
      %v7396 = vpop.f32.mrb[0].mxu0
      %7397 = vmatprep.mubr.bf16.mxu0 0
      %7398 = vmatmul.mubr.bf16.gmra.mrb[0].mxu0 %v7056
      %v7399 = vpop.f32.mrb[0].mxu0
      %v7400 = vadd.f32 0.0, %v7399
      %v7401 = vpop.f32.mrb[0].mxu0
      %v7402 = vpop.f32.mrb[0].mxu0
      %v7403 = vadd.f32 0.0, %v7402
      %v7404 = vpop.f32.mrb[0].mxu0
      %7405 = vmatprep.mubr.bf16.mxu0 0
      %7406 = vmatmul.mubr.bf16.gmra.mrb[0].mxu0 %v7059
      %v7407 = vpop.f32.mrb[0].mxu0
      %v7408 = vadd.f32 0.0, %v7407
      %v7409 = vpop.f32.mrb[0].mxu0
      %v7410 = vpop.f32.mrb[0].mxu0
      %v7411 = vadd.f32 0.0, %v7410
      %v7412 = vpop.f32.mrb[0].mxu0
      %7413 = vdwg.mxu0
      %v7414 = vpack.c.bf16 %v7099, %v7096
      %v7415 = vpack.c.bf16 %v7107, %v7104
      %v7416 = vpack.c.bf16 %v7115, %v7112
      %v7417 = vpack.c.bf16 %v7123, %v7120
      %v7418 = vpack.c.bf16 %v7131, %v7128
      %v7419 = vpack.c.bf16 %v7139, %v7136
      %v7420 = vpack.c.bf16 %v7147, %v7144
      %v7421 = vpack.c.bf16 %v7155, %v7152
      %v7422 = vpack.c.bf16 %v7163, %v7160
      %v7423 = vpack.c.bf16 %v7171, %v7168
      %v7424 = vpack.c.bf16 %v7179, %v7176
      %v7425 = vpack.c.bf16 %v7187, %v7184
      %v7426 = vpack.c.bf16 %v7195, %v7192
      %v7427 = vpack.c.bf16 %v7203, %v7200
      %v7428 = vpack.c.bf16 %v7211, %v7208
      %v7429 = vpack.c.bf16 %v7219, %v7216
      %v7430 = vpack.c.bf16 %v7227, %v7224
      %v7431 = vpack.c.bf16 %v7235, %v7232
      %v7432 = vpack.c.bf16 %v7243, %v7240
      %v7433 = vpack.c.bf16 %v7251, %v7248
      %v7434 = vpack.c.bf16 %v7259, %v7256
      %v7435 = vpack.c.bf16 %v7267, %v7264
      %v7436 = vpack.c.bf16 %v7275, %v7272
      %v7437 = vpack.c.bf16 %v7283, %v7280
      %v7438 = vpack.c.bf16 %v7291, %v7288
      %v7439 = vpack.c.bf16 %v7299, %v7296
      %v7440 = vpack.c.bf16 %v7307, %v7304
      %v7441 = vpack.c.bf16 %v7315, %v7312
      %v7442 = vpack.c.bf16 %v7323, %v7320
      %v7443 = vpack.c.bf16 %v7331, %v7328
      %v7444 = vpack.c.bf16 %v7339, %v7336
      %v7445 = vpack.c.bf16 %v7347, %v7344
      %v7446 = vpack.c.bf16 %v7355, %v7352
      %v7447 = vpack.c.bf16 %v7363, %v7360
      %v7448 = vpack.c.bf16 %v7371, %v7368
      %v7449 = vpack.c.bf16 %v7379, %v7376
      %v7450 = vpack.c.bf16 %v7387, %v7384
      %v7451 = vpack.c.bf16 %v7395, %v7392
      %v7452 = vpack.c.bf16 %v7403, %v7400
      %v7453 = vpack.c.bf16 %v7411, %v7408
      %v7454 = vld [vmem:[%s0] sm:$0xff]
      %v7455 = vld [vmem:[%s0 + $0x8] sm:$0xff]
      %v7456 = vld [vmem:[%s0 + $0x10] sm:$0xf]
      %v7457 = vld [vmem:[%s0 + $0x14] sm:$0xff]
      %v7458 = vld [vmem:[%s0 + $0x1c] sm:$0xff]
      %v7459 = vld [vmem:[%s0 + $0x24] sm:$0xf]
      %v7460 = vld [vmem:[%s0 + $0x28] sm:$0xff]
      %v7461 = vld [vmem:[%s0 + $0x30] sm:$0xff]
      %v7462 = vld [vmem:[%s0 + $0x38] sm:$0xf]
      %v7463 = vld [vmem:[%s0 + $0x3c] sm:$0xff]
      %v7464 = vld [vmem:[%s0 + $0x44] sm:$0xff]
      %v7465 = vld [vmem:[%s0 + $0x4c] sm:$0xf]
      %v7466 = vld [vmem:[%s0 + $0x50] sm:$0xff]
      %v7467 = vld [vmem:[%s0 + $0x58] sm:$0xff]
      %v7468 = vld [vmem:[%s0 + $0x60] sm:$0xf]
      %v7469 = vld [vmem:[%s0 + $0x64] sm:$0xff]
      %v7470 = vld [vmem:[%s0 + $0x6c] sm:$0xff]
      %v7471 = vld [vmem:[%s0 + $0x74] sm:$0xf]
      %v7472 = vld [vmem:[%s0 + $0x78] sm:$0xff]
      %v7473 = vld [vmem:[%s0 + $0x80] sm:$0xff]
      %v7474 = vld [vmem:[%s0 + $0x88] sm:$0xf]
      %v7475 = vld [vmem:[%s0 + $0x8c] sm:$0xff]
      %v7476 = vld [vmem:[%s0 + $0x94] sm:$0xff]
      %v7477 = vld [vmem:[%s0 + $0x9c] sm:$0xf]
      %v7478 = vld [vmem:[%s0 + $0xa0] sm:$0xff]
      %v7479 = vld [vmem:[%s0 + $0xa8] sm:$0xff]
      %v7480 = vld [vmem:[%s0 + $0xb0] sm:$0xf]
      %v7481 = vld [vmem:[%s0 + $0xb4] sm:$0xff]
      %v7482 = vld [vmem:[%s0 + $0xbc] sm:$0xff]
      %v7483 = vld [vmem:[%s0 + $0xc4] sm:$0xf]
      %v7484 = vld [vmem:[%s0 + $0xc8] sm:$0xff]
      %v7485 = vld [vmem:[%s0 + $0xd0] sm:$0xff]
      %v7486 = vld [vmem:[%s0 + $0xd8] sm:$0xf]
      %v7487 = vld [vmem:[%s0 + $0xdc] sm:$0xff]
      %v7488 = vld [vmem:[%s0 + $0xe4] sm:$0xff]
      %v7489 = vld [vmem:[%s0 + $0xec] sm:$0xf]
      %v7490 = vld [vmem:[%s0 + $0xf0] sm:$0xff]
      %v7491 = vld [vmem:[%s0 + $0xf8] sm:$0xff]
      %v7492 = vld [vmem:[%s0 + $0x100] sm:$0xf]
      %v7493 = vld [vmem:[%s0 + $0x104] sm:$0xff]
      %v7494 = vld [vmem:[%s0 + $0x10c] sm:$0xff]
      %v7495 = vld [vmem:[%s0 + $0x114] sm:$0xf]
      %v7496 = vld [vmem:[%s0 + $0x118] sm:$0xff]
      %v7497 = vld [vmem:[%s0 + $0x120] sm:$0xff]
      %v7498 = vld [vmem:[%s0 + $0x128] sm:$0xf]
      %v7499 = vld [vmem:[%s0 + $0x12c] sm:$0xff]
      %v7500 = vld [vmem:[%s0 + $0x134] sm:$0xff]
      %v7501 = vld [vmem:[%s0 + $0x13c] sm:$0xf]
      %v7502 = vld [vmem:[%s0 + $0x140] sm:$0xff]
      %v7503 = vld [vmem:[%s0 + $0x148] sm:$0xff]
      %v7504 = vld [vmem:[%s0 + $0x150] sm:$0xf]
      %v7505 = vld [vmem:[%s0 + $0x154] sm:$0xff]
      %v7506 = vld [vmem:[%s0 + $0x15c] sm:$0xff]
      %v7507 = vld [vmem:[%s0 + $0x164] sm:$0xf]
      %v7508 = vld [vmem:[%s0 + $0x168] sm:$0xff]
      %v7509 = vld [vmem:[%s0 + $0x170] sm:$0xff]
      %v7510 = vld [vmem:[%s0 + $0x178] sm:$0xf]
      %v7511 = vld [vmem:[%s0 + $0x17c] sm:$0xff]
      %v7512 = vld [vmem:[%s0 + $0x184] sm:$0xff]
      %v7513 = vld [vmem:[%s0 + $0x18c] sm:$0xf]
      %v7514 = vld [vmem:[%s0 + $0x190] sm:$0xff]
      %v7515 = vld [vmem:[%s0 + $0x198] sm:$0xff]
      %v7516 = vld [vmem:[%s0 + $0x1a0] sm:$0xf]
      %v7517 = vld [vmem:[%s0 + $0x1a4] sm:$0xff]
      %v7518 = vld [vmem:[%s0 + $0x1ac] sm:$0xff]
      %v7519 = vld [vmem:[%s0 + $0x1b4] sm:$0xf]
      %v7520 = vld [vmem:[%s0 + $0x1b8] sm:$0xff]
      %v7521 = vld [vmem:[%s0 + $0x1c0] sm:$0xff]
      %v7522 = vld [vmem:[%s0 + $0x1c8] sm:$0xf]
      %v7523 = vld [vmem:[%s0 + $0x1cc] sm:$0xff]
      %v7524 = vld [vmem:[%s0 + $0x1d4] sm:$0xff]
      %v7525 = vld [vmem:[%s0 + $0x1dc] sm:$0xf]
      %v7526 = vld [vmem:[%s0 + $0x1e0] sm:$0xff]
      %v7527 = vld [vmem:[%s0 + $0x1e8] sm:$0xff]
      %v7528 = vld [vmem:[%s0 + $0x1f0] sm:$0xf]
      %v7529 = vld [vmem:[%s0 + $0x1f4] sm:$0xff]
      %v7530 = vld [vmem:[%s0 + $0x1fc] sm:$0xff]
      %v7531 = vld [vmem:[%s0 + $0x204] sm:$0xf]
      %v7532 = vld [vmem:[%s0 + $0x208] sm:$0xff]
      %v7533 = vld [vmem:[%s0 + $0x210] sm:$0xff]
      %v7534 = vld [vmem:[%s0 + $0x218] sm:$0xf]
      %v7535 = vld [vmem:[%s0 + $0x21c] sm:$0xff]
      %v7536 = vld [vmem:[%s0 + $0x224] sm:$0xff]
      %v7537 = vld [vmem:[%s0 + $0x22c] sm:$0xf]
      %v7538 = vld [vmem:[%s0 + $0x230] sm:$0xff]
      %v7539 = vld [vmem:[%s0 + $0x238] sm:$0xff]
      %v7540 = vld [vmem:[%s0 + $0x240] sm:$0xf]
      %v7541 = vld [vmem:[%s0 + $0x244] sm:$0xff]
      %v7542 = vld [vmem:[%s0 + $0x24c] sm:$0xff]
      %v7543 = vld [vmem:[%s0 + $0x254] sm:$0xf]
      %v7544 = vld [vmem:[%s0 + $0x258] sm:$0xff]
      %v7545 = vld [vmem:[%s0 + $0x260] sm:$0xff]
      %v7546 = vld [vmem:[%s0 + $0x268] sm:$0xf]
      %v7547 = vld [vmem:[%s0 + $0x26c] sm:$0xff]
      %v7548 = vld [vmem:[%s0 + $0x274] sm:$0xff]
      %v7549 = vld [vmem:[%s0 + $0x27c] sm:$0xf]
      %v7550 = vld [vmem:[%s0 + $0x280] sm:$0xff]
      %v7551 = vld [vmem:[%s0 + $0x288] sm:$0xff]
      %v7552 = vld [vmem:[%s0 + $0x290] sm:$0xf]
      %v7553 = vld [vmem:[%s0 + $0x294] sm:$0xff]
      %v7554 = vld [vmem:[%s0 + $0x29c] sm:$0xff]
      %v7555 = vld [vmem:[%s0 + $0x2a4] sm:$0xf]
      %v7556 = vld [vmem:[%s0 + $0x2a8] sm:$0xff]
      %v7557 = vld [vmem:[%s0 + $0x2b0] sm:$0xff]
      %v7558 = vld [vmem:[%s0 + $0x2b8] sm:$0xf]
      %v7559 = vld [vmem:[%s0 + $0x2bc] sm:$0xff]
      %v7560 = vld [vmem:[%s0 + $0x2c4] sm:$0xff]
      %v7561 = vld [vmem:[%s0 + $0x2cc] sm:$0xf]
      %v7562 = vld [vmem:[%s0 + $0x2d0] sm:$0xff]
      %v7563 = vld [vmem:[%s0 + $0x2d8] sm:$0xff]
      %v7564 = vld [vmem:[%s0 + $0x2e0] sm:$0xf]
      %v7565 = vld [vmem:[%s0 + $0x2e4] sm:$0xff]
      %v7566 = vld [vmem:[%s0 + $0x2ec] sm:$0xff]
      %v7567 = vld [vmem:[%s0 + $0x2f4] sm:$0xf]
      %v7568 = vld [vmem:[%s0 + $0x2f8] sm:$0xff]
      %v7569 = vld [vmem:[%s0 + $0x300] sm:$0xff]
      %v7570 = vld [vmem:[%s0 + $0x308] sm:$0xf]
      %v7571 = vld [vmem:[%s0 + $0x30c] sm:$0xff]
      %v7572 = vld [vmem:[%s0 + $0x314] sm:$0xff]
      %v7573 = vld [vmem:[%s0 + $0x31c] sm:$0xf]
      %v7574 = vld [vmem:[%s0 + $0x320] sm:$0xff]
      %v7575 = vld [vmem:[%s0 + $0x328] sm:$0xff]
      %v7576 = vld [vmem:[%s0 + $0x330] sm:$0xf]
      %v7577 = vld [vmem:[%s0 + $0x334] sm:$0xff]
      %v7578 = vld [vmem:[%s0 + $0x33c] sm:$0xff]
      %v7579 = vld [vmem:[%s0 + $0x344] sm:$0xf]
      %v7580 = vld [vmem:[%s0 + $0x348] sm:$0xff]
      %v7581 = vld [vmem:[%s0 + $0x350] sm:$0xff]
      %v7582 = vld [vmem:[%s0 + $0x358] sm:$0xf]
      %v7583 = vld [vmem:[%s0 + $0x35c] sm:$0xff]
      %v7584 = vld [vmem:[%s0 + $0x364] sm:$0xff]
      %v7585 = vld [vmem:[%s0 + $0x36c] sm:$0xf]
      %v7586 = vld [vmem:[%s0 + $0x370] sm:$0xff]
      %v7587 = vld [vmem:[%s0 + $0x378] sm:$0xff]
      %v7588 = vld [vmem:[%s0 + $0x380] sm:$0xf]
      %v7589 = vld [vmem:[%s0 + $0x384] sm:$0xff]
      %v7590 = vld [vmem:[%s0 + $0x38c] sm:$0xff]
      %v7591 = vld [vmem:[%s0 + $0x394] sm:$0xf]
      %v7592 = vld [vmem:[%s0 + $0x398] sm:$0xff]
      %v7593 = vld [vmem:[%s0 + $0x3a0] sm:$0xff]
      %v7594 = vld [vmem:[%s0 + $0x3a8] sm:$0xf]
      %v7595 = vld [vmem:[%s0 + $0x3ac] sm:$0xff]
      %v7596 = vld [vmem:[%s0 + $0x3b4] sm:$0xff]
      %v7597 = vld [vmem:[%s0 + $0x3bc] sm:$0xf]
      %v7598 = vld [vmem:[%s0 + $0x3c0] sm:$0xff]
      %v7599 = vld [vmem:[%s0 + $0x3c8] sm:$0xff]
      %v7600 = vld [vmem:[%s0 + $0x3d0] sm:$0xf]
      %v7601 = vld [vmem:[%s0 + $0x3d4] sm:$0xff]
      %v7602 = vld [vmem:[%s0 + $0x3dc] sm:$0xff]
      %v7603 = vld [vmem:[%s0 + $0x3e4] sm:$0xf]
      %v7604 = vld [vmem:[%s0 + $0x3e8] sm:$0xff]
      %v7605 = vld [vmem:[%s0 + $0x3f0] sm:$0xff]
      %v7606 = vld [vmem:[%s0 + $0x3f8] sm:$0xf]
      %v7607 = vld [vmem:[%s0 + $0x3fc] sm:$0xff]
      %v7608 = vld [vmem:[%s0 + $0x404] sm:$0xff]
      %v7609 = vld [vmem:[%s0 + $0x40c] sm:$0xf]
      %v7610 = vld [vmem:[%s0 + $0x410] sm:$0xff]
      %v7611 = vld [vmem:[%s0 + $0x418] sm:$0xff]
      %v7612 = vld [vmem:[%s0 + $0x420] sm:$0xf]
      %v7613 = vld [vmem:[%s0 + $0x424] sm:$0xff]
      %v7614 = vld [vmem:[%s0 + $0x42c] sm:$0xff]
      %v7615 = vld [vmem:[%s0 + $0x434] sm:$0xf]
      %v7616 = vld [vmem:[%s0 + $0x438] sm:$0xff]
      %v7617 = vld [vmem:[%s0 + $0x440] sm:$0xff]
      %v7618 = vld [vmem:[%s0 + $0x448] sm:$0xf]
      %v7619 = vld [vmem:[%s0 + $0x44c] sm:$0xff]
      %v7620 = vld [vmem:[%s0 + $0x454] sm:$0xff]
      %v7621 = vld [vmem:[%s0 + $0x45c] sm:$0xf]
      %v7622 = vld [vmem:[%s0 + $0x460] sm:$0xff]
      %v7623 = vld [vmem:[%s0 + $0x468] sm:$0xff]
      %v7624 = vld [vmem:[%s0 + $0x470] sm:$0xf]
      %v7625 = vld [vmem:[%s0 + $0x474] sm:$0xff]
      %v7626 = vld [vmem:[%s0 + $0x47c] sm:$0xff]
      %v7627 = vld [vmem:[%s0 + $0x484] sm:$0xf]
      %v7628 = vld [vmem:[%s0 + $0x488] sm:$0xff]
      %v7629 = vld [vmem:[%s0 + $0x490] sm:$0xff]
      %v7630 = vld [vmem:[%s0 + $0x498] sm:$0xf]
      %v7631 = vld [vmem:[%s0 + $0x49c] sm:$0xff]
      %v7632 = vld [vmem:[%s0 + $0x4a4] sm:$0xff]
      %v7633 = vld [vmem:[%s0 + $0x4ac] sm:$0xf]
      %v7634 = vld [vmem:[%s0 + $0x4b0] sm:$0xff]
      %v7635 = vld [vmem:[%s0 + $0x4b8] sm:$0xff]
      %v7636 = vld [vmem:[%s0 + $0x4c0] sm:$0xf]
      %v7637 = vld [vmem:[%s0 + $0x4c4] sm:$0xff]
      %v7638 = vld [vmem:[%s0 + $0x4cc] sm:$0xff]
      %v7639 = vld [vmem:[%s0 + $0x4d4] sm:$0xf]
      %v7640 = vld [vmem:[%s0 + $0x4d8] sm:$0xff]
      %v7641 = vld [vmem:[%s0 + $0x4e0] sm:$0xff]
      %v7642 = vld [vmem:[%s0 + $0x4e8] sm:$0xf]
      %v7643 = vld [vmem:[%s0 + $0x4ec] sm:$0xff]
      %v7644 = vld [vmem:[%s0 + $0x4f4] sm:$0xff]
      %v7645 = vld [vmem:[%s0 + $0x4fc] sm:$0xf]
      %v7646 = vld [vmem:[%s0 + $0x500] sm:$0xff]
      %v7647 = vld [vmem:[%s0 + $0x508] sm:$0xff]
      %v7648 = vld [vmem:[%s0 + $0x510] sm:$0xf]
      %v7649 = vld [vmem:[%s0 + $0x514] sm:$0xff]
      %v7650 = vld [vmem:[%s0 + $0x51c] sm:$0xff]
      %v7651 = vld [vmem:[%s0 + $0x524] sm:$0xf]
      %v7652 = vld [vmem:[%s0 + $0x528] sm:$0xff]
      %v7653 = vld [vmem:[%s0 + $0x530] sm:$0xff]
      %v7654 = vld [vmem:[%s0 + $0x538] sm:$0xf]
      %v7655 = vld [vmem:[%s0 + $0x53c] sm:$0xff]
      %v7656 = vld [vmem:[%s0 + $0x544] sm:$0xff]
      %v7657 = vld [vmem:[%s0 + $0x54c] sm:$0xf]
      %v7658 = vld [vmem:[%s0 + $0x550] sm:$0xff]
      %v7659 = vld [vmem:[%s0 + $0x558] sm:$0xff]
      %v7660 = vld [vmem:[%s0 + $0x560] sm:$0xf]
      %v7661 = vld [vmem:[%s0 + $0x564] sm:$0xff]
      %v7662 = vld [vmem:[%s0 + $0x56c] sm:$0xff]
      %v7663 = vld [vmem:[%s0 + $0x574] sm:$0xf]
      %v7664 = vld [vmem:[%s0 + $0x578] sm:$0xff]
      %v7665 = vld [vmem:[%s0 + $0x580] sm:$0xff]
      %v7666 = vld [vmem:[%s0 + $0x588] sm:$0xf]
      %v7667 = vld [vmem:[%s0 + $0x58c] sm:$0xff]
      %v7668 = vld [vmem:[%s0 + $0x594] sm:$0xff]
      %v7669 = vld [vmem:[%s0 + $0x59c] sm:$0xf]
      %v7670 = vld [vmem:[%s0 + $0x5a0] sm:$0xff]
      %v7671 = vld [vmem:[%s0 + $0x5a8] sm:$0xff]
      %v7672 = vld [vmem:[%s0 + $0x5b0] sm:$0xf]
      %v7673 = vld [vmem:[%s0 + $0x5b4] sm:$0xff]
      %v7674 = vld [vmem:[%s0 + $0x5bc] sm:$0xff]
      %v7675 = vld [vmem:[%s0 + $0x5c4] sm:$0xf]
      %v7676 = vld [vmem:[%s0 + $0x5c8] sm:$0xff]
      %v7677 = vld [vmem:[%s0 + $0x5d0] sm:$0xff]
      %v7678 = vld [vmem:[%s0 + $0x5d8] sm:$0xf]
      %v7679 = vld [vmem:[%s0 + $0x5dc] sm:$0xff]
      %v7680 = vld [vmem:[%s0 + $0x5e4] sm:$0xff]
      %v7681 = vld [vmem:[%s0 + $0x5ec] sm:$0xf]
      %v7682 = vld [vmem:[%s0 + $0x5f0] sm:$0xff]
      %v7683 = vld [vmem:[%s0 + $0x5f8] sm:$0xff]
      %v7684 = vld [vmem:[%s0 + $0x600] sm:$0xf]
      %v7685 = vld [vmem:[%s0 + $0x604] sm:$0xff]
      %v7686 = vld [vmem:[%s0 + $0x60c] sm:$0xff]
      %v7687 = vld [vmem:[%s0 + $0x614] sm:$0xf]
      %v7688 = vld [vmem:[%s0 + $0x618] sm:$0xff]
      %v7689 = vld [vmem:[%s0 + $0x620] sm:$0xff]
      %v7690 = vld [vmem:[%s0 + $0x628] sm:$0xf]
      %v7691 = vld [vmem:[%s0 + $0x62c] sm:$0xff]
      %v7692 = vld [vmem:[%s0 + $0x634] sm:$0xff]
      %v7693 = vld [vmem:[%s0 + $0x63c] sm:$0xf]
      %v7695 = vlaneseq
      %v7696 = vshrl.u32 %v7695, 7
      %v7697 = vsub.s32 0, %v7696
      %v7698 = vrot.slane %v6916, %v7697
      %v7940 = vunpack.c.l.b16 %v7454
      %v7941 = vunpack.c.h.b16 %v7454
      %v7942 = vunpack.c.l.b16 %v7455
      %v7943 = vunpack.c.h.b16 %v7455
      %v7944 = vunpack.c.l.b16 %v7456
      %v7945 = vunpack.c.l.b16 %v7457
      %v7946 = vunpack.c.h.b16 %v7457
      %v7947 = vunpack.c.l.b16 %v7458
      %v7948 = vunpack.c.h.b16 %v7458
      %v7949 = vunpack.c.l.b16 %v7459
      %v7950 = vunpack.c.l.b16 %v7460
      %v7951 = vunpack.c.h.b16 %v7460
      %v7952 = vunpack.c.l.b16 %v7461
      %v7953 = vunpack.c.h.b16 %v7461
      %v7954 = vunpack.c.l.b16 %v7462
      %v7955 = vunpack.c.l.b16 %v7463
      %v7956 = vunpack.c.h.b16 %v7463
      %v7957 = vunpack.c.l.b16 %v7464
      %v7958 = vunpack.c.h.b16 %v7464
      %v7959 = vunpack.c.l.b16 %v7465
      %v7960 = vunpack.c.l.b16 %v7466
      %v7961 = vunpack.c.h.b16 %v7466
      %v7962 = vunpack.c.l.b16 %v7467
      %v7963 = vunpack.c.h.b16 %v7467
      %v7964 = vunpack.c.l.b16 %v7468
      %v7965 = vunpack.c.l.b16 %v7469
      %v7966 = vunpack.c.h.b16 %v7469
      %v7967 = vunpack.c.l.b16 %v7470
      %v7968 = vunpack.c.h.b16 %v7470
      %v7969 = vunpack.c.l.b16 %v7471
      %v7970 = vunpack.c.l.b16 %v7472
      %v7971 = vunpack.c.h.b16 %v7472
      %v7972 = vunpack.c.l.b16 %v7473
      %v7973 = vunpack.c.h.b16 %v7473
      %v7974 = vunpack.c.l.b16 %v7474
      %v7975 = vunpack.c.l.b16 %v7475
      %v7976 = vunpack.c.h.b16 %v7475
      %v7977 = vunpack.c.l.b16 %v7476
      %v7978 = vunpack.c.h.b16 %v7476
      %v7979 = vunpack.c.l.b16 %v7477
      %v7980 = vunpack.c.l.b16 %v7478
      %v7981 = vunpack.c.h.b16 %v7478
      %v7982 = vunpack.c.l.b16 %v7479
      %v7983 = vunpack.c.h.b16 %v7479
      %v7984 = vunpack.c.l.b16 %v7480
      %v7985 = vunpack.c.l.b16 %v7481
      %v7986 = vunpack.c.h.b16 %v7481
      %v7987 = vunpack.c.l.b16 %v7482
      %v7988 = vunpack.c.h.b16 %v7482
      %v7989 = vunpack.c.l.b16 %v7483
      %v7990 = vunpack.c.l.b16 %v7484
      %v7991 = vunpack.c.h.b16 %v7484
      %v7992 = vunpack.c.l.b16 %v7485
      %v7993 = vunpack.c.h.b16 %v7485
      %v7994 = vunpack.c.l.b16 %v7486
      %v7995 = vunpack.c.l.b16 %v7487
      %v7996 = vunpack.c.h.b16 %v7487
      %v7997 = vunpack.c.l.b16 %v7488
      %v7998 = vunpack.c.h.b16 %v7488
      %v7999 = vunpack.c.l.b16 %v7489
      %v8000 = vunpack.c.l.b16 %v7490
      %v8001 = vunpack.c.h.b16 %v7490
      %v8002 = vunpack.c.l.b16 %v7491
      %v8003 = vunpack.c.h.b16 %v7491
      %v8004 = vunpack.c.l.b16 %v7492
      %v8005 = vunpack.c.l.b16 %v7493
      %v8006 = vunpack.c.h.b16 %v7493
      %v8007 = vunpack.c.l.b16 %v7494
      %v8008 = vunpack.c.h.b16 %v7494
      %v8009 = vunpack.c.l.b16 %v7495
      %v8010 = vunpack.c.l.b16 %v7496
      %v8011 = vunpack.c.h.b16 %v7496
      %v8012 = vunpack.c.l.b16 %v7497
      %v8013 = vunpack.c.h.b16 %v7497
      %v8014 = vunpack.c.l.b16 %v7498
      %v8015 = vunpack.c.l.b16 %v7499
      %v8016 = vunpack.c.h.b16 %v7499
      %v8017 = vunpack.c.l.b16 %v7500
      %v8018 = vunpack.c.h.b16 %v7500
      %v8019 = vunpack.c.l.b16 %v7501
      %v8020 = vunpack.c.l.b16 %v7502
      %v8021 = vunpack.c.h.b16 %v7502
      %v8022 = vunpack.c.l.b16 %v7503
      %v8023 = vunpack.c.h.b16 %v7503
      %v8024 = vunpack.c.l.b16 %v7504
      %v8025 = vunpack.c.l.b16 %v7505
      %v8026 = vunpack.c.h.b16 %v7505
      %v8027 = vunpack.c.l.b16 %v7506
      %v8028 = vunpack.c.h.b16 %v7506
      %v8029 = vunpack.c.l.b16 %v7507
      %v8030 = vunpack.c.l.b16 %v7508
      %v8031 = vunpack.c.h.b16 %v7508
      %v8032 = vunpack.c.l.b16 %v7509
      %v8033 = vunpack.c.h.b16 %v7509
      %v8034 = vunpack.c.l.b16 %v7510
      %v8035 = vunpack.c.l.b16 %v7511
      %v8036 = vunpack.c.h.b16 %v7511
      %v8037 = vunpack.c.l.b16 %v7512
      %v8038 = vunpack.c.h.b16 %v7512
      %v8039 = vunpack.c.l.b16 %v7513
      %v8040 = vunpack.c.l.b16 %v7514
      %v8041 = vunpack.c.h.b16 %v7514
      %v8042 = vunpack.c.l.b16 %v7515
      %v8043 = vunpack.c.h.b16 %v7515
      %v8044 = vunpack.c.l.b16 %v7516
      %v8045 = vunpack.c.l.b16 %v7517
      %v8046 = vunpack.c.h.b16 %v7517
      %v8047 = vunpack.c.l.b16 %v7518
      %v8048 = vunpack.c.h.b16 %v7518
      %v8049 = vunpack.c.l.b16 %v7519
      %v8050 = vunpack.c.l.b16 %v7520
      %v8051 = vunpack.c.h.b16 %v7520
      %v8052 = vunpack.c.l.b16 %v7521
      %v8053 = vunpack.c.h.b16 %v7521
      %v8054 = vunpack.c.l.b16 %v7522
      %v8055 = vunpack.c.l.b16 %v7523
      %v8056 = vunpack.c.h.b16 %v7523
      %v8057 = vunpack.c.l.b16 %v7524
      %v8058 = vunpack.c.h.b16 %v7524
      %v8059 = vunpack.c.l.b16 %v7525
      %v8060 = vunpack.c.l.b16 %v7526
      %v8061 = vunpack.c.h.b16 %v7526
      %v8062 = vunpack.c.l.b16 %v7527
      %v8063 = vunpack.c.h.b16 %v7527
      %v8064 = vunpack.c.l.b16 %v7528
      %v8065 = vunpack.c.l.b16 %v7529
      %v8066 = vunpack.c.h.b16 %v7529
      %v8067 = vunpack.c.l.b16 %v7530
      %v8068 = vunpack.c.h.b16 %v7530
      %v8069 = vunpack.c.l.b16 %v7531
      %v8070 = vunpack.c.l.b16 %v7532
      %v8071 = vunpack.c.h.b16 %v7532
      %v8072 = vunpack.c.l.b16 %v7533
      %v8073 = vunpack.c.h.b16 %v7533
      %v8074 = vunpack.c.l.b16 %v7534
      %v8075 = vunpack.c.l.b16 %v7535
      %v8076 = vunpack.c.h.b16 %v7535
      %v8077 = vunpack.c.l.b16 %v7536
      %v8078 = vunpack.c.h.b16 %v7536
      %v8079 = vunpack.c.l.b16 %v7537
      %v8080 = vunpack.c.l.b16 %v7538
      %v8081 = vunpack.c.h.b16 %v7538
      %v8082 = vunpack.c.l.b16 %v7539
      %v8083 = vunpack.c.h.b16 %v7539
      %v8084 = vunpack.c.l.b16 %v7540
      %v8085 = vunpack.c.l.b16 %v7541
      %v8086 = vunpack.c.h.b16 %v7541
      %v8087 = vunpack.c.l.b16 %v7542
      %v8088 = vunpack.c.h.b16 %v7542
      %v8089 = vunpack.c.l.b16 %v7543
      %v8090 = vunpack.c.l.b16 %v7544
      %v8091 = vunpack.c.h.b16 %v7544
      %v8092 = vunpack.c.l.b16 %v7545
      %v8093 = vunpack.c.h.b16 %v7545
      %v8094 = vunpack.c.l.b16 %v7546
      %v8095 = vunpack.c.l.b16 %v7547
      %v8096 = vunpack.c.h.b16 %v7547
      %v8097 = vunpack.c.l.b16 %v7548
      %v8098 = vunpack.c.h.b16 %v7548
      %v8099 = vunpack.c.l.b16 %v7549
      %v8100 = vunpack.c.l.b16 %v7550
      %v8101 = vunpack.c.h.b16 %v7550
      %v8102 = vunpack.c.l.b16 %v7551
      %v8103 = vunpack.c.h.b16 %v7551
      %v8104 = vunpack.c.l.b16 %v7552
      %v8105 = vunpack.c.l.b16 %v7553
      %v8106 = vunpack.c.h.b16 %v7553
      %v8107 = vunpack.c.l.b16 %v7554
      %v8108 = vunpack.c.h.b16 %v7554
      %v8109 = vunpack.c.l.b16 %v7555
      %v8110 = vunpack.c.l.b16 %v7556
      %v8111 = vunpack.c.h.b16 %v7556
      %v8112 = vunpack.c.l.b16 %v7557
      %v8113 = vunpack.c.h.b16 %v7557
      %v8114 = vunpack.c.l.b16 %v7558
      %v8115 = vunpack.c.l.b16 %v7559
      %v8116 = vunpack.c.h.b16 %v7559
      %v8117 = vunpack.c.l.b16 %v7560
      %v8118 = vunpack.c.h.b16 %v7560
      %v8119 = vunpack.c.l.b16 %v7561
      %v8120 = vunpack.c.l.b16 %v7562
      %v8121 = vunpack.c.h.b16 %v7562
      %v8122 = vunpack.c.l.b16 %v7563
      %v8123 = vunpack.c.h.b16 %v7563
      %v8124 = vunpack.c.l.b16 %v7564
      %v8125 = vunpack.c.l.b16 %v7565
      %v8126 = vunpack.c.h.b16 %v7565
      %v8127 = vunpack.c.l.b16 %v7566
      %v8128 = vunpack.c.h.b16 %v7566
      %v8129 = vunpack.c.l.b16 %v7567
      %v8130 = vunpack.c.l.b16 %v7568
      %v8131 = vunpack.c.h.b16 %v7568
      %v8132 = vunpack.c.l.b16 %v7569
      %v8133 = vunpack.c.h.b16 %v7569
      %v8134 = vunpack.c.l.b16 %v7570
      %v8135 = vunpack.c.l.b16 %v7571
      %v8136 = vunpack.c.h.b16 %v7571
      %v8137 = vunpack.c.l.b16 %v7572
      %v8138 = vunpack.c.h.b16 %v7572
      %v8139 = vunpack.c.l.b16 %v7573
      %v8140 = vunpack.c.l.b16 %v7574
      %v8141 = vunpack.c.h.b16 %v7574
      %v8142 = vunpack.c.l.b16 %v7575
      %v8143 = vunpack.c.h.b16 %v7575
      %v8144 = vunpack.c.l.b16 %v7576
      %v8145 = vunpack.c.l.b16 %v7577
      %v8146 = vunpack.c.h.b16 %v7577
      %v8147 = vunpack.c.l.b16 %v7578
      %v8148 = vunpack.c.h.b16 %v7578
      %v8149 = vunpack.c.l.b16 %v7579
      %v8150 = vunpack.c.l.b16 %v7580
      %v8151 = vunpack.c.h.b16 %v7580
      %v8152 = vunpack.c.l.b16 %v7581
      %v8153 = vunpack.c.h.b16 %v7581
      %v8154 = vunpack.c.l.b16 %v7582
      %v8155 = vunpack.c.l.b16 %v7583
      %v8156 = vunpack.c.h.b16 %v7583
      %v8157 = vunpack.c.l.b16 %v7584
      %v8158 = vunpack.c.h.b16 %v7584
      %v8159 = vunpack.c.l.b16 %v7585
      %v8160 = vunpack.c.l.b16 %v7586
      %v8161 = vunpack.c.h.b16 %v7586
      %v8162 = vunpack.c.l.b16 %v7587
      %v8163 = vunpack.c.h.b16 %v7587
      %v8164 = vunpack.c.l.b16 %v7588
      %v8165 = vunpack.c.l.b16 %v7589
      %v8166 = vunpack.c.h.b16 %v7589
      %v8167 = vunpack.c.l.b16 %v7590
      %v8168 = vunpack.c.h.b16 %v7590
      %v8169 = vunpack.c.l.b16 %v7591
      %v8170 = vunpack.c.l.b16 %v7592
      %v8171 = vunpack.c.h.b16 %v7592
      %v8172 = vunpack.c.l.b16 %v7593
      %v8173 = vunpack.c.h.b16 %v7593
      %v8174 = vunpack.c.l.b16 %v7594
      %v8175 = vunpack.c.l.b16 %v7595
      %v8176 = vunpack.c.h.b16 %v7595
      %v8177 = vunpack.c.l.b16 %v7596
      %v8178 = vunpack.c.h.b16 %v7596
      %v8179 = vunpack.c.l.b16 %v7597
      %v8180 = vunpack.c.l.b16 %v7598
      %v8181 = vunpack.c.h.b16 %v7598
      %v8182 = vunpack.c.l.b16 %v7599
      %v8183 = vunpack.c.h.b16 %v7599
      %v8184 = vunpack.c.l.b16 %v7600
      %v8185 = vunpack.c.l.b16 %v7601
      %v8186 = vunpack.c.h.b16 %v7601
      %v8187 = vunpack.c.l.b16 %v7602
      %v8188 = vunpack.c.h.b16 %v7602
      %v8189 = vunpack.c.l.b16 %v7603
      %v8190 = vunpack.c.l.b16 %v7604
      %v8191 = vunpack.c.h.b16 %v7604
      %v8192 = vunpack.c.l.b16 %v7605
      %v8193 = vunpack.c.h.b16 %v7605
      %v8194 = vunpack.c.l.b16 %v7606
      %v8195 = vunpack.c.l.b16 %v7607
      %v8196 = vunpack.c.h.b16 %v7607
      %v8197 = vunpack.c.l.b16 %v7608
      %v8198 = vunpack.c.h.b16 %v7608
      %v8199 = vunpack.c.l.b16 %v7609
      %v8200 = vunpack.c.l.b16 %v7610
      %v8201 = vunpack.c.h.b16 %v7610
      %v8202 = vunpack.c.l.b16 %v7611
      %v8203 = vunpack.c.h.b16 %v7611
      %v8204 = vunpack.c.l.b16 %v7612
      %v8205 = vunpack.c.l.b16 %v7613
      %v8206 = vunpack.c.h.b16 %v7613
      %v8207 = vunpack.c.l.b16 %v7614
      %v8208 = vunpack.c.h.b16 %v7614
      %v8209 = vunpack.c.l.b16 %v7615
      %v8210 = vunpack.c.l.b16 %v7616
      %v8211 = vunpack.c.h.b16 %v7616
      %v8212 = vunpack.c.l.b16 %v7617
      %v8213 = vunpack.c.h.b16 %v7617
      %v8214 = vunpack.c.l.b16 %v7618
      %v8215 = vunpack.c.l.b16 %v7619
      %v8216 = vunpack.c.h.b16 %v7619
      %v8217 = vunpack.c.l.b16 %v7620
      %v8218 = vunpack.c.h.b16 %v7620
      %v8219 = vunpack.c.l.b16 %v7621
      %v8220 = vunpack.c.l.b16 %v7622
      %v8221 = vunpack.c.h.b16 %v7622
      %v8222 = vunpack.c.l.b16 %v7623
      %v8223 = vunpack.c.h.b16 %v7623
      %v8224 = vunpack.c.l.b16 %v7624
      %v8225 = vunpack.c.l.b16 %v7625
      %v8226 = vunpack.c.h.b16 %v7625
      %v8227 = vunpack.c.l.b16 %v7626
      %v8228 = vunpack.c.h.b16 %v7626
      %v8229 = vunpack.c.l.b16 %v7627
      %v8230 = vunpack.c.l.b16 %v7628
      %v8231 = vunpack.c.h.b16 %v7628
      %v8232 = vunpack.c.l.b16 %v7629
      %v8233 = vunpack.c.h.b16 %v7629
      %v8234 = vunpack.c.l.b16 %v7630
      %v8235 = vunpack.c.l.b16 %v7631
      %v8236 = vunpack.c.h.b16 %v7631
      %v8237 = vunpack.c.l.b16 %v7632
      %v8238 = vunpack.c.h.b16 %v7632
      %v8239 = vunpack.c.l.b16 %v7633
      %v8240 = vunpack.c.l.b16 %v7634
      %v8241 = vunpack.c.h.b16 %v7634
      %v8242 = vunpack.c.l.b16 %v7635
      %v8243 = vunpack.c.h.b16 %v7635
      %v8244 = vunpack.c.l.b16 %v7636
      %v8245 = vunpack.c.l.b16 %v7637
      %v8246 = vunpack.c.h.b16 %v7637
      %v8247 = vunpack.c.l.b16 %v7638
      %v8248 = vunpack.c.h.b16 %v7638
      %v8249 = vunpack.c.l.b16 %v7639
      %v8250 = vunpack.c.l.b16 %v7640
      %v8251 = vunpack.c.h.b16 %v7640
      %v8252 = vunpack.c.l.b16 %v7641
      %v8253 = vunpack.c.h.b16 %v7641
      %v8254 = vunpack.c.l.b16 %v7642
      %v8255 = vunpack.c.l.b16 %v7643
      %v8256 = vunpack.c.h.b16 %v7643
      %v8257 = vunpack.c.l.b16 %v7644
      %v8258 = vunpack.c.h.b16 %v7644
      %v8259 = vunpack.c.l.b16 %v7645
      %v8260 = vunpack.c.l.b16 %v7646
      %v8261 = vunpack.c.h.b16 %v7646
      %v8262 = vunpack.c.l.b16 %v7647
      %v8263 = vunpack.c.h.b16 %v7647
      %v8264 = vunpack.c.l.b16 %v7648
      %v8265 = vunpack.c.l.b16 %v7649
      %v8266 = vunpack.c.h.b16 %v7649
      %v8267 = vunpack.c.l.b16 %v7650
      %v8268 = vunpack.c.h.b16 %v7650
      %v8269 = vunpack.c.l.b16 %v7651
      %v8270 = vunpack.c.l.b16 %v7652
      %v8271 = vunpack.c.h.b16 %v7652
      %v8272 = vunpack.c.l.b16 %v7653
      %v8273 = vunpack.c.h.b16 %v7653
      %v8274 = vunpack.c.l.b16 %v7654
      %v8275 = vunpack.c.l.b16 %v7655
      %v8276 = vunpack.c.h.b16 %v7655
      %v8277 = vunpack.c.l.b16 %v7656
      %v8278 = vunpack.c.h.b16 %v7656
      %v8279 = vunpack.c.l.b16 %v7657
      %v8280 = vunpack.c.l.b16 %v7658
      %v8281 = vunpack.c.h.b16 %v7658
      %v8282 = vunpack.c.l.b16 %v7659
      %v8283 = vunpack.c.h.b16 %v7659
      %v8284 = vunpack.c.l.b16 %v7660
      %v8285 = vunpack.c.l.b16 %v7661
      %v8286 = vunpack.c.h.b16 %v7661
      %v8287 = vunpack.c.l.b16 %v7662
      %v8288 = vunpack.c.h.b16 %v7662
      %v8289 = vunpack.c.l.b16 %v7663
      %v8290 = vunpack.c.l.b16 %v7664
      %v8291 = vunpack.c.h.b16 %v7664
      %v8292 = vunpack.c.l.b16 %v7665
      %v8293 = vunpack.c.h.b16 %v7665
      %v8294 = vunpack.c.l.b16 %v7666
      %v8295 = vunpack.c.l.b16 %v7667
      %v8296 = vunpack.c.h.b16 %v7667
      %v8297 = vunpack.c.l.b16 %v7668
      %v8298 = vunpack.c.h.b16 %v7668
      %v8299 = vunpack.c.l.b16 %v7669
      %v8300 = vunpack.c.l.b16 %v7670
      %v8301 = vunpack.c.h.b16 %v7670
      %v8302 = vunpack.c.l.b16 %v7671
      %v8303 = vunpack.c.h.b16 %v7671
      %v8304 = vunpack.c.l.b16 %v7672
      %v8305 = vunpack.c.l.b16 %v7673
      %v8306 = vunpack.c.h.b16 %v7673
      %v8307 = vunpack.c.l.b16 %v7674
      %v8308 = vunpack.c.h.b16 %v7674
      %v8309 = vunpack.c.l.b16 %v7675
      %v8310 = vunpack.c.l.b16 %v7676
      %v8311 = vunpack.c.h.b16 %v7676
      %v8312 = vunpack.c.l.b16 %v7677
      %v8313 = vunpack.c.h.b16 %v7677
      %v8314 = vunpack.c.l.b16 %v7678
      %v8315 = vunpack.c.l.b16 %v7679
      %v8316 = vunpack.c.h.b16 %v7679
      %v8317 = vunpack.c.l.b16 %v7680
      %v8318 = vunpack.c.h.b16 %v7680
      %v8319 = vunpack.c.l.b16 %v7681
      %v8320 = vunpack.c.l.b16 %v7682
      %v8321 = vunpack.c.h.b16 %v7682
      %v8322 = vunpack.c.l.b16 %v7683
      %v8323 = vunpack.c.h.b16 %v7683
      %v8324 = vunpack.c.l.b16 %v7684
      %v8325 = vunpack.c.l.b16 %v7685
      %v8326 = vunpack.c.h.b16 %v7685
      %v8327 = vunpack.c.l.b16 %v7686
      %v8328 = vunpack.c.h.b16 %v7686
      %v8329 = vunpack.c.l.b16 %v7687
      %v8330 = vunpack.c.l.b16 %v7688
      %v8331 = vunpack.c.h.b16 %v7688
      %v8332 = vunpack.c.l.b16 %v7689
      %v8333 = vunpack.c.h.b16 %v7689
      %v8334 = vunpack.c.l.b16 %v7690
      %v8335 = vunpack.c.l.b16 %v7691
      %v8336 = vunpack.c.h.b16 %v7691
      %v8337 = vunpack.c.l.b16 %v7692
      %v8338 = vunpack.c.h.b16 %v7692
      %v8339 = vunpack.c.l.b16 %v7693
      %v8340 = vpack.c.b16 %v7945, %v7940
      %v8341 = vpack.c.b16 %v7946, %v7941
      %v8342 = vpack.c.b16 %v7947, %v7942
      %v8343 = vpack.c.b16 %v7948, %v7943
      %v8344 = vpack.c.b16 %v7949, %v7944
      %v8345 = vpack.c.b16 %v7955, %v7950
      %v8346 = vpack.c.b16 %v7956, %v7951
      %v8347 = vpack.c.b16 %v7957, %v7952
      %v8348 = vpack.c.b16 %v7958, %v7953
      %v8349 = vpack.c.b16 %v7959, %v7954
      %v8350 = vpack.c.b16 %v7965, %v7960
      %v8351 = vpack.c.b16 %v7966, %v7961
      %v8352 = vpack.c.b16 %v7967, %v7962
      %v8353 = vpack.c.b16 %v7968, %v7963
      %v8354 = vpack.c.b16 %v7969, %v7964
      %v8355 = vpack.c.b16 %v7975, %v7970
      %v8356 = vpack.c.b16 %v7976, %v7971
      %v8357 = vpack.c.b16 %v7977, %v7972
      %v8358 = vpack.c.b16 %v7978, %v7973
      %v8359 = vpack.c.b16 %v7979, %v7974
      %v8360 = vpack.c.b16 %v7985, %v7980
      %v8361 = vpack.c.b16 %v7986, %v7981
      %v8362 = vpack.c.b16 %v7987, %v7982
      %v8363 = vpack.c.b16 %v7988, %v7983
      %v8364 = vpack.c.b16 %v7989, %v7984
      %v8365 = vpack.c.b16 %v7995, %v7990
      %v8366 = vpack.c.b16 %v7996, %v7991
      %v8367 = vpack.c.b16 %v7997, %v7992
      %v8368 = vpack.c.b16 %v7998, %v7993
      %v8369 = vpack.c.b16 %v7999, %v7994
      %v8370 = vpack.c.b16 %v8005, %v8000
      %v8371 = vpack.c.b16 %v8006, %v8001
      %v8372 = vpack.c.b16 %v8007, %v8002
      %v8373 = vpack.c.b16 %v8008, %v8003
      %v8374 = vpack.c.b16 %v8009, %v8004
      %v8375 = vpack.c.b16 %v8015, %v8010
      %v8376 = vpack.c.b16 %v8016, %v8011
      %v8377 = vpack.c.b16 %v8017, %v8012
      %v8378 = vpack.c.b16 %v8018, %v8013
      %v8379 = vpack.c.b16 %v8019, %v8014
      %v8380 = vpack.c.b16 %v8025, %v8020
      %v8381 = vpack.c.b16 %v8026, %v8021
      %v8382 = vpack.c.b16 %v8027, %v8022
      %v8383 = vpack.c.b16 %v8028, %v8023
      %v8384 = vpack.c.b16 %v8029, %v8024
      %v8385 = vpack.c.b16 %v8035, %v8030
      %v8386 = vpack.c.b16 %v8036, %v8031
      %v8387 = vpack.c.b16 %v8037, %v8032
      %v8388 = vpack.c.b16 %v8038, %v8033
      %v8389 = vpack.c.b16 %v8039, %v8034
      %v8390 = vpack.c.b16 %v8045, %v8040
      %v8391 = vpack.c.b16 %v8046, %v8041
      %v8392 = vpack.c.b16 %v8047, %v8042
      %v8393 = vpack.c.b16 %v8048, %v8043
      %v8394 = vpack.c.b16 %v8049, %v8044
      %v8395 = vpack.c.b16 %v8055, %v8050
      %v8396 = vpack.c.b16 %v8056, %v8051
      %v8397 = vpack.c.b16 %v8057, %v8052
      %v8398 = vpack.c.b16 %v8058, %v8053
      %v8399 = vpack.c.b16 %v8059, %v8054
      %v8400 = vpack.c.b16 %v8065, %v8060
      %v8401 = vpack.c.b16 %v8066, %v8061
      %v8402 = vpack.c.b16 %v8067, %v8062
      %v8403 = vpack.c.b16 %v8068, %v8063
      %v8404 = vpack.c.b16 %v8069, %v8064
      %v8405 = vpack.c.b16 %v8075, %v8070
      %v8406 = vpack.c.b16 %v8076, %v8071
      %v8407 = vpack.c.b16 %v8077, %v8072
      %v8408 = vpack.c.b16 %v8078, %v8073
      %v8409 = vpack.c.b16 %v8079, %v8074
      %v8410 = vpack.c.b16 %v8085, %v8080
      %v8411 = vpack.c.b16 %v8086, %v8081
      %v8412 = vpack.c.b16 %v8087, %v8082
      %v8413 = vpack.c.b16 %v8088, %v8083
      %v8414 = vpack.c.b16 %v8089, %v8084
      %v8415 = vpack.c.b16 %v8095, %v8090
      %v8416 = vpack.c.b16 %v8096, %v8091
      %v8417 = vpack.c.b16 %v8097, %v8092
      %v8418 = vpack.c.b16 %v8098, %v8093
      %v8419 = vpack.c.b16 %v8099, %v8094
      %v8420 = vpack.c.b16 %v8105, %v8100
      %v8421 = vpack.c.b16 %v8106, %v8101
      %v8422 = vpack.c.b16 %v8107, %v8102
      %v8423 = vpack.c.b16 %v8108, %v8103
      %v8424 = vpack.c.b16 %v8109, %v8104
      %v8425 = vpack.c.b16 %v8115, %v8110
      %v8426 = vpack.c.b16 %v8116, %v8111
      %v8427 = vpack.c.b16 %v8117, %v8112
      %v8428 = vpack.c.b16 %v8118, %v8113
      %v8429 = vpack.c.b16 %v8119, %v8114
      %v8430 = vpack.c.b16 %v8125, %v8120
      %v8431 = vpack.c.b16 %v8126, %v8121
      %v8432 = vpack.c.b16 %v8127, %v8122
      %v8433 = vpack.c.b16 %v8128, %v8123
      %v8434 = vpack.c.b16 %v8129, %v8124
      %v8435 = vpack.c.b16 %v8135, %v8130
      %v8436 = vpack.c.b16 %v8136, %v8131
      %v8437 = vpack.c.b16 %v8137, %v8132
      %v8438 = vpack.c.b16 %v8138, %v8133
      %v8439 = vpack.c.b16 %v8139, %v8134
      %v8440 = vpack.c.b16 %v8145, %v8140
      %v8441 = vpack.c.b16 %v8146, %v8141
      %v8442 = vpack.c.b16 %v8147, %v8142
      %v8443 = vpack.c.b16 %v8148, %v8143
      %v8444 = vpack.c.b16 %v8149, %v8144
      %v8445 = vpack.c.b16 %v8155, %v8150
      %v8446 = vpack.c.b16 %v8156, %v8151
      %v8447 = vpack.c.b16 %v8157, %v8152
      %v8448 = vpack.c.b16 %v8158, %v8153
      %v8449 = vpack.c.b16 %v8159, %v8154
      %v8450 = vpack.c.b16 %v8165, %v8160
      %v8451 = vpack.c.b16 %v8166, %v8161
      %v8452 = vpack.c.b16 %v8167, %v8162
      %v8453 = vpack.c.b16 %v8168, %v8163
      %v8454 = vpack.c.b16 %v8169, %v8164
      %v8455 = vpack.c.b16 %v8175, %v8170
      %v8456 = vpack.c.b16 %v8176, %v8171
      %v8457 = vpack.c.b16 %v8177, %v8172
      %v8458 = vpack.c.b16 %v8178, %v8173
      %v8459 = vpack.c.b16 %v8179, %v8174
      %v8460 = vpack.c.b16 %v8185, %v8180
      %v8461 = vpack.c.b16 %v8186, %v8181
      %v8462 = vpack.c.b16 %v8187, %v8182
      %v8463 = vpack.c.b16 %v8188, %v8183
      %v8464 = vpack.c.b16 %v8189, %v8184
      %v8465 = vpack.c.b16 %v8195, %v8190
      %v8466 = vpack.c.b16 %v8196, %v8191
      %v8467 = vpack.c.b16 %v8197, %v8192
      %v8468 = vpack.c.b16 %v8198, %v8193
      %v8469 = vpack.c.b16 %v8199, %v8194
      %v8470 = vpack.c.b16 %v8205, %v8200
      %v8471 = vpack.c.b16 %v8206, %v8201
      %v8472 = vpack.c.b16 %v8207, %v8202
      %v8473 = vpack.c.b16 %v8208, %v8203
      %v8474 = vpack.c.b16 %v8209, %v8204
      %v8475 = vpack.c.b16 %v8215, %v8210
      %v8476 = vpack.c.b16 %v8216, %v8211
      %v8477 = vpack.c.b16 %v8217, %v8212
      %v8478 = vpack.c.b16 %v8218, %v8213
      %v8479 = vpack.c.b16 %v8219, %v8214
      %v8480 = vpack.c.b16 %v8225, %v8220
      %v8481 = vpack.c.b16 %v8226, %v8221
      %v8482 = vpack.c.b16 %v8227, %v8222
      %v8483 = vpack.c.b16 %v8228, %v8223
      %v8484 = vpack.c.b16 %v8229, %v8224
      %v8485 = vpack.c.b16 %v8235, %v8230
      %v8486 = vpack.c.b16 %v8236, %v8231
      %v8487 = vpack.c.b16 %v8237, %v8232
      %v8488 = vpack.c.b16 %v8238, %v8233
      %v8489 = vpack.c.b16 %v8239, %v8234
      %v8490 = vpack.c.b16 %v8245, %v8240
      %v8491 = vpack.c.b16 %v8246, %v8241
      %v8492 = vpack.c.b16 %v8247, %v8242
      %v8493 = vpack.c.b16 %v8248, %v8243
      %v8494 = vpack.c.b16 %v8249, %v8244
      %v8495 = vpack.c.b16 %v8255, %v8250
      %v8496 = vpack.c.b16 %v8256, %v8251
      %v8497 = vpack.c.b16 %v8257, %v8252
      %v8498 = vpack.c.b16 %v8258, %v8253
      %v8499 = vpack.c.b16 %v8259, %v8254
      %v8500 = vpack.c.b16 %v8265, %v8260
      %v8501 = vpack.c.b16 %v8266, %v8261
      %v8502 = vpack.c.b16 %v8267, %v8262
      %v8503 = vpack.c.b16 %v8268, %v8263
      %v8504 = vpack.c.b16 %v8269, %v8264
      %v8505 = vpack.c.b16 %v8275, %v8270
      %v8506 = vpack.c.b16 %v8276, %v8271
      %v8507 = vpack.c.b16 %v8277, %v8272
      %v8508 = vpack.c.b16 %v8278, %v8273
      %v8509 = vpack.c.b16 %v8279, %v8274
      %v8510 = vpack.c.b16 %v8285, %v8280
      %v8511 = vpack.c.b16 %v8286, %v8281
      %v8512 = vpack.c.b16 %v8287, %v8282
      %v8513 = vpack.c.b16 %v8288, %v8283
      %v8514 = vpack.c.b16 %v8289, %v8284
      %v8515 = vpack.c.b16 %v8295, %v8290
      %v8516 = vpack.c.b16 %v8296, %v8291
      %v8517 = vpack.c.b16 %v8297, %v8292
      %v8518 = vpack.c.b16 %v8298, %v8293
      %v8519 = vpack.c.b16 %v8299, %v8294
      %v8520 = vpack.c.b16 %v8305, %v8300
      %v8521 = vpack.c.b16 %v8306, %v8301
      %v8522 = vpack.c.b16 %v8307, %v8302
      %v8523 = vpack.c.b16 %v8308, %v8303
      %v8524 = vpack.c.b16 %v8309, %v8304
      %v8525 = vpack.c.b16 %v8315, %v8310
      %v8526 = vpack.c.b16 %v8316, %v8311
      %v8527 = vpack.c.b16 %v8317, %v8312
      %v8528 = vpack.c.b16 %v8318, %v8313
      %v8529 = vpack.c.b16 %v8319, %v8314
      %v8530 = vpack.c.b16 %v8325, %v8320
      %v8531 = vpack.c.b16 %v8326, %v8321
      %v8532 = vpack.c.b16 %v8327, %v8322
      %v8533 = vpack.c.b16 %v8328, %v8323
      %v8534 = vpack.c.b16 %v8329, %v8324
      %v8535 = vpack.c.b16 %v8335, %v8330
      %v8536 = vpack.c.b16 %v8336, %v8331
      %v8537 = vpack.c.b16 %v8337, %v8332
      %v8538 = vpack.c.b16 %v8338, %v8333
      %v8539 = vpack.c.b16 %v8339, %v8334
      %8740 = vmatprep.subr.bf16.mxu0 0
      %8741 = vmatpush1.bf16.msra.mxu0 %v7414
      %8742 = vmatprep.subr.bf16.mxu0 0
      %8743 = vmatpush1.bf16.msra.mxu0 %v7415
      %8744 = vmatprep.subr.bf16.mxu0 0
      %8745 = vmatpush1.bf16.msra.mxu0 %v7416
      %8746 = vmatprep.subr.bf16.mxu0 0
      %8747 = vmatpush1.bf16.msra.mxu0 %v7417
      %8748 = vmatprep.subr.bf16.mxu0 0
      %8749 = vmatpush1.bf16.msra.mxu0 %v7418
      %8750 = vmatprep.subr.bf16.mxu0 0
      %8751 = vmatpush1.bf16.msra.mxu0 %v7419
      %8752 = vmatprep.subr.bf16.mxu0 0
      %8753 = vmatpush1.bf16.msra.mxu0 %v7420
      %8754 = vmatprep.subr.bf16.mxu0 0
      %8755 = vmatpush1.bf16.msra.mxu0 %v7421
      %8756 = vmatprep.subr.bf16.mxu0 0
      %8757 = vmatpush1.bf16.msra.mxu0 %v7422
      %8758 = vmatprep.subr.bf16.mxu0 0
      %8759 = vmatpush1.bf16.msra.mxu0 %v7423
      %8760 = vmatprep.subr.bf16.mxu0 0
      %8761 = vmatpush1.bf16.msra.mxu0 %v7424
      %8762 = vmatprep.subr.bf16.mxu0 0
      %8763 = vmatpush1.bf16.msra.mxu0 %v7425
      %8764 = vmatprep.subr.bf16.mxu0 0
      %8765 = vmatpush1.bf16.msra.mxu0 %v7426
      %8766 = vmatprep.subr.bf16.mxu0 0
      %8767 = vmatpush1.bf16.msra.mxu0 %v7427
      %8768 = vmatprep.subr.bf16.mxu0 0
      %8769 = vmatpush1.bf16.msra.mxu0 %v7428
      %8770 = vmatprep.subr.bf16.mxu0 0
      %8771 = vmatpush1.bf16.msra.mxu0 %v7429
      %8772 = vmatprep.mubr.bf16.mxu0 %v8341
      %8773 = vmatmul.mubr.bf16.gmra.mrb[0].mxu0 %v8340
      %v8774 = vpop.f32.mrb[0].mxu0
      %v8775 = vadd.f32 %v7698, %v8774
      %v8776 = vpop.f32.mrb[0].mxu0
      %v8777 = vpop.f32.mrb[0].mxu0
      %v8778 = vadd.f32 %v7698, %v8777
      %v8779 = vpop.f32.mrb[0].mxu0
      %8780 = vmatprep.mubr.bf16.mxu0 %v8346
      %8781 = vmatmul.mubr.bf16.gmra.mrb[0].mxu0 %v8345
      %v8782 = vpop.f32.mrb[0].mxu0
      %v8783 = vadd.f32 %v7698, %v8782
      %v8784 = vpop.f32.mrb[0].mxu0
      %v8785 = vpop.f32.mrb[0].mxu0
      %v8786 = vadd.f32 %v7698, %v8785
      %v8787 = vpop.f32.mrb[0].mxu0
      %8788 = vmatprep.mubr.bf16.mxu0 %v8351
      %8789 = vmatmul.mubr.bf16.gmra.mrb[0].mxu0 %v8350
      %v8790 = vpop.f32.mrb[0].mxu0
      %v8791 = vadd.f32 %v7698, %v8790
      %v8792 = vpop.f32.mrb[0].mxu0
      %v8793 = vpop.f32.mrb[0].mxu0
      %v8794 = vadd.f32 %v7698, %v8793
      %v8795 = vpop.f32.mrb[0].mxu0
      %8796 = vmatprep.mubr.bf16.mxu0 %v8356
      %8797 = vmatmul.mubr.bf16.gmra.mrb[0].mxu0 %v8355
      %v8798 = vpop.f32.mrb[0].mxu0
      %v8799 = vadd.f32 %v7698, %v8798
      %v8800 = vpop.f32.mrb[0].mxu0
      %v8801 = vpop.f32.mrb[0].mxu0
      %v8802 = vadd.f32 %v7698, %v8801
      %v8803 = vpop.f32.mrb[0].mxu0
      %8804 = vmatprep.mubr.bf16.mxu0 %v8361
      %8805 = vmatmul.mubr.bf16.gmra.mrb[0].mxu0 %v8360
      %v8806 = vpop.f32.mrb[0].mxu0
      %v8807 = vadd.f32 %v7698, %v8806
      %v8808 = vpop.f32.mrb[0].mxu0
      %v8809 = vpop.f32.mrb[0].mxu0
      %v8810 = vadd.f32 %v7698, %v8809
      %v8811 = vpop.f32.mrb[0].mxu0
      %8812 = vmatprep.mubr.bf16.mxu0 %v8366
      %8813 = vmatmul.mubr.bf16.gmra.mrb[0].mxu0 %v8365
      %v8814 = vpop.f32.mrb[0].mxu0
      %v8815 = vadd.f32 %v7698, %v8814
      %v8816 = vpop.f32.mrb[0].mxu0
      %v8817 = vpop.f32.mrb[0].mxu0
      %v8818 = vadd.f32 %v7698, %v8817
      %v8819 = vpop.f32.mrb[0].mxu0
      %8820 = vmatprep.mubr.bf16.mxu0 %v8371
      %8821 = vmatmul.mubr.bf16.gmra.mrb[0].mxu0 %v8370
      %v8822 = vpop.f32.mrb[0].mxu0
      %v8823 = vadd.f32 %v7698, %v8822
      %v8824 = vpop.f32.mrb[0].mxu0
      %v8825 = vpop.f32.mrb[0].mxu0
      %v8826 = vadd.f32 %v7698, %v8825
      %v8827 = vpop.f32.mrb[0].mxu0
      %8828 = vmatprep.mubr.bf16.mxu0 %v8376
      %8829 = vmatmul.mubr.bf16.gmra.mrb[0].mxu0 %v8375
      %v8830 = vpop.f32.mrb[0].mxu0
      %v8831 = vadd.f32 %v7698, %v8830
      %v8832 = vpop.f32.mrb[0].mxu0
      %v8833 = vpop.f32.mrb[0].mxu0
      %v8834 = vadd.f32 %v7698, %v8833
      %v8835 = vpop.f32.mrb[0].mxu0
      %8836 = vmatprep.mubr.bf16.mxu0 %v8381
      %8837 = vmatmul.mubr.bf16.gmra.mrb[0].mxu0 %v8380
      %v8838 = vpop.f32.mrb[0].mxu0
      %v8839 = vadd.f32 %v7698, %v8838
      %v8840 = vpop.f32.mrb[0].mxu0
      %v8841 = vpop.f32.mrb[0].mxu0
      %v8842 = vadd.f32 %v7698, %v8841
      %v8843 = vpop.f32.mrb[0].mxu0
      %8844 = vmatprep.mubr.bf16.mxu0 %v8386
      %8845 = vmatmul.mubr.bf16.gmra.mrb[0].mxu0 %v8385
      %v8846 = vpop.f32.mrb[0].mxu0
      %v8847 = vadd.f32 %v7698, %v8846
      %v8848 = vpop.f32.mrb[0].mxu0
      %v8849 = vpop.f32.mrb[0].mxu0
      %v8850 = vadd.f32 %v7698, %v8849
      %v8851 = vpop.f32.mrb[0].mxu0
      %8852 = vmatprep.mubr.bf16.mxu0 %v8391
      %8853 = vmatmul.mubr.bf16.gmra.mrb[0].mxu0 %v8390
      %v8854 = vpop.f32.mrb[0].mxu0
      %v8855 = vadd.f32 %v7698, %v8854
      %v8856 = vpop.f32.mrb[0].mxu0
      %v8857 = vpop.f32.mrb[0].mxu0
      %v8858 = vadd.f32 %v7698, %v8857
      %v8859 = vpop.f32.mrb[0].mxu0
      %8860 = vmatprep.mubr.bf16.mxu0 %v8396
      %8861 = vmatmul.mubr.bf16.gmra.mrb[0].mxu0 %v8395
      %v8862 = vpop.f32.mrb[0].mxu0
      %v8863 = vadd.f32 %v7698, %v8862
      %v8864 = vpop.f32.mrb[0].mxu0
      %v8865 = vpop.f32.mrb[0].mxu0
      %v8866 = vadd.f32 %v7698, %v8865
      %v8867 = vpop.f32.mrb[0].mxu0
      %8868 = vmatprep.mubr.bf16.mxu0 %v8401
      %8869 = vmatmul.mubr.bf16.gmra.mrb[0].mxu0 %v8400
      %v8870 = vpop.f32.mrb[0].mxu0
      %v8871 = vadd.f32 %v7698, %v8870
      %v8872 = vpop.f32.mrb[0].mxu0
      %v8873 = vpop.f32.mrb[0].mxu0
      %v8874 = vadd.f32 %v7698, %v8873
      %v8875 = vpop.f32.mrb[0].mxu0
      %8876 = vmatprep.mubr.bf16.mxu0 %v8406
      %8877 = vmatmul.mubr.bf16.gmra.mrb[0].mxu0 %v8405
      %v8878 = vpop.f32.mrb[0].mxu0
      %v8879 = vadd.f32 %v7698, %v8878
      %v8880 = vpop.f32.mrb[0].mxu0
      %v8881 = vpop.f32.mrb[0].mxu0
      %v8882 = vadd.f32 %v7698, %v8881
      %v8883 = vpop.f32.mrb[0].mxu0
      %8884 = vmatprep.mubr.bf16.mxu0 %v8411
      %8885 = vmatmul.mubr.bf16.gmra.mrb[0].mxu0 %v8410
      %v8886 = vpop.f32.mrb[0].mxu0
      %v8887 = vadd.f32 %v7698, %v8886
      %v8888 = vpop.f32.mrb[0].mxu0
      %v8889 = vpop.f32.mrb[0].mxu0
      %v8890 = vadd.f32 %v7698, %v8889
      %v8891 = vpop.f32.mrb[0].mxu0
      %8892 = vmatprep.mubr.bf16.mxu0 %v8416
      %8893 = vmatmul.mubr.bf16.gmra.mrb[0].mxu0 %v8415
      %v8894 = vpop.f32.mrb[0].mxu0
      %v8895 = vadd.f32 %v7698, %v8894
      %v8896 = vpop.f32.mrb[0].mxu0
      %v8897 = vpop.f32.mrb[0].mxu0
      %v8898 = vadd.f32 %v7698, %v8897
      %v8899 = vpop.f32.mrb[0].mxu0
      %8900 = vmatprep.mubr.bf16.mxu0 %v8421
      %8901 = vmatmul.mubr.bf16.gmra.mrb[0].mxu0 %v8420
      %v8902 = vpop.f32.mrb[0].mxu0
      %v8903 = vadd.f32 %v7698, %v8902
      %v8904 = vpop.f32.mrb[0].mxu0
      %v8905 = vpop.f32.mrb[0].mxu0
      %v8906 = vadd.f32 %v7698, %v8905
      %v8907 = vpop.f32.mrb[0].mxu0
      %8908 = vmatprep.mubr.bf16.mxu0 %v8426
      %8909 = vmatmul.mubr.bf16.gmra.mrb[0].mxu0 %v8425
      %v8910 = vpop.f32.mrb[0].mxu0
      %v8911 = vadd.f32 %v7698, %v8910
      %v8912 = vpop.f32.mrb[0].mxu0
      %v8913 = vpop.f32.mrb[0].mxu0
      %v8914 = vadd.f32 %v7698, %v8913
      %v8915 = vpop.f32.mrb[0].mxu0
      %8916 = vmatprep.mubr.bf16.mxu0 %v8431
      %8917 = vmatmul.mubr.bf16.gmra.mrb[0].mxu0 %v8430
      %v8918 = vpop.f32.mrb[0].mxu0
      %v8919 = vadd.f32 %v7698, %v8918
      %v8920 = vpop.f32.mrb[0].mxu0
      %v8921 = vpop.f32.mrb[0].mxu0
      %v8922 = vadd.f32 %v7698, %v8921
      %v8923 = vpop.f32.mrb[0].mxu0
      %8924 = vmatprep.mubr.bf16.mxu0 %v8436
      %8925 = vmatmul.mubr.bf16.gmra.mrb[0].mxu0 %v8435
      %v8926 = vpop.f32.mrb[0].mxu0
      %v8927 = vadd.f32 %v7698, %v8926
      %v8928 = vpop.f32.mrb[0].mxu0
      %v8929 = vpop.f32.mrb[0].mxu0
      %v8930 = vadd.f32 %v7698, %v8929
      %v8931 = vpop.f32.mrb[0].mxu0
      %8932 = vmatprep.mubr.bf16.mxu0 %v8441
      %8933 = vmatmul.mubr.bf16.gmra.mrb[0].mxu0 %v8440
      %v8934 = vpop.f32.mrb[0].mxu0
      %v8935 = vadd.f32 %v7698, %v8934
      %v8936 = vpop.f32.mrb[0].mxu0
      %v8937 = vpop.f32.mrb[0].mxu0
      %v8938 = vadd.f32 %v7698, %v8937
      %v8939 = vpop.f32.mrb[0].mxu0
      %8940 = vmatprep.mubr.bf16.mxu0 %v8446
      %8941 = vmatmul.mubr.bf16.gmra.mrb[0].mxu0 %v8445
      %v8942 = vpop.f32.mrb[0].mxu0
      %v8943 = vadd.f32 %v7698, %v8942
      %v8944 = vpop.f32.mrb[0].mxu0
      %v8945 = vpop.f32.mrb[0].mxu0
      %v8946 = vadd.f32 %v7698, %v8945
      %v8947 = vpop.f32.mrb[0].mxu0
      %8948 = vmatprep.mubr.bf16.mxu0 %v8451
      %8949 = vmatmul.mubr.bf16.gmra.mrb[0].mxu0 %v8450
      %v8950 = vpop.f32.mrb[0].mxu0
      %v8951 = vadd.f32 %v7698, %v8950
      %v8952 = vpop.f32.mrb[0].mxu0
      %v8953 = vpop.f32.mrb[0].mxu0
      %v8954 = vadd.f32 %v7698, %v8953
      %v8955 = vpop.f32.mrb[0].mxu0
      %8956 = vmatprep.mubr.bf16.mxu0 %v8456
      %8957 = vmatmul.mubr.bf16.gmra.mrb[0].mxu0 %v8455
      %v8958 = vpop.f32.mrb[0].mxu0
      %v8959 = vadd.f32 %v7698, %v8958
      %v8960 = vpop.f32.mrb[0].mxu0
      %v8961 = vpop.f32.mrb[0].mxu0
      %v8962 = vadd.f32 %v7698, %v8961
      %v8963 = vpop.f32.mrb[0].mxu0
      %8964 = vmatprep.mubr.bf16.mxu0 %v8461
      %8965 = vmatmul.mubr.bf16.gmra.mrb[0].mxu0 %v8460
      %v8966 = vpop.f32.mrb[0].mxu0
      %v8967 = vadd.f32 %v7698, %v8966
      %v8968 = vpop.f32.mrb[0].mxu0
      %v8969 = vpop.f32.mrb[0].mxu0
      %v8970 = vadd.f32 %v7698, %v8969
      %v8971 = vpop.f32.mrb[0].mxu0
      %8972 = vmatprep.mubr.bf16.mxu0 %v8466
      %8973 = vmatmul.mubr.bf16.gmra.mrb[0].mxu0 %v8465
      %v8974 = vpop.f32.mrb[0].mxu0
      %v8975 = vadd.f32 %v7698, %v8974
      %v8976 = vpop.f32.mrb[0].mxu0
      %v8977 = vpop.f32.mrb[0].mxu0
      %v8978 = vadd.f32 %v7698, %v8977
      %v8979 = vpop.f32.mrb[0].mxu0
      %8980 = vmatprep.mubr.bf16.mxu0 %v8471
      %8981 = vmatmul.mubr.bf16.gmra.mrb[0].mxu0 %v8470
      %v8982 = vpop.f32.mrb[0].mxu0
      %v8983 = vadd.f32 %v7698, %v8982
      %v8984 = vpop.f32.mrb[0].mxu0
      %v8985 = vpop.f32.mrb[0].mxu0
      %v8986 = vadd.f32 %v7698, %v8985
      %v8987 = vpop.f32.mrb[0].mxu0
      %8988 = vmatprep.mubr.bf16.mxu0 %v8476
      %8989 = vmatmul.mubr.bf16.gmra.mrb[0].mxu0 %v8475
      %v8990 = vpop.f32.mrb[0].mxu0
      %v8991 = vadd.f32 %v7698, %v8990
      %v8992 = vpop.f32.mrb[0].mxu0
      %v8993 = vpop.f32.mrb[0].mxu0
      %v8994 = vadd.f32 %v7698, %v8993
      %v8995 = vpop.f32.mrb[0].mxu0
      %8996 = vmatprep.mubr.bf16.mxu0 %v8481
      %8997 = vmatmul.mubr.bf16.gmra.mrb[0].mxu0 %v8480
      %v8998 = vpop.f32.mrb[0].mxu0
      %v8999 = vadd.f32 %v7698, %v8998
      %v9000 = vpop.f32.mrb[0].mxu0
      %v9001 = vpop.f32.mrb[0].mxu0
      %v9002 = vadd.f32 %v7698, %v9001
      %v9003 = vpop.f32.mrb[0].mxu0
      %9004 = vmatprep.mubr.bf16.mxu0 %v8486
      %9005 = vmatmul.mubr.bf16.gmra.mrb[0].mxu0 %v8485
      %v9006 = vpop.f32.mrb[0].mxu0
      %v9007 = vadd.f32 %v7698, %v9006
      %v9008 = vpop.f32.mrb[0].mxu0
      %v9009 = vpop.f32.mrb[0].mxu0
      %v9010 = vadd.f32 %v7698, %v9009
      %v9011 = vpop.f32.mrb[0].mxu0
      %9012 = vmatprep.mubr.bf16.mxu0 %v8491
      %9013 = vmatmul.mubr.bf16.gmra.mrb[0].mxu0 %v8490
      %v9014 = vpop.f32.mrb[0].mxu0
      %v9015 = vadd.f32 %v7698, %v9014
      %v9016 = vpop.f32.mrb[0].mxu0
      %v9017 = vpop.f32.mrb[0].mxu0
      %v9018 = vadd.f32 %v7698, %v9017
      %v9019 = vpop.f32.mrb[0].mxu0
      %9020 = vmatprep.mubr.bf16.mxu0 %v8496
      %9021 = vmatmul.mubr.bf16.gmra.mrb[0].mxu0 %v8495
      %v9022 = vpop.f32.mrb[0].mxu0
      %v9023 = vadd.f32 %v7698, %v9022
      %v9024 = vpop.f32.mrb[0].mxu0
      %v9025 = vpop.f32.mrb[0].mxu0
      %v9026 = vadd.f32 %v7698, %v9025
      %v9027 = vpop.f32.mrb[0].mxu0
      %9028 = vmatprep.mubr.bf16.mxu0 %v8501
      %9029 = vmatmul.mubr.bf16.gmra.mrb[0].mxu0 %v8500
      %v9030 = vpop.f32.mrb[0].mxu0
      %v9031 = vadd.f32 %v7698, %v9030
      %v9032 = vpop.f32.mrb[0].mxu0
      %v9033 = vpop.f32.mrb[0].mxu0
      %v9034 = vadd.f32 %v7698, %v9033
      %v9035 = vpop.f32.mrb[0].mxu0
      %9036 = vmatprep.mubr.bf16.mxu0 %v8506
      %9037 = vmatmul.mubr.bf16.gmra.mrb[0].mxu0 %v8505
      %v9038 = vpop.f32.mrb[0].mxu0
      %v9039 = vadd.f32 %v7698, %v9038
      %v9040 = vpop.f32.mrb[0].mxu0
      %v9041 = vpop.f32.mrb[0].mxu0
      %v9042 = vadd.f32 %v7698, %v9041
      %v9043 = vpop.f32.mrb[0].mxu0
      %9044 = vmatprep.mubr.bf16.mxu0 %v8511
      %9045 = vmatmul.mubr.bf16.gmra.mrb[0].mxu0 %v8510
      %v9046 = vpop.f32.mrb[0].mxu0
      %v9047 = vadd.f32 %v7698, %v9046
      %v9048 = vpop.f32.mrb[0].mxu0
      %v9049 = vpop.f32.mrb[0].mxu0
      %v9050 = vadd.f32 %v7698, %v9049
      %v9051 = vpop.f32.mrb[0].mxu0
      %9052 = vmatprep.mubr.bf16.mxu0 %v8516
      %9053 = vmatmul.mubr.bf16.gmra.mrb[0].mxu0 %v8515
      %v9054 = vpop.f32.mrb[0].mxu0
      %v9055 = vadd.f32 %v7698, %v9054
      %v9056 = vpop.f32.mrb[0].mxu0
      %v9057 = vpop.f32.mrb[0].mxu0
      %v9058 = vadd.f32 %v7698, %v9057
      %v9059 = vpop.f32.mrb[0].mxu0
      %9060 = vmatprep.mubr.bf16.mxu0 %v8521
      %9061 = vmatmul.mubr.bf16.gmra.mrb[0].mxu0 %v8520
      %v9062 = vpop.f32.mrb[0].mxu0
      %v9063 = vadd.f32 %v7698, %v9062
      %v9064 = vpop.f32.mrb[0].mxu0
      %v9065 = vpop.f32.mrb[0].mxu0
      %v9066 = vadd.f32 %v7698, %v9065
      %v9067 = vpop.f32.mrb[0].mxu0
      %9068 = vmatprep.mubr.bf16.mxu0 %v8526
      %9069 = vmatmul.mubr.bf16.gmra.mrb[0].mxu0 %v8525
      %v9070 = vpop.f32.mrb[0].mxu0
      %v9071 = vadd.f32 %v7698, %v9070
      %v9072 = vpop.f32.mrb[0].mxu0
      %v9073 = vpop.f32.mrb[0].mxu0
      %v9074 = vadd.f32 %v7698, %v9073
      %v9075 = vpop.f32.mrb[0].mxu0
      %9076 = vmatprep.mubr.bf16.mxu0 %v8531
      %9077 = vmatmul.mubr.bf16.gmra.mrb[0].mxu0 %v8530
      %v9078 = vpop.f32.mrb[0].mxu0
      %v9079 = vadd.f32 %v7698, %v9078
      %v9080 = vpop.f32.mrb[0].mxu0
      %v9081 = vpop.f32.mrb[0].mxu0
      %v9082 = vadd.f32 %v7698, %v9081
      %v9083 = vpop.f32.mrb[0].mxu0
      %9084 = vmatprep.mubr.bf16.mxu0 %v8536
      %9085 = vmatmul.mubr.bf16.gmra.mrb[0].mxu0 %v8535
      %v9086 = vpop.f32.mrb[0].mxu0
      %v9087 = vadd.f32 %v7698, %v9086
      %v9088 = vpop.f32.mrb[0].mxu0
      %v9089 = vpop.f32.mrb[0].mxu0
      %v9090 = vadd.f32 %v7698, %v9089
      %v9091 = vpop.f32.mrb[0].mxu0
      %9092 = vdwg.mxu0
      %9093 = vmatprep.subr.bf16.mxu0 0
      %9094 = vmatpush1.bf16.msra.mxu0 %v7430
      %9095 = vmatprep.subr.bf16.mxu0 0
      %9096 = vmatpush1.bf16.msra.mxu0 %v7431
      %9097 = vmatprep.subr.bf16.mxu0 0
      %9098 = vmatpush1.bf16.msra.mxu0 %v7432
      %9099 = vmatprep.subr.bf16.mxu0 0
      %9100 = vmatpush1.bf16.msra.mxu0 %v7433
      %9101 = vmatprep.subr.bf16.mxu0 0
      %9102 = vmatpush1.bf16.msra.mxu0 %v7434
      %9103 = vmatprep.subr.bf16.mxu0 0
      %9104 = vmatpush1.bf16.msra.mxu0 %v7435
      %9105 = vmatprep.subr.bf16.mxu0 0
      %9106 = vmatpush1.bf16.msra.mxu0 %v7436
      %9107 = vmatprep.subr.bf16.mxu0 0
      %9108 = vmatpush1.bf16.msra.mxu0 %v7437
      %9109 = vmatprep.subr.bf16.mxu0 0
      %9110 = vmatpush1.bf16.msra.mxu0 %v7438
      %9111 = vmatprep.subr.bf16.mxu0 0
      %9112 = vmatpush1.bf16.msra.mxu0 %v7439
      %9113 = vmatprep.subr.bf16.mxu0 0
      %9114 = vmatpush1.bf16.msra.mxu0 %v7440
      %9115 = vmatprep.subr.bf16.mxu0 0
      %9116 = vmatpush1.bf16.msra.mxu0 %v7441
      %9117 = vmatprep.subr.bf16.mxu0 0
      %9118 = vmatpush1.bf16.msra.mxu0 %v7442
      %9119 = vmatprep.subr.bf16.mxu0 0
      %9120 = vmatpush1.bf16.msra.mxu0 %v7443
      %9121 = vmatprep.subr.bf16.mxu0 0
      %9122 = vmatpush1.bf16.msra.mxu0 %v7444
      %9123 = vmatprep.subr.bf16.mxu0 0
      %9124 = vmatpush1.bf16.msra.mxu0 %v7445
      %9125 = vmatprep.mubr.bf16.mxu0 %v8343
      %9126 = vmatmul.mubr.bf16.gmra.mrb[0].mxu0 %v8342
      %v9127 = vpop.f32.mrb[0].mxu0
      %v9128 = vadd.f32 %v8775, %v9127
      %v9129 = vpop.f32.mrb[0].mxu0
      %v9130 = vpop.f32.mrb[0].mxu0
      %v9131 = vadd.f32 %v8778, %v9130
      %v9132 = vpop.f32.mrb[0].mxu0
      %9133 = vmatprep.mubr.bf16.mxu0 %v8348
      %9134 = vmatmul.mubr.bf16.gmra.mrb[0].mxu0 %v8347
      %v9135 = vpop.f32.mrb[0].mxu0
      %v9136 = vadd.f32 %v8783, %v9135
      %v9137 = vpop.f32.mrb[0].mxu0
      %v9138 = vpop.f32.mrb[0].mxu0
      %v9139 = vadd.f32 %v8786, %v9138
      %v9140 = vpop.f32.mrb[0].mxu0
      %9141 = vmatprep.mubr.bf16.mxu0 %v8353
      %9142 = vmatmul.mubr.bf16.gmra.mrb[0].mxu0 %v8352
      %v9143 = vpop.f32.mrb[0].mxu0
      %v9144 = vadd.f32 %v8791, %v9143
      %v9145 = vpop.f32.mrb[0].mxu0
      %v9146 = vpop.f32.mrb[0].mxu0
      %v9147 = vadd.f32 %v8794, %v9146
      %v9148 = vpop.f32.mrb[0].mxu0
      %9149 = vmatprep.mubr.bf16.mxu0 %v8358
      %9150 = vmatmul.mubr.bf16.gmra.mrb[0].mxu0 %v8357
      %v9151 = vpop.f32.mrb[0].mxu0
      %v9152 = vadd.f32 %v8799, %v9151
      %v9153 = vpop.f32.mrb[0].mxu0
      %v9154 = vpop.f32.mrb[0].mxu0
      %v9155 = vadd.f32 %v8802, %v9154
      %v9156 = vpop.f32.mrb[0].mxu0
      %9157 = vmatprep.mubr.bf16.mxu0 %v8363
      %9158 = vmatmul.mubr.bf16.gmra.mrb[0].mxu0 %v8362
      %v9159 = vpop.f32.mrb[0].mxu0
      %v9160 = vadd.f32 %v8807, %v9159
      %v9161 = vpop.f32.mrb[0].mxu0
      %v9162 = vpop.f32.mrb[0].mxu0
      %v9163 = vadd.f32 %v8810, %v9162
      %v9164 = vpop.f32.mrb[0].mxu0
      %9165 = vmatprep.mubr.bf16.mxu0 %v8368
      %9166 = vmatmul.mubr.bf16.gmra.mrb[0].mxu0 %v8367
      %v9167 = vpop.f32.mrb[0].mxu0
      %v9168 = vadd.f32 %v8815, %v9167
      %v9169 = vpop.f32.mrb[0].mxu0
      %v9170 = vpop.f32.mrb[0].mxu0
      %v9171 = vadd.f32 %v8818, %v9170
      %v9172 = vpop.f32.mrb[0].mxu0
      %9173 = vmatprep.mubr.bf16.mxu0 %v8373
      %9174 = vmatmul.mubr.bf16.gmra.mrb[0].mxu0 %v8372
      %v9175 = vpop.f32.mrb[0].mxu0
      %v9176 = vadd.f32 %v8823, %v9175
      %v9177 = vpop.f32.mrb[0].mxu0
      %v9178 = vpop.f32.mrb[0].mxu0
      %v9179 = vadd.f32 %v8826, %v9178
      %v9180 = vpop.f32.mrb[0].mxu0
      %9181 = vmatprep.mubr.bf16.mxu0 %v8378
      %9182 = vmatmul.mubr.bf16.gmra.mrb[0].mxu0 %v8377
      %v9183 = vpop.f32.mrb[0].mxu0
      %v9184 = vadd.f32 %v8831, %v9183
      %v9185 = vpop.f32.mrb[0].mxu0
      %v9186 = vpop.f32.mrb[0].mxu0
      %v9187 = vadd.f32 %v8834, %v9186
      %v9188 = vpop.f32.mrb[0].mxu0
      %9189 = vmatprep.mubr.bf16.mxu0 %v8383
      %9190 = vmatmul.mubr.bf16.gmra.mrb[0].mxu0 %v8382
      %v9191 = vpop.f32.mrb[0].mxu0
      %v9192 = vadd.f32 %v8839, %v9191
      %v9193 = vpop.f32.mrb[0].mxu0
      %v9194 = vpop.f32.mrb[0].mxu0
      %v9195 = vadd.f32 %v8842, %v9194
      %v9196 = vpop.f32.mrb[0].mxu0
      %9197 = vmatprep.mubr.bf16.mxu0 %v8388
      %9198 = vmatmul.mubr.bf16.gmra.mrb[0].mxu0 %v8387
      %v9199 = vpop.f32.mrb[0].mxu0
      %v9200 = vadd.f32 %v8847, %v9199
      %v9201 = vpop.f32.mrb[0].mxu0
      %v9202 = vpop.f32.mrb[0].mxu0
      %v9203 = vadd.f32 %v8850, %v9202
      %v9204 = vpop.f32.mrb[0].mxu0
      %9205 = vmatprep.mubr.bf16.mxu0 %v8393
      %9206 = vmatmul.mubr.bf16.gmra.mrb[0].mxu0 %v8392
      %v9207 = vpop.f32.mrb[0].mxu0
      %v9208 = vadd.f32 %v8855, %v9207
      %v9209 = vpop.f32.mrb[0].mxu0
      %v9210 = vpop.f32.mrb[0].mxu0
      %v9211 = vadd.f32 %v8858, %v9210
      %v9212 = vpop.f32.mrb[0].mxu0
      %9213 = vmatprep.mubr.bf16.mxu0 %v8398
      %9214 = vmatmul.mubr.bf16.gmra.mrb[0].mxu0 %v8397
      %v9215 = vpop.f32.mrb[0].mxu0
      %v9216 = vadd.f32 %v8863, %v9215
      %v9217 = vpop.f32.mrb[0].mxu0
      %v9218 = vpop.f32.mrb[0].mxu0
      %v9219 = vadd.f32 %v8866, %v9218
      %v9220 = vpop.f32.mrb[0].mxu0
      %9221 = vmatprep.mubr.bf16.mxu0 %v8403
      %9222 = vmatmul.mubr.bf16.gmra.mrb[0].mxu0 %v8402
      %v9223 = vpop.f32.mrb[0].mxu0
      %v9224 = vadd.f32 %v8871, %v9223
      %v9225 = vpop.f32.mrb[0].mxu0
      %v9226 = vpop.f32.mrb[0].mxu0
      %v9227 = vadd.f32 %v8874, %v9226
      %v9228 = vpop.f32.mrb[0].mxu0
      %9229 = vmatprep.mubr.bf16.mxu0 %v8408
      %9230 = vmatmul.mubr.bf16.gmra.mrb[0].mxu0 %v8407
      %v9231 = vpop.f32.mrb[0].mxu0
      %v9232 = vadd.f32 %v8879, %v9231
      %v9233 = vpop.f32.mrb[0].mxu0
      %v9234 = vpop.f32.mrb[0].mxu0
      %v9235 = vadd.f32 %v8882, %v9234
      %v9236 = vpop.f32.mrb[0].mxu0
      %9237 = vmatprep.mubr.bf16.mxu0 %v8413
      %9238 = vmatmul.mubr.bf16.gmra.mrb[0].mxu0 %v8412
      %v9239 = vpop.f32.mrb[0].mxu0
      %v9240 = vadd.f32 %v8887, %v9239
      %v9241 = vpop.f32.mrb[0].mxu0
      %v9242 = vpop.f32.mrb[0].mxu0
      %v9243 = vadd.f32 %v8890, %v9242
      %v9244 = vpop.f32.mrb[0].mxu0
      %9245 = vmatprep.mubr.bf16.mxu0 %v8418
      %9246 = vmatmul.mubr.bf16.gmra.mrb[0].mxu0 %v8417
      %v9247 = vpop.f32.mrb[0].mxu0
      %v9248 = vadd.f32 %v8895, %v9247
      %v9249 = vpop.f32.mrb[0].mxu0
      %v9250 = vpop.f32.mrb[0].mxu0
      %v9251 = vadd.f32 %v8898, %v9250
      %v9252 = vpop.f32.mrb[0].mxu0
      %9253 = vmatprep.mubr.bf16.mxu0 %v8423
      %9254 = vmatmul.mubr.bf16.gmra.mrb[0].mxu0 %v8422
      %v9255 = vpop.f32.mrb[0].mxu0
      %v9256 = vadd.f32 %v8903, %v9255
      %v9257 = vpop.f32.mrb[0].mxu0
      %v9258 = vpop.f32.mrb[0].mxu0
      %v9259 = vadd.f32 %v8906, %v9258
      %v9260 = vpop.f32.mrb[0].mxu0
      %9261 = vmatprep.mubr.bf16.mxu0 %v8428
      %9262 = vmatmul.mubr.bf16.gmra.mrb[0].mxu0 %v8427
      %v9263 = vpop.f32.mrb[0].mxu0
      %v9264 = vadd.f32 %v8911, %v9263
      %v9265 = vpop.f32.mrb[0].mxu0
      %v9266 = vpop.f32.mrb[0].mxu0
      %v9267 = vadd.f32 %v8914, %v9266
      %v9268 = vpop.f32.mrb[0].mxu0
      %9269 = vmatprep.mubr.bf16.mxu0 %v8433
      %9270 = vmatmul.mubr.bf16.gmra.mrb[0].mxu0 %v8432
      %v9271 = vpop.f32.mrb[0].mxu0
      %v9272 = vadd.f32 %v8919, %v9271
      %v9273 = vpop.f32.mrb[0].mxu0
      %v9274 = vpop.f32.mrb[0].mxu0
      %v9275 = vadd.f32 %v8922, %v9274
      %v9276 = vpop.f32.mrb[0].mxu0
      %9277 = vmatprep.mubr.bf16.mxu0 %v8438
      %9278 = vmatmul.mubr.bf16.gmra.mrb[0].mxu0 %v8437
      %v9279 = vpop.f32.mrb[0].mxu0
      %v9280 = vadd.f32 %v8927, %v9279
      %v9281 = vpop.f32.mrb[0].mxu0
      %v9282 = vpop.f32.mrb[0].mxu0
      %v9283 = vadd.f32 %v8930, %v9282
      %v9284 = vpop.f32.mrb[0].mxu0
      %9285 = vmatprep.mubr.bf16.mxu0 %v8443
      %9286 = vmatmul.mubr.bf16.gmra.mrb[0].mxu0 %v8442
      %v9287 = vpop.f32.mrb[0].mxu0
      %v9288 = vadd.f32 %v8935, %v9287
      %v9289 = vpop.f32.mrb[0].mxu0
      %v9290 = vpop.f32.mrb[0].mxu0
      %v9291 = vadd.f32 %v8938, %v9290
      %v9292 = vpop.f32.mrb[0].mxu0
      %9293 = vmatprep.mubr.bf16.mxu0 %v8448
      %9294 = vmatmul.mubr.bf16.gmra.mrb[0].mxu0 %v8447
      %v9295 = vpop.f32.mrb[0].mxu0
      %v9296 = vadd.f32 %v8943, %v9295
      %v9297 = vpop.f32.mrb[0].mxu0
      %v9298 = vpop.f32.mrb[0].mxu0
      %v9299 = vadd.f32 %v8946, %v9298
      %v9300 = vpop.f32.mrb[0].mxu0
      %9301 = vmatprep.mubr.bf16.mxu0 %v8453
      %9302 = vmatmul.mubr.bf16.gmra.mrb[0].mxu0 %v8452
      %v9303 = vpop.f32.mrb[0].mxu0
      %v9304 = vadd.f32 %v8951, %v9303
      %v9305 = vpop.f32.mrb[0].mxu0
      %v9306 = vpop.f32.mrb[0].mxu0
      %v9307 = vadd.f32 %v8954, %v9306
      %v9308 = vpop.f32.mrb[0].mxu0
      %9309 = vmatprep.mubr.bf16.mxu0 %v8458
      %9310 = vmatmul.mubr.bf16.gmra.mrb[0].mxu0 %v8457
      %v9311 = vpop.f32.mrb[0].mxu0
      %v9312 = vadd.f32 %v8959, %v9311
      %v9313 = vpop.f32.mrb[0].mxu0
      %v9314 = vpop.f32.mrb[0].mxu0
      %v9315 = vadd.f32 %v8962, %v9314
      %v9316 = vpop.f32.mrb[0].mxu0
      %9317 = vmatprep.mubr.bf16.mxu0 %v8463
      %9318 = vmatmul.mubr.bf16.gmra.mrb[0].mxu0 %v8462
      %v9319 = vpop.f32.mrb[0].mxu0
      %v9320 = vadd.f32 %v8967, %v9319
      %v9321 = vpop.f32.mrb[0].mxu0
      %v9322 = vpop.f32.mrb[0].mxu0
      %v9323 = vadd.f32 %v8970, %v9322
      %v9324 = vpop.f32.mrb[0].mxu0
      %9325 = vmatprep.mubr.bf16.mxu0 %v8468
      %9326 = vmatmul.mubr.bf16.gmra.mrb[0].mxu0 %v8467
      %v9327 = vpop.f32.mrb[0].mxu0
      %v9328 = vadd.f32 %v8975, %v9327
      %v9329 = vpop.f32.mrb[0].mxu0
      %v9330 = vpop.f32.mrb[0].mxu0
      %v9331 = vadd.f32 %v8978, %v9330
      %v9332 = vpop.f32.mrb[0].mxu0
      %9333 = vmatprep.mubr.bf16.mxu0 %v8473
      %9334 = vmatmul.mubr.bf16.gmra.mrb[0].mxu0 %v8472
      %v9335 = vpop.f32.mrb[0].mxu0
      %v9336 = vadd.f32 %v8983, %v9335
      %v9337 = vpop.f32.mrb[0].mxu0
      %v9338 = vpop.f32.mrb[0].mxu0
      %v9339 = vadd.f32 %v8986, %v9338
      %v9340 = vpop.f32.mrb[0].mxu0
      %9341 = vmatprep.mubr.bf16.mxu0 %v8478
      %9342 = vmatmul.mubr.bf16.gmra.mrb[0].mxu0 %v8477
      %v9343 = vpop.f32.mrb[0].mxu0
      %v9344 = vadd.f32 %v8991, %v9343
      %v9345 = vpop.f32.mrb[0].mxu0
      %v9346 = vpop.f32.mrb[0].mxu0
      %v9347 = vadd.f32 %v8994, %v9346
      %v9348 = vpop.f32.mrb[0].mxu0
      %9349 = vmatprep.mubr.bf16.mxu0 %v8483
      %9350 = vmatmul.mubr.bf16.gmra.mrb[0].mxu0 %v8482
      %v9351 = vpop.f32.mrb[0].mxu0
      %v9352 = vadd.f32 %v8999, %v9351
      %v9353 = vpop.f32.mrb[0].mxu0
      %v9354 = vpop.f32.mrb[0].mxu0
      %v9355 = vadd.f32 %v9002, %v9354
      %v9356 = vpop.f32.mrb[0].mxu0
      %9357 = vmatprep.mubr.bf16.mxu0 %v8488
      %9358 = vmatmul.mubr.bf16.gmra.mrb[0].mxu0 %v8487
      %v9359 = vpop.f32.mrb[0].mxu0
      %v9360 = vadd.f32 %v9007, %v9359
      %v9361 = vpop.f32.mrb[0].mxu0
      %v9362 = vpop.f32.mrb[0].mxu0
      %v9363 = vadd.f32 %v9010, %v9362
      %v9364 = vpop.f32.mrb[0].mxu0
      %9365 = vmatprep.mubr.bf16.mxu0 %v8493
      %9366 = vmatmul.mubr.bf16.gmra.mrb[0].mxu0 %v8492
      %v9367 = vpop.f32.mrb[0].mxu0
      %v9368 = vadd.f32 %v9015, %v9367
      %v9369 = vpop.f32.mrb[0].mxu0
      %v9370 = vpop.f32.mrb[0].mxu0
      %v9371 = vadd.f32 %v9018, %v9370
      %v9372 = vpop.f32.mrb[0].mxu0
      %9373 = vmatprep.mubr.bf16.mxu0 %v8498
      %9374 = vmatmul.mubr.bf16.gmra.mrb[0].mxu0 %v8497
      %v9375 = vpop.f32.mrb[0].mxu0
      %v9376 = vadd.f32 %v9023, %v9375
      %v9377 = vpop.f32.mrb[0].mxu0
      %v9378 = vpop.f32.mrb[0].mxu0
      %v9379 = vadd.f32 %v9026, %v9378
      %v9380 = vpop.f32.mrb[0].mxu0
      %9381 = vmatprep.mubr.bf16.mxu0 %v8503
      %9382 = vmatmul.mubr.bf16.gmra.mrb[0].mxu0 %v8502
      %v9383 = vpop.f32.mrb[0].mxu0
      %v9384 = vadd.f32 %v9031, %v9383
      %v9385 = vpop.f32.mrb[0].mxu0
      %v9386 = vpop.f32.mrb[0].mxu0
      %v9387 = vadd.f32 %v9034, %v9386
      %v9388 = vpop.f32.mrb[0].mxu0
      %9389 = vmatprep.mubr.bf16.mxu0 %v8508
      %9390 = vmatmul.mubr.bf16.gmra.mrb[0].mxu0 %v8507
      %v9391 = vpop.f32.mrb[0].mxu0
      %v9392 = vadd.f32 %v9039, %v9391
      %v9393 = vpop.f32.mrb[0].mxu0
      %v9394 = vpop.f32.mrb[0].mxu0
      %v9395 = vadd.f32 %v9042, %v9394
      %v9396 = vpop.f32.mrb[0].mxu0
      %9397 = vmatprep.mubr.bf16.mxu0 %v8513
      %9398 = vmatmul.mubr.bf16.gmra.mrb[0].mxu0 %v8512
      %v9399 = vpop.f32.mrb[0].mxu0
      %v9400 = vadd.f32 %v9047, %v9399
      %v9401 = vpop.f32.mrb[0].mxu0
      %v9402 = vpop.f32.mrb[0].mxu0
      %v9403 = vadd.f32 %v9050, %v9402
      %v9404 = vpop.f32.mrb[0].mxu0
      %9405 = vmatprep.mubr.bf16.mxu0 %v8518
      %9406 = vmatmul.mubr.bf16.gmra.mrb[0].mxu0 %v8517
      %v9407 = vpop.f32.mrb[0].mxu0
      %v9408 = vadd.f32 %v9055, %v9407
      %v9409 = vpop.f32.mrb[0].mxu0
      %v9410 = vpop.f32.mrb[0].mxu0
      %v9411 = vadd.f32 %v9058, %v9410
      %v9412 = vpop.f32.mrb[0].mxu0
      %9413 = vmatprep.mubr.bf16.mxu0 %v8523
      %9414 = vmatmul.mubr.bf16.gmra.mrb[0].mxu0 %v8522
      %v9415 = vpop.f32.mrb[0].mxu0
      %v9416 = vadd.f32 %v9063, %v9415
      %v9417 = vpop.f32.mrb[0].mxu0
      %v9418 = vpop.f32.mrb[0].mxu0
      %v9419 = vadd.f32 %v9066, %v9418
      %v9420 = vpop.f32.mrb[0].mxu0
      %9421 = vmatprep.mubr.bf16.mxu0 %v8528
      %9422 = vmatmul.mubr.bf16.gmra.mrb[0].mxu0 %v8527
      %v9423 = vpop.f32.mrb[0].mxu0
      %v9424 = vadd.f32 %v9071, %v9423
      %v9425 = vpop.f32.mrb[0].mxu0
      %v9426 = vpop.f32.mrb[0].mxu0
      %v9427 = vadd.f32 %v9074, %v9426
      %v9428 = vpop.f32.mrb[0].mxu0
      %9429 = vmatprep.mubr.bf16.mxu0 %v8533
      %9430 = vmatmul.mubr.bf16.gmra.mrb[0].mxu0 %v8532
      %v9431 = vpop.f32.mrb[0].mxu0
      %v9432 = vadd.f32 %v9079, %v9431
      %v9433 = vpop.f32.mrb[0].mxu0
      %v9434 = vpop.f32.mrb[0].mxu0
      %v9435 = vadd.f32 %v9082, %v9434
      %v9436 = vpop.f32.mrb[0].mxu0
      %9437 = vmatprep.mubr.bf16.mxu0 %v8538
      %9438 = vmatmul.mubr.bf16.gmra.mrb[0].mxu0 %v8537
      %v9439 = vpop.f32.mrb[0].mxu0
      %v9440 = vadd.f32 %v9087, %v9439
      %v9441 = vpop.f32.mrb[0].mxu0
      %v9442 = vpop.f32.mrb[0].mxu0
      %v9443 = vadd.f32 %v9090, %v9442
      %v9444 = vpop.f32.mrb[0].mxu0
      %9445 = vdwg.mxu0
      %9446 = vmatprep.subr.bf16.mxu0 0
      %9447 = vmatpush1.bf16.msra.mxu0 %v7446
      %9448 = vmatprep.subr.bf16.mxu0 0
      %9449 = vmatpush1.bf16.msra.mxu0 %v7447
      %9450 = vmatprep.subr.bf16.mxu0 0
      %9451 = vmatpush1.bf16.msra.mxu0 %v7448
      %9452 = vmatprep.subr.bf16.mxu0 0
      %9453 = vmatpush1.bf16.msra.mxu0 %v7449
      %9454 = vmatprep.subr.bf16.mxu0 0
      %9455 = vmatpush1.bf16.msra.mxu0 %v7450
      %9456 = vmatprep.subr.bf16.mxu0 0
      %9457 = vmatpush1.bf16.msra.mxu0 %v7451
      %9458 = vmatprep.subr.bf16.mxu0 0
      %9459 = vmatpush1.bf16.msra.mxu0 %v7452
      %9460 = vmatprep.subr.bf16.mxu0 0
      %9461 = vmatpush1.bf16.msra.mxu0 %v7453
      %9462 = vmatprep.subr.bf16.mxu0 0
      %9463 = vmatpush1.bf16.msra.mxu0 0
      %9464 = vmatprep.subr.bf16.mxu0 0
      %9465 = vmatpush1.bf16.msra.mxu0 0
      %9466 = vmatprep.subr.bf16.mxu0 0
      %9467 = vmatpush1.bf16.msra.mxu0 0
      %9468 = vmatprep.subr.bf16.mxu0 0
      %9469 = vmatpush1.bf16.msra.mxu0 0
      %9470 = vmatprep.subr.bf16.mxu0 0
      %9471 = vmatpush1.bf16.msra.mxu0 0
      %9472 = vmatprep.subr.bf16.mxu0 0
      %9473 = vmatpush1.bf16.msra.mxu0 0
      %9474 = vmatprep.subr.bf16.mxu0 0
      %9475 = vmatpush1.bf16.msra.mxu0 0
      %9476 = vmatprep.subr.bf16.mxu0 0
      %9477 = vmatpush1.bf16.msra.mxu0 0
      %9478 = vmatprep.mubr.bf16.mxu0 0
      %9479 = vmatmul.mubr.bf16.gmra.mrb[0].mxu0 %v8344
      %v9480 = vpop.f32.mrb[0].mxu0
      %v9481 = vadd.f32 %v9128, %v9480
      %v9482 = vpop.f32.mrb[0].mxu0
      %v9483 = vpop.f32.mrb[0].mxu0
      %v9484 = vadd.f32 %v9131, %v9483
      %v9485 = vpop.f32.mrb[0].mxu0
      %9486 = vmatprep.mubr.bf16.mxu0 0
      %9487 = vmatmul.mubr.bf16.gmra.mrb[0].mxu0 %v8349
      %v9488 = vpop.f32.mrb[0].mxu0
      %v9489 = vadd.f32 %v9136, %v9488
      %v9490 = vpop.f32.mrb[0].mxu0
      %v9491 = vpop.f32.mrb[0].mxu0
      %v9492 = vadd.f32 %v9139, %v9491
      %v9493 = vpop.f32.mrb[0].mxu0
      %9494 = vmatprep.mubr.bf16.mxu0 0
      %9495 = vmatmul.mubr.bf16.gmra.mrb[0].mxu0 %v8354
      %v9496 = vpop.f32.mrb[0].mxu0
      %v9497 = vadd.f32 %v9144, %v9496
      %v9498 = vpop.f32.mrb[0].mxu0
      %v9499 = vpop.f32.mrb[0].mxu0
      %v9500 = vadd.f32 %v9147, %v9499
      %v9501 = vpop.f32.mrb[0].mxu0
      %9502 = vmatprep.mubr.bf16.mxu0 0
      %9503 = vmatmul.mubr.bf16.gmra.mrb[0].mxu0 %v8359
      %v9504 = vpop.f32.mrb[0].mxu0
      %v9505 = vadd.f32 %v9152, %v9504
      %v9506 = vpop.f32.mrb[0].mxu0
      %v9507 = vpop.f32.mrb[0].mxu0
      %v9508 = vadd.f32 %v9155, %v9507
      %v9509 = vpop.f32.mrb[0].mxu0
      %9510 = vmatprep.mubr.bf16.mxu0 0
      %9511 = vmatmul.mubr.bf16.gmra.mrb[0].mxu0 %v8364
      %v9512 = vpop.f32.mrb[0].mxu0
      %v9513 = vadd.f32 %v9160, %v9512
      %v9514 = vpop.f32.mrb[0].mxu0
      %v9515 = vpop.f32.mrb[0].mxu0
      %v9516 = vadd.f32 %v9163, %v9515
      %v9517 = vpop.f32.mrb[0].mxu0
      %9518 = vmatprep.mubr.bf16.mxu0 0
      %9519 = vmatmul.mubr.bf16.gmra.mrb[0].mxu0 %v8369
      %v9520 = vpop.f32.mrb[0].mxu0
      %v9521 = vadd.f32 %v9168, %v9520
      %v9522 = vpop.f32.mrb[0].mxu0
      %v9523 = vpop.f32.mrb[0].mxu0
      %v9524 = vadd.f32 %v9171, %v9523
      %v9525 = vpop.f32.mrb[0].mxu0
      %9526 = vmatprep.mubr.bf16.mxu0 0
      %9527 = vmatmul.mubr.bf16.gmra.mrb[0].mxu0 %v8374
      %v9528 = vpop.f32.mrb[0].mxu0
      %v9529 = vadd.f32 %v9176, %v9528
      %v9530 = vpop.f32.mrb[0].mxu0
      %v9531 = vpop.f32.mrb[0].mxu0
      %v9532 = vadd.f32 %v9179, %v9531
      %v9533 = vpop.f32.mrb[0].mxu0
      %9534 = vmatprep.mubr.bf16.mxu0 0
      %9535 = vmatmul.mubr.bf16.gmra.mrb[0].mxu0 %v8379
      %v9536 = vpop.f32.mrb[0].mxu0
      %v9537 = vadd.f32 %v9184, %v9536
      %v9538 = vpop.f32.mrb[0].mxu0
      %v9539 = vpop.f32.mrb[0].mxu0
      %v9540 = vadd.f32 %v9187, %v9539
      %v9541 = vpop.f32.mrb[0].mxu0
      %9542 = vmatprep.mubr.bf16.mxu0 0
      %9543 = vmatmul.mubr.bf16.gmra.mrb[0].mxu0 %v8384
      %v9544 = vpop.f32.mrb[0].mxu0
      %v9545 = vadd.f32 %v9192, %v9544
      %v9546 = vpop.f32.mrb[0].mxu0
      %v9547 = vpop.f32.mrb[0].mxu0
      %v9548 = vadd.f32 %v9195, %v9547
      %v9549 = vpop.f32.mrb[0].mxu0
      %9550 = vmatprep.mubr.bf16.mxu0 0
      %9551 = vmatmul.mubr.bf16.gmra.mrb[0].mxu0 %v8389
      %v9552 = vpop.f32.mrb[0].mxu0
      %v9553 = vadd.f32 %v9200, %v9552
      %v9554 = vpop.f32.mrb[0].mxu0
      %v9555 = vpop.f32.mrb[0].mxu0
      %v9556 = vadd.f32 %v9203, %v9555
      %v9557 = vpop.f32.mrb[0].mxu0
      %9558 = vmatprep.mubr.bf16.mxu0 0
      %9559 = vmatmul.mubr.bf16.gmra.mrb[0].mxu0 %v8394
      %v9560 = vpop.f32.mrb[0].mxu0
      %v9561 = vadd.f32 %v9208, %v9560
      %v9562 = vpop.f32.mrb[0].mxu0
      %v9563 = vpop.f32.mrb[0].mxu0
      %v9564 = vadd.f32 %v9211, %v9563
      %v9565 = vpop.f32.mrb[0].mxu0
      %9566 = vmatprep.mubr.bf16.mxu0 0
      %9567 = vmatmul.mubr.bf16.gmra.mrb[0].mxu0 %v8399
      %v9568 = vpop.f32.mrb[0].mxu0
      %v9569 = vadd.f32 %v9216, %v9568
      %v9570 = vpop.f32.mrb[0].mxu0
      %v9571 = vpop.f32.mrb[0].mxu0
      %v9572 = vadd.f32 %v9219, %v9571
      %v9573 = vpop.f32.mrb[0].mxu0
      %9574 = vmatprep.mubr.bf16.mxu0 0
      %9575 = vmatmul.mubr.bf16.gmra.mrb[0].mxu0 %v8404
      %v9576 = vpop.f32.mrb[0].mxu0
      %v9577 = vadd.f32 %v9224, %v9576
      %v9578 = vpop.f32.mrb[0].mxu0
      %v9579 = vpop.f32.mrb[0].mxu0
      %v9580 = vadd.f32 %v9227, %v9579
      %v9581 = vpop.f32.mrb[0].mxu0
      %9582 = vmatprep.mubr.bf16.mxu0 0
      %9583 = vmatmul.mubr.bf16.gmra.mrb[0].mxu0 %v8409
      %v9584 = vpop.f32.mrb[0].mxu0
      %v9585 = vadd.f32 %v9232, %v9584
      %v9586 = vpop.f32.mrb[0].mxu0
      %v9587 = vpop.f32.mrb[0].mxu0
      %v9588 = vadd.f32 %v9235, %v9587
      %v9589 = vpop.f32.mrb[0].mxu0
      %9590 = vmatprep.mubr.bf16.mxu0 0
      %9591 = vmatmul.mubr.bf16.gmra.mrb[0].mxu0 %v8414
      %v9592 = vpop.f32.mrb[0].mxu0
      %v9593 = vadd.f32 %v9240, %v9592
      %v9594 = vpop.f32.mrb[0].mxu0
      %v9595 = vpop.f32.mrb[0].mxu0
      %v9596 = vadd.f32 %v9243, %v9595
      %v9597 = vpop.f32.mrb[0].mxu0
      %9598 = vmatprep.mubr.bf16.mxu0 0
      %9599 = vmatmul.mubr.bf16.gmra.mrb[0].mxu0 %v8419
      %v9600 = vpop.f32.mrb[0].mxu0
      %v9601 = vadd.f32 %v9248, %v9600
      %v9602 = vpop.f32.mrb[0].mxu0
      %v9603 = vpop.f32.mrb[0].mxu0
      %v9604 = vadd.f32 %v9251, %v9603
      %v9605 = vpop.f32.mrb[0].mxu0
      %9606 = vmatprep.mubr.bf16.mxu0 0
      %9607 = vmatmul.mubr.bf16.gmra.mrb[0].mxu0 %v8424
      %v9608 = vpop.f32.mrb[0].mxu0
      %v9609 = vadd.f32 %v9256, %v9608
      %v9610 = vpop.f32.mrb[0].mxu0
      %v9611 = vpop.f32.mrb[0].mxu0
      %v9612 = vadd.f32 %v9259, %v9611
      %v9613 = vpop.f32.mrb[0].mxu0
      %9614 = vmatprep.mubr.bf16.mxu0 0
      %9615 = vmatmul.mubr.bf16.gmra.mrb[0].mxu0 %v8429
      %v9616 = vpop.f32.mrb[0].mxu0
      %v9617 = vadd.f32 %v9264, %v9616
      %v9618 = vpop.f32.mrb[0].mxu0
      %v9619 = vpop.f32.mrb[0].mxu0
      %v9620 = vadd.f32 %v9267, %v9619
      %v9621 = vpop.f32.mrb[0].mxu0
      %9622 = vmatprep.mubr.bf16.mxu0 0
      %9623 = vmatmul.mubr.bf16.gmra.mrb[0].mxu0 %v8434
      %v9624 = vpop.f32.mrb[0].mxu0
      %v9625 = vadd.f32 %v9272, %v9624
      %v9626 = vpop.f32.mrb[0].mxu0
      %v9627 = vpop.f32.mrb[0].mxu0
      %v9628 = vadd.f32 %v9275, %v9627
      %v9629 = vpop.f32.mrb[0].mxu0
      %9630 = vmatprep.mubr.bf16.mxu0 0
      %9631 = vmatmul.mubr.bf16.gmra.mrb[0].mxu0 %v8439
      %v9632 = vpop.f32.mrb[0].mxu0
      %v9633 = vadd.f32 %v9280, %v9632
      %v9634 = vpop.f32.mrb[0].mxu0
      %v9635 = vpop.f32.mrb[0].mxu0
      %v9636 = vadd.f32 %v9283, %v9635
      %v9637 = vpop.f32.mrb[0].mxu0
      %9638 = vmatprep.mubr.bf16.mxu0 0
      %9639 = vmatmul.mubr.bf16.gmra.mrb[0].mxu0 %v8444
      %v9640 = vpop.f32.mrb[0].mxu0
      %v9641 = vadd.f32 %v9288, %v9640
      %v9642 = vpop.f32.mrb[0].mxu0
      %v9643 = vpop.f32.mrb[0].mxu0
      %v9644 = vadd.f32 %v9291, %v9643
      %v9645 = vpop.f32.mrb[0].mxu0
      %9646 = vmatprep.mubr.bf16.mxu0 0
      %9647 = vmatmul.mubr.bf16.gmra.mrb[0].mxu0 %v8449
      %v9648 = vpop.f32.mrb[0].mxu0
      %v9649 = vadd.f32 %v9296, %v9648
      %v9650 = vpop.f32.mrb[0].mxu0
      %v9651 = vpop.f32.mrb[0].mxu0
      %v9652 = vadd.f32 %v9299, %v9651
      %v9653 = vpop.f32.mrb[0].mxu0
      %9654 = vmatprep.mubr.bf16.mxu0 0
      %9655 = vmatmul.mubr.bf16.gmra.mrb[0].mxu0 %v8454
      %v9656 = vpop.f32.mrb[0].mxu0
      %v9657 = vadd.f32 %v9304, %v9656
      %v9658 = vpop.f32.mrb[0].mxu0
      %v9659 = vpop.f32.mrb[0].mxu0
      %v9660 = vadd.f32 %v9307, %v9659
      %v9661 = vpop.f32.mrb[0].mxu0
      %9662 = vmatprep.mubr.bf16.mxu0 0
      %9663 = vmatmul.mubr.bf16.gmra.mrb[0].mxu0 %v8459
      %v9664 = vpop.f32.mrb[0].mxu0
      %v9665 = vadd.f32 %v9312, %v9664
      %v9666 = vpop.f32.mrb[0].mxu0
      %v9667 = vpop.f32.mrb[0].mxu0
      %v9668 = vadd.f32 %v9315, %v9667
      %v9669 = vpop.f32.mrb[0].mxu0
      %9670 = vmatprep.mubr.bf16.mxu0 0
      %9671 = vmatmul.mubr.bf16.gmra.mrb[0].mxu0 %v8464
      %v9672 = vpop.f32.mrb[0].mxu0
      %v9673 = vadd.f32 %v9320, %v9672
      %v9674 = vpop.f32.mrb[0].mxu0
      %v9675 = vpop.f32.mrb[0].mxu0
      %v9676 = vadd.f32 %v9323, %v9675
      %v9677 = vpop.f32.mrb[0].mxu0
      %9678 = vmatprep.mubr.bf16.mxu0 0
      %9679 = vmatmul.mubr.bf16.gmra.mrb[0].mxu0 %v8469
      %v9680 = vpop.f32.mrb[0].mxu0
      %v9681 = vadd.f32 %v9328, %v9680
      %v9682 = vpop.f32.mrb[0].mxu0
      %v9683 = vpop.f32.mrb[0].mxu0
      %v9684 = vadd.f32 %v9331, %v9683
      %v9685 = vpop.f32.mrb[0].mxu0
      %9686 = vmatprep.mubr.bf16.mxu0 0
      %9687 = vmatmul.mubr.bf16.gmra.mrb[0].mxu0 %v8474
      %v9688 = vpop.f32.mrb[0].mxu0
      %v9689 = vadd.f32 %v9336, %v9688
      %v9690 = vpop.f32.mrb[0].mxu0
      %v9691 = vpop.f32.mrb[0].mxu0
      %v9692 = vadd.f32 %v9339, %v9691
      %v9693 = vpop.f32.mrb[0].mxu0
      %9694 = vmatprep.mubr.bf16.mxu0 0
      %9695 = vmatmul.mubr.bf16.gmra.mrb[0].mxu0 %v8479
      %v9696 = vpop.f32.mrb[0].mxu0
      %v9697 = vadd.f32 %v9344, %v9696
      %v9698 = vpop.f32.mrb[0].mxu0
      %v9699 = vpop.f32.mrb[0].mxu0
      %v9700 = vadd.f32 %v9347, %v9699
      %v9701 = vpop.f32.mrb[0].mxu0
      %9702 = vmatprep.mubr.bf16.mxu0 0
      %9703 = vmatmul.mubr.bf16.gmra.mrb[0].mxu0 %v8484
      %v9704 = vpop.f32.mrb[0].mxu0
      %v9705 = vadd.f32 %v9352, %v9704
      %v9706 = vpop.f32.mrb[0].mxu0
      %v9707 = vpop.f32.mrb[0].mxu0
      %v9708 = vadd.f32 %v9355, %v9707
      %v9709 = vpop.f32.mrb[0].mxu0
      %9710 = vmatprep.mubr.bf16.mxu0 0
      %9711 = vmatmul.mubr.bf16.gmra.mrb[0].mxu0 %v8489
      %v9712 = vpop.f32.mrb[0].mxu0
      %v9713 = vadd.f32 %v9360, %v9712
      %v9714 = vpop.f32.mrb[0].mxu0
      %v9715 = vpop.f32.mrb[0].mxu0
      %v9716 = vadd.f32 %v9363, %v9715
      %v9717 = vpop.f32.mrb[0].mxu0
      %9718 = vmatprep.mubr.bf16.mxu0 0
      %9719 = vmatmul.mubr.bf16.gmra.mrb[0].mxu0 %v8494
      %v9720 = vpop.f32.mrb[0].mxu0
      %v9721 = vadd.f32 %v9368, %v9720
      %v9722 = vpop.f32.mrb[0].mxu0
      %v9723 = vpop.f32.mrb[0].mxu0
      %v9724 = vadd.f32 %v9371, %v9723
      %v9725 = vpop.f32.mrb[0].mxu0
      %9726 = vmatprep.mubr.bf16.mxu0 0
      %9727 = vmatmul.mubr.bf16.gmra.mrb[0].mxu0 %v8499
      %v9728 = vpop.f32.mrb[0].mxu0
      %v9729 = vadd.f32 %v9376, %v9728
      %v9730 = vpop.f32.mrb[0].mxu0
      %v9731 = vpop.f32.mrb[0].mxu0
      %v9732 = vadd.f32 %v9379, %v9731
      %v9733 = vpop.f32.mrb[0].mxu0
      %9734 = vmatprep.mubr.bf16.mxu0 0
      %9735 = vmatmul.mubr.bf16.gmra.mrb[0].mxu0 %v8504
      %v9736 = vpop.f32.mrb[0].mxu0
      %v9737 = vadd.f32 %v9384, %v9736
      %v9738 = vpop.f32.mrb[0].mxu0
      %v9739 = vpop.f32.mrb[0].mxu0
      %v9740 = vadd.f32 %v9387, %v9739
      %v9741 = vpop.f32.mrb[0].mxu0
      %9742 = vmatprep.mubr.bf16.mxu0 0
      %9743 = vmatmul.mubr.bf16.gmra.mrb[0].mxu0 %v8509
      %v9744 = vpop.f32.mrb[0].mxu0
      %v9745 = vadd.f32 %v9392, %v9744
      %v9746 = vpop.f32.mrb[0].mxu0
      %v9747 = vpop.f32.mrb[0].mxu0
      %v9748 = vadd.f32 %v9395, %v9747
      %v9749 = vpop.f32.mrb[0].mxu0
      %9750 = vmatprep.mubr.bf16.mxu0 0
      %9751 = vmatmul.mubr.bf16.gmra.mrb[0].mxu0 %v8514
      %v9752 = vpop.f32.mrb[0].mxu0
      %v9753 = vadd.f32 %v9400, %v9752
      %v9754 = vpop.f32.mrb[0].mxu0
      %v9755 = vpop.f32.mrb[0].mxu0
      %v9756 = vadd.f32 %v9403, %v9755
      %v9757 = vpop.f32.mrb[0].mxu0
      %9758 = vmatprep.mubr.bf16.mxu0 0
      %9759 = vmatmul.mubr.bf16.gmra.mrb[0].mxu0 %v8519
      %v9760 = vpop.f32.mrb[0].mxu0
      %v9761 = vadd.f32 %v9408, %v9760
      %v9762 = vpop.f32.mrb[0].mxu0
      %v9763 = vpop.f32.mrb[0].mxu0
      %v9764 = vadd.f32 %v9411, %v9763
      %v9765 = vpop.f32.mrb[0].mxu0
      %9766 = vmatprep.mubr.bf16.mxu0 0
      %9767 = vmatmul.mubr.bf16.gmra.mrb[0].mxu0 %v8524
      %v9768 = vpop.f32.mrb[0].mxu0
      %v9769 = vadd.f32 %v9416, %v9768
      %v9770 = vpop.f32.mrb[0].mxu0
      %v9771 = vpop.f32.mrb[0].mxu0
      %v9772 = vadd.f32 %v9419, %v9771
      %v9773 = vpop.f32.mrb[0].mxu0
      %9774 = vmatprep.mubr.bf16.mxu0 0
      %9775 = vmatmul.mubr.bf16.gmra.mrb[0].mxu0 %v8529
      %v9776 = vpop.f32.mrb[0].mxu0
      %v9777 = vadd.f32 %v9424, %v9776
      %v9778 = vpop.f32.mrb[0].mxu0
      %v9779 = vpop.f32.mrb[0].mxu0
      %v9780 = vadd.f32 %v9427, %v9779
      %v9781 = vpop.f32.mrb[0].mxu0
      %9782 = vmatprep.mubr.bf16.mxu0 0
      %9783 = vmatmul.mubr.bf16.gmra.mrb[0].mxu0 %v8534
      %v9784 = vpop.f32.mrb[0].mxu0
      %v9785 = vadd.f32 %v9432, %v9784
      %v9786 = vpop.f32.mrb[0].mxu0
      %v9787 = vpop.f32.mrb[0].mxu0
      %v9788 = vadd.f32 %v9435, %v9787
      %v9789 = vpop.f32.mrb[0].mxu0
      %9790 = vmatprep.mubr.bf16.mxu0 0
      %9791 = vmatmul.mubr.bf16.gmra.mrb[0].mxu0 %v8539
      %v9792 = vpop.f32.mrb[0].mxu0
      %v9793 = vadd.f32 %v9440, %v9792
      %v9794 = vpop.f32.mrb[0].mxu0
      %v9795 = vpop.f32.mrb[0].mxu0
      %v9796 = vadd.f32 %v9443, %v9795
      %v9797 = vpop.f32.mrb[0].mxu0
      %9798 = vdwg.mxu0
      %9799 = vst [vmem:[%s12] sm:$0xff] %v9481
      %9800 = vst [vmem:[%s12 + $0x8] sm:$0xff] %v9484
      %9801 = vst [vmem:[%s12 + $0x10] sm:$0xff] %v9489
      %9802 = vst [vmem:[%s12 + $0x18] sm:$0xff] %v9492
      %9803 = vst [vmem:[%s12 + $0x20] sm:$0xff] %v9497
      %9804 = vst [vmem:[%s12 + $0x28] sm:$0xff] %v9500
      %9805 = vst [vmem:[%s12 + $0x30] sm:$0xff] %v9505
      %9806 = vst [vmem:[%s12 + $0x38] sm:$0xff] %v9508
      %9807 = vst [vmem:[%s12 + $0x40] sm:$0xff] %v9513
      %9808 = vst [vmem:[%s12 + $0x48] sm:$0xff] %v9516
      %9809 = vst [vmem:[%s12 + $0x50] sm:$0xff] %v9521
      %9810 = vst [vmem:[%s12 + $0x58] sm:$0xff] %v9524
      %9811 = vst [vmem:[%s12 + $0x60] sm:$0xff] %v9529
      %9812 = vst [vmem:[%s12 + $0x68] sm:$0xff] %v9532
      %9813 = vst [vmem:[%s12 + $0x70] sm:$0xff] %v9537
      %9814 = vst [vmem:[%s12 + $0x78] sm:$0xff] %v9540
      %9815 = vst [vmem:[%s12 + $0x80] sm:$0xff] %v9545
      %9816 = vst [vmem:[%s12 + $0x88] sm:$0xff] %v9548
      %9817 = vst [vmem:[%s12 + $0x90] sm:$0xff] %v9553
      %9818 = vst [vmem:[%s12 + $0x98] sm:$0xff] %v9556
      %9819 = vst [vmem:[%s12 + $0xa0] sm:$0xff] %v9561
      %9820 = vst [vmem:[%s12 + $0xa8] sm:$0xff] %v9564
      %9821 = vst [vmem:[%s12 + $0xb0] sm:$0xff] %v9569
      %9822 = vst [vmem:[%s12 + $0xb8] sm:$0xff] %v9572
      %9823 = vst [vmem:[%s12 + $0xc0] sm:$0xff] %v9577
      %9824 = vst [vmem:[%s12 + $0xc8] sm:$0xff] %v9580
      %9825 = vst [vmem:[%s12 + $0xd0] sm:$0xff] %v9585
      %9826 = vst [vmem:[%s12 + $0xd8] sm:$0xff] %v9588
      %9827 = vst [vmem:[%s12 + $0xe0] sm:$0xff] %v9593
      %9828 = vst [vmem:[%s12 + $0xe8] sm:$0xff] %v9596
      %9829 = vst [vmem:[%s12 + $0xf0] sm:$0xff] %v9601
      %9830 = vst [vmem:[%s12 + $0xf8] sm:$0xff] %v9604
      %9831 = vst [vmem:[%s12 + $0x100] sm:$0xff] %v9609
      %9832 = vst [vmem:[%s12 + $0x108] sm:$0xff] %v9612
      %9833 = vst [vmem:[%s12 + $0x110] sm:$0xff] %v9617
      %9834 = vst [vmem:[%s12 + $0x118] sm:$0xff] %v9620
      %9835 = vst [vmem:[%s12 + $0x120] sm:$0xff] %v9625
      %9836 = vst [vmem:[%s12 + $0x128] sm:$0xff] %v9628
      %9837 = vst [vmem:[%s12 + $0x130] sm:$0xff] %v9633
      %9838 = vst [vmem:[%s12 + $0x138] sm:$0xff] %v9636
      %9839 = vst [vmem:[%s12 + $0x140] sm:$0xff] %v9641
      %9840 = vst [vmem:[%s12 + $0x148] sm:$0xff] %v9644
      %9841 = vst [vmem:[%s12 + $0x150] sm:$0xff] %v9649
      %9842 = vst [vmem:[%s12 + $0x158] sm:$0xff] %v9652
      %9843 = vst [vmem:[%s12 + $0x160] sm:$0xff] %v9657
      %9844 = vst [vmem:[%s12 + $0x168] sm:$0xff] %v9660
      %9845 = vst [vmem:[%s12 + $0x170] sm:$0xff] %v9665
      %9846 = vst [vmem:[%s12 + $0x178] sm:$0xff] %v9668
      %9847 = vst [vmem:[%s12 + $0x180] sm:$0xff] %v9673
      %9848 = vst [vmem:[%s12 + $0x188] sm:$0xff] %v9676
      %9849 = vst [vmem:[%s12 + $0x190] sm:$0xff] %v9681
      %9850 = vst [vmem:[%s12 + $0x198] sm:$0xff] %v9684
      %9851 = vst [vmem:[%s12 + $0x1a0] sm:$0xff] %v9689
      %9852 = vst [vmem:[%s12 + $0x1a8] sm:$0xff] %v9692
      %9853 = vst [vmem:[%s12 + $0x1b0] sm:$0xff] %v9697
      %9854 = vst [vmem:[%s12 + $0x1b8] sm:$0xff] %v9700
      %9855 = vst [vmem:[%s12 + $0x1c0] sm:$0xff] %v9705
      %9856 = vst [vmem:[%s12 + $0x1c8] sm:$0xff] %v9708
      %9857 = vst [vmem:[%s12 + $0x1d0] sm:$0xff] %v9713
      %9858 = vst [vmem:[%s12 + $0x1d8] sm:$0xff] %v9716
      %9859 = vst [vmem:[%s12 + $0x1e0] sm:$0xff] %v9721
      %9860 = vst [vmem:[%s12 + $0x1e8] sm:$0xff] %v9724
      %9861 = vst [vmem:[%s12 + $0x1f0] sm:$0xff] %v9729
      %9862 = vst [vmem:[%s12 + $0x1f8] sm:$0xff] %v9732
      %9863 = vst [vmem:[%s12 + $0x200] sm:$0xff] %v9737
      %9864 = vst [vmem:[%s12 + $0x208] sm:$0xff] %v9740
      %9865 = vst [vmem:[%s12 + $0x210] sm:$0xff] %v9745
      %9866 = vst [vmem:[%s12 + $0x218] sm:$0xff] %v9748
      %9867 = vst [vmem:[%s12 + $0x220] sm:$0xff] %v9753
      %9868 = vst [vmem:[%s12 + $0x228] sm:$0xff] %v9756
      %9869 = vst [vmem:[%s12 + $0x230] sm:$0xff] %v9761
      %9870 = vst [vmem:[%s12 + $0x238] sm:$0xff] %v9764
      %9871 = vst [vmem:[%s12 + $0x240] sm:$0xff] %v9769
      %9872 = vst [vmem:[%s12 + $0x248] sm:$0xff] %v9772
      %9873 = vst [vmem:[%s12 + $0x250] sm:$0xff] %v9777
      %9874 = vst [vmem:[%s12 + $0x258] sm:$0xff] %v9780
      %9875 = vst [vmem:[%s12 + $0x260] sm:$0xff] %v9785
      %9876 = vst [vmem:[%s12 + $0x268] sm:$0xff] %v9788
      %9877 = vst [vmem:[%s12 + $0x270] sm:$0xff] %v9793
      %9878 = vst [vmem:[%s12 + $0x278] sm:$0xff] %v9796
      %vm9879 = vcmp.gt.f32.partialorder %v9481, 0.0
      %vm9880 = vcmp.gt.f32.partialorder %v9484, 0.0
      %vm9881 = vcmp.gt.f32.partialorder %v9489, 0.0
      %vm9882 = vcmp.gt.f32.partialorder %v9492, 0.0
      %vm9883 = vcmp.gt.f32.partialorder %v9497, 0.0
      %vm9884 = vcmp.gt.f32.partialorder %v9500, 0.0
      %vm9885 = vcmp.gt.f32.partialorder %v9505, 0.0
      %vm9886 = vcmp.gt.f32.partialorder %v9508, 0.0
      %vm9887 = vcmp.gt.f32.partialorder %v9513, 0.0
      %vm9888 = vcmp.gt.f32.partialorder %v9516, 0.0
      %vm9889 = vcmp.gt.f32.partialorder %v9521, 0.0
      %vm9890 = vcmp.gt.f32.partialorder %v9524, 0.0
      %vm9891 = vcmp.gt.f32.partialorder %v9529, 0.0
      %vm9892 = vcmp.gt.f32.partialorder %v9532, 0.0
      %vm9893 = vcmp.gt.f32.partialorder %v9537, 0.0
      %vm9894 = vcmp.gt.f32.partialorder %v9540, 0.0
      %vm9895 = vcmp.gt.f32.partialorder %v9545, 0.0
      %vm9896 = vcmp.gt.f32.partialorder %v9548, 0.0
      %vm9897 = vcmp.gt.f32.partialorder %v9553, 0.0
      %vm9898 = vcmp.gt.f32.partialorder %v9556, 0.0
      %vm9899 = vcmp.gt.f32.partialorder %v9561, 0.0
      %vm9900 = vcmp.gt.f32.partialorder %v9564, 0.0
      %vm9901 = vcmp.gt.f32.partialorder %v9569, 0.0
      %vm9902 = vcmp.gt.f32.partialorder %v9572, 0.0
      %vm9903 = vcmp.gt.f32.partialorder %v9577, 0.0
      %vm9904 = vcmp.gt.f32.partialorder %v9580, 0.0
      %vm9905 = vcmp.gt.f32.partialorder %v9585, 0.0
      %vm9906 = vcmp.gt.f32.partialorder %v9588, 0.0
      %vm9907 = vcmp.gt.f32.partialorder %v9593, 0.0
      %vm9908 = vcmp.gt.f32.partialorder %v9596, 0.0
      %vm9909 = vcmp.gt.f32.partialorder %v9601, 0.0
      %vm9910 = vcmp.gt.f32.partialorder %v9604, 0.0
      %vm9911 = vcmp.gt.f32.partialorder %v9609, 0.0
      %vm9912 = vcmp.gt.f32.partialorder %v9612, 0.0
      %vm9913 = vcmp.gt.f32.partialorder %v9617, 0.0
      %vm9914 = vcmp.gt.f32.partialorder %v9620, 0.0
      %vm9915 = vcmp.gt.f32.partialorder %v9625, 0.0
      %vm9916 = vcmp.gt.f32.partialorder %v9628, 0.0
      %vm9917 = vcmp.gt.f32.partialorder %v9633, 0.0
      %vm9918 = vcmp.gt.f32.partialorder %v9636, 0.0
      %vm9919 = vcmp.gt.f32.partialorder %v9641, 0.0
      %vm9920 = vcmp.gt.f32.partialorder %v9644, 0.0
      %vm9921 = vcmp.gt.f32.partialorder %v9649, 0.0
      %vm9922 = vcmp.gt.f32.partialorder %v9652, 0.0
      %vm9923 = vcmp.gt.f32.partialorder %v9657, 0.0
      %vm9924 = vcmp.gt.f32.partialorder %v9660, 0.0
      %vm9925 = vcmp.gt.f32.partialorder %v9665, 0.0
      %vm9926 = vcmp.gt.f32.partialorder %v9668, 0.0
      %vm9927 = vcmp.gt.f32.partialorder %v9673, 0.0
      %vm9928 = vcmp.gt.f32.partialorder %v9676, 0.0
      %vm9929 = vcmp.gt.f32.partialorder %v9681, 0.0
      %vm9930 = vcmp.gt.f32.partialorder %v9684, 0.0
      %vm9931 = vcmp.gt.f32.partialorder %v9689, 0.0
      %vm9932 = vcmp.gt.f32.partialorder %v9692, 0.0
      %vm9933 = vcmp.gt.f32.partialorder %v9697, 0.0
      %vm9934 = vcmp.gt.f32.partialorder %v9700, 0.0
      %vm9935 = vcmp.gt.f32.partialorder %v9705, 0.0
      %vm9936 = vcmp.gt.f32.partialorder %v9708, 0.0
      %vm9937 = vcmp.gt.f32.partialorder %v9713, 0.0
      %vm9938 = vcmp.gt.f32.partialorder %v9716, 0.0
      %vm9939 = vcmp.gt.f32.partialorder %v9721, 0.0
      %vm9940 = vcmp.gt.f32.partialorder %v9724, 0.0
      %vm9941 = vcmp.gt.f32.partialorder %v9729, 0.0
      %vm9942 = vcmp.gt.f32.partialorder %v9732, 0.0
      %vm9943 = vcmp.gt.f32.partialorder %v9737, 0.0
      %vm9944 = vcmp.gt.f32.partialorder %v9740, 0.0
      %vm9945 = vcmp.gt.f32.partialorder %v9745, 0.0
      %vm9946 = vcmp.gt.f32.partialorder %v9748, 0.0
      %vm9947 = vcmp.gt.f32.partialorder %v9753, 0.0
      %vm9948 = vcmp.gt.f32.partialorder %v9756, 0.0
      %vm9949 = vcmp.gt.f32.partialorder %v9761, 0.0
      %vm9950 = vcmp.gt.f32.partialorder %v9764, 0.0
      %vm9951 = vcmp.gt.f32.partialorder %v9769, 0.0
      %vm9952 = vcmp.gt.f32.partialorder %v9772, 0.0
      %vm9953 = vcmp.gt.f32.partialorder %v9777, 0.0
      %vm9954 = vcmp.gt.f32.partialorder %v9780, 0.0
      %vm9955 = vcmp.gt.f32.partialorder %v9785, 0.0
      %vm9956 = vcmp.gt.f32.partialorder %v9788, 0.0
      %vm9957 = vcmp.gt.f32.partialorder %v9793, 0.0
      %vm9958 = vcmp.gt.f32.partialorder %v9796, 0.0
      %v9959 = vmul.f32 %v9481, 0.01
      %v9960 = vmul.f32 %v9484, 0.01
      %v9961 = vmul.f32 %v9489, 0.01
      %v9962 = vmul.f32 %v9492, 0.01
      %v9963 = vmul.f32 %v9497, 0.01
      %v9964 = vmul.f32 %v9500, 0.01
      %v9965 = vmul.f32 %v9505, 0.01
      %v9966 = vmul.f32 %v9508, 0.01
      %v9967 = vmul.f32 %v9513, 0.01
      %v9968 = vmul.f32 %v9516, 0.01
      %v9969 = vmul.f32 %v9521, 0.01
      %v9970 = vmul.f32 %v9524, 0.01
      %v9971 = vmul.f32 %v9529, 0.01
      %v9972 = vmul.f32 %v9532, 0.01
      %v9973 = vmul.f32 %v9537, 0.01
      %v9974 = vmul.f32 %v9540, 0.01
      %v9975 = vmul.f32 %v9545, 0.01
      %v9976 = vmul.f32 %v9548, 0.01
      %v9977 = vmul.f32 %v9553, 0.01
      %v9978 = vmul.f32 %v9556, 0.01
      %v9979 = vmul.f32 %v9561, 0.01
      %v9980 = vmul.f32 %v9564, 0.01
      %v9981 = vmul.f32 %v9569, 0.01
      %v9982 = vmul.f32 %v9572, 0.01
      %v9983 = vmul.f32 %v9577, 0.01
      %v9984 = vmul.f32 %v9580, 0.01
      %v9985 = vmul.f32 %v9585, 0.01
      %v9986 = vmul.f32 %v9588, 0.01
      %v9987 = vmul.f32 %v9593, 0.01
      %v9988 = vmul.f32 %v9596, 0.01
      %v9989 = vmul.f32 %v9601, 0.01
      %v9990 = vmul.f32 %v9604, 0.01
      %v9991 = vmul.f32 %v9609, 0.01
      %v9992 = vmul.f32 %v9612, 0.01
      %v9993 = vmul.f32 %v9617, 0.01
      %v9994 = vmul.f32 %v9620, 0.01
      %v9995 = vmul.f32 %v9625, 0.01
      %v9996 = vmul.f32 %v9628, 0.01
      %v9997 = vmul.f32 %v9633, 0.01
      %v9998 = vmul.f32 %v9636, 0.01
      %v9999 = vmul.f32 %v9641, 0.01
      %v10000 = vmul.f32 %v9644, 0.01
      %v10001 = vmul.f32 %v9649, 0.01
      %v10002 = vmul.f32 %v9652, 0.01
      %v10003 = vmul.f32 %v9657, 0.01
      %v10004 = vmul.f32 %v9660, 0.01
      %v10005 = vmul.f32 %v9665, 0.01
      %v10006 = vmul.f32 %v9668, 0.01
      %v10007 = vmul.f32 %v9673, 0.01
      %v10008 = vmul.f32 %v9676, 0.01
      %v10009 = vmul.f32 %v9681, 0.01
      %v10010 = vmul.f32 %v9684, 0.01
      %v10011 = vmul.f32 %v9689, 0.01
      %v10012 = vmul.f32 %v9692, 0.01
      %v10013 = vmul.f32 %v9697, 0.01
      %v10014 = vmul.f32 %v9700, 0.01
      %v10015 = vmul.f32 %v9705, 0.01
      %v10016 = vmul.f32 %v9708, 0.01
      %v10017 = vmul.f32 %v9713, 0.01
      %v10018 = vmul.f32 %v9716, 0.01
      %v10019 = vmul.f32 %v9721, 0.01
      %v10020 = vmul.f32 %v9724, 0.01
      %v10021 = vmul.f32 %v9729, 0.01
      %v10022 = vmul.f32 %v9732, 0.01
      %v10023 = vmul.f32 %v9737, 0.01
      %v10024 = vmul.f32 %v9740, 0.01
      %v10025 = vmul.f32 %v9745, 0.01
      %v10026 = vmul.f32 %v9748, 0.01
      %v10027 = vmul.f32 %v9753, 0.01
      %v10028 = vmul.f32 %v9756, 0.01
      %v10029 = vmul.f32 %v9761, 0.01
      %v10030 = vmul.f32 %v9764, 0.01
      %v10031 = vmul.f32 %v9769, 0.01
      %v10032 = vmul.f32 %v9772, 0.01
      %v10033 = vmul.f32 %v9777, 0.01
      %v10034 = vmul.f32 %v9780, 0.01
      %v10035 = vmul.f32 %v9785, 0.01
      %v10036 = vmul.f32 %v9788, 0.01
      %v10037 = vmul.f32 %v9793, 0.01
      %v10038 = vmul.f32 %v9796, 0.01
      %v10039 = vsel %vm9879, %v9481, %v9959
      %v10040 = vsel %vm9880, %v9484, %v9960
      %v10041 = vsel %vm9881, %v9489, %v9961
      %v10042 = vsel %vm9882, %v9492, %v9962
      %v10043 = vsel %vm9883, %v9497, %v9963
      %v10044 = vsel %vm9884, %v9500, %v9964
      %v10045 = vsel %vm9885, %v9505, %v9965
      %v10046 = vsel %vm9886, %v9508, %v9966
      %v10047 = vsel %vm9887, %v9513, %v9967
      %v10048 = vsel %vm9888, %v9516, %v9968
      %v10049 = vsel %vm9889, %v9521, %v9969
      %v10050 = vsel %vm9890, %v9524, %v9970
      %v10051 = vsel %vm9891, %v9529, %v9971
      %v10052 = vsel %vm9892, %v9532, %v9972
      %v10053 = vsel %vm9893, %v9537, %v9973
      %v10054 = vsel %vm9894, %v9540, %v9974
      %v10055 = vsel %vm9895, %v9545, %v9975
      %v10056 = vsel %vm9896, %v9548, %v9976
      %v10057 = vsel %vm9897, %v9553, %v9977
      %v10058 = vsel %vm9898, %v9556, %v9978
      %v10059 = vsel %vm9899, %v9561, %v9979
      %v10060 = vsel %vm9900, %v9564, %v9980
      %v10061 = vsel %vm9901, %v9569, %v9981
      %v10062 = vsel %vm9902, %v9572, %v9982
      %v10063 = vsel %vm9903, %v9577, %v9983
      %v10064 = vsel %vm9904, %v9580, %v9984
      %v10065 = vsel %vm9905, %v9585, %v9985
      %v10066 = vsel %vm9906, %v9588, %v9986
      %v10067 = vsel %vm9907, %v9593, %v9987
      %v10068 = vsel %vm9908, %v9596, %v9988
      %v10069 = vsel %vm9909, %v9601, %v9989
      %v10070 = vsel %vm9910, %v9604, %v9990
      %v10071 = vsel %vm9911, %v9609, %v9991
      %v10072 = vsel %vm9912, %v9612, %v9992
      %v10073 = vsel %vm9913, %v9617, %v9993
      %v10074 = vsel %vm9914, %v9620, %v9994
      %v10075 = vsel %vm9915, %v9625, %v9995
      %v10076 = vsel %vm9916, %v9628, %v9996
      %v10077 = vsel %vm9917, %v9633, %v9997
      %v10078 = vsel %vm9918, %v9636, %v9998
      %v10079 = vsel %vm9919, %v9641, %v9999
      %v10080 = vsel %vm9920, %v9644, %v10000
      %v10081 = vsel %vm9921, %v9649, %v10001
      %v10082 = vsel %vm9922, %v9652, %v10002
      %v10083 = vsel %vm9923, %v9657, %v10003
      %v10084 = vsel %vm9924, %v9660, %v10004
      %v10085 = vsel %vm9925, %v9665, %v10005
      %v10086 = vsel %vm9926, %v9668, %v10006
      %v10087 = vsel %vm9927, %v9673, %v10007
      %v10088 = vsel %vm9928, %v9676, %v10008
      %v10089 = vsel %vm9929, %v9681, %v10009
      %v10090 = vsel %vm9930, %v9684, %v10010
      %v10091 = vsel %vm9931, %v9689, %v10011
      %v10092 = vsel %vm9932, %v9692, %v10012
      %v10093 = vsel %vm9933, %v9697, %v10013
      %v10094 = vsel %vm9934, %v9700, %v10014
      %v10095 = vsel %vm9935, %v9705, %v10015
      %v10096 = vsel %vm9936, %v9708, %v10016
      %v10097 = vsel %vm9937, %v9713, %v10017
      %v10098 = vsel %vm9938, %v9716, %v10018
      %v10099 = vsel %vm9939, %v9721, %v10019
      %v10100 = vsel %vm9940, %v9724, %v10020
      %v10101 = vsel %vm9941, %v9729, %v10021
      %v10102 = vsel %vm9942, %v9732, %v10022
      %v10103 = vsel %vm9943, %v9737, %v10023
      %v10104 = vsel %vm9944, %v9740, %v10024
      %v10105 = vsel %vm9945, %v9745, %v10025
      %v10106 = vsel %vm9946, %v9748, %v10026
      %v10107 = vsel %vm9947, %v9753, %v10027
      %v10108 = vsel %vm9948, %v9756, %v10028
      %v10109 = vsel %vm9949, %v9761, %v10029
      %v10110 = vsel %vm9950, %v9764, %v10030
      %v10111 = vsel %vm9951, %v9769, %v10031
      %v10112 = vsel %vm9952, %v9772, %v10032
      %v10113 = vsel %vm9953, %v9777, %v10033
      %v10114 = vsel %vm9954, %v9780, %v10034
      %v10115 = vsel %vm9955, %v9785, %v10035
      %v10116 = vsel %vm9956, %v9788, %v10036
      %v10117 = vsel %vm9957, %v9793, %v10037
      %v10118 = vsel %vm9958, %v9796, %v10038
      %v10119 = vld [vmem:[%s6] sm:$0xff]
      %v10120 = vld [vmem:[%s6 + $0x8] sm:$0xff]
      %v10121 = vld [vmem:[%s6 + $0x10] sm:$0xff]
      %v10122 = vld [vmem:[%s6 + $0x18] sm:$0xff]
      %v10123 = vld [vmem:[%s6 + $0x20] sm:$0xff]
      %v10124 = vld [vmem:[%s6 + $0x28] sm:$0xff]
      %v10125 = vld [vmem:[%s6 + $0x30] sm:$0xff]
      %v10126 = vld [vmem:[%s6 + $0x38] sm:$0xff]
      %v10127 = vld [vmem:[%s6 + $0x40] sm:$0xff]
      %v10128 = vld [vmem:[%s6 + $0x48] sm:$0xff]
      %v10129 = vld [vmem:[%s6 + $0x50] sm:$0xff]
      %v10130 = vld [vmem:[%s6 + $0x58] sm:$0xff]
      %v10131 = vld [vmem:[%s6 + $0x60] sm:$0xff]
      %v10132 = vld [vmem:[%s6 + $0x68] sm:$0xff]
      %v10133 = vld [vmem:[%s6 + $0x70] sm:$0xff]
      %v10134 = vld [vmem:[%s6 + $0x78] sm:$0xff]
      %v10135 = vld [vmem:[%s6 + $0x80] sm:$0xff]
      %v10136 = vld [vmem:[%s6 + $0x88] sm:$0xff]
      %v10137 = vld [vmem:[%s6 + $0x90] sm:$0xff]
      %v10138 = vld [vmem:[%s6 + $0x98] sm:$0xff]
      %v10139 = vld [vmem:[%s6 + $0xa0] sm:$0xff]
      %v10140 = vld [vmem:[%s6 + $0xa8] sm:$0xff]
      %v10141 = vld [vmem:[%s6 + $0xb0] sm:$0xff]
      %v10142 = vld [vmem:[%s6 + $0xb8] sm:$0xff]
      %v10143 = vld [vmem:[%s6 + $0xc0] sm:$0xff]
      %v10144 = vld [vmem:[%s6 + $0xc8] sm:$0xff]
      %v10145 = vld [vmem:[%s6 + $0xd0] sm:$0xff]
      %v10146 = vld [vmem:[%s6 + $0xd8] sm:$0xff]
      %v10147 = vld [vmem:[%s6 + $0xe0] sm:$0xff]
      %v10148 = vld [vmem:[%s6 + $0xe8] sm:$0xff]
      %v10149 = vld [vmem:[%s6 + $0xf0] sm:$0xff]
      %v10150 = vld [vmem:[%s6 + $0xf8] sm:$0xff]
      %v10151 = vld [vmem:[%s6 + $0x100] sm:$0xff]
      %v10152 = vld [vmem:[%s6 + $0x108] sm:$0xff]
      %v10153 = vld [vmem:[%s6 + $0x110] sm:$0xff]
      %v10154 = vld [vmem:[%s6 + $0x118] sm:$0xff]
      %v10155 = vld [vmem:[%s6 + $0x120] sm:$0xff]
      %v10156 = vld [vmem:[%s6 + $0x128] sm:$0xff]
      %v10157 = vld [vmem:[%s6 + $0x130] sm:$0xff]
      %v10158 = vld [vmem:[%s6 + $0x138] sm:$0xff]
      %v10159 = vld [vmem:[%s6 + $0x140] sm:$0xff]
      %v10160 = vld [vmem:[%s6 + $0x148] sm:$0xff]
      %v10161 = vld [vmem:[%s6 + $0x150] sm:$0xff]
      %v10162 = vld [vmem:[%s6 + $0x158] sm:$0xff]
      %v10163 = vld [vmem:[%s6 + $0x160] sm:$0xff]
      %v10164 = vld [vmem:[%s6 + $0x168] sm:$0xff]
      %v10165 = vld [vmem:[%s6 + $0x170] sm:$0xff]
      %v10166 = vld [vmem:[%s6 + $0x178] sm:$0xff]
      %v10167 = vld [vmem:[%s6 + $0x180] sm:$0xff]
      %v10168 = vld [vmem:[%s6 + $0x188] sm:$0xff]
      %v10169 = vld [vmem:[%s6 + $0x190] sm:$0xff]
      %v10170 = vld [vmem:[%s6 + $0x198] sm:$0xff]
      %v10171 = vld [vmem:[%s6 + $0x1a0] sm:$0xff]
      %v10172 = vld [vmem:[%s6 + $0x1a8] sm:$0xff]
      %v10173 = vld [vmem:[%s6 + $0x1b0] sm:$0xff]
      %v10174 = vld [vmem:[%s6 + $0x1b8] sm:$0xff]
      %v10175 = vld [vmem:[%s6 + $0x1c0] sm:$0xff]
      %v10176 = vld [vmem:[%s6 + $0x1c8] sm:$0xff]
      %v10177 = vld [vmem:[%s6 + $0x1d0] sm:$0xff]
      %v10178 = vld [vmem:[%s6 + $0x1d8] sm:$0xff]
      %v10179 = vld [vmem:[%s6 + $0x1e0] sm:$0xff]
      %v10180 = vld [vmem:[%s6 + $0x1e8] sm:$0xff]
      %v10181 = vld [vmem:[%s6 + $0x1f0] sm:$0xff]
      %v10182 = vld [vmem:[%s6 + $0x1f8] sm:$0xff]
      %v10183 = vld [vmem:[%s6 + $0x200] sm:$0xff]
      %v10184 = vld [vmem:[%s6 + $0x208] sm:$0xff]
      %v10185 = vld [vmem:[%s6 + $0x210] sm:$0xff]
      %v10186 = vld [vmem:[%s6 + $0x218] sm:$0xff]
      %v10187 = vld [vmem:[%s6 + $0x220] sm:$0xff]
      %v10188 = vld [vmem:[%s6 + $0x228] sm:$0xff]
      %v10189 = vld [vmem:[%s6 + $0x230] sm:$0xff]
      %v10190 = vld [vmem:[%s6 + $0x238] sm:$0xff]
      %v10191 = vld [vmem:[%s6 + $0x240] sm:$0xff]
      %v10192 = vld [vmem:[%s6 + $0x248] sm:$0xff]
      %v10193 = vld [vmem:[%s6 + $0x250] sm:$0xff]
      %v10194 = vld [vmem:[%s6 + $0x258] sm:$0xff]
      %v10195 = vld [vmem:[%s6 + $0x260] sm:$0xff]
      %v10196 = vld [vmem:[%s6 + $0x268] sm:$0xff]
      %v10197 = vld [vmem:[%s6 + $0x270] sm:$0xff]
      %v10198 = vld [vmem:[%s6 + $0x278] sm:$0xff]
      %v10199 = vld [vmem:[%s6 + $0x280] sm:$0xff]
      %v10200 = vld [vmem:[%s6 + $0x288] sm:$0xff]
      %v10201 = vld [vmem:[%s6 + $0x290] sm:$0xff]
      %v10202 = vld [vmem:[%s6 + $0x298] sm:$0xff]
      %v10203 = vld [vmem:[%s6 + $0x2a0] sm:$0xff]
      %v10204 = vld [vmem:[%s6 + $0x2a8] sm:$0xff]
      %v10205 = vld [vmem:[%s6 + $0x2b0] sm:$0xff]
      %v10206 = vld [vmem:[%s6 + $0x2b8] sm:$0xff]
      %v10207 = vld [vmem:[%s6 + $0x2c0] sm:$0xff]
      %v10208 = vld [vmem:[%s6 + $0x2c8] sm:$0xff]
      %v10209 = vld [vmem:[%s6 + $0x2d0] sm:$0xff]
      %v10210 = vld [vmem:[%s6 + $0x2d8] sm:$0xff]
      %v10211 = vld [vmem:[%s6 + $0x2e0] sm:$0xff]
      %v10212 = vld [vmem:[%s6 + $0x2e8] sm:$0xff]
      %v10213 = vld [vmem:[%s6 + $0x2f0] sm:$0xff]
      %v10214 = vld [vmem:[%s6 + $0x2f8] sm:$0xff]
      %v10215 = vld [vmem:[%s6 + $0x300] sm:$0xff]
      %v10216 = vld [vmem:[%s6 + $0x308] sm:$0xff]
      %v10217 = vld [vmem:[%s6 + $0x310] sm:$0xff]
      %v10218 = vld [vmem:[%s6 + $0x318] sm:$0xff]
      %v10219 = vld [vmem:[%s6 + $0x320] sm:$0xff]
      %v10220 = vld [vmem:[%s6 + $0x328] sm:$0xff]
      %v10221 = vld [vmem:[%s6 + $0x330] sm:$0xff]
      %v10222 = vld [vmem:[%s6 + $0x338] sm:$0xff]
      %v10223 = vld [vmem:[%s6 + $0x340] sm:$0xff]
      %v10224 = vld [vmem:[%s6 + $0x348] sm:$0xff]
      %v10225 = vld [vmem:[%s6 + $0x350] sm:$0xff]
      %v10226 = vld [vmem:[%s6 + $0x358] sm:$0xff]
      %v10227 = vld [vmem:[%s6 + $0x360] sm:$0xff]
      %v10228 = vld [vmem:[%s6 + $0x368] sm:$0xff]
      %v10229 = vld [vmem:[%s6 + $0x370] sm:$0xff]
      %v10230 = vld [vmem:[%s6 + $0x378] sm:$0xff]
      %v10231 = vld [vmem:[%s6 + $0x380] sm:$0xff]
      %v10232 = vld [vmem:[%s6 + $0x388] sm:$0xff]
      %v10233 = vld [vmem:[%s6 + $0x390] sm:$0xff]
      %v10234 = vld [vmem:[%s6 + $0x398] sm:$0xff]
      %v10235 = vld [vmem:[%s6 + $0x3a0] sm:$0xff]
      %v10236 = vld [vmem:[%s6 + $0x3a8] sm:$0xff]
      %v10237 = vld [vmem:[%s6 + $0x3b0] sm:$0xff]
      %v10238 = vld [vmem:[%s6 + $0x3b8] sm:$0xff]
      %v10239 = vld [vmem:[%s6 + $0x3c0] sm:$0xff]
      %v10240 = vld [vmem:[%s6 + $0x3c8] sm:$0xff]
      %v10241 = vld [vmem:[%s6 + $0x3d0] sm:$0xff]
      %v10242 = vld [vmem:[%s6 + $0x3d8] sm:$0xff]
      %v10243 = vld [vmem:[%s6 + $0x3e0] sm:$0xff]
      %v10244 = vld [vmem:[%s6 + $0x3e8] sm:$0xff]
      %v10245 = vld [vmem:[%s6 + $0x3f0] sm:$0xff]
      %v10246 = vld [vmem:[%s6 + $0x3f8] sm:$0xff]
      %v10247 = vld [vmem:[%s6 + $0x400] sm:$0xff]
      %v10248 = vld [vmem:[%s6 + $0x408] sm:$0xff]
      %v10249 = vld [vmem:[%s6 + $0x410] sm:$0xff]
      %v10250 = vld [vmem:[%s6 + $0x418] sm:$0xff]
      %v10251 = vld [vmem:[%s6 + $0x420] sm:$0xff]
      %v10252 = vld [vmem:[%s6 + $0x428] sm:$0xff]
      %v10253 = vld [vmem:[%s6 + $0x430] sm:$0xff]
      %v10254 = vld [vmem:[%s6 + $0x438] sm:$0xff]
      %v10255 = vld [vmem:[%s6 + $0x440] sm:$0xff]
      %v10256 = vld [vmem:[%s6 + $0x448] sm:$0xff]
      %v10257 = vld [vmem:[%s6 + $0x450] sm:$0xff]
      %v10258 = vld [vmem:[%s6 + $0x458] sm:$0xff]
      %v10259 = vld [vmem:[%s6 + $0x460] sm:$0xff]
      %v10260 = vld [vmem:[%s6 + $0x468] sm:$0xff]
      %v10261 = vld [vmem:[%s6 + $0x470] sm:$0xff]
      %v10262 = vld [vmem:[%s6 + $0x478] sm:$0xff]
      %v10263 = vld [vmem:[%s6 + $0x480] sm:$0xff]
      %v10264 = vld [vmem:[%s6 + $0x488] sm:$0xff]
      %v10265 = vld [vmem:[%s6 + $0x490] sm:$0xff]
      %v10266 = vld [vmem:[%s6 + $0x498] sm:$0xff]
      %v10267 = vld [vmem:[%s6 + $0x4a0] sm:$0xff]
      %v10268 = vld [vmem:[%s6 + $0x4a8] sm:$0xff]
      %v10269 = vld [vmem:[%s6 + $0x4b0] sm:$0xff]
      %v10270 = vld [vmem:[%s6 + $0x4b8] sm:$0xff]
      %v10271 = vld [vmem:[%s6 + $0x4c0] sm:$0xff]
      %v10272 = vld [vmem:[%s6 + $0x4c8] sm:$0xff]
      %v10273 = vld [vmem:[%s6 + $0x4d0] sm:$0xff]
      %v10274 = vld [vmem:[%s6 + $0x4d8] sm:$0xff]
      %v10275 = vld [vmem:[%s6 + $0x4e0] sm:$0xff]
      %v10276 = vld [vmem:[%s6 + $0x4e8] sm:$0xff]
      %v10277 = vld [vmem:[%s6 + $0x4f0] sm:$0xff]
      %v10278 = vld [vmem:[%s6 + $0x4f8] sm:$0xff]
      %10280 = vset.pattern.permute.xlu0 64
      %10281 = vperm.xlu0 %10280, %v10039
      %v10282 = vpop.permute.xlu0 %10281
      %10285 = vset.pattern.permute.xlu0 64
      %10286 = vperm.xlu0 %10285, %v10040
      %v10287 = vpop.permute.xlu0 %10286
      %10290 = vset.pattern.permute.xlu0 64
      %10291 = vperm.xlu0 %10290, %v10041
      %v10292 = vpop.permute.xlu0 %10291
      %10295 = vset.pattern.permute.xlu0 64
      %10296 = vperm.xlu0 %10295, %v10042
      %v10297 = vpop.permute.xlu0 %10296
      %10300 = vset.pattern.permute.xlu0 64
      %10301 = vperm.xlu0 %10300, %v10043
      %v10302 = vpop.permute.xlu0 %10301
      %10305 = vset.pattern.permute.xlu0 64
      %10306 = vperm.xlu0 %10305, %v10044
      %v10307 = vpop.permute.xlu0 %10306
      %10310 = vset.pattern.permute.xlu0 64
      %10311 = vperm.xlu0 %10310, %v10045
      %v10312 = vpop.permute.xlu0 %10311
      %10315 = vset.pattern.permute.xlu0 64
      %10316 = vperm.xlu0 %10315, %v10046
      %v10317 = vpop.permute.xlu0 %10316
      %10320 = vset.pattern.permute.xlu0 64
      %10321 = vperm.xlu0 %10320, %v10047
      %v10322 = vpop.permute.xlu0 %10321
      %10325 = vset.pattern.permute.xlu0 64
      %10326 = vperm.xlu0 %10325, %v10048
      %v10327 = vpop.permute.xlu0 %10326
      %10330 = vset.pattern.permute.xlu0 64
      %10331 = vperm.xlu0 %10330, %v10049
      %v10332 = vpop.permute.xlu0 %10331
      %10335 = vset.pattern.permute.xlu0 64
      %10336 = vperm.xlu0 %10335, %v10050
      %v10337 = vpop.permute.xlu0 %10336
      %10340 = vset.pattern.permute.xlu0 64
      %10341 = vperm.xlu0 %10340, %v10051
      %v10342 = vpop.permute.xlu0 %10341
      %10345 = vset.pattern.permute.xlu0 64
      %10346 = vperm.xlu0 %10345, %v10052
      %v10347 = vpop.permute.xlu0 %10346
      %10350 = vset.pattern.permute.xlu0 64
      %10351 = vperm.xlu0 %10350, %v10053
      %v10352 = vpop.permute.xlu0 %10351
      %10355 = vset.pattern.permute.xlu0 64
      %10356 = vperm.xlu0 %10355, %v10054
      %v10357 = vpop.permute.xlu0 %10356
      %10360 = vset.pattern.permute.xlu0 64
      %10361 = vperm.xlu0 %10360, %v10055
      %v10362 = vpop.permute.xlu0 %10361
      %10365 = vset.pattern.permute.xlu0 64
      %10366 = vperm.xlu0 %10365, %v10056
      %v10367 = vpop.permute.xlu0 %10366
      %10370 = vset.pattern.permute.xlu0 64
      %10371 = vperm.xlu0 %10370, %v10057
      %v10372 = vpop.permute.xlu0 %10371
      %10375 = vset.pattern.permute.xlu0 64
      %10376 = vperm.xlu0 %10375, %v10058
      %v10377 = vpop.permute.xlu0 %10376
      %10380 = vset.pattern.permute.xlu0 64
      %10381 = vperm.xlu0 %10380, %v10059
      %v10382 = vpop.permute.xlu0 %10381
      %10385 = vset.pattern.permute.xlu0 64
      %10386 = vperm.xlu0 %10385, %v10060
      %v10387 = vpop.permute.xlu0 %10386
      %10390 = vset.pattern.permute.xlu0 64
      %10391 = vperm.xlu0 %10390, %v10061
      %v10392 = vpop.permute.xlu0 %10391
      %10395 = vset.pattern.permute.xlu0 64
      %10396 = vperm.xlu0 %10395, %v10062
      %v10397 = vpop.permute.xlu0 %10396
      %10400 = vset.pattern.permute.xlu0 64
      %10401 = vperm.xlu0 %10400, %v10063
      %v10402 = vpop.permute.xlu0 %10401
      %10405 = vset.pattern.permute.xlu0 64
      %10406 = vperm.xlu0 %10405, %v10064
      %v10407 = vpop.permute.xlu0 %10406
      %10410 = vset.pattern.permute.xlu0 64
      %10411 = vperm.xlu0 %10410, %v10065
      %v10412 = vpop.permute.xlu0 %10411
      %10415 = vset.pattern.permute.xlu0 64
      %10416 = vperm.xlu0 %10415, %v10066
      %v10417 = vpop.permute.xlu0 %10416
      %10420 = vset.pattern.permute.xlu0 64
      %10421 = vperm.xlu0 %10420, %v10067
      %v10422 = vpop.permute.xlu0 %10421
      %10425 = vset.pattern.permute.xlu0 64
      %10426 = vperm.xlu0 %10425, %v10068
      %v10427 = vpop.permute.xlu0 %10426
      %10430 = vset.pattern.permute.xlu0 64
      %10431 = vperm.xlu0 %10430, %v10069
      %v10432 = vpop.permute.xlu0 %10431
      %10435 = vset.pattern.permute.xlu0 64
      %10436 = vperm.xlu0 %10435, %v10070
      %v10437 = vpop.permute.xlu0 %10436
      %10440 = vset.pattern.permute.xlu0 64
      %10441 = vperm.xlu0 %10440, %v10071
      %v10442 = vpop.permute.xlu0 %10441
      %10445 = vset.pattern.permute.xlu0 64
      %10446 = vperm.xlu0 %10445, %v10072
      %v10447 = vpop.permute.xlu0 %10446
      %10450 = vset.pattern.permute.xlu0 64
      %10451 = vperm.xlu0 %10450, %v10073
      %v10452 = vpop.permute.xlu0 %10451
      %10455 = vset.pattern.permute.xlu0 64
      %10456 = vperm.xlu0 %10455, %v10074
      %v10457 = vpop.permute.xlu0 %10456
      %10460 = vset.pattern.permute.xlu0 64
      %10461 = vperm.xlu0 %10460, %v10075
      %v10462 = vpop.permute.xlu0 %10461
      %10465 = vset.pattern.permute.xlu0 64
      %10466 = vperm.xlu0 %10465, %v10076
      %v10467 = vpop.permute.xlu0 %10466
      %10470 = vset.pattern.permute.xlu0 64
      %10471 = vperm.xlu0 %10470, %v10077
      %v10472 = vpop.permute.xlu0 %10471
      %10475 = vset.pattern.permute.xlu0 64
      %10476 = vperm.xlu0 %10475, %v10078
      %v10477 = vpop.permute.xlu0 %10476
      %10480 = vset.pattern.permute.xlu0 64
      %10481 = vperm.xlu0 %10480, %v10079
      %v10482 = vpop.permute.xlu0 %10481
      %10485 = vset.pattern.permute.xlu0 64
      %10486 = vperm.xlu0 %10485, %v10080
      %v10487 = vpop.permute.xlu0 %10486
      %10490 = vset.pattern.permute.xlu0 64
      %10491 = vperm.xlu0 %10490, %v10081
      %v10492 = vpop.permute.xlu0 %10491
      %10495 = vset.pattern.permute.xlu0 64
      %10496 = vperm.xlu0 %10495, %v10082
      %v10497 = vpop.permute.xlu0 %10496
      %10500 = vset.pattern.permute.xlu0 64
      %10501 = vperm.xlu0 %10500, %v10083
      %v10502 = vpop.permute.xlu0 %10501
      %10505 = vset.pattern.permute.xlu0 64
      %10506 = vperm.xlu0 %10505, %v10084
      %v10507 = vpop.permute.xlu0 %10506
      %10510 = vset.pattern.permute.xlu0 64
      %10511 = vperm.xlu0 %10510, %v10085
      %v10512 = vpop.permute.xlu0 %10511
      %10515 = vset.pattern.permute.xlu0 64
      %10516 = vperm.xlu0 %10515, %v10086
      %v10517 = vpop.permute.xlu0 %10516
      %10520 = vset.pattern.permute.xlu0 64
      %10521 = vperm.xlu0 %10520, %v10087
      %v10522 = vpop.permute.xlu0 %10521
      %10525 = vset.pattern.permute.xlu0 64
      %10526 = vperm.xlu0 %10525, %v10088
      %v10527 = vpop.permute.xlu0 %10526
      %10530 = vset.pattern.permute.xlu0 64
      %10531 = vperm.xlu0 %10530, %v10089
      %v10532 = vpop.permute.xlu0 %10531
      %10535 = vset.pattern.permute.xlu0 64
      %10536 = vperm.xlu0 %10535, %v10090
      %v10537 = vpop.permute.xlu0 %10536
      %10540 = vset.pattern.permute.xlu0 64
      %10541 = vperm.xlu0 %10540, %v10091
      %v10542 = vpop.permute.xlu0 %10541
      %10545 = vset.pattern.permute.xlu0 64
      %10546 = vperm.xlu0 %10545, %v10092
      %v10547 = vpop.permute.xlu0 %10546
      %10550 = vset.pattern.permute.xlu0 64
      %10551 = vperm.xlu0 %10550, %v10093
      %v10552 = vpop.permute.xlu0 %10551
      %10555 = vset.pattern.permute.xlu0 64
      %10556 = vperm.xlu0 %10555, %v10094
      %v10557 = vpop.permute.xlu0 %10556
      %10560 = vset.pattern.permute.xlu0 64
      %10561 = vperm.xlu0 %10560, %v10095
      %v10562 = vpop.permute.xlu0 %10561
      %10565 = vset.pattern.permute.xlu0 64
      %10566 = vperm.xlu0 %10565, %v10096
      %v10567 = vpop.permute.xlu0 %10566
      %10570 = vset.pattern.permute.xlu0 64
      %10571 = vperm.xlu0 %10570, %v10097
      %v10572 = vpop.permute.xlu0 %10571
      %10575 = vset.pattern.permute.xlu0 64
      %10576 = vperm.xlu0 %10575, %v10098
      %v10577 = vpop.permute.xlu0 %10576
      %10580 = vset.pattern.permute.xlu0 64
      %10581 = vperm.xlu0 %10580, %v10099
      %v10582 = vpop.permute.xlu0 %10581
      %10585 = vset.pattern.permute.xlu0 64
      %10586 = vperm.xlu0 %10585, %v10100
      %v10587 = vpop.permute.xlu0 %10586
      %10590 = vset.pattern.permute.xlu0 64
      %10591 = vperm.xlu0 %10590, %v10101
      %v10592 = vpop.permute.xlu0 %10591
      %10595 = vset.pattern.permute.xlu0 64
      %10596 = vperm.xlu0 %10595, %v10102
      %v10597 = vpop.permute.xlu0 %10596
      %10600 = vset.pattern.permute.xlu0 64
      %10601 = vperm.xlu0 %10600, %v10103
      %v10602 = vpop.permute.xlu0 %10601
      %10605 = vset.pattern.permute.xlu0 64
      %10606 = vperm.xlu0 %10605, %v10104
      %v10607 = vpop.permute.xlu0 %10606
      %10610 = vset.pattern.permute.xlu0 64
      %10611 = vperm.xlu0 %10610, %v10105
      %v10612 = vpop.permute.xlu0 %10611
      %10615 = vset.pattern.permute.xlu0 64
      %10616 = vperm.xlu0 %10615, %v10106
      %v10617 = vpop.permute.xlu0 %10616
      %10620 = vset.pattern.permute.xlu0 64
      %10621 = vperm.xlu0 %10620, %v10107
      %v10622 = vpop.permute.xlu0 %10621
      %10625 = vset.pattern.permute.xlu0 64
      %10626 = vperm.xlu0 %10625, %v10108
      %v10627 = vpop.permute.xlu0 %10626
      %10630 = vset.pattern.permute.xlu0 64
      %10631 = vperm.xlu0 %10630, %v10109
      %v10632 = vpop.permute.xlu0 %10631
      %10635 = vset.pattern.permute.xlu0 64
      %10636 = vperm.xlu0 %10635, %v10110
      %v10637 = vpop.permute.xlu0 %10636
      %10640 = vset.pattern.permute.xlu0 64
      %10641 = vperm.xlu0 %10640, %v10111
      %v10642 = vpop.permute.xlu0 %10641
      %10645 = vset.pattern.permute.xlu0 64
      %10646 = vperm.xlu0 %10645, %v10112
      %v10647 = vpop.permute.xlu0 %10646
      %10650 = vset.pattern.permute.xlu0 64
      %10651 = vperm.xlu0 %10650, %v10113
      %v10652 = vpop.permute.xlu0 %10651
      %10655 = vset.pattern.permute.xlu0 64
      %10656 = vperm.xlu0 %10655, %v10114
      %v10657 = vpop.permute.xlu0 %10656
      %10660 = vset.pattern.permute.xlu0 64
      %10661 = vperm.xlu0 %10660, %v10115
      %v10662 = vpop.permute.xlu0 %10661
      %10665 = vset.pattern.permute.xlu0 64
      %10666 = vperm.xlu0 %10665, %v10116
      %v10667 = vpop.permute.xlu0 %10666
      %10670 = vset.pattern.permute.xlu0 64
      %10671 = vperm.xlu0 %10670, %v10117
      %v10672 = vpop.permute.xlu0 %10671
      %10675 = vset.pattern.permute.xlu0 64
      %10676 = vperm.xlu0 %10675, %v10118
      %v10677 = vpop.permute.xlu0 %10676
      %v10679 = vmul.f32 %v10282, %v10119
      %v10680 = vmul.f32 %v10282, %v10120
      %v10681 = vmul.f32 %v10287, %v10121
      %v10682 = vmul.f32 %v10287, %v10122
      %v10683 = vmul.f32 %v10292, %v10123
      %v10684 = vmul.f32 %v10292, %v10124
      %v10685 = vmul.f32 %v10297, %v10125
      %v10686 = vmul.f32 %v10297, %v10126
      %v10687 = vmul.f32 %v10302, %v10127
      %v10688 = vmul.f32 %v10302, %v10128
      %v10689 = vmul.f32 %v10307, %v10129
      %v10690 = vmul.f32 %v10307, %v10130
      %v10691 = vmul.f32 %v10312, %v10131
      %v10692 = vmul.f32 %v10312, %v10132
      %v10693 = vmul.f32 %v10317, %v10133
      %v10694 = vmul.f32 %v10317, %v10134
      %v10695 = vmul.f32 %v10322, %v10135
      %v10696 = vmul.f32 %v10322, %v10136
      %v10697 = vmul.f32 %v10327, %v10137
      %v10698 = vmul.f32 %v10327, %v10138
      %v10699 = vmul.f32 %v10332, %v10139
      %v10700 = vmul.f32 %v10332, %v10140
      %v10701 = vmul.f32 %v10337, %v10141
      %v10702 = vmul.f32 %v10337, %v10142
      %v10703 = vmul.f32 %v10342, %v10143
      %v10704 = vmul.f32 %v10342, %v10144
      %v10705 = vmul.f32 %v10347, %v10145
      %v10706 = vmul.f32 %v10347, %v10146
      %v10707 = vmul.f32 %v10352, %v10147
      %v10708 = vmul.f32 %v10352, %v10148
      %v10709 = vmul.f32 %v10357, %v10149
      %v10710 = vmul.f32 %v10357, %v10150
      %v10711 = vmul.f32 %v10362, %v10151
      %v10712 = vmul.f32 %v10362, %v10152
      %v10713 = vmul.f32 %v10367, %v10153
      %v10714 = vmul.f32 %v10367, %v10154
      %v10715 = vmul.f32 %v10372, %v10155
      %v10716 = vmul.f32 %v10372, %v10156
      %v10717 = vmul.f32 %v10377, %v10157
      %v10718 = vmul.f32 %v10377, %v10158
      %v10719 = vmul.f32 %v10382, %v10159
      %v10720 = vmul.f32 %v10382, %v10160
      %v10721 = vmul.f32 %v10387, %v10161
      %v10722 = vmul.f32 %v10387, %v10162
      %v10723 = vmul.f32 %v10392, %v10163
      %v10724 = vmul.f32 %v10392, %v10164
      %v10725 = vmul.f32 %v10397, %v10165
      %v10726 = vmul.f32 %v10397, %v10166
      %v10727 = vmul.f32 %v10402, %v10167
      %v10728 = vmul.f32 %v10402, %v10168
      %v10729 = vmul.f32 %v10407, %v10169
      %v10730 = vmul.f32 %v10407, %v10170
      %v10731 = vmul.f32 %v10412, %v10171
      %v10732 = vmul.f32 %v10412, %v10172
      %v10733 = vmul.f32 %v10417, %v10173
      %v10734 = vmul.f32 %v10417, %v10174
      %v10735 = vmul.f32 %v10422, %v10175
      %v10736 = vmul.f32 %v10422, %v10176
      %v10737 = vmul.f32 %v10427, %v10177
      %v10738 = vmul.f32 %v10427, %v10178
      %v10739 = vmul.f32 %v10432, %v10179
      %v10740 = vmul.f32 %v10432, %v10180
      %v10741 = vmul.f32 %v10437, %v10181
      %v10742 = vmul.f32 %v10437, %v10182
      %v10743 = vmul.f32 %v10442, %v10183
      %v10744 = vmul.f32 %v10442, %v10184
      %v10745 = vmul.f32 %v10447, %v10185
      %v10746 = vmul.f32 %v10447, %v10186
      %v10747 = vmul.f32 %v10452, %v10187
      %v10748 = vmul.f32 %v10452, %v10188
      %v10749 = vmul.f32 %v10457, %v10189
      %v10750 = vmul.f32 %v10457, %v10190
      %v10751 = vmul.f32 %v10462, %v10191
      %v10752 = vmul.f32 %v10462, %v10192
      %v10753 = vmul.f32 %v10467, %v10193
      %v10754 = vmul.f32 %v10467, %v10194
      %v10755 = vmul.f32 %v10472, %v10195
      %v10756 = vmul.f32 %v10472, %v10196
      %v10757 = vmul.f32 %v10477, %v10197
      %v10758 = vmul.f32 %v10477, %v10198
      %v10759 = vmul.f32 %v10482, %v10199
      %v10760 = vmul.f32 %v10482, %v10200
      %v10761 = vmul.f32 %v10487, %v10201
      %v10762 = vmul.f32 %v10487, %v10202
      %v10763 = vmul.f32 %v10492, %v10203
      %v10764 = vmul.f32 %v10492, %v10204
      %v10765 = vmul.f32 %v10497, %v10205
      %v10766 = vmul.f32 %v10497, %v10206
      %v10767 = vmul.f32 %v10502, %v10207
      %v10768 = vmul.f32 %v10502, %v10208
      %v10769 = vmul.f32 %v10507, %v10209
      %v10770 = vmul.f32 %v10507, %v10210
      %v10771 = vmul.f32 %v10512, %v10211
      %v10772 = vmul.f32 %v10512, %v10212
      %v10773 = vmul.f32 %v10517, %v10213
      %v10774 = vmul.f32 %v10517, %v10214
      %v10775 = vmul.f32 %v10522, %v10215
      %v10776 = vmul.f32 %v10522, %v10216
      %v10777 = vmul.f32 %v10527, %v10217
      %v10778 = vmul.f32 %v10527, %v10218
      %v10779 = vmul.f32 %v10532, %v10219
      %v10780 = vmul.f32 %v10532, %v10220
      %v10781 = vmul.f32 %v10537, %v10221
      %v10782 = vmul.f32 %v10537, %v10222
      %v10783 = vmul.f32 %v10542, %v10223
      %v10784 = vmul.f32 %v10542, %v10224
      %v10785 = vmul.f32 %v10547, %v10225
      %v10786 = vmul.f32 %v10547, %v10226
      %v10787 = vmul.f32 %v10552, %v10227
      %v10788 = vmul.f32 %v10552, %v10228
      %v10789 = vmul.f32 %v10557, %v10229
      %v10790 = vmul.f32 %v10557, %v10230
      %v10791 = vmul.f32 %v10562, %v10231
      %v10792 = vmul.f32 %v10562, %v10232
      %v10793 = vmul.f32 %v10567, %v10233
      %v10794 = vmul.f32 %v10567, %v10234
      %v10795 = vmul.f32 %v10572, %v10235
      %v10796 = vmul.f32 %v10572, %v10236
      %v10797 = vmul.f32 %v10577, %v10237
      %v10798 = vmul.f32 %v10577, %v10238
      %v10799 = vmul.f32 %v10582, %v10239
      %v10800 = vmul.f32 %v10582, %v10240
      %v10801 = vmul.f32 %v10587, %v10241
      %v10802 = vmul.f32 %v10587, %v10242
      %v10803 = vmul.f32 %v10592, %v10243
      %v10804 = vmul.f32 %v10592, %v10244
      %v10805 = vmul.f32 %v10597, %v10245
      %v10806 = vmul.f32 %v10597, %v10246
      %v10807 = vmul.f32 %v10602, %v10247
      %v10808 = vmul.f32 %v10602, %v10248
      %v10809 = vmul.f32 %v10607, %v10249
      %v10810 = vmul.f32 %v10607, %v10250
      %v10811 = vmul.f32 %v10612, %v10251
      %v10812 = vmul.f32 %v10612, %v10252
      %v10813 = vmul.f32 %v10617, %v10253
      %v10814 = vmul.f32 %v10617, %v10254
      %v10815 = vmul.f32 %v10622, %v10255
      %v10816 = vmul.f32 %v10622, %v10256
      %v10817 = vmul.f32 %v10627, %v10257
      %v10818 = vmul.f32 %v10627, %v10258
      %v10819 = vmul.f32 %v10632, %v10259
      %v10820 = vmul.f32 %v10632, %v10260
      %v10821 = vmul.f32 %v10637, %v10261
      %v10822 = vmul.f32 %v10637, %v10262
      %v10823 = vmul.f32 %v10642, %v10263
      %v10824 = vmul.f32 %v10642, %v10264
      %v10825 = vmul.f32 %v10647, %v10265
      %v10826 = vmul.f32 %v10647, %v10266
      %v10827 = vmul.f32 %v10652, %v10267
      %v10828 = vmul.f32 %v10652, %v10268
      %v10829 = vmul.f32 %v10657, %v10269
      %v10830 = vmul.f32 %v10657, %v10270
      %v10831 = vmul.f32 %v10662, %v10271
      %v10832 = vmul.f32 %v10662, %v10272
      %v10833 = vmul.f32 %v10667, %v10273
      %v10834 = vmul.f32 %v10667, %v10274
      %v10835 = vmul.f32 %v10672, %v10275
      %v10836 = vmul.f32 %v10672, %v10276
      %v10837 = vmul.f32 %v10677, %v10277
      %v10838 = vmul.f32 %v10677, %v10278
      %v10839 = vadd.f32 %v10679, %v10681
      %v10840 = vadd.f32 %v10839, %v10683
      %v10841 = vadd.f32 %v10840, %v10685
      %v10842 = vadd.f32 %v10841, %v10687
      %v10843 = vadd.f32 %v10842, %v10689
      %v10844 = vadd.f32 %v10843, %v10691
      %v10845 = vadd.f32 %v10844, %v10693
      %v10846 = vadd.f32 %v10845, %v10695
      %v10847 = vadd.f32 %v10846, %v10697
      %v10848 = vadd.f32 %v10847, %v10699
      %v10849 = vadd.f32 %v10848, %v10701
      %v10850 = vadd.f32 %v10849, %v10703
      %v10851 = vadd.f32 %v10850, %v10705
      %v10852 = vadd.f32 %v10851, %v10707
      %v10853 = vadd.f32 %v10852, %v10709
      %v10854 = vadd.f32 %v10853, %v10711
      %v10855 = vadd.f32 %v10854, %v10713
      %v10856 = vadd.f32 %v10855, %v10715
      %v10857 = vadd.f32 %v10856, %v10717
      %v10858 = vadd.f32 %v10857, %v10719
      %v10859 = vadd.f32 %v10858, %v10721
      %v10860 = vadd.f32 %v10859, %v10723
      %v10861 = vadd.f32 %v10860, %v10725
      %v10862 = vadd.f32 %v10861, %v10727
      %v10863 = vadd.f32 %v10862, %v10729
      %v10864 = vadd.f32 %v10863, %v10731
      %v10865 = vadd.f32 %v10864, %v10733
      %v10866 = vadd.f32 %v10865, %v10735
      %v10867 = vadd.f32 %v10866, %v10737
      %v10868 = vadd.f32 %v10867, %v10739
      %v10869 = vadd.f32 %v10868, %v10741
      %v10870 = vadd.f32 %v10869, %v10743
      %v10871 = vadd.f32 %v10870, %v10745
      %v10872 = vadd.f32 %v10871, %v10747
      %v10873 = vadd.f32 %v10872, %v10749
      %v10874 = vadd.f32 %v10873, %v10751
      %v10875 = vadd.f32 %v10874, %v10753
      %v10876 = vadd.f32 %v10875, %v10755
      %v10877 = vadd.f32 %v10876, %v10757
      %v10878 = vadd.f32 %v10877, %v10759
      %v10879 = vadd.f32 %v10878, %v10761
      %v10880 = vadd.f32 %v10879, %v10763
      %v10881 = vadd.f32 %v10880, %v10765
      %v10882 = vadd.f32 %v10881, %v10767
      %v10883 = vadd.f32 %v10882, %v10769
      %v10884 = vadd.f32 %v10883, %v10771
      %v10885 = vadd.f32 %v10884, %v10773
      %v10886 = vadd.f32 %v10885, %v10775
      %v10887 = vadd.f32 %v10886, %v10777
      %v10888 = vadd.f32 %v10887, %v10779
      %v10889 = vadd.f32 %v10888, %v10781
      %v10890 = vadd.f32 %v10889, %v10783
      %v10891 = vadd.f32 %v10890, %v10785
      %v10892 = vadd.f32 %v10891, %v10787
      %v10893 = vadd.f32 %v10892, %v10789
      %v10894 = vadd.f32 %v10893, %v10791
      %v10895 = vadd.f32 %v10894, %v10793
      %v10896 = vadd.f32 %v10895, %v10795
      %v10897 = vadd.f32 %v10896, %v10797
      %v10898 = vadd.f32 %v10897, %v10799
      %v10899 = vadd.f32 %v10898, %v10801
      %v10900 = vadd.f32 %v10899, %v10803
      %v10901 = vadd.f32 %v10900, %v10805
      %v10902 = vadd.f32 %v10901, %v10807
      %v10903 = vadd.f32 %v10902, %v10809
      %v10904 = vadd.f32 %v10903, %v10811
      %v10905 = vadd.f32 %v10904, %v10813
      %v10906 = vadd.f32 %v10905, %v10815
      %v10907 = vadd.f32 %v10906, %v10817
      %v10908 = vadd.f32 %v10907, %v10819
      %v10909 = vadd.f32 %v10908, %v10821
      %v10910 = vadd.f32 %v10909, %v10823
      %v10911 = vadd.f32 %v10910, %v10825
      %v10912 = vadd.f32 %v10911, %v10827
      %v10913 = vadd.f32 %v10912, %v10829
      %v10914 = vadd.f32 %v10913, %v10831
      %v10915 = vadd.f32 %v10914, %v10833
      %v10916 = vadd.f32 %v10915, %v10835
      %v10917 = vadd.f32 %v10916, %v10837
      %v10918 = vrot.slane %v10917, 4
      %v10919 = vadd.f32 %v10917, %v10918
      %v10920 = vrot.slane %v10919, 2
      %v10921 = vadd.f32 %v10919, %v10920
      %v10922 = vrot.slane %v10921, 1
      %v10923 = vadd.f32 %v10921, %v10922
      %v10924 = vsel %vm3507, %v10680, 0.0
      %v10925 = vsel %vm3507, %v10682, 0.0
      %v10926 = vadd.f32 %v10924, %v10925
      %v10927 = vsel %vm3507, %v10684, 0.0
      %v10928 = vadd.f32 %v10926, %v10927
      %v10929 = vsel %vm3507, %v10686, 0.0
      %v10930 = vadd.f32 %v10928, %v10929
      %v10931 = vsel %vm3507, %v10688, 0.0
      %v10932 = vadd.f32 %v10930, %v10931
      %v10933 = vsel %vm3507, %v10690, 0.0
      %v10934 = vadd.f32 %v10932, %v10933
      %v10935 = vsel %vm3507, %v10692, 0.0
      %v10936 = vadd.f32 %v10934, %v10935
      %v10937 = vsel %vm3507, %v10694, 0.0
      %v10938 = vadd.f32 %v10936, %v10937
      %v10939 = vsel %vm3507, %v10696, 0.0
      %v10940 = vadd.f32 %v10938, %v10939
      %v10941 = vsel %vm3507, %v10698, 0.0
      %v10942 = vadd.f32 %v10940, %v10941
      %v10943 = vsel %vm3507, %v10700, 0.0
      %v10944 = vadd.f32 %v10942, %v10943
      %v10945 = vsel %vm3507, %v10702, 0.0
      %v10946 = vadd.f32 %v10944, %v10945
      %v10947 = vsel %vm3507, %v10704, 0.0
      %v10948 = vadd.f32 %v10946, %v10947
      %v10949 = vsel %vm3507, %v10706, 0.0
      %v10950 = vadd.f32 %v10948, %v10949
      %v10951 = vsel %vm3507, %v10708, 0.0
      %v10952 = vadd.f32 %v10950, %v10951
      %v10953 = vsel %vm3507, %v10710, 0.0
      %v10954 = vadd.f32 %v10952, %v10953
      %v10955 = vsel %vm3507, %v10712, 0.0
      %v10956 = vadd.f32 %v10954, %v10955
      %v10957 = vsel %vm3507, %v10714, 0.0
      %v10958 = vadd.f32 %v10956, %v10957
      %v10959 = vsel %vm3507, %v10716, 0.0
      %v10960 = vadd.f32 %v10958, %v10959
      %v10961 = vsel %vm3507, %v10718, 0.0
      %v10962 = vadd.f32 %v10960, %v10961
      %v10963 = vsel %vm3507, %v10720, 0.0
      %v10964 = vadd.f32 %v10962, %v10963
      %v10965 = vsel %vm3507, %v10722, 0.0
      %v10966 = vadd.f32 %v10964, %v10965
      %v10967 = vsel %vm3507, %v10724, 0.0
      %v10968 = vadd.f32 %v10966, %v10967
      %v10969 = vsel %vm3507, %v10726, 0.0
      %v10970 = vadd.f32 %v10968, %v10969
      %v10971 = vsel %vm3507, %v10728, 0.0
      %v10972 = vadd.f32 %v10970, %v10971
      %v10973 = vsel %vm3507, %v10730, 0.0
      %v10974 = vadd.f32 %v10972, %v10973
      %v10975 = vsel %vm3507, %v10732, 0.0
      %v10976 = vadd.f32 %v10974, %v10975
      %v10977 = vsel %vm3507, %v10734, 0.0
      %v10978 = vadd.f32 %v10976, %v10977
      %v10979 = vsel %vm3507, %v10736, 0.0
      %v10980 = vadd.f32 %v10978, %v10979
      %v10981 = vsel %vm3507, %v10738, 0.0
      %v10982 = vadd.f32 %v10980, %v10981
      %v10983 = vsel %vm3507, %v10740, 0.0
      %v10984 = vadd.f32 %v10982, %v10983
      %v10985 = vsel %vm3507, %v10742, 0.0
      %v10986 = vadd.f32 %v10984, %v10985
      %v10987 = vsel %vm3507, %v10744, 0.0
      %v10988 = vadd.f32 %v10986, %v10987
      %v10989 = vsel %vm3507, %v10746, 0.0
      %v10990 = vadd.f32 %v10988, %v10989
      %v10991 = vsel %vm3507, %v10748, 0.0
      %v10992 = vadd.f32 %v10990, %v10991
      %v10993 = vsel %vm3507, %v10750, 0.0
      %v10994 = vadd.f32 %v10992, %v10993
      %v10995 = vsel %vm3507, %v10752, 0.0
      %v10996 = vadd.f32 %v10994, %v10995
      %v10997 = vsel %vm3507, %v10754, 0.0
      %v10998 = vadd.f32 %v10996, %v10997
      %v10999 = vsel %vm3507, %v10756, 0.0
      %v11000 = vadd.f32 %v10998, %v10999
      %v11001 = vsel %vm3507, %v10758, 0.0
      %v11002 = vadd.f32 %v11000, %v11001
      %v11003 = vsel %vm3507, %v10760, 0.0
      %v11004 = vadd.f32 %v11002, %v11003
      %v11005 = vsel %vm3507, %v10762, 0.0
      %v11006 = vadd.f32 %v11004, %v11005
      %v11007 = vsel %vm3507, %v10764, 0.0
      %v11008 = vadd.f32 %v11006, %v11007
      %v11009 = vsel %vm3507, %v10766, 0.0
      %v11010 = vadd.f32 %v11008, %v11009
      %v11011 = vsel %vm3507, %v10768, 0.0
      %v11012 = vadd.f32 %v11010, %v11011
      %v11013 = vsel %vm3507, %v10770, 0.0
      %v11014 = vadd.f32 %v11012, %v11013
      %v11015 = vsel %vm3507, %v10772, 0.0
      %v11016 = vadd.f32 %v11014, %v11015
      %v11017 = vsel %vm3507, %v10774, 0.0
      %v11018 = vadd.f32 %v11016, %v11017
      %v11019 = vsel %vm3507, %v10776, 0.0
      %v11020 = vadd.f32 %v11018, %v11019
      %v11021 = vsel %vm3507, %v10778, 0.0
      %v11022 = vadd.f32 %v11020, %v11021
      %v11023 = vsel %vm3507, %v10780, 0.0
      %v11024 = vadd.f32 %v11022, %v11023
      %v11025 = vsel %vm3507, %v10782, 0.0
      %v11026 = vadd.f32 %v11024, %v11025
      %v11027 = vsel %vm3507, %v10784, 0.0
      %v11028 = vadd.f32 %v11026, %v11027
      %v11029 = vsel %vm3507, %v10786, 0.0
      %v11030 = vadd.f32 %v11028, %v11029
      %v11031 = vsel %vm3507, %v10788, 0.0
      %v11032 = vadd.f32 %v11030, %v11031
      %v11033 = vsel %vm3507, %v10790, 0.0
      %v11034 = vadd.f32 %v11032, %v11033
      %v11035 = vsel %vm3507, %v10792, 0.0
      %v11036 = vadd.f32 %v11034, %v11035
      %v11037 = vsel %vm3507, %v10794, 0.0
      %v11038 = vadd.f32 %v11036, %v11037
      %v11039 = vsel %vm3507, %v10796, 0.0
      %v11040 = vadd.f32 %v11038, %v11039
      %v11041 = vsel %vm3507, %v10798, 0.0
      %v11042 = vadd.f32 %v11040, %v11041
      %v11043 = vsel %vm3507, %v10800, 0.0
      %v11044 = vadd.f32 %v11042, %v11043
      %v11045 = vsel %vm3507, %v10802, 0.0
      %v11046 = vadd.f32 %v11044, %v11045
      %v11047 = vsel %vm3507, %v10804, 0.0
      %v11048 = vadd.f32 %v11046, %v11047
      %v11049 = vsel %vm3507, %v10806, 0.0
      %v11050 = vadd.f32 %v11048, %v11049
      %v11051 = vsel %vm3507, %v10808, 0.0
      %v11052 = vadd.f32 %v11050, %v11051
      %v11053 = vsel %vm3507, %v10810, 0.0
      %v11054 = vadd.f32 %v11052, %v11053
      %v11055 = vsel %vm3507, %v10812, 0.0
      %v11056 = vadd.f32 %v11054, %v11055
      %v11057 = vsel %vm3507, %v10814, 0.0
      %v11058 = vadd.f32 %v11056, %v11057
      %v11059 = vsel %vm3507, %v10816, 0.0
      %v11060 = vadd.f32 %v11058, %v11059
      %v11061 = vsel %vm3507, %v10818, 0.0
      %v11062 = vadd.f32 %v11060, %v11061
      %v11063 = vsel %vm3507, %v10820, 0.0
      %v11064 = vadd.f32 %v11062, %v11063
      %v11065 = vsel %vm3507, %v10822, 0.0
      %v11066 = vadd.f32 %v11064, %v11065
      %v11067 = vsel %vm3507, %v10824, 0.0
      %v11068 = vadd.f32 %v11066, %v11067
      %v11069 = vsel %vm3507, %v10826, 0.0
      %v11070 = vadd.f32 %v11068, %v11069
      %v11071 = vsel %vm3507, %v10828, 0.0
      %v11072 = vadd.f32 %v11070, %v11071
      %v11073 = vsel %vm3507, %v10830, 0.0
      %v11074 = vadd.f32 %v11072, %v11073
      %v11075 = vsel %vm3507, %v10832, 0.0
      %v11076 = vadd.f32 %v11074, %v11075
      %v11077 = vsel %vm3507, %v10834, 0.0
      %v11078 = vadd.f32 %v11076, %v11077
      %v11079 = vsel %vm3507, %v10836, 0.0
      %v11080 = vadd.f32 %v11078, %v11079
      %v11081 = vsel %vm3507, %v10838, 0.0
      %v11082 = vadd.f32 %v11080, %v11081
      %v11083 = vrot.slane %v11082, 4
      %v11084 = vadd.f32 %v11082, %v11083
      %v11085 = vrot.slane %v11084, 2
      %v11086 = vadd.f32 %v11084, %v11085
      %v11087 = vrot.slane %v11086, 1
      %v11088 = vadd.f32 %v11086, %v11087
      %v11089 = vld [vmem:[%s7] sm:$0x3]
      %v11091 = vlaneseq
      %v11092 = vshrl.u32 %v11091, 7
      %v11093 = vsub.s32 0, %v11092
      %v11094 = vrot.slane %v11089, %v11093
      %v11095 = vlaneseq
      %v11096 = vshrl.u32 %v11095, 7
      %v11097 = vsub.s32 1, %v11096
      %v11098 = vrot.slane %v11089, %v11097
      %v11101 = vadd.f32 %v10923, %v11094
      %v11102 = vadd.f32 %v11088, %v11098
      %v11103 = vadd.f32 %v11101, %v6534
      %v11104 = vxor.u32 %v11103, 2147483648
      %v11105 = vmul.f32 %v11104, 1.442695
      %v11106 = vpow.pop %v11105
      %v11107 = vadd.f32 %v11106, 1.0
      %v11108 = vrcp.pop %v11107
      %v11109 = vmul.f32 1.0, %v11108
      %v11110 = vmul.f32 %v11109, %v6536
      %v11111 = vadd.f32 %v11102, %v11110
      %v11112 = vtanh.pop %v11111
      %v11113 = vsub.f32 1.0, %v11109
      %11115 = vrot.lane.b32.xlu0 %v11112, 64
      %v11116 = vpop.permute.xlu0 %11115
      %v11118 = vmul.f32 %v11113, %v11116
      %v11119 = vmul.f32 %v11109, %v6412
      %v11120 = vadd.f32 %v11118, %v11119
      %v11121 = vld [vmem:[%s10] sm:$0x1]
      %v11123 = vlaneseq
      %v11124 = vshrl.u32 %v11123, 7
      %v11125 = vsub.s32 0, %v11124
      %v11126 = vrot.slane %v11121, %v11125
      %11127 = vrot.lane.b32.xlu0 %v11126, 64
      %v11128 = vpop.permute.xlu0 %11127
      %v11130 = vmul.f32 %v11120, %v11128
      %11132 = vrot.lane.b32.xlu0 %v11130, 64
      %v11133 = vpop.permute.xlu0 %11132
      %v11135 = vsel %vm6427, %v11133, 0.0
      %11136 = vadd.xlane.f32.xlu0 %v11135
      %v11137 = vpop.xlane.xlu0 %11136
      %v11138 = vld [vmem:[#allocation2] sm:$0x1]
      %v11139 = vadd.f32 %v11137, %v11138
      %v11140 = vxor.u32 %v11139, 2147483648
      %v11141 = vmul.f32 %v11140, 1.442695
      %v11142 = vpow.pop %v11141
      %v11143 = vadd.f32 %v11142, 1.0
      %v11144 = vrcp.pop %v11143
      %v11145 = vmul.f32 1.0, %v11144
      %v11146 = vadd.f32 %v11145, 0.0
      %s11147 = vtos %v11146
      %s11148 = sadd.f32 %s6539, %s11147
      %s11149 = sadd.s32 %s6540, 1
    $region54: #{lastgcn_forward.1} parent=1 // loop_footer
      _
    $region55: #{lastgcn_forward.1} parent=1 // loop_footer_branch
      %6538 = sbr.rel target = $region51
    $region56: #{lastgcn_forward.1} parent=1 // loop_exit
      _
    %s11150 = scalar_lea.smem [#allocation3], 0
    %11151 = sst [smem:[%s11150]] %s6540
    %s11152 = scalar_lea.smem [#allocation5], 0
    %11153 = sst [smem:[%s11152]] %s6541
    // Predicated region
    $region57: #{lastgcn_forward.1} parent=1 // pred_check
      _
    $region58: #{lastgcn_forward.1} parent=1 // pred_check_branch
      %11155 = sbr.rel (0) target = $region60
    $region59: #{lastgcn_forward.1} parent=1 // pred_region
      _
    $region60: #{lastgcn_forward.1} parent=1 // pred_fallthru
      _
    // Predicated region
    $region61: #{lastgcn_forward.1} parent=1 // pred_check
      _
    $region62: #{lastgcn_forward.1} parent=1 // pred_check_branch
      %11157 = sbr.rel (0) target = $region64
    $region63: #{lastgcn_forward.1} parent=1 // pred_region
      %s11159 = ssub.s32 16, 16
      %11160 = vsyncadd [#allocation4], %s11159
      %11163 = dma.smem_to_hbm [#allocation3], 16, %s13, [#allocation4]
    $region64: #{lastgcn_forward.1} parent=1 // pred_fallthru
      _
    // Predicated region
    $region65: #{lastgcn_forward.1} parent=1 // pred_check
      _
    $region66: #{lastgcn_forward.1} parent=1 // pred_check_branch
      %11165 = sbr.rel (0) target = $region68
    $region67: #{lastgcn_forward.1} parent=1 // pred_region
      %s11167 = ssub.s32 16, 16
      %11168 = vsyncadd [#allocation6], %s11167
      %11171 = dma.smem_to_hbm [#allocation5], 16, %s14, [#allocation6]
    $region68: #{lastgcn_forward.1} parent=1 // pred_fallthru
      _
    // Predicated region
    $region69: #{lastgcn_forward.1} parent=1 // pred_check
      _
    $region70: #{lastgcn_forward.1} parent=1 // pred_check_branch
      %11173 = sbr.rel (0) target = $region72
    $region71: #{lastgcn_forward.1} parent=1 // pred_region
      _
    $region72: #{lastgcn_forward.1} parent=1 // pred_fallthru
      _
    // Predicated region
    $region73: #{lastgcn_forward.1} parent=1 // pred_check
      _
    $region74: #{lastgcn_forward.1} parent=1 // pred_check_branch
      %11175 = sbr.rel (0) target = $region76
    $region75: #{lastgcn_forward.1} parent=1 // pred_region
      %11176 = dma.done [#allocation4], 16
    $region76: #{lastgcn_forward.1} parent=1 // pred_fallthru
      _
    // Predicated region
    $region77: #{lastgcn_forward.1} parent=1 // pred_check
      _
    $region78: #{lastgcn_forward.1} parent=1 // pred_check_branch
      %11178 = sbr.rel (0) target = $region80
    $region79: #{lastgcn_forward.1} parent=1 // pred_region
      %11179 = dma.done [#allocation6], 16
    $region80: #{lastgcn_forward.1} parent=1 // pred_fallthru
      _
    %11180 = sfence
    %11181 = vsyncpa [#allocation4], 1
    %11182 = vsyncpa [#allocation6], 1

</llo_original>
